<compile_context>
chip_gen: v6e
topology: v6e:2x2x1
jax: 0.10.0
libtpu: 0.0.40
codegen_flags: <defaults>
</compile_context>

<pallas_src>
import jax
import jax.numpy as jnp
from jax import lax
from jax.experimental import pallas as pl
from jax.experimental.pallas import tpu as pltpu


def _lstm_extraction_kernel(
    x_ref,            # (T, B, E)  time-major embeddings
    last_idx_ref,     # (B, 1)     int32 last valid index per batch row
    wxfb_ref,         # (E, 8H)    bi-LSTM input proj, fwd|bwd concatenated
    bfb_ref,          # (1, 8H)    bi-LSTM biases (ih+hh pre-summed), fwd|bwd
    whf_ref, whb_ref,              # bi-LSTM recurrent weights: (H, 4H) each
    w1x_ref, w1h_ref, b1_ref,      # lstm_1: (2H,8H), (2H,8H), (1,8H)
    w2x_ref, w2h_ref, b2_ref,      # lstm_2
    ln1_g_ref, ln1_b_ref,          # LayerNorm1: (1,2H)
    ln2_g_ref, ln2_b_ref,          # LayerNorm2: (1,2H)
    bn_scale_ref, bn_shift_ref,    # folded BatchNorm affine: (1,4H)
    out_ref,                       # (B, 4H)
    seq_f_ref,                     # scratch (T, B, H):  forward-dir hidden seq
    seq_ref,                       # scratch (T, B, 2H): layer activations (reused)
    gates_ref,                     # scratch (T, B, 8H): hoisted input-proj gates
):
    T, B, E = x_ref.shape
    H = whf_ref.shape[0]           # lstm_hidden_size
    H2 = 2 * H
    G = 8 * H                      # gate-buffer width (= 2*4H = 4*2H)

    def sigmoid(z):                # single EUP op (tanh) instead of exp+recip
        return 0.5 * jnp.tanh(0.5 * z) + 0.5

    def cell(pre_g, h, c, wh, hid):
        # pre_g already holds x_t @ W_ih + (b_ih + b_hh); gate order i, f, g, o
        g = pre_g + jnp.dot(h, wh, preferred_element_type=jnp.float32)
        i = sigmoid(g[:, 0 * hid:1 * hid])
        f = sigmoid(g[:, 1 * hid:2 * hid])
        gg = jnp.tanh(g[:, 2 * hid:3 * hid])
        o = sigmoid(g[:, 3 * hid:4 * hid])
        c_new = f * c + i * gg
        h_new = o * jnp.tanh(c_new)
        return h_new, c_new

    def layernorm(v, gamma, beta):
        mu = jnp.mean(v, axis=-1, keepdims=True)
        var = jnp.mean(jnp.square(v - mu), axis=-1, keepdims=True)
        return (v - mu) * lax.rsqrt(var + 1e-5) * gamma + beta

    zh = jnp.zeros((B, H), jnp.float32)
    zh2 = jnp.zeros((B, H2), jnp.float32)

    # Hoisted parameter loads (kept out of the unrolled loop bodies).
    whf = whf_ref[...]
    whb = whb_ref[...]
    w1h = w1h_ref[...]
    w2h = w2h_ref[...]
    ln1_g = ln1_g_ref[...]; ln1_b = ln1_b_ref[...]
    ln2_g = ln2_g_ref[...]; ln2_b = ln2_b_ref[...]

    # -- Stage 0: hoisted bi-LSTM input projection (both dirs, one matmul) ---
    x_flat = x_ref[...].reshape(T * B, E)
    gates_ref[...] = (
        jnp.dot(x_flat, wxfb_ref[...], preferred_element_type=jnp.float32)
        + bfb_ref[...]
    ).reshape(T, B, G)

    # -- Pass 1: bi-LSTM, forward direction ----------------------------------
    def fwd_body(t, carry):
        h, c = carry
        h, c = cell(gates_ref[t][:, 0:4 * H], h, c, whf, H)
        seq_f_ref[t] = h
        return (h, c)
    lax.fori_loop(0, T, fwd_body, (zh, zh), unroll=True)

    # -- Pass 2: bi-LSTM backward direction, fused concat + LayerNorm1 -------
    def bwd_body(t, carry):
        h, c = carry
        s = T - 1 - t
        h, c = cell(gates_ref[s][:, 4 * H:8 * H], h, c, whb, H)
        both = jnp.concatenate([seq_f_ref[s], h], axis=-1)       # (B, 2H)
        seq_ref[s] = layernorm(both, ln1_g, ln1_b)
        return (h, c)
    lax.fori_loop(0, T, bwd_body, (zh, zh), unroll=True)

    # -- Stage 1: hoisted lstm_1 input projection ----------------------------
    seq_flat = seq_ref[...].reshape(T * B, H2)
    gates_ref[...] = (
        jnp.dot(seq_flat, w1x_ref[...], preferred_element_type=jnp.float32)
        + b1_ref[...]
    ).reshape(T, B, G)

    # -- Pass 3: lstm_1, fused residual + LayerNorm2 (in-place rewrite) ------
    def l1_body(t, carry):
        h, c = carry
        x_t = seq_ref[t]
        h, c = cell(gates_ref[t], h, c, w1h, H2)
        seq_ref[t] = layernorm(h + x_t, ln2_g, ln2_b)
        return (h, c)
    lax.fori_loop(0, T, l1_body, (zh2, zh2), unroll=True)

    # -- Stage 2: hoisted lstm_2 input projection ----------------------------
    seq_flat2 = seq_ref[...].reshape(T * B, H2)
    gates_ref[...] = (
        jnp.dot(seq_flat2, w2x_ref[...], preferred_element_type=jnp.float32)
        + b2_ref[...]
    ).reshape(T, B, G)

    # -- Pass 4: lstm_2, fused last-index gather (out_1) + max-pool (out_2) --
    last_idx = last_idx_ref[...]                                 # (B, 1) int32

    def l2_body(t, carry):
        h, c, out1, out2 = carry
        h, c = cell(gates_ref[t], h, c, w2h, H2)
        sel = last_idx == t                                      # (B, 1) bool
        out1 = jnp.where(sel, h, out1)
        out2 = jnp.maximum(out2, h)
        return (h, c, out1, out2)
    _, _, out1, out2 = lax.fori_loop(
        0, T, l2_body,
        (zh2, zh2, zh2, jnp.full((B, H2), -1e30, jnp.float32)),
        unroll=True)

    # -- Epilogue: concat + folded BatchNorm + ReLU (Dropout = identity) -----
    feat = jnp.concatenate([out1, out2], axis=-1)                # (B, 4H)
    y = feat * bn_scale_ref[...] + bn_shift_ref[...]
    out_ref[...] = jnp.maximum(y, 0.0)


@jax.jit
def lstm_extraction_v2_forward(inp_embed, inp_last_idx, params):
    """inp_embed: (B, T, E) f32, inp_last_idx: (B,) int. Returns (B, 4H) f32."""
    B, T, _ = inp_embed.shape
    H = params["whf"].shape[0]
    x_tbe = jnp.transpose(inp_embed, (1, 0, 2)).astype(jnp.float32)   # (T, B, E)
    last_idx = inp_last_idx.astype(jnp.int32).reshape(B, 1)

    # Pre-concatenate the two bi-LSTM input projections so the kernel does one
    # (T*B, E) @ (E, 8H) matmul for both directions.
    wxfb = jnp.concatenate([params["wxf"], params["wxb"]], axis=-1)   # (E, 8H)
    bfb = jnp.concatenate([params["bf"], params["bb"]], axis=-1)      # (1, 8H)

    return pl.pallas_call(
        _lstm_extraction_kernel,
        out_shape=jax.ShapeDtypeStruct((B, 4 * H), jnp.float32),
        scratch_shapes=[
            pltpu.VMEM((T, B, H), jnp.float32),       # forward-dir hidden seq
            pltpu.VMEM((T, B, 2 * H), jnp.float32),   # layer activations (reused)
            pltpu.VMEM((T, B, 8 * H), jnp.float32),   # hoisted gate pre-activations
        ],
    )(
        x_tbe, last_idx,
        wxfb, bfb, params["whf"], params["whb"],
        params["w1x"], params["w1h"], params["b1"],
        params["w2x"], params["w2h"], params["b2"],
        params["ln1_g"], params["ln1_b"],
        params["ln2_g"], params["ln2_b"],
        params["bn_scale"], params["bn_shift"],
    )


# ----------------------------------------------------------------------------
# Parameter construction (deterministic, mimics nn.LSTM / LayerNorm / BN init)
# ----------------------------------------------------------------------------
def init_params(key, embed_size, hidden, eps=1e-5):
    keys = jax.random.split(key, 7)

    def lstm_weights(k, in_f, hid):
        k1, k2, k3, k4 = jax.random.split(k, 4)
        bound = 1.0 / (hid ** 0.5)
        # stored as (in, 4*hid) so the kernel computes x @ W; gate order i,f,g,o
        wx = jax.random.uniform(k1, (in_f, 4 * hid), jnp.float32, -bound, bound)
        wh = jax.random.uniform(k2, (hid, 4 * hid), jnp.float32, -bound, bound)
        bi = jax.random.uniform(k3, (4 * hid,), jnp.float32, -bound, bound)
        bh = jax.random.uniform(k4, (4 * hid,), jnp.float32, -bound, bound)
        return wx, wh, (bi + bh).reshape(1, 4 * hid)   # biases pre-summed

    def affine(k, n):
        kg, kb = jax.random.split(k)
        g = 1.0 + 0.1 * jax.random.normal(kg, (1, n), jnp.float32)
        b = 0.1 * jax.random.normal(kb, (1, n), jnp.float32)
        return g, b

    wxf, whf, bf = lstm_weights(keys[0], embed_size, hidden)
    wxb, whb, bb = lstm_weights(keys[1], embed_size, hidden)
    w1x, w1h, b1 = lstm_weights(keys[2], 2 * hidden, 2 * hidden)
    w2x, w2h, b2 = lstm_weights(keys[3], 2 * hidden, 2 * hidden)
    ln1_g, ln1_b = affine(keys[4], 2 * hidden)
    ln2_g, ln2_b = affine(keys[5], 2 * hidden)

    kg, kb2, km, kv = jax.random.split(keys[6], 4)
    n_bn = 4 * hidden
    gamma = 1.0 + 0.1 * jax.random.normal(kg, (1, n_bn), jnp.float32)
    beta = 0.1 * jax.random.normal(kb2, (1, n_bn), jnp.float32)
    rmean = 0.1 * jax.random.normal(km, (1, n_bn), jnp.float32)
    rvar = 1.0 + 0.1 * jax.random.uniform(kv, (1, n_bn), jnp.float32)
    bn_scale = gamma / jnp.sqrt(rvar + eps)            # folded eval-mode BN
    bn_shift = beta - rmean * bn_scale

    return dict(wxf=wxf, whf=whf, bf=bf, wxb=wxb, whb=whb, bb=bb,
                w1x=w1x, w1h=w1h, b1=b1, w2x=w2x, w2h=w2h, b2=b2,
                ln1_g=ln1_g, ln1_b=ln1_b, ln2_g=ln2_g, ln2_b=ln2_b,
                bn_scale=bn_scale, bn_shift=bn_shift)


# ----------------------------------------------------------------------------
# Pure-JAX reference (eval-mode) for correctness checking
# ----------------------------------------------------------------------------
def _lstm_ref(x, wx, wh, b, reverse=False):
    T, B, _ = x.shape
    H = wh.shape[0]
    h = jnp.zeros((B, H), jnp.float32)
    c = jnp.zeros((B, H), jnp.float32)
    outs = [None] * T
    order = range(T - 1, -1, -1) if reverse else range(T)
    for t in order:
        g = (jnp.dot(x[t], wx, precision=lax.Precision.HIGHEST)
             + jnp.dot(h, wh, precision=lax.Precision.HIGHEST) + b)
        i = jax.nn.sigmoid(g[:, 0 * H:1 * H])
        f = jax.nn.sigmoid(g[:, 1 * H:2 * H])
        gg = jnp.tanh(g[:, 2 * H:3 * H])
        o = jax.nn.sigmoid(g[:, 3 * H:4 * H])
        c = f * c + i * gg
        h = o * jnp.tanh(c)
        outs[t] = h
    return jnp.stack(outs, axis=0)


def _layernorm_ref(x, g, b, eps=1e-5):
    mu = jnp.mean(x, axis=-1, keepdims=True)
    var = jnp.mean(jnp.square(x - mu), axis=-1, keepdims=True)
    return (x - mu) / jnp.sqrt(var + eps) * g + b


def _reference_forward(inp_embed, inp_last_idx, p):
    x = jnp.transpose(inp_embed, (1, 0, 2))                     # (T, B, E)
    hf = _lstm_ref(x, p["wxf"], p["whf"], p["bf"])
    hb = _lstm_ref(x, p["wxb"], p["whb"], p["bb"], reverse=True)
    bi = _layernorm_ref(jnp.concatenate([hf, hb], axis=-1), p["ln1_g"], p["ln1_b"])
    h1 = _lstm_ref(bi, p["w1x"], p["w1h"], p["b1"])
    h1 = _layernorm_ref(h1 + bi, p["ln2_g"], p["ln2_b"])
    h2 = _lstm_ref(h1, p["w2x"], p["w2h"], p["b2"])
    B = inp_embed.shape[0]
    out1 = h2[inp_last_idx, jnp.arange(B), :]                   # last-step gather
    out2 = jnp.max(h2, axis=0)                                  # max-pool over T
    feat = jnp.concatenate([out1, out2], axis=-1)
    return jnp.maximum(feat * p["bn_scale"] + p["bn_shift"], 0.0)


if __name__ == "__main__":
    BATCH, SEQ_LEN, EMBED_SIZE, LSTM_HIDDEN = 4, 8, 32, 32   # seq_len == max_seq_len

    key = jax.random.PRNGKey(0)
    kx, ki, kp = jax.random.split(key, 3)
    inp_embed = jax.random.normal(kx, (BATCH, SEQ_LEN, EMBED_SIZE), jnp.float32)
    inp_last_idx = jax.random.randint(ki, (BATCH,), 0, SEQ_LEN, jnp.int32)
    params = init_params(kp, EMBED_SIZE, LSTM_HIDDEN)

    out = lstm_extraction_v2_forward(inp_embed, inp_last_idx, params)
    out = jax.block_until_ready(out)

    ref = _reference_forward(inp_embed, inp_last_idx, params)
    assert out.shape == (BATCH, 4 * LSTM_HIDDEN)
    assert jnp.allclose(out, ref, rtol=1e-2, atol=1e-2), "mismatch vs reference"

    print("KERNEL_OK")
</pallas_src>

<mosaic_0001>
module attributes {stable_mosaic.version = 11 : i64} {
  func.func @_lstm_extraction_kernel(%arg0: memref<8x4x32xf32, #tpu.memory_space<vmem>>, %arg1: memref<4x1xi32, #tpu.memory_space<vmem>>, %arg2: memref<32x256xf32, #tpu.memory_space<vmem>>, %arg3: memref<1x256xf32, #tpu.memory_space<vmem>>, %arg4: memref<32x128xf32, #tpu.memory_space<vmem>>, %arg5: memref<32x128xf32, #tpu.memory_space<vmem>>, %arg6: memref<64x256xf32, #tpu.memory_space<vmem>>, %arg7: memref<64x256xf32, #tpu.memory_space<vmem>>, %arg8: memref<1x256xf32, #tpu.memory_space<vmem>>, %arg9: memref<64x256xf32, #tpu.memory_space<vmem>>, %arg10: memref<64x256xf32, #tpu.memory_space<vmem>>, %arg11: memref<1x256xf32, #tpu.memory_space<vmem>>, %arg12: memref<1x64xf32, #tpu.memory_space<vmem>>, %arg13: memref<1x64xf32, #tpu.memory_space<vmem>>, %arg14: memref<1x64xf32, #tpu.memory_space<vmem>>, %arg15: memref<1x64xf32, #tpu.memory_space<vmem>>, %arg16: memref<1x128xf32, #tpu.memory_space<vmem>>, %arg17: memref<1x128xf32, #tpu.memory_space<vmem>>, %arg18: memref<4x128xf32, #tpu.memory_space<vmem>>, %arg19: memref<8x4x32xf32, #tpu.memory_space<vmem>>, %arg20: memref<8x4x64xf32, #tpu.memory_space<vmem>>, %arg21: memref<8x4x256xf32, #tpu.memory_space<vmem>>) attributes {dimension_semantics = [], scalar_prefetch = 0 : i64, scratch_operands = 3 : i64, tpu.core_type = #tpu.core_type<tc>} {
    %cst = arith.constant 0.000000e+00 : f32
    %0 = vector.broadcast %cst : f32 to vector<4x32xf32>
    %cst_0 = arith.constant 0.000000e+00 : f32
    %1 = vector.broadcast %cst_0 : f32 to vector<4x64xf32>
    %c0 = arith.constant 0 : index
    %c0_1 = arith.constant 0 : index
    %2 = vector.load %arg4[%c0, %c0_1] : memref<32x128xf32, #tpu.memory_space<vmem>>, vector<32x128xf32>
    %c0_2 = arith.constant 0 : index
    %c0_3 = arith.constant 0 : index
    %3 = vector.load %arg5[%c0_2, %c0_3] : memref<32x128xf32, #tpu.memory_space<vmem>>, vector<32x128xf32>
    %c0_4 = arith.constant 0 : index
    %c0_5 = arith.constant 0 : index
    %4 = vector.load %arg7[%c0_4, %c0_5] : memref<64x256xf32, #tpu.memory_space<vmem>>, vector<64x256xf32>
    %c0_6 = arith.constant 0 : index
    %c0_7 = arith.constant 0 : index
    %5 = vector.load %arg10[%c0_6, %c0_7] : memref<64x256xf32, #tpu.memory_space<vmem>>, vector<64x256xf32>
    %c0_8 = arith.constant 0 : index
    %c0_9 = arith.constant 0 : index
    %6 = vector.load %arg12[%c0_8, %c0_9] : memref<1x64xf32, #tpu.memory_space<vmem>>, vector<1x64xf32>
    %c0_10 = arith.constant 0 : index
    %c0_11 = arith.constant 0 : index
    %7 = vector.load %arg13[%c0_10, %c0_11] : memref<1x64xf32, #tpu.memory_space<vmem>>, vector<1x64xf32>
    %c0_12 = arith.constant 0 : index
    %c0_13 = arith.constant 0 : index
    %8 = vector.load %arg14[%c0_12, %c0_13] : memref<1x64xf32, #tpu.memory_space<vmem>>, vector<1x64xf32>
    %c0_14 = arith.constant 0 : index
    %c0_15 = arith.constant 0 : index
    %9 = vector.load %arg15[%c0_14, %c0_15] : memref<1x64xf32, #tpu.memory_space<vmem>>, vector<1x64xf32>
    %c0_16 = arith.constant 0 : index
    %c0_17 = arith.constant 0 : index
    %c0_18 = arith.constant 0 : index
    %10 = vector.load %arg0[%c0_16, %c0_17, %c0_18] : memref<8x4x32xf32, #tpu.memory_space<vmem>>, vector<8x4x32xf32>
    %11 = vector.shape_cast %10 : vector<8x4x32xf32> to vector<32x32xf32>
    %c0_19 = arith.constant 0 : index
    %c0_20 = arith.constant 0 : index
    %12 = vector.load %arg2[%c0_19, %c0_20] : memref<32x256xf32, #tpu.memory_space<vmem>>, vector<32x256xf32>
    %cst_21 = arith.constant dense<0.000000e+00> : vector<32x256xf32>
    %13 = tpu.matmul %11, %12, %cst_21 {dimension_numbers = #tpu.dot_dimension_numbers<[1], [0], [0], [1], [0, 0, 1, 1], [], []>} : vector<32x32xf32>, vector<32x256xf32>, vector<32x256xf32> -> vector<32x256xf32>
    %c0_22 = arith.constant 0 : index
    %c0_23 = arith.constant 0 : index
    %14 = vector.load %arg3[%c0_22, %c0_23] : memref<1x256xf32, #tpu.memory_space<vmem>>, vector<1x256xf32>
    %15 = vector.broadcast %14 : vector<1x256xf32> to vector<32x256xf32>
    %16 = arith.addf %13, %15 : vector<32x256xf32>
    %17 = vector.shape_cast %16 : vector<32x256xf32> to vector<8x4x256xf32>
    %c0_24 = arith.constant 0 : index
    %c0_25 = arith.constant 0 : index
    %c0_26 = arith.constant 0 : index
    %18 = vector.load %arg21[%c0_24, %c0_25, %c0_26] : memref<8x4x256xf32, #tpu.memory_space<vmem>>, vector<8x4x256xf32>
    tpu.vector_store %arg21[%c0_24, %c0_25, %c0_26], %17 {strides = array<i32>} : memref<8x4x256xf32, #tpu.memory_space<vmem>>, vector<8x4x256xf32>,
    %c0_i32 = arith.constant 0 : i32
    %19 = arith.index_cast %c0_i32 : i32 to index
    %c0_27 = arith.constant 0 : index
    %c0_28 = arith.constant 0 : index
    %20 = vector.load %arg21[%19, %c0_27, %c0_28] : memref<8x4x256xf32, #tpu.memory_space<vmem>>, vector<1x4x256xf32>
    %21 = vector.shape_cast %20 : vector<1x4x256xf32> to vector<4x256xf32>
    %22 = vector.extract_strided_slice %21 {offsets = [0, 0], sizes = [4, 128], strides = [1, 1]} : vector<4x256xf32> to vector<4x128xf32>
    %cst_29 = arith.constant dense<0.000000e+00> : vector<4x128xf32>
    %23 = tpu.matmul %0, %2, %cst_29 {dimension_numbers = #tpu.dot_dimension_numbers<[1], [0], [0], [1], [0, 0, 1, 1], [], []>} : vector<4x32xf32>, vector<32x128xf32>, vector<4x128xf32> -> vector<4x128xf32>
    %24 = arith.addf %22, %23 : vector<4x128xf32>
    %25 = vector.extract_strided_slice %24 {offsets = [0, 0], sizes = [4, 32], strides = [1, 1]} : vector<4x128xf32> to vector<4x32xf32>
    %cst_30 = arith.constant 5.000000e-01 : f32
    %26 = vector.broadcast %cst_30 : f32 to vector<4x32xf32>
    %27 = arith.mulf %26, %25 : vector<4x32xf32>
    %28 = math.tanh %27 : vector<4x32xf32>
    %cst_31 = arith.constant 5.000000e-01 : f32
    %29 = vector.broadcast %cst_31 : f32 to vector<4x32xf32>
    %30 = arith.mulf %29, %28 : vector<4x32xf32>
    %cst_32 = arith.constant 5.000000e-01 : f32
    %31 = vector.broadcast %cst_32 : f32 to vector<4x32xf32>
    %32 = arith.addf %30, %31 : vector<4x32xf32>
    %33 = vector.extract_strided_slice %24 {offsets = [0, 32], sizes = [4, 32], strides = [1, 1]} : vector<4x128xf32> to vector<4x32xf32>
    %cst_33 = arith.constant 5.000000e-01 : f32
    %34 = vector.broadcast %cst_33 : f32 to vector<4x32xf32>
    %35 = arith.mulf %34, %33 : vector<4x32xf32>
    %36 = math.tanh %35 : vector<4x32xf32>
    %cst_34 = arith.constant 5.000000e-01 : f32
    %37 = vector.broadcast %cst_34 : f32 to vector<4x32xf32>
    %38 = arith.mulf %37, %36 : vector<4x32xf32>
    %cst_35 = arith.constant 5.000000e-01 : f32
    %39 = vector.broadcast %cst_35 : f32 to vector<4x32xf32>
    %40 = arith.addf %38, %39 : vector<4x32xf32>
    %41 = vector.extract_strided_slice %24 {offsets = [0, 64], sizes = [4, 32], strides = [1, 1]} : vector<4x128xf32> to vector<4x32xf32>
    %42 = math.tanh %41 : vector<4x32xf32>
    %43 = vector.extract_strided_slice %24 {offsets = [0, 96], sizes = [4, 32], strides = [1, 1]} : vector<4x128xf32> to vector<4x32xf32>
    %cst_36 = arith.constant 5.000000e-01 : f32
    %44 = vector.broadcast %cst_36 : f32 to vector<4x32xf32>
    %45 = arith.mulf %44, %43 : vector<4x32xf32>
    %46 = math.tanh %45 : vector<4x32xf32>
    %cst_37 = arith.constant 5.000000e-01 : f32
    %47 = vector.broadcast %cst_37 : f32 to vector<4x32xf32>
    %48 = arith.mulf %47, %46 : vector<4x32xf32>
    %cst_38 = arith.constant 5.000000e-01 : f32
    %49 = vector.broadcast %cst_38 : f32 to vector<4x32xf32>
    %50 = arith.addf %48, %49 : vector<4x32xf32>
    %51 = arith.mulf %40, %0 : vector<4x32xf32>
    %52 = arith.mulf %32, %42 : vector<4x32xf32>
    %53 = arith.addf %51, %52 : vector<4x32xf32>
    %54 = math.tanh %53 : vector<4x32xf32>
    %55 = arith.mulf %50, %54 : vector<4x32xf32>
    %56 = arith.index_cast %c0_i32 : i32 to index
    %c0_39 = arith.constant 0 : index
    %c0_40 = arith.constant 0 : index
    %57 = vector.load %arg19[%56, %c0_39, %c0_40] : memref<8x4x32xf32, #tpu.memory_space<vmem>>, vector<1x4x32xf32>
    %58 = vector.shape_cast %57 : vector<1x4x32xf32> to vector<4x32xf32>
    %59 = vector.shape_cast %55 : vector<4x32xf32> to vector<1x4x32xf32>
    tpu.vector_store %arg19[%56, %c0_39, %c0_40], %59 {strides = array<i32>} : memref<8x4x32xf32, #tpu.memory_space<vmem>>, vector<1x4x32xf32>,
    %c1_i32 = arith.constant 1 : i32
    %60 = arith.index_cast %c1_i32 : i32 to index
    %c0_41 = arith.constant 0 : index
    %c0_42 = arith.constant 0 : index
    %61 = vector.load %arg21[%60, %c0_41, %c0_42] : memref<8x4x256xf32, #tpu.memory_space<vmem>>, vector<1x4x256xf32>
    %62 = vector.shape_cast %61 : vector<1x4x256xf32> to vector<4x256xf32>
    %63 = vector.extract_strided_slice %62 {offsets = [0, 0], sizes = [4, 128], strides = [1, 1]} : vector<4x256xf32> to vector<4x128xf32>
    %cst_43 = arith.constant dense<0.000000e+00> : vector<4x128xf32>
    %64 = tpu.matmul %55, %2, %cst_43 {dimension_numbers = #tpu.dot_dimension_numbers<[1], [0], [0], [1], [0, 0, 1, 1], [], []>} : vector<4x32xf32>, vector<32x128xf32>, vector<4x128xf32> -> vector<4x128xf32>
    %65 = arith.addf %63, %64 : vector<4x128xf32>
    %66 = vector.extract_strided_slice %65 {offsets = [0, 0], sizes = [4, 32], strides = [1, 1]} : vector<4x128xf32> to vector<4x32xf32>
    %cst_44 = arith.constant 5.000000e-01 : f32
    %67 = vector.broadcast %cst_44 : f32 to vector<4x32xf32>
    %68 = arith.mulf %67, %66 : vector<4x32xf32>
    %69 = math.tanh %68 : vector<4x32xf32>
    %cst_45 = arith.constant 5.000000e-01 : f32
    %70 = vector.broadcast %cst_45 : f32 to vector<4x32xf32>
    %71 = arith.mulf %70, %69 : vector<4x32xf32>
    %cst_46 = arith.constant 5.000000e-01 : f32
    %72 = vector.broadcast %cst_46 : f32 to vector<4x32xf32>
    %73 = arith.addf %71, %72 : vector<4x32xf32>
    %74 = vector.extract_strided_slice %65 {offsets = [0, 32], sizes = [4, 32], strides = [1, 1]} : vector<4x128xf32> to vector<4x32xf32>
    %cst_47 = arith.constant 5.000000e-01 : f32
    %75 = vector.broadcast %cst_47 : f32 to vector<4x32xf32>
    %76 = arith.mulf %75, %74 : vector<4x32xf32>
    %77 = math.tanh %76 : vector<4x32xf32>
    %cst_48 = arith.constant 5.000000e-01 : f32
    %78 = vector.broadcast %cst_48 : f32 to vector<4x32xf32>
    %79 = arith.mulf %78, %77 : vector<4x32xf32>
    %cst_49 = arith.constant 5.000000e-01 : f32
    %80 = vector.broadcast %cst_49 : f32 to vector<4x32xf32>
    %81 = arith.addf %79, %80 : vector<4x32xf32>
    %82 = vector.extract_strided_slice %65 {offsets = [0, 64], sizes = [4, 32], strides = [1, 1]} : vector<4x128xf32> to vector<4x32xf32>
    %83 = math.tanh %82 : vector<4x32xf32>
    %84 = vector.extract_strided_slice %65 {offsets = [0, 96], sizes = [4, 32], strides = [1, 1]} : vector<4x128xf32> to vector<4x32xf32>
    %cst_50 = arith.constant 5.000000e-01 : f32
    %85 = vector.broadcast %cst_50 : f32 to vector<4x32xf32>
    %86 = arith.mulf %85, %84 : vector<4x32xf32>
    %87 = math.tanh %86 : vector<4x32xf32>
    %cst_51 = arith.constant 5.000000e-01 : f32
    %88 = vector.broadcast %cst_51 : f32 to vector<4x32xf32>
    %89 = arith.mulf %88, %87 : vector<4x32xf32>
    %cst_52 = arith.constant 5.000000e-01 : f32
    %90 = vector.broadcast %cst_52 : f32 to vector<4x32xf32>
    %91 = arith.addf %89, %90 : vector<4x32xf32>
    %92 = arith.mulf %81, %53 : vector<4x32xf32>
    %93 = arith.mulf %73, %83 : vector<4x32xf32>
    %94 = arith.addf %92, %93 : vector<4x32xf32>
    %95 = math.tanh %94 : vector<4x32xf32>
    %96 = arith.mulf %91, %95 : vector<4x32xf32>
    %97 = arith.index_cast %c1_i32 : i32 to index
    %c0_53 = arith.constant 0 : index
    %c0_54 = arith.constant 0 : index
    %98 = vector.load %arg19[%97, %c0_53, %c0_54] : memref<8x4x32xf32, #tpu.memory_space<vmem>>, vector<1x4x32xf32>
    %99 = vector.shape_cast %98 : vector<1x4x32xf32> to vector<4x32xf32>
    %100 = vector.shape_cast %96 : vector<4x32xf32> to vector<1x4x32xf32>
    tpu.vector_store %arg19[%97, %c0_53, %c0_54], %100 {strides = array<i32>} : memref<8x4x32xf32, #tpu.memory_space<vmem>>, vector<1x4x32xf32>,
    %c2_i32 = arith.constant 2 : i32
    %101 = arith.index_cast %c2_i32 : i32 to index
    %c0_55 = arith.constant 0 : index
    %c0_56 = arith.constant 0 : index
    %102 = vector.load %arg21[%101, %c0_55, %c0_56] : memref<8x4x256xf32, #tpu.memory_space<vmem>>, vector<1x4x256xf32>
    %103 = vector.shape_cast %102 : vector<1x4x256xf32> to vector<4x256xf32>
    %104 = vector.extract_strided_slice %103 {offsets = [0, 0], sizes = [4, 128], strides = [1, 1]} : vector<4x256xf32> to vector<4x128xf32>
    %cst_57 = arith.constant dense<0.000000e+00> : vector<4x128xf32>
    %105 = tpu.matmul %96, %2, %cst_57 {dimension_numbers = #tpu.dot_dimension_numbers<[1], [0], [0], [1], [0, 0, 1, 1], [], []>} : vector<4x32xf32>, vector<32x128xf32>, vector<4x128xf32> -> vector<4x128xf32>
    %106 = arith.addf %104, %105 : vector<4x128xf32>
    %107 = vector.extract_strided_slice %106 {offsets = [0, 0], sizes = [4, 32], strides = [1, 1]} : vector<4x128xf32> to vector<4x32xf32>
    %cst_58 = arith.constant 5.000000e-01 : f32
    %108 = vector.broadcast %cst_58 : f32 to vector<4x32xf32>
    %109 = arith.mulf %108, %107 : vector<4x32xf32>
    %110 = math.tanh %109 : vector<4x32xf32>
    %cst_59 = arith.constant 5.000000e-01 : f32
    %111 = vector.broadcast %cst_59 : f32 to vector<4x32xf32>
    %112 = arith.mulf %111, %110 : vector<4x32xf32>
    %cst_60 = arith.constant 5.000000e-01 : f32
    %113 = vector.broadcast %cst_60 : f32 to vector<4x32xf32>
    %114 = arith.addf %112, %113 : vector<4x32xf32>
    %115 = vector.extract_strided_slice %106 {offsets = [0, 32], sizes = [4, 32], strides = [1, 1]} : vector<4x128xf32> to vector<4x32xf32>
    %cst_61 = arith.constant 5.000000e-01 : f32
    %116 = vector.broadcast %cst_61 : f32 to vector<4x32xf32>
    %117 = arith.mulf %116, %115 : vector<4x32xf32>
    %118 = math.tanh %117 : vector<4x32xf32>
    %cst_62 = arith.constant 5.000000e-01 : f32
    %119 = vector.broadcast %cst_62 : f32 to vector<4x32xf32>
    %120 = arith.mulf %119, %118 : vector<4x32xf32>
    %cst_63 = arith.constant 5.000000e-01 : f32
    %121 = vector.broadcast %cst_63 : f32 to vector<4x32xf32>
    %122 = arith.addf %120, %121 : vector<4x32xf32>
    %123 = vector.extract_strided_slice %106 {offsets = [0, 64], sizes = [4, 32], strides = [1, 1]} : vector<4x128xf32> to vector<4x32xf32>
    %124 = math.tanh %123 : vector<4x32xf32>
    %125 = vector.extract_strided_slice %106 {offsets = [0, 96], sizes = [4, 32], strides = [1, 1]} : vector<4x128xf32> to vector<4x32xf32>
    %cst_64 = arith.constant 5.000000e-01 : f32
    %126 = vector.broadcast %cst_64 : f32 to vector<4x32xf32>
    %127 = arith.mulf %126, %125 : vector<4x32xf32>
    %128 = math.tanh %127 : vector<4x32xf32>
    %cst_65 = arith.constant 5.000000e-01 : f32
    %129 = vector.broadcast %cst_65 : f32 to vector<4x32xf32>
    %130 = arith.mulf %129, %128 : vector<4x32xf32>
    %cst_66 = arith.constant 5.000000e-01 : f32
    %131 = vector.broadcast %cst_66 : f32 to vector<4x32xf32>
    %132 = arith.addf %130, %131 : vector<4x32xf32>
    %133 = arith.mulf %122, %94 : vector<4x32xf32>
    %134 = arith.mulf %114, %124 : vector<4x32xf32>
    %135 = arith.addf %133, %134 : vector<4x32xf32>
    %136 = math.tanh %135 : vector<4x32xf32>
    %137 = arith.mulf %132, %136 : vector<4x32xf32>
    %138 = arith.index_cast %c2_i32 : i32 to index
    %c0_67 = arith.constant 0 : index
    %c0_68 = arith.constant 0 : index
    %139 = vector.load %arg19[%138, %c0_67, %c0_68] : memref<8x4x32xf32, #tpu.memory_space<vmem>>, vector<1x4x32xf32>
    %140 = vector.shape_cast %139 : vector<1x4x32xf32> to vector<4x32xf32>
    %141 = vector.shape_cast %137 : vector<4x32xf32> to vector<1x4x32xf32>
    tpu.vector_store %arg19[%138, %c0_67, %c0_68], %141 {strides = array<i32>} : memref<8x4x32xf32, #tpu.memory_space<vmem>>, vector<1x4x32xf32>,
    %c3_i32 = arith.constant 3 : i32
    %142 = arith.index_cast %c3_i32 : i32 to index
    %c0_69 = arith.constant 0 : index
    %c0_70 = arith.constant 0 : index
    %143 = vector.load %arg21[%142, %c0_69, %c0_70] : memref<8x4x256xf32, #tpu.memory_space<vmem>>, vector<1x4x256xf32>
    %144 = vector.shape_cast %143 : vector<1x4x256xf32> to vector<4x256xf32>
    %145 = vector.extract_strided_slice %144 {offsets = [0, 0], sizes = [4, 128], strides = [1, 1]} : vector<4x256xf32> to vector<4x128xf32>
    %cst_71 = arith.constant dense<0.000000e+00> : vector<4x128xf32>
    %146 = tpu.matmul %137, %2, %cst_71 {dimension_numbers = #tpu.dot_dimension_numbers<[1], [0], [0], [1], [0, 0, 1, 1], [], []>} : vector<4x32xf32>, vector<32x128xf32>, vector<4x128xf32> -> vector<4x128xf32>
    %147 = arith.addf %145, %146 : vector<4x128xf32>
    %148 = vector.extract_strided_slice %147 {offsets = [0, 0], sizes = [4, 32], strides = [1, 1]} : vector<4x128xf32> to vector<4x32xf32>
    %cst_72 = arith.constant 5.000000e-01 : f32
    %149 = vector.broadcast %cst_72 : f32 to vector<4x32xf32>
    %150 = arith.mulf %149, %148 : vector<4x32xf32>
    %151 = math.tanh %150 : vector<4x32xf32>
    %cst_73 = arith.constant 5.000000e-01 : f32
    %152 = vector.broadcast %cst_73 : f32 to vector<4x32xf32>
    %153 = arith.mulf %152, %151 : vector<4x32xf32>
    %cst_74 = arith.constant 5.000000e-01 : f32
    %154 = vector.broadcast %cst_74 : f32 to vector<4x32xf32>
    %155 = arith.addf %153, %154 : vector<4x32xf32>
    %156 = vector.extract_strided_slice %147 {offsets = [0, 32], sizes = [4, 32], strides = [1, 1]} : vector<4x128xf32> to vector<4x32xf32>
    %cst_75 = arith.constant 5.000000e-01 : f32
    %157 = vector.broadcast %cst_75 : f32 to vector<4x32xf32>
    %158 = arith.mulf %157, %156 : vector<4x32xf32>
    %159 = math.tanh %158 : vector<4x32xf32>
    %cst_76 = arith.constant 5.000000e-01 : f32
    %160 = vector.broadcast %cst_76 : f32 to vector<4x32xf32>
    %161 = arith.mulf %160, %159 : vector<4x32xf32>
    %cst_77 = arith.constant 5.000000e-01 : f32
    %162 = vector.broadcast %cst_77 : f32 to vector<4x32xf32>
    %163 = arith.addf %161, %162 : vector<4x32xf32>
    %164 = vector.extract_strided_slice %147 {offsets = [0, 64], sizes = [4, 32], strides = [1, 1]} : vector<4x128xf32> to vector<4x32xf32>
    %165 = math.tanh %164 : vector<4x32xf32>
    %166 = vector.extract_strided_slice %147 {offsets = [0, 96], sizes = [4, 32], strides = [1, 1]} : vector<4x128xf32> to vector<4x32xf32>
    %cst_78 = arith.constant 5.000000e-01 : f32
    %167 = vector.broadcast %cst_78 : f32 to vector<4x32xf32>
    %168 = arith.mulf %167, %166 : vector<4x32xf32>
    %169 = math.tanh %168 : vector<4x32xf32>
    %cst_79 = arith.constant 5.000000e-01 : f32
    %170 = vector.broadcast %cst_79 : f32 to vector<4x32xf32>
    %171 = arith.mulf %170, %169 : vector<4x32xf32>
    %cst_80 = arith.constant 5.000000e-01 : f32
    %172 = vector.broadcast %cst_80 : f32 to vector<4x32xf32>
    %173 = arith.addf %171, %172 : vector<4x32xf32>
    %174 = arith.mulf %163, %135 : vector<4x32xf32>
    %175 = arith.mulf %155, %165 : vector<4x32xf32>
    %176 = arith.addf %174, %175 : vector<4x32xf32>
    %177 = math.tanh %176 : vector<4x32xf32>
    %178 = arith.mulf %173, %177 : vector<4x32xf32>
    %179 = arith.index_cast %c3_i32 : i32 to index
    %c0_81 = arith.constant 0 : index
    %c0_82 = arith.constant 0 : index
    %180 = vector.load %arg19[%179, %c0_81, %c0_82] : memref<8x4x32xf32, #tpu.memory_space<vmem>>, vector<1x4x32xf32>
    %181 = vector.shape_cast %180 : vector<1x4x32xf32> to vector<4x32xf32>
    %182 = vector.shape_cast %178 : vector<4x32xf32> to vector<1x4x32xf32>
    tpu.vector_store %arg19[%179, %c0_81, %c0_82], %182 {strides = array<i32>} : memref<8x4x32xf32, #tpu.memory_space<vmem>>, vector<1x4x32xf32>,
    %c4_i32 = arith.constant 4 : i32
    %183 = arith.index_cast %c4_i32 : i32 to index
    %c0_83 = arith.constant 0 : index
    %c0_84 = arith.constant 0 : index
    %184 = vector.load %arg21[%183, %c0_83, %c0_84] : memref<8x4x256xf32, #tpu.memory_space<vmem>>, vector<1x4x256xf32>
    %185 = vector.shape_cast %184 : vector<1x4x256xf32> to vector<4x256xf32>
    %186 = vector.extract_strided_slice %185 {offsets = [0, 0], sizes = [4, 128], strides = [1, 1]} : vector<4x256xf32> to vector<4x128xf32>
    %cst_85 = arith.constant dense<0.000000e+00> : vector<4x128xf32>
    %187 = tpu.matmul %178, %2, %cst_85 {dimension_numbers = #tpu.dot_dimension_numbers<[1], [0], [0], [1], [0, 0, 1, 1], [], []>} : vector<4x32xf32>, vector<32x128xf32>, vector<4x128xf32> -> vector<4x128xf32>
    %188 = arith.addf %186, %187 : vector<4x128xf32>
    %189 = vector.extract_strided_slice %188 {offsets = [0, 0], sizes = [4, 32], strides = [1, 1]} : vector<4x128xf32> to vector<4x32xf32>
    %cst_86 = arith.constant 5.000000e-01 : f32
    %190 = vector.broadcast %cst_86 : f32 to vector<4x32xf32>
    %191 = arith.mulf %190, %189 : vector<4x32xf32>
    %192 = math.tanh %191 : vector<4x32xf32>
    %cst_87 = arith.constant 5.000000e-01 : f32
    %193 = vector.broadcast %cst_87 : f32 to vector<4x32xf32>
    %194 = arith.mulf %193, %192 : vector<4x32xf32>
    %cst_88 = arith.constant 5.000000e-01 : f32
    %195 = vector.broadcast %cst_88 : f32 to vector<4x32xf32>
    %196 = arith.addf %194, %195 : vector<4x32xf32>
    %197 = vector.extract_strided_slice %188 {offsets = [0, 32], sizes = [4, 32], strides = [1, 1]} : vector<4x128xf32> to vector<4x32xf32>
    %cst_89 = arith.constant 5.000000e-01 : f32
    %198 = vector.broadcast %cst_89 : f32 to vector<4x32xf32>
    %199 = arith.mulf %198, %197 : vector<4x32xf32>
    %200 = math.tanh %199 : vector<4x32xf32>
    %cst_90 = arith.constant 5.000000e-01 : f32
    %201 = vector.broadcast %cst_90 : f32 to vector<4x32xf32>
    %202 = arith.mulf %201, %200 : vector<4x32xf32>
    %cst_91 = arith.constant 5.000000e-01 : f32
    %203 = vector.broadcast %cst_91 : f32 to vector<4x32xf32>
    %204 = arith.addf %202, %203 : vector<4x32xf32>
    %205 = vector.extract_strided_slice %188 {offsets = [0, 64], sizes = [4, 32], strides = [1, 1]} : vector<4x128xf32> to vector<4x32xf32>
    %206 = math.tanh %205 : vector<4x32xf32>
    %207 = vector.extract_strided_slice %188 {offsets = [0, 96], sizes = [4, 32], strides = [1, 1]} : vector<4x128xf32> to vector<4x32xf32>
    %cst_92 = arith.constant 5.000000e-01 : f32
    %208 = vector.broadcast %cst_92 : f32 to vector<4x32xf32>
    %209 = arith.mulf %208, %207 : vector<4x32xf32>
    %210 = math.tanh %209 : vector<4x32xf32>
    %cst_93 = arith.constant 5.000000e-01 : f32
    %211 = vector.broadcast %cst_93 : f32 to vector<4x32xf32>
    %212 = arith.mulf %211, %210 : vector<4x32xf32>
    %cst_94 = arith.constant 5.000000e-01 : f32
    %213 = vector.broadcast %cst_94 : f32 to vector<4x32xf32>
    %214 = arith.addf %212, %213 : vector<4x32xf32>
    %215 = arith.mulf %204, %176 : vector<4x32xf32>
    %216 = arith.mulf %196, %206 : vector<4x32xf32>
    %217 = arith.addf %215, %216 : vector<4x32xf32>
    %218 = math.tanh %217 : vector<4x32xf32>
    %219 = arith.mulf %214, %218 : vector<4x32xf32>
    %220 = arith.index_cast %c4_i32 : i32 to index
    %c0_95 = arith.constant 0 : index
    %c0_96 = arith.constant 0 : index
    %221 = vector.load %arg19[%220, %c0_95, %c0_96] : memref<8x4x32xf32, #tpu.memory_space<vmem>>, vector<1x4x32xf32>
    %222 = vector.shape_cast %221 : vector<1x4x32xf32> to vector<4x32xf32>
    %223 = vector.shape_cast %219 : vector<4x32xf32> to vector<1x4x32xf32>
    tpu.vector_store %arg19[%220, %c0_95, %c0_96], %223 {strides = array<i32>} : memref<8x4x32xf32, #tpu.memory_space<vmem>>, vector<1x4x32xf32>,
    %c5_i32 = arith.constant 5 : i32
    %224 = arith.index_cast %c5_i32 : i32 to index
    %c0_97 = arith.constant 0 : index
    %c0_98 = arith.constant 0 : index
    %225 = vector.load %arg21[%224, %c0_97, %c0_98] : memref<8x4x256xf32, #tpu.memory_space<vmem>>, vector<1x4x256xf32>
    %226 = vector.shape_cast %225 : vector<1x4x256xf32> to vector<4x256xf32>
    %227 = vector.extract_strided_slice %226 {offsets = [0, 0], sizes = [4, 128], strides = [1, 1]} : vector<4x256xf32> to vector<4x128xf32>
    %cst_99 = arith.constant dense<0.000000e+00> : vector<4x128xf32>
    %228 = tpu.matmul %219, %2, %cst_99 {dimension_numbers = #tpu.dot_dimension_numbers<[1], [0], [0], [1], [0, 0, 1, 1], [], []>} : vector<4x32xf32>, vector<32x128xf32>, vector<4x128xf32> -> vector<4x128xf32>
    %229 = arith.addf %227, %228 : vector<4x128xf32>
    %230 = vector.extract_strided_slice %229 {offsets = [0, 0], sizes = [4, 32], strides = [1, 1]} : vector<4x128xf32> to vector<4x32xf32>
    %cst_100 = arith.constant 5.000000e-01 : f32
    %231 = vector.broadcast %cst_100 : f32 to vector<4x32xf32>
    %232 = arith.mulf %231, %230 : vector<4x32xf32>
    %233 = math.tanh %232 : vector<4x32xf32>
    %cst_101 = arith.constant 5.000000e-01 : f32
    %234 = vector.broadcast %cst_101 : f32 to vector<4x32xf32>
    %235 = arith.mulf %234, %233 : vector<4x32xf32>
    %cst_102 = arith.constant 5.000000e-01 : f32
    %236 = vector.broadcast %cst_102 : f32 to vector<4x32xf32>
    %237 = arith.addf %235, %236 : vector<4x32xf32>
    %238 = vector.extract_strided_slice %229 {offsets = [0, 32], sizes = [4, 32], strides = [1, 1]} : vector<4x128xf32> to vector<4x32xf32>
    %cst_103 = arith.constant 5.000000e-01 : f32
    %239 = vector.broadcast %cst_103 : f32 to vector<4x32xf32>
    %240 = arith.mulf %239, %238 : vector<4x32xf32>
    %241 = math.tanh %240 : vector<4x32xf32>
    %cst_104 = arith.constant 5.000000e-01 : f32
    %242 = vector.broadcast %cst_104 : f32 to vector<4x32xf32>
    %243 = arith.mulf %242, %241 : vector<4x32xf32>
    %cst_105 = arith.constant 5.000000e-01 : f32
    %244 = vector.broadcast %cst_105 : f32 to vector<4x32xf32>
    %245 = arith.addf %243, %244 : vector<4x32xf32>
    %246 = vector.extract_strided_slice %229 {offsets = [0, 64], sizes = [4, 32], strides = [1, 1]} : vector<4x128xf32> to vector<4x32xf32>
    %247 = math.tanh %246 : vector<4x32xf32>
    %248 = vector.extract_strided_slice %229 {offsets = [0, 96], sizes = [4, 32], strides = [1, 1]} : vector<4x128xf32> to vector<4x32xf32>
    %cst_106 = arith.constant 5.000000e-01 : f32
    %249 = vector.broadcast %cst_106 : f32 to vector<4x32xf32>
    %250 = arith.mulf %249, %248 : vector<4x32xf32>
    %251 = math.tanh %250 : vector<4x32xf32>
    %cst_107 = arith.constant 5.000000e-01 : f32
    %252 = vector.broadcast %cst_107 : f32 to vector<4x32xf32>
    %253 = arith.mulf %252, %251 : vector<4x32xf32>
    %cst_108 = arith.constant 5.000000e-01 : f32
    %254 = vector.broadcast %cst_108 : f32 to vector<4x32xf32>
    %255 = arith.addf %253, %254 : vector<4x32xf32>
    %256 = arith.mulf %245, %217 : vector<4x32xf32>
    %257 = arith.mulf %237, %247 : vector<4x32xf32>
    %258 = arith.addf %256, %257 : vector<4x32xf32>
    %259 = math.tanh %258 : vector<4x32xf32>
    %260 = arith.mulf %255, %259 : vector<4x32xf32>
    %261 = arith.index_cast %c5_i32 : i32 to index
    %c0_109 = arith.constant 0 : index
    %c0_110 = arith.constant 0 : index
    %262 = vector.load %arg19[%261, %c0_109, %c0_110] : memref<8x4x32xf32, #tpu.memory_space<vmem>>, vector<1x4x32xf32>
    %263 = vector.shape_cast %262 : vector<1x4x32xf32> to vector<4x32xf32>
    %264 = vector.shape_cast %260 : vector<4x32xf32> to vector<1x4x32xf32>
    tpu.vector_store %arg19[%261, %c0_109, %c0_110], %264 {strides = array<i32>} : memref<8x4x32xf32, #tpu.memory_space<vmem>>, vector<1x4x32xf32>,
    %c6_i32 = arith.constant 6 : i32
    %265 = arith.index_cast %c6_i32 : i32 to index
    %c0_111 = arith.constant 0 : index
    %c0_112 = arith.constant 0 : index
    %266 = vector.load %arg21[%265, %c0_111, %c0_112] : memref<8x4x256xf32, #tpu.memory_space<vmem>>, vector<1x4x256xf32>
    %267 = vector.shape_cast %266 : vector<1x4x256xf32> to vector<4x256xf32>
    %268 = vector.extract_strided_slice %267 {offsets = [0, 0], sizes = [4, 128], strides = [1, 1]} : vector<4x256xf32> to vector<4x128xf32>
    %cst_113 = arith.constant dense<0.000000e+00> : vector<4x128xf32>
    %269 = tpu.matmul %260, %2, %cst_113 {dimension_numbers = #tpu.dot_dimension_numbers<[1], [0], [0], [1], [0, 0, 1, 1], [], []>} : vector<4x32xf32>, vector<32x128xf32>, vector<4x128xf32> -> vector<4x128xf32>
    %270 = arith.addf %268, %269 : vector<4x128xf32>
    %271 = vector.extract_strided_slice %270 {offsets = [0, 0], sizes = [4, 32], strides = [1, 1]} : vector<4x128xf32> to vector<4x32xf32>
    %cst_114 = arith.constant 5.000000e-01 : f32
    %272 = vector.broadcast %cst_114 : f32 to vector<4x32xf32>
    %273 = arith.mulf %272, %271 : vector<4x32xf32>
    %274 = math.tanh %273 : vector<4x32xf32>
    %cst_115 = arith.constant 5.000000e-01 : f32
    %275 = vector.broadcast %cst_115 : f32 to vector<4x32xf32>
    %276 = arith.mulf %275, %274 : vector<4x32xf32>
    %cst_116 = arith.constant 5.000000e-01 : f32
    %277 = vector.broadcast %cst_116 : f32 to vector<4x32xf32>
    %278 = arith.addf %276, %277 : vector<4x32xf32>
    %279 = vector.extract_strided_slice %270 {offsets = [0, 32], sizes = [4, 32], strides = [1, 1]} : vector<4x128xf32> to vector<4x32xf32>
    %cst_117 = arith.constant 5.000000e-01 : f32
    %280 = vector.broadcast %cst_117 : f32 to vector<4x32xf32>
    %281 = arith.mulf %280, %279 : vector<4x32xf32>
    %282 = math.tanh %281 : vector<4x32xf32>
    %cst_118 = arith.constant 5.000000e-01 : f32
    %283 = vector.broadcast %cst_118 : f32 to vector<4x32xf32>
    %284 = arith.mulf %283, %282 : vector<4x32xf32>
    %cst_119 = arith.constant 5.000000e-01 : f32
    %285 = vector.broadcast %cst_119 : f32 to vector<4x32xf32>
    %286 = arith.addf %284, %285 : vector<4x32xf32>
    %287 = vector.extract_strided_slice %270 {offsets = [0, 64], sizes = [4, 32], strides = [1, 1]} : vector<4x128xf32> to vector<4x32xf32>
    %288 = math.tanh %287 : vector<4x32xf32>
    %289 = vector.extract_strided_slice %270 {offsets = [0, 96], sizes = [4, 32], strides = [1, 1]} : vector<4x128xf32> to vector<4x32xf32>
    %cst_120 = arith.constant 5.000000e-01 : f32
    %290 = vector.broadcast %cst_120 : f32 to vector<4x32xf32>
    %291 = arith.mulf %290, %289 : vector<4x32xf32>
    %292 = math.tanh %291 : vector<4x32xf32>
    %cst_121 = arith.constant 5.000000e-01 : f32
    %293 = vector.broadcast %cst_121 : f32 to vector<4x32xf32>
    %294 = arith.mulf %293, %292 : vector<4x32xf32>
    %cst_122 = arith.constant 5.000000e-01 : f32
    %295 = vector.broadcast %cst_122 : f32 to vector<4x32xf32>
    %296 = arith.addf %294, %295 : vector<4x32xf32>
    %297 = arith.mulf %286, %258 : vector<4x32xf32>
    %298 = arith.mulf %278, %288 : vector<4x32xf32>
    %299 = arith.addf %297, %298 : vector<4x32xf32>
    %300 = math.tanh %299 : vector<4x32xf32>
    %301 = arith.mulf %296, %300 : vector<4x32xf32>
    %302 = arith.index_cast %c6_i32 : i32 to index
    %c0_123 = arith.constant 0 : index
    %c0_124 = arith.constant 0 : index
    %303 = vector.load %arg19[%302, %c0_123, %c0_124] : memref<8x4x32xf32, #tpu.memory_space<vmem>>, vector<1x4x32xf32>
    %304 = vector.shape_cast %303 : vector<1x4x32xf32> to vector<4x32xf32>
    %305 = vector.shape_cast %301 : vector<4x32xf32> to vector<1x4x32xf32>
    tpu.vector_store %arg19[%302, %c0_123, %c0_124], %305 {strides = array<i32>} : memref<8x4x32xf32, #tpu.memory_space<vmem>>, vector<1x4x32xf32>,
    %c7_i32 = arith.constant 7 : i32
    %306 = arith.index_cast %c7_i32 : i32 to index
    %c0_125 = arith.constant 0 : index
    %c0_126 = arith.constant 0 : index
    %307 = vector.load %arg21[%306, %c0_125, %c0_126] : memref<8x4x256xf32, #tpu.memory_space<vmem>>, vector<1x4x256xf32>
    %308 = vector.shape_cast %307 : vector<1x4x256xf32> to vector<4x256xf32>
    %309 = vector.extract_strided_slice %308 {offsets = [0, 0], sizes = [4, 128], strides = [1, 1]} : vector<4x256xf32> to vector<4x128xf32>
    %cst_127 = arith.constant dense<0.000000e+00> : vector<4x128xf32>
    %310 = tpu.matmul %301, %2, %cst_127 {dimension_numbers = #tpu.dot_dimension_numbers<[1], [0], [0], [1], [0, 0, 1, 1], [], []>} : vector<4x32xf32>, vector<32x128xf32>, vector<4x128xf32> -> vector<4x128xf32>
    %311 = arith.addf %309, %310 : vector<4x128xf32>
    %312 = vector.extract_strided_slice %311 {offsets = [0, 0], sizes = [4, 32], strides = [1, 1]} : vector<4x128xf32> to vector<4x32xf32>
    %cst_128 = arith.constant 5.000000e-01 : f32
    %313 = vector.broadcast %cst_128 : f32 to vector<4x32xf32>
    %314 = arith.mulf %313, %312 : vector<4x32xf32>
    %315 = math.tanh %314 : vector<4x32xf32>
    %cst_129 = arith.constant 5.000000e-01 : f32
    %316 = vector.broadcast %cst_129 : f32 to vector<4x32xf32>
    %317 = arith.mulf %316, %315 : vector<4x32xf32>
    %cst_130 = arith.constant 5.000000e-01 : f32
    %318 = vector.broadcast %cst_130 : f32 to vector<4x32xf32>
    %319 = arith.addf %317, %318 : vector<4x32xf32>
    %320 = vector.extract_strided_slice %311 {offsets = [0, 32], sizes = [4, 32], strides = [1, 1]} : vector<4x128xf32> to vector<4x32xf32>
    %cst_131 = arith.constant 5.000000e-01 : f32
    %321 = vector.broadcast %cst_131 : f32 to vector<4x32xf32>
    %322 = arith.mulf %321, %320 : vector<4x32xf32>
    %323 = math.tanh %322 : vector<4x32xf32>
    %cst_132 = arith.constant 5.000000e-01 : f32
    %324 = vector.broadcast %cst_132 : f32 to vector<4x32xf32>
    %325 = arith.mulf %324, %323 : vector<4x32xf32>
    %cst_133 = arith.constant 5.000000e-01 : f32
    %326 = vector.broadcast %cst_133 : f32 to vector<4x32xf32>
    %327 = arith.addf %325, %326 : vector<4x32xf32>
    %328 = vector.extract_strided_slice %311 {offsets = [0, 64], sizes = [4, 32], strides = [1, 1]} : vector<4x128xf32> to vector<4x32xf32>
    %329 = math.tanh %328 : vector<4x32xf32>
    %330 = vector.extract_strided_slice %311 {offsets = [0, 96], sizes = [4, 32], strides = [1, 1]} : vector<4x128xf32> to vector<4x32xf32>
    %cst_134 = arith.constant 5.000000e-01 : f32
    %331 = vector.broadcast %cst_134 : f32 to vector<4x32xf32>
    %332 = arith.mulf %331, %330 : vector<4x32xf32>
    %333 = math.tanh %332 : vector<4x32xf32>
    %cst_135 = arith.constant 5.000000e-01 : f32
    %334 = vector.broadcast %cst_135 : f32 to vector<4x32xf32>
    %335 = arith.mulf %334, %333 : vector<4x32xf32>
    %cst_136 = arith.constant 5.000000e-01 : f32
    %336 = vector.broadcast %cst_136 : f32 to vector<4x32xf32>
    %337 = arith.addf %335, %336 : vector<4x32xf32>
    %338 = arith.mulf %327, %299 : vector<4x32xf32>
    %339 = arith.mulf %319, %329 : vector<4x32xf32>
    %340 = arith.addf %338, %339 : vector<4x32xf32>
    %341 = math.tanh %340 : vector<4x32xf32>
    %342 = arith.mulf %337, %341 : vector<4x32xf32>
    %343 = arith.index_cast %c7_i32 : i32 to index
    %c0_137 = arith.constant 0 : index
    %c0_138 = arith.constant 0 : index
    %344 = vector.load %arg19[%343, %c0_137, %c0_138] : memref<8x4x32xf32, #tpu.memory_space<vmem>>, vector<1x4x32xf32>
    %345 = vector.shape_cast %344 : vector<1x4x32xf32> to vector<4x32xf32>
    %346 = vector.shape_cast %342 : vector<4x32xf32> to vector<1x4x32xf32>
    tpu.vector_store %arg19[%343, %c0_137, %c0_138], %346 {strides = array<i32>} : memref<8x4x32xf32, #tpu.memory_space<vmem>>, vector<1x4x32xf32>,
    %c8_i32 = arith.constant 8 : i32
    %c0_i32_139 = arith.constant 0 : i32
    %c7_i32_140 = arith.constant 7 : i32
    %347 = arith.subi %c7_i32_140, %c0_i32_139 : i32
    %348 = arith.index_cast %347 : i32 to index
    %c0_141 = arith.constant 0 : index
    %c0_142 = arith.constant 0 : index
    %349 = vector.load %arg21[%348, %c0_141, %c0_142] : memref<8x4x256xf32, #tpu.memory_space<vmem>>, vector<1x4x256xf32>
    %350 = vector.shape_cast %349 : vector<1x4x256xf32> to vector<4x256xf32>
    %351 = vector.extract_strided_slice %350 {offsets = [0, 128], sizes = [4, 128], strides = [1, 1]} : vector<4x256xf32> to vector<4x128xf32>
    %cst_143 = arith.constant dense<0.000000e+00> : vector<4x128xf32>
    %352 = tpu.matmul %0, %3, %cst_143 {dimension_numbers = #tpu.dot_dimension_numbers<[1], [0], [0], [1], [0, 0, 1, 1], [], []>} : vector<4x32xf32>, vector<32x128xf32>, vector<4x128xf32> -> vector<4x128xf32>
    %353 = arith.addf %351, %352 : vector<4x128xf32>
    %354 = vector.extract_strided_slice %353 {offsets = [0, 0], sizes = [4, 32], strides = [1, 1]} : vector<4x128xf32> to vector<4x32xf32>
    %cst_144 = arith.constant 5.000000e-01 : f32
    %355 = vector.broadcast %cst_144 : f32 to vector<4x32xf32>
    %356 = arith.mulf %355, %354 : vector<4x32xf32>
    %357 = math.tanh %356 : vector<4x32xf32>
    %cst_145 = arith.constant 5.000000e-01 : f32
    %358 = vector.broadcast %cst_145 : f32 to vector<4x32xf32>
    %359 = arith.mulf %358, %357 : vector<4x32xf32>
    %cst_146 = arith.constant 5.000000e-01 : f32
    %360 = vector.broadcast %cst_146 : f32 to vector<4x32xf32>
    %361 = arith.addf %359, %360 : vector<4x32xf32>
    %362 = vector.extract_strided_slice %353 {offsets = [0, 32], sizes = [4, 32], strides = [1, 1]} : vector<4x128xf32> to vector<4x32xf32>
    %cst_147 = arith.constant 5.000000e-01 : f32
    %363 = vector.broadcast %cst_147 : f32 to vector<4x32xf32>
    %364 = arith.mulf %363, %362 : vector<4x32xf32>
    %365 = math.tanh %364 : vector<4x32xf32>
    %cst_148 = arith.constant 5.000000e-01 : f32
    %366 = vector.broadcast %cst_148 : f32 to vector<4x32xf32>
    %367 = arith.mulf %366, %365 : vector<4x32xf32>
    %cst_149 = arith.constant 5.000000e-01 : f32
    %368 = vector.broadcast %cst_149 : f32 to vector<4x32xf32>
    %369 = arith.addf %367, %368 : vector<4x32xf32>
    %370 = vector.extract_strided_slice %353 {offsets = [0, 64], sizes = [4, 32], strides = [1, 1]} : vector<4x128xf32> to vector<4x32xf32>
    %371 = math.tanh %370 : vector<4x32xf32>
    %372 = vector.extract_strided_slice %353 {offsets = [0, 96], sizes = [4, 32], strides = [1, 1]} : vector<4x128xf32> to vector<4x32xf32>
    %cst_150 = arith.constant 5.000000e-01 : f32
    %373 = vector.broadcast %cst_150 : f32 to vector<4x32xf32>
    %374 = arith.mulf %373, %372 : vector<4x32xf32>
    %375 = math.tanh %374 : vector<4x32xf32>
    %cst_151 = arith.constant 5.000000e-01 : f32
    %376 = vector.broadcast %cst_151 : f32 to vector<4x32xf32>
    %377 = arith.mulf %376, %375 : vector<4x32xf32>
    %cst_152 = arith.constant 5.000000e-01 : f32
    %378 = vector.broadcast %cst_152 : f32 to vector<4x32xf32>
    %379 = arith.addf %377, %378 : vector<4x32xf32>
    %380 = arith.mulf %369, %0 : vector<4x32xf32>
    %381 = arith.mulf %361, %371 : vector<4x32xf32>
    %382 = arith.addf %380, %381 : vector<4x32xf32>
    %383 = math.tanh %382 : vector<4x32xf32>
    %384 = arith.mulf %379, %383 : vector<4x32xf32>
    %385 = arith.index_cast %347 : i32 to index
    %c0_153 = arith.constant 0 : index
    %c0_154 = arith.constant 0 : index
    %386 = vector.load %arg19[%385, %c0_153, %c0_154] : memref<8x4x32xf32, #tpu.memory_space<vmem>>, vector<1x4x32xf32>
    %387 = vector.shape_cast %386 : vector<1x4x32xf32> to vector<4x32xf32>
    %388 = tpu.concatenate %387, %384 in 1 : vector<4x32xf32>, vector<4x32xf32> -> vector<4x64xf32>
    %cst_155 = arith.constant dense<0.000000e+00> : vector<4xf32>
    %389 = vector.multi_reduction <add>, %388, %cst_155 [1] : vector<4x64xf32> to vector<4xf32>
    %390 = vector.shape_cast %389 : vector<4xf32> to vector<4x1xf32>
    %cst_156 = arith.constant 6.400000e+01 : f32
    %391 = vector.broadcast %cst_156 : f32 to vector<4x1xf32>
    %392 = arith.divf %390, %391 : vector<4x1xf32>
    %393 = vector.broadcast %392 : vector<4x1xf32> to vector<4x64xf32>
    %394 = arith.subf %388, %393 : vector<4x64xf32>
    %395 = arith.mulf %394, %394 : vector<4x64xf32>
    %cst_157 = arith.constant dense<0.000000e+00> : vector<4xf32>
    %396 = vector.multi_reduction <add>, %395, %cst_157 [1] : vector<4x64xf32> to vector<4xf32>
    %397 = vector.shape_cast %396 : vector<4xf32> to vector<4x1xf32>
    %cst_158 = arith.constant 6.400000e+01 : f32
    %398 = vector.broadcast %cst_158 : f32 to vector<4x1xf32>
    %399 = arith.divf %397, %398 : vector<4x1xf32>
    %400 = vector.broadcast %392 : vector<4x1xf32> to vector<4x64xf32>
    %401 = arith.subf %388, %400 : vector<4x64xf32>
    %cst_159 = arith.constant 9.99999974E-6 : f32
    %402 = vector.broadcast %cst_159 : f32 to vector<4x1xf32>
    %403 = arith.addf %399, %402 : vector<4x1xf32>
    %404 = math.rsqrt %403 : vector<4x1xf32>
    %405 = vector.broadcast %404 : vector<4x1xf32> to vector<4x64xf32>
    %406 = arith.mulf %401, %405 : vector<4x64xf32>
    %407 = vector.broadcast %6 : vector<1x64xf32> to vector<4x64xf32>
    %408 = arith.mulf %406, %407 : vector<4x64xf32>
    %409 = vector.broadcast %7 : vector<1x64xf32> to vector<4x64xf32>
    %410 = arith.addf %408, %409 : vector<4x64xf32>
    %411 = arith.index_cast %347 : i32 to index
    %c0_160 = arith.constant 0 : index
    %c0_161 = arith.constant 0 : index
    %412 = vector.load %arg20[%411, %c0_160, %c0_161] : memref<8x4x64xf32, #tpu.memory_space<vmem>>, vector<1x4x64xf32>
    %413 = vector.shape_cast %412 : vector<1x4x64xf32> to vector<4x64xf32>
    %414 = vector.shape_cast %410 : vector<4x64xf32> to vector<1x4x64xf32>
    tpu.vector_store %arg20[%411, %c0_160, %c0_161], %414 {strides = array<i32>} : memref<8x4x64xf32, #tpu.memory_space<vmem>>, vector<1x4x64xf32>,
    %c1_i32_162 = arith.constant 1 : i32
    %c7_i32_163 = arith.constant 7 : i32
    %415 = arith.subi %c7_i32_163, %c1_i32_162 : i32
    %416 = arith.index_cast %415 : i32 to index
    %c0_164 = arith.constant 0 : index
    %c0_165 = arith.constant 0 : index
    %417 = vector.load %arg21[%416, %c0_164, %c0_165] : memref<8x4x256xf32, #tpu.memory_space<vmem>>, vector<1x4x256xf32>
    %418 = vector.shape_cast %417 : vector<1x4x256xf32> to vector<4x256xf32>
    %419 = vector.extract_strided_slice %418 {offsets = [0, 128], sizes = [4, 128], strides = [1, 1]} : vector<4x256xf32> to vector<4x128xf32>
    %cst_166 = arith.constant dense<0.000000e+00> : vector<4x128xf32>
    %420 = tpu.matmul %384, %3, %cst_166 {dimension_numbers = #tpu.dot_dimension_numbers<[1], [0], [0], [1], [0, 0, 1, 1], [], []>} : vector<4x32xf32>, vector<32x128xf32>, vector<4x128xf32> -> vector<4x128xf32>
    %421 = arith.addf %419, %420 : vector<4x128xf32>
    %422 = vector.extract_strided_slice %421 {offsets = [0, 0], sizes = [4, 32], strides = [1, 1]} : vector<4x128xf32> to vector<4x32xf32>
    %cst_167 = arith.constant 5.000000e-01 : f32
    %423 = vector.broadcast %cst_167 : f32 to vector<4x32xf32>
    %424 = arith.mulf %423, %422 : vector<4x32xf32>
    %425 = math.tanh %424 : vector<4x32xf32>
    %cst_168 = arith.constant 5.000000e-01 : f32
    %426 = vector.broadcast %cst_168 : f32 to vector<4x32xf32>
    %427 = arith.mulf %426, %425 : vector<4x32xf32>
    %cst_169 = arith.constant 5.000000e-01 : f32
    %428 = vector.broadcast %cst_169 : f32 to vector<4x32xf32>
    %429 = arith.addf %427, %428 : vector<4x32xf32>
    %430 = vector.extract_strided_slice %421 {offsets = [0, 32], sizes = [4, 32], strides = [1, 1]} : vector<4x128xf32> to vector<4x32xf32>
    %cst_170 = arith.constant 5.000000e-01 : f32
    %431 = vector.broadcast %cst_170 : f32 to vector<4x32xf32>
    %432 = arith.mulf %431, %430 : vector<4x32xf32>
    %433 = math.tanh %432 : vector<4x32xf32>
    %cst_171 = arith.constant 5.000000e-01 : f32
    %434 = vector.broadcast %cst_171 : f32 to vector<4x32xf32>
    %435 = arith.mulf %434, %433 : vector<4x32xf32>
    %cst_172 = arith.constant 5.000000e-01 : f32
    %436 = vector.broadcast %cst_172 : f32 to vector<4x32xf32>
    %437 = arith.addf %435, %436 : vector<4x32xf32>
    %438 = vector.extract_strided_slice %421 {offsets = [0, 64], sizes = [4, 32], strides = [1, 1]} : vector<4x128xf32> to vector<4x32xf32>
    %439 = math.tanh %438 : vector<4x32xf32>
    %440 = vector.extract_strided_slice %421 {offsets = [0, 96], sizes = [4, 32], strides = [1, 1]} : vector<4x128xf32> to vector<4x32xf32>
    %cst_173 = arith.constant 5.000000e-01 : f32
    %441 = vector.broadcast %cst_173 : f32 to vector<4x32xf32>
    %442 = arith.mulf %441, %440 : vector<4x32xf32>
    %443 = math.tanh %442 : vector<4x32xf32>
    %cst_174 = arith.constant 5.000000e-01 : f32
    %444 = vector.broadcast %cst_174 : f32 to vector<4x32xf32>
    %445 = arith.mulf %444, %443 : vector<4x32xf32>
    %cst_175 = arith.constant 5.000000e-01 : f32
    %446 = vector.broadcast %cst_175 : f32 to vector<4x32xf32>
    %447 = arith.addf %445, %446 : vector<4x32xf32>
    %448 = arith.mulf %437, %382 : vector<4x32xf32>
    %449 = arith.mulf %429, %439 : vector<4x32xf32>
    %450 = arith.addf %448, %449 : vector<4x32xf32>
    %451 = math.tanh %450 : vector<4x32xf32>
    %452 = arith.mulf %447, %451 : vector<4x32xf32>
    %453 = arith.index_cast %415 : i32 to index
    %c0_176 = arith.constant 0 : index
    %c0_177 = arith.constant 0 : index
    %454 = vector.load %arg19[%453, %c0_176, %c0_177] : memref<8x4x32xf32, #tpu.memory_space<vmem>>, vector<1x4x32xf32>
    %455 = vector.shape_cast %454 : vector<1x4x32xf32> to vector<4x32xf32>
    %456 = tpu.concatenate %455, %452 in 1 : vector<4x32xf32>, vector<4x32xf32> -> vector<4x64xf32>
    %cst_178 = arith.constant dense<0.000000e+00> : vector<4xf32>
    %457 = vector.multi_reduction <add>, %456, %cst_178 [1] : vector<4x64xf32> to vector<4xf32>
    %458 = vector.shape_cast %457 : vector<4xf32> to vector<4x1xf32>
    %cst_179 = arith.constant 6.400000e+01 : f32
    %459 = vector.broadcast %cst_179 : f32 to vector<4x1xf32>
    %460 = arith.divf %458, %459 : vector<4x1xf32>
    %461 = vector.broadcast %460 : vector<4x1xf32> to vector<4x64xf32>
    %462 = arith.subf %456, %461 : vector<4x64xf32>
    %463 = arith.mulf %462, %462 : vector<4x64xf32>
    %cst_180 = arith.constant dense<0.000000e+00> : vector<4xf32>
    %464 = vector.multi_reduction <add>, %463, %cst_180 [1] : vector<4x64xf32> to vector<4xf32>
    %465 = vector.shape_cast %464 : vector<4xf32> to vector<4x1xf32>
    %cst_181 = arith.constant 6.400000e+01 : f32
    %466 = vector.broadcast %cst_181 : f32 to vector<4x1xf32>
    %467 = arith.divf %465, %466 : vector<4x1xf32>
    %468 = vector.broadcast %460 : vector<4x1xf32> to vector<4x64xf32>
    %469 = arith.subf %456, %468 : vector<4x64xf32>
    %cst_182 = arith.constant 9.99999974E-6 : f32
    %470 = vector.broadcast %cst_182 : f32 to vector<4x1xf32>
    %471 = arith.addf %467, %470 : vector<4x1xf32>
    %472 = math.rsqrt %471 : vector<4x1xf32>
    %473 = vector.broadcast %472 : vector<4x1xf32> to vector<4x64xf32>
    %474 = arith.mulf %469, %473 : vector<4x64xf32>
    %475 = vector.broadcast %6 : vector<1x64xf32> to vector<4x64xf32>
    %476 = arith.mulf %474, %475 : vector<4x64xf32>
    %477 = vector.broadcast %7 : vector<1x64xf32> to vector<4x64xf32>
    %478 = arith.addf %476, %477 : vector<4x64xf32>
    %479 = arith.index_cast %415 : i32 to index
    %c0_183 = arith.constant 0 : index
    %c0_184 = arith.constant 0 : index
    %480 = vector.load %arg20[%479, %c0_183, %c0_184] : memref<8x4x64xf32, #tpu.memory_space<vmem>>, vector<1x4x64xf32>
    %481 = vector.shape_cast %480 : vector<1x4x64xf32> to vector<4x64xf32>
    %482 = vector.shape_cast %478 : vector<4x64xf32> to vector<1x4x64xf32>
    tpu.vector_store %arg20[%479, %c0_183, %c0_184], %482 {strides = array<i32>} : memref<8x4x64xf32, #tpu.memory_space<vmem>>, vector<1x4x64xf32>,
    %c2_i32_185 = arith.constant 2 : i32
    %c7_i32_186 = arith.constant 7 : i32
    %483 = arith.subi %c7_i32_186, %c2_i32_185 : i32
    %484 = arith.index_cast %483 : i32 to index
    %c0_187 = arith.constant 0 : index
    %c0_188 = arith.constant 0 : index
    %485 = vector.load %arg21[%484, %c0_187, %c0_188] : memref<8x4x256xf32, #tpu.memory_space<vmem>>, vector<1x4x256xf32>
    %486 = vector.shape_cast %485 : vector<1x4x256xf32> to vector<4x256xf32>
    %487 = vector.extract_strided_slice %486 {offsets = [0, 128], sizes = [4, 128], strides = [1, 1]} : vector<4x256xf32> to vector<4x128xf32>
    %cst_189 = arith.constant dense<0.000000e+00> : vector<4x128xf32>
    %488 = tpu.matmul %452, %3, %cst_189 {dimension_numbers = #tpu.dot_dimension_numbers<[1], [0], [0], [1], [0, 0, 1, 1], [], []>} : vector<4x32xf32>, vector<32x128xf32>, vector<4x128xf32> -> vector<4x128xf32>
    %489 = arith.addf %487, %488 : vector<4x128xf32>
    %490 = vector.extract_strided_slice %489 {offsets = [0, 0], sizes = [4, 32], strides = [1, 1]} : vector<4x128xf32> to vector<4x32xf32>
    %cst_190 = arith.constant 5.000000e-01 : f32
    %491 = vector.broadcast %cst_190 : f32 to vector<4x32xf32>
    %492 = arith.mulf %491, %490 : vector<4x32xf32>
    %493 = math.tanh %492 : vector<4x32xf32>
    %cst_191 = arith.constant 5.000000e-01 : f32
    %494 = vector.broadcast %cst_191 : f32 to vector<4x32xf32>
    %495 = arith.mulf %494, %493 : vector<4x32xf32>
    %cst_192 = arith.constant 5.000000e-01 : f32
    %496 = vector.broadcast %cst_192 : f32 to vector<4x32xf32>
    %497 = arith.addf %495, %496 : vector<4x32xf32>
    %498 = vector.extract_strided_slice %489 {offsets = [0, 32], sizes = [4, 32], strides = [1, 1]} : vector<4x128xf32> to vector<4x32xf32>
    %cst_193 = arith.constant 5.000000e-01 : f32
    %499 = vector.broadcast %cst_193 : f32 to vector<4x32xf32>
    %500 = arith.mulf %499, %498 : vector<4x32xf32>
    %501 = math.tanh %500 : vector<4x32xf32>
    %cst_194 = arith.constant 5.000000e-01 : f32
    %502 = vector.broadcast %cst_194 : f32 to vector<4x32xf32>
    %503 = arith.mulf %502, %501 : vector<4x32xf32>
    %cst_195 = arith.constant 5.000000e-01 : f32
    %504 = vector.broadcast %cst_195 : f32 to vector<4x32xf32>
    %505 = arith.addf %503, %504 : vector<4x32xf32>
    %506 = vector.extract_strided_slice %489 {offsets = [0, 64], sizes = [4, 32], strides = [1, 1]} : vector<4x128xf32> to vector<4x32xf32>
    %507 = math.tanh %506 : vector<4x32xf32>
    %508 = vector.extract_strided_slice %489 {offsets = [0, 96], sizes = [4, 32], strides = [1, 1]} : vector<4x128xf32> to vector<4x32xf32>
    %cst_196 = arith.constant 5.000000e-01 : f32
    %509 = vector.broadcast %cst_196 : f32 to vector<4x32xf32>
    %510 = arith.mulf %509, %508 : vector<4x32xf32>
    %511 = math.tanh %510 : vector<4x32xf32>
    %cst_197 = arith.constant 5.000000e-01 : f32
    %512 = vector.broadcast %cst_197 : f32 to vector<4x32xf32>
    %513 = arith.mulf %512, %511 : vector<4x32xf32>
    %cst_198 = arith.constant 5.000000e-01 : f32
    %514 = vector.broadcast %cst_198 : f32 to vector<4x32xf32>
    %515 = arith.addf %513, %514 : vector<4x32xf32>
    %516 = arith.mulf %505, %450 : vector<4x32xf32>
    %517 = arith.mulf %497, %507 : vector<4x32xf32>
    %518 = arith.addf %516, %517 : vector<4x32xf32>
    %519 = math.tanh %518 : vector<4x32xf32>
    %520 = arith.mulf %515, %519 : vector<4x32xf32>
    %521 = arith.index_cast %483 : i32 to index
    %c0_199 = arith.constant 0 : index
    %c0_200 = arith.constant 0 : index
    %522 = vector.load %arg19[%521, %c0_199, %c0_200] : memref<8x4x32xf32, #tpu.memory_space<vmem>>, vector<1x4x32xf32>
    %523 = vector.shape_cast %522 : vector<1x4x32xf32> to vector<4x32xf32>
    %524 = tpu.concatenate %523, %520 in 1 : vector<4x32xf32>, vector<4x32xf32> -> vector<4x64xf32>
    %cst_201 = arith.constant dense<0.000000e+00> : vector<4xf32>
    %525 = vector.multi_reduction <add>, %524, %cst_201 [1] : vector<4x64xf32> to vector<4xf32>
    %526 = vector.shape_cast %525 : vector<4xf32> to vector<4x1xf32>
    %cst_202 = arith.constant 6.400000e+01 : f32
    %527 = vector.broadcast %cst_202 : f32 to vector<4x1xf32>
    %528 = arith.divf %526, %527 : vector<4x1xf32>
    %529 = vector.broadcast %528 : vector<4x1xf32> to vector<4x64xf32>
    %530 = arith.subf %524, %529 : vector<4x64xf32>
    %531 = arith.mulf %530, %530 : vector<4x64xf32>
    %cst_203 = arith.constant dense<0.000000e+00> : vector<4xf32>
    %532 = vector.multi_reduction <add>, %531, %cst_203 [1] : vector<4x64xf32> to vector<4xf32>
    %533 = vector.shape_cast %532 : vector<4xf32> to vector<4x1xf32>
    %cst_204 = arith.constant 6.400000e+01 : f32
    %534 = vector.broadcast %cst_204 : f32 to vector<4x1xf32>
    %535 = arith.divf %533, %534 : vector<4x1xf32>
    %536 = vector.broadcast %528 : vector<4x1xf32> to vector<4x64xf32>
    %537 = arith.subf %524, %536 : vector<4x64xf32>
    %cst_205 = arith.constant 9.99999974E-6 : f32
    %538 = vector.broadcast %cst_205 : f32 to vector<4x1xf32>
    %539 = arith.addf %535, %538 : vector<4x1xf32>
    %540 = math.rsqrt %539 : vector<4x1xf32>
    %541 = vector.broadcast %540 : vector<4x1xf32> to vector<4x64xf32>
    %542 = arith.mulf %537, %541 : vector<4x64xf32>
    %543 = vector.broadcast %6 : vector<1x64xf32> to vector<4x64xf32>
    %544 = arith.mulf %542, %543 : vector<4x64xf32>
    %545 = vector.broadcast %7 : vector<1x64xf32> to vector<4x64xf32>
    %546 = arith.addf %544, %545 : vector<4x64xf32>
    %547 = arith.index_cast %483 : i32 to index
    %c0_206 = arith.constant 0 : index
    %c0_207 = arith.constant 0 : index
    %548 = vector.load %arg20[%547, %c0_206, %c0_207] : memref<8x4x64xf32, #tpu.memory_space<vmem>>, vector<1x4x64xf32>
    %549 = vector.shape_cast %548 : vector<1x4x64xf32> to vector<4x64xf32>
    %550 = vector.shape_cast %546 : vector<4x64xf32> to vector<1x4x64xf32>
    tpu.vector_store %arg20[%547, %c0_206, %c0_207], %550 {strides = array<i32>} : memref<8x4x64xf32, #tpu.memory_space<vmem>>, vector<1x4x64xf32>,
    %c3_i32_208 = arith.constant 3 : i32
    %c7_i32_209 = arith.constant 7 : i32
    %551 = arith.subi %c7_i32_209, %c3_i32_208 : i32
    %552 = arith.index_cast %551 : i32 to index
    %c0_210 = arith.constant 0 : index
    %c0_211 = arith.constant 0 : index
    %553 = vector.load %arg21[%552, %c0_210, %c0_211] : memref<8x4x256xf32, #tpu.memory_space<vmem>>, vector<1x4x256xf32>
    %554 = vector.shape_cast %553 : vector<1x4x256xf32> to vector<4x256xf32>
    %555 = vector.extract_strided_slice %554 {offsets = [0, 128], sizes = [4, 128], strides = [1, 1]} : vector<4x256xf32> to vector<4x128xf32>
    %cst_212 = arith.constant dense<0.000000e+00> : vector<4x128xf32>
    %556 = tpu.matmul %520, %3, %cst_212 {dimension_numbers = #tpu.dot_dimension_numbers<[1], [0], [0], [1], [0, 0, 1, 1], [], []>} : vector<4x32xf32>, vector<32x128xf32>, vector<4x128xf32> -> vector<4x128xf32>
    %557 = arith.addf %555, %556 : vector<4x128xf32>
    %558 = vector.extract_strided_slice %557 {offsets = [0, 0], sizes = [4, 32], strides = [1, 1]} : vector<4x128xf32> to vector<4x32xf32>
    %cst_213 = arith.constant 5.000000e-01 : f32
    %559 = vector.broadcast %cst_213 : f32 to vector<4x32xf32>
    %560 = arith.mulf %559, %558 : vector<4x32xf32>
    %561 = math.tanh %560 : vector<4x32xf32>
    %cst_214 = arith.constant 5.000000e-01 : f32
    %562 = vector.broadcast %cst_214 : f32 to vector<4x32xf32>
    %563 = arith.mulf %562, %561 : vector<4x32xf32>
    %cst_215 = arith.constant 5.000000e-01 : f32
    %564 = vector.broadcast %cst_215 : f32 to vector<4x32xf32>
    %565 = arith.addf %563, %564 : vector<4x32xf32>
    %566 = vector.extract_strided_slice %557 {offsets = [0, 32], sizes = [4, 32], strides = [1, 1]} : vector<4x128xf32> to vector<4x32xf32>
    %cst_216 = arith.constant 5.000000e-01 : f32
    %567 = vector.broadcast %cst_216 : f32 to vector<4x32xf32>
    %568 = arith.mulf %567, %566 : vector<4x32xf32>
    %569 = math.tanh %568 : vector<4x32xf32>
    %cst_217 = arith.constant 5.000000e-01 : f32
    %570 = vector.broadcast %cst_217 : f32 to vector<4x32xf32>
    %571 = arith.mulf %570, %569 : vector<4x32xf32>
    %cst_218 = arith.constant 5.000000e-01 : f32
    %572 = vector.broadcast %cst_218 : f32 to vector<4x32xf32>
    %573 = arith.addf %571, %572 : vector<4x32xf32>
    %574 = vector.extract_strided_slice %557 {offsets = [0, 64], sizes = [4, 32], strides = [1, 1]} : vector<4x128xf32> to vector<4x32xf32>
    %575 = math.tanh %574 : vector<4x32xf32>
    %576 = vector.extract_strided_slice %557 {offsets = [0, 96], sizes = [4, 32], strides = [1, 1]} : vector<4x128xf32> to vector<4x32xf32>
    %cst_219 = arith.constant 5.000000e-01 : f32
    %577 = vector.broadcast %cst_219 : f32 to vector<4x32xf32>
    %578 = arith.mulf %577, %576 : vector<4x32xf32>
    %579 = math.tanh %578 : vector<4x32xf32>
    %cst_220 = arith.constant 5.000000e-01 : f32
    %580 = vector.broadcast %cst_220 : f32 to vector<4x32xf32>
    %581 = arith.mulf %580, %579 : vector<4x32xf32>
    %cst_221 = arith.constant 5.000000e-01 : f32
    %582 = vector.broadcast %cst_221 : f32 to vector<4x32xf32>
    %583 = arith.addf %581, %582 : vector<4x32xf32>
    %584 = arith.mulf %573, %518 : vector<4x32xf32>
    %585 = arith.mulf %565, %575 : vector<4x32xf32>
    %586 = arith.addf %584, %585 : vector<4x32xf32>
    %587 = math.tanh %586 : vector<4x32xf32>
    %588 = arith.mulf %583, %587 : vector<4x32xf32>
    %589 = arith.index_cast %551 : i32 to index
    %c0_222 = arith.constant 0 : index
    %c0_223 = arith.constant 0 : index
    %590 = vector.load %arg19[%589, %c0_222, %c0_223] : memref<8x4x32xf32, #tpu.memory_space<vmem>>, vector<1x4x32xf32>
    %591 = vector.shape_cast %590 : vector<1x4x32xf32> to vector<4x32xf32>
    %592 = tpu.concatenate %591, %588 in 1 : vector<4x32xf32>, vector<4x32xf32> -> vector<4x64xf32>
    %cst_224 = arith.constant dense<0.000000e+00> : vector<4xf32>
    %593 = vector.multi_reduction <add>, %592, %cst_224 [1] : vector<4x64xf32> to vector<4xf32>
    %594 = vector.shape_cast %593 : vector<4xf32> to vector<4x1xf32>
    %cst_225 = arith.constant 6.400000e+01 : f32
    %595 = vector.broadcast %cst_225 : f32 to vector<4x1xf32>
    %596 = arith.divf %594, %595 : vector<4x1xf32>
    %597 = vector.broadcast %596 : vector<4x1xf32> to vector<4x64xf32>
    %598 = arith.subf %592, %597 : vector<4x64xf32>
    %599 = arith.mulf %598, %598 : vector<4x64xf32>
    %cst_226 = arith.constant dense<0.000000e+00> : vector<4xf32>
    %600 = vector.multi_reduction <add>, %599, %cst_226 [1] : vector<4x64xf32> to vector<4xf32>
    %601 = vector.shape_cast %600 : vector<4xf32> to vector<4x1xf32>
    %cst_227 = arith.constant 6.400000e+01 : f32
    %602 = vector.broadcast %cst_227 : f32 to vector<4x1xf32>
    %603 = arith.divf %601, %602 : vector<4x1xf32>
    %604 = vector.broadcast %596 : vector<4x1xf32> to vector<4x64xf32>
    %605 = arith.subf %592, %604 : vector<4x64xf32>
    %cst_228 = arith.constant 9.99999974E-6 : f32
    %606 = vector.broadcast %cst_228 : f32 to vector<4x1xf32>
    %607 = arith.addf %603, %606 : vector<4x1xf32>
    %608 = math.rsqrt %607 : vector<4x1xf32>
    %609 = vector.broadcast %608 : vector<4x1xf32> to vector<4x64xf32>
    %610 = arith.mulf %605, %609 : vector<4x64xf32>
    %611 = vector.broadcast %6 : vector<1x64xf32> to vector<4x64xf32>
    %612 = arith.mulf %610, %611 : vector<4x64xf32>
    %613 = vector.broadcast %7 : vector<1x64xf32> to vector<4x64xf32>
    %614 = arith.addf %612, %613 : vector<4x64xf32>
    %615 = arith.index_cast %551 : i32 to index
    %c0_229 = arith.constant 0 : index
    %c0_230 = arith.constant 0 : index
    %616 = vector.load %arg20[%615, %c0_229, %c0_230] : memref<8x4x64xf32, #tpu.memory_space<vmem>>, vector<1x4x64xf32>
    %617 = vector.shape_cast %616 : vector<1x4x64xf32> to vector<4x64xf32>
    %618 = vector.shape_cast %614 : vector<4x64xf32> to vector<1x4x64xf32>
    tpu.vector_store %arg20[%615, %c0_229, %c0_230], %618 {strides = array<i32>} : memref<8x4x64xf32, #tpu.memory_space<vmem>>, vector<1x4x64xf32>,
    %c4_i32_231 = arith.constant 4 : i32
    %c7_i32_232 = arith.constant 7 : i32
    %619 = arith.subi %c7_i32_232, %c4_i32_231 : i32
    %620 = arith.index_cast %619 : i32 to index
    %c0_233 = arith.constant 0 : index
    %c0_234 = arith.constant 0 : index
    %621 = vector.load %arg21[%620, %c0_233, %c0_234] : memref<8x4x256xf32, #tpu.memory_space<vmem>>, vector<1x4x256xf32>
    %622 = vector.shape_cast %621 : vector<1x4x256xf32> to vector<4x256xf32>
    %623 = vector.extract_strided_slice %622 {offsets = [0, 128], sizes = [4, 128], strides = [1, 1]} : vector<4x256xf32> to vector<4x128xf32>
    %cst_235 = arith.constant dense<0.000000e+00> : vector<4x128xf32>
    %624 = tpu.matmul %588, %3, %cst_235 {dimension_numbers = #tpu.dot_dimension_numbers<[1], [0], [0], [1], [0, 0, 1, 1], [], []>} : vector<4x32xf32>, vector<32x128xf32>, vector<4x128xf32> -> vector<4x128xf32>
    %625 = arith.addf %623, %624 : vector<4x128xf32>
    %626 = vector.extract_strided_slice %625 {offsets = [0, 0], sizes = [4, 32], strides = [1, 1]} : vector<4x128xf32> to vector<4x32xf32>
    %cst_236 = arith.constant 5.000000e-01 : f32
    %627 = vector.broadcast %cst_236 : f32 to vector<4x32xf32>
    %628 = arith.mulf %627, %626 : vector<4x32xf32>
    %629 = math.tanh %628 : vector<4x32xf32>
    %cst_237 = arith.constant 5.000000e-01 : f32
    %630 = vector.broadcast %cst_237 : f32 to vector<4x32xf32>
    %631 = arith.mulf %630, %629 : vector<4x32xf32>
    %cst_238 = arith.constant 5.000000e-01 : f32
    %632 = vector.broadcast %cst_238 : f32 to vector<4x32xf32>
    %633 = arith.addf %631, %632 : vector<4x32xf32>
    %634 = vector.extract_strided_slice %625 {offsets = [0, 32], sizes = [4, 32], strides = [1, 1]} : vector<4x128xf32> to vector<4x32xf32>
    %cst_239 = arith.constant 5.000000e-01 : f32
    %635 = vector.broadcast %cst_239 : f32 to vector<4x32xf32>
    %636 = arith.mulf %635, %634 : vector<4x32xf32>
    %637 = math.tanh %636 : vector<4x32xf32>
    %cst_240 = arith.constant 5.000000e-01 : f32
    %638 = vector.broadcast %cst_240 : f32 to vector<4x32xf32>
    %639 = arith.mulf %638, %637 : vector<4x32xf32>
    %cst_241 = arith.constant 5.000000e-01 : f32
    %640 = vector.broadcast %cst_241 : f32 to vector<4x32xf32>
    %641 = arith.addf %639, %640 : vector<4x32xf32>
    %642 = vector.extract_strided_slice %625 {offsets = [0, 64], sizes = [4, 32], strides = [1, 1]} : vector<4x128xf32> to vector<4x32xf32>
    %643 = math.tanh %642 : vector<4x32xf32>
    %644 = vector.extract_strided_slice %625 {offsets = [0, 96], sizes = [4, 32], strides = [1, 1]} : vector<4x128xf32> to vector<4x32xf32>
    %cst_242 = arith.constant 5.000000e-01 : f32
    %645 = vector.broadcast %cst_242 : f32 to vector<4x32xf32>
    %646 = arith.mulf %645, %644 : vector<4x32xf32>
    %647 = math.tanh %646 : vector<4x32xf32>
    %cst_243 = arith.constant 5.000000e-01 : f32
    %648 = vector.broadcast %cst_243 : f32 to vector<4x32xf32>
    %649 = arith.mulf %648, %647 : vector<4x32xf32>
    %cst_244 = arith.constant 5.000000e-01 : f32
    %650 = vector.broadcast %cst_244 : f32 to vector<4x32xf32>
    %651 = arith.addf %649, %650 : vector<4x32xf32>
    %652 = arith.mulf %641, %586 : vector<4x32xf32>
    %653 = arith.mulf %633, %643 : vector<4x32xf32>
    %654 = arith.addf %652, %653 : vector<4x32xf32>
    %655 = math.tanh %654 : vector<4x32xf32>
    %656 = arith.mulf %651, %655 : vector<4x32xf32>
    %657 = arith.index_cast %619 : i32 to index
    %c0_245 = arith.constant 0 : index
    %c0_246 = arith.constant 0 : index
    %658 = vector.load %arg19[%657, %c0_245, %c0_246] : memref<8x4x32xf32, #tpu.memory_space<vmem>>, vector<1x4x32xf32>
    %659 = vector.shape_cast %658 : vector<1x4x32xf32> to vector<4x32xf32>
    %660 = tpu.concatenate %659, %656 in 1 : vector<4x32xf32>, vector<4x32xf32> -> vector<4x64xf32>
    %cst_247 = arith.constant dense<0.000000e+00> : vector<4xf32>
    %661 = vector.multi_reduction <add>, %660, %cst_247 [1] : vector<4x64xf32> to vector<4xf32>
    %662 = vector.shape_cast %661 : vector<4xf32> to vector<4x1xf32>
    %cst_248 = arith.constant 6.400000e+01 : f32
    %663 = vector.broadcast %cst_248 : f32 to vector<4x1xf32>
    %664 = arith.divf %662, %663 : vector<4x1xf32>
    %665 = vector.broadcast %664 : vector<4x1xf32> to vector<4x64xf32>
    %666 = arith.subf %660, %665 : vector<4x64xf32>
    %667 = arith.mulf %666, %666 : vector<4x64xf32>
    %cst_249 = arith.constant dense<0.000000e+00> : vector<4xf32>
    %668 = vector.multi_reduction <add>, %667, %cst_249 [1] : vector<4x64xf32> to vector<4xf32>
    %669 = vector.shape_cast %668 : vector<4xf32> to vector<4x1xf32>
    %cst_250 = arith.constant 6.400000e+01 : f32
    %670 = vector.broadcast %cst_250 : f32 to vector<4x1xf32>
    %671 = arith.divf %669, %670 : vector<4x1xf32>
    %672 = vector.broadcast %664 : vector<4x1xf32> to vector<4x64xf32>
    %673 = arith.subf %660, %672 : vector<4x64xf32>
    %cst_251 = arith.constant 9.99999974E-6 : f32
    %674 = vector.broadcast %cst_251 : f32 to vector<4x1xf32>
    %675 = arith.addf %671, %674 : vector<4x1xf32>
    %676 = math.rsqrt %675 : vector<4x1xf32>
    %677 = vector.broadcast %676 : vector<4x1xf32> to vector<4x64xf32>
    %678 = arith.mulf %673, %677 : vector<4x64xf32>
    %679 = vector.broadcast %6 : vector<1x64xf32> to vector<4x64xf32>
    %680 = arith.mulf %678, %679 : vector<4x64xf32>
    %681 = vector.broadcast %7 : vector<1x64xf32> to vector<4x64xf32>
    %682 = arith.addf %680, %681 : vector<4x64xf32>
    %683 = arith.index_cast %619 : i32 to index
    %c0_252 = arith.constant 0 : index
    %c0_253 = arith.constant 0 : index
    %684 = vector.load %arg20[%683, %c0_252, %c0_253] : memref<8x4x64xf32, #tpu.memory_space<vmem>>, vector<1x4x64xf32>
    %685 = vector.shape_cast %684 : vector<1x4x64xf32> to vector<4x64xf32>
    %686 = vector.shape_cast %682 : vector<4x64xf32> to vector<1x4x64xf32>
    tpu.vector_store %arg20[%683, %c0_252, %c0_253], %686 {strides = array<i32>} : memref<8x4x64xf32, #tpu.memory_space<vmem>>, vector<1x4x64xf32>,
    %c5_i32_254 = arith.constant 5 : i32
    %c7_i32_255 = arith.constant 7 : i32
    %687 = arith.subi %c7_i32_255, %c5_i32_254 : i32
    %688 = arith.index_cast %687 : i32 to index
    %c0_256 = arith.constant 0 : index
    %c0_257 = arith.constant 0 : index
    %689 = vector.load %arg21[%688, %c0_256, %c0_257] : memref<8x4x256xf32, #tpu.memory_space<vmem>>, vector<1x4x256xf32>
    %690 = vector.shape_cast %689 : vector<1x4x256xf32> to vector<4x256xf32>
    %691 = vector.extract_strided_slice %690 {offsets = [0, 128], sizes = [4, 128], strides = [1, 1]} : vector<4x256xf32> to vector<4x128xf32>
    %cst_258 = arith.constant dense<0.000000e+00> : vector<4x128xf32>
    %692 = tpu.matmul %656, %3, %cst_258 {dimension_numbers = #tpu.dot_dimension_numbers<[1], [0], [0], [1], [0, 0, 1, 1], [], []>} : vector<4x32xf32>, vector<32x128xf32>, vector<4x128xf32> -> vector<4x128xf32>
    %693 = arith.addf %691, %692 : vector<4x128xf32>
    %694 = vector.extract_strided_slice %693 {offsets = [0, 0], sizes = [4, 32], strides = [1, 1]} : vector<4x128xf32> to vector<4x32xf32>
    %cst_259 = arith.constant 5.000000e-01 : f32
    %695 = vector.broadcast %cst_259 : f32 to vector<4x32xf32>
    %696 = arith.mulf %695, %694 : vector<4x32xf32>
    %697 = math.tanh %696 : vector<4x32xf32>
    %cst_260 = arith.constant 5.000000e-01 : f32
    %698 = vector.broadcast %cst_260 : f32 to vector<4x32xf32>
    %699 = arith.mulf %698, %697 : vector<4x32xf32>
    %cst_261 = arith.constant 5.000000e-01 : f32
    %700 = vector.broadcast %cst_261 : f32 to vector<4x32xf32>
    %701 = arith.addf %699, %700 : vector<4x32xf32>
    %702 = vector.extract_strided_slice %693 {offsets = [0, 32], sizes = [4, 32], strides = [1, 1]} : vector<4x128xf32> to vector<4x32xf32>
    %cst_262 = arith.constant 5.000000e-01 : f32
    %703 = vector.broadcast %cst_262 : f32 to vector<4x32xf32>
    %704 = arith.mulf %703, %702 : vector<4x32xf32>
    %705 = math.tanh %704 : vector<4x32xf32>
    %cst_263 = arith.constant 5.000000e-01 : f32
    %706 = vector.broadcast %cst_263 : f32 to vector<4x32xf32>
    %707 = arith.mulf %706, %705 : vector<4x32xf32>
    %cst_264 = arith.constant 5.000000e-01 : f32
    %708 = vector.broadcast %cst_264 : f32 to vector<4x32xf32>
    %709 = arith.addf %707, %708 : vector<4x32xf32>
    %710 = vector.extract_strided_slice %693 {offsets = [0, 64], sizes = [4, 32], strides = [1, 1]} : vector<4x128xf32> to vector<4x32xf32>
    %711 = math.tanh %710 : vector<4x32xf32>
    %712 = vector.extract_strided_slice %693 {offsets = [0, 96], sizes = [4, 32], strides = [1, 1]} : vector<4x128xf32> to vector<4x32xf32>
    %cst_265 = arith.constant 5.000000e-01 : f32
    %713 = vector.broadcast %cst_265 : f32 to vector<4x32xf32>
    %714 = arith.mulf %713, %712 : vector<4x32xf32>
    %715 = math.tanh %714 : vector<4x32xf32>
    %cst_266 = arith.constant 5.000000e-01 : f32
    %716 = vector.broadcast %cst_266 : f32 to vector<4x32xf32>
    %717 = arith.mulf %716, %715 : vector<4x32xf32>
    %cst_267 = arith.constant 5.000000e-01 : f32
    %718 = vector.broadcast %cst_267 : f32 to vector<4x32xf32>
    %719 = arith.addf %717, %718 : vector<4x32xf32>
    %720 = arith.mulf %709, %654 : vector<4x32xf32>
    %721 = arith.mulf %701, %711 : vector<4x32xf32>
    %722 = arith.addf %720, %721 : vector<4x32xf32>
    %723 = math.tanh %722 : vector<4x32xf32>
    %724 = arith.mulf %719, %723 : vector<4x32xf32>
    %725 = arith.index_cast %687 : i32 to index
    %c0_268 = arith.constant 0 : index
    %c0_269 = arith.constant 0 : index
    %726 = vector.load %arg19[%725, %c0_268, %c0_269] : memref<8x4x32xf32, #tpu.memory_space<vmem>>, vector<1x4x32xf32>
    %727 = vector.shape_cast %726 : vector<1x4x32xf32> to vector<4x32xf32>
    %728 = tpu.concatenate %727, %724 in 1 : vector<4x32xf32>, vector<4x32xf32> -> vector<4x64xf32>
    %cst_270 = arith.constant dense<0.000000e+00> : vector<4xf32>
    %729 = vector.multi_reduction <add>, %728, %cst_270 [1] : vector<4x64xf32> to vector<4xf32>
    %730 = vector.shape_cast %729 : vector<4xf32> to vector<4x1xf32>
    %cst_271 = arith.constant 6.400000e+01 : f32
    %731 = vector.broadcast %cst_271 : f32 to vector<4x1xf32>
    %732 = arith.divf %730, %731 : vector<4x1xf32>
    %733 = vector.broadcast %732 : vector<4x1xf32> to vector<4x64xf32>
    %734 = arith.subf %728, %733 : vector<4x64xf32>
    %735 = arith.mulf %734, %734 : vector<4x64xf32>
    %cst_272 = arith.constant dense<0.000000e+00> : vector<4xf32>
    %736 = vector.multi_reduction <add>, %735, %cst_272 [1] : vector<4x64xf32> to vector<4xf32>
    %737 = vector.shape_cast %736 : vector<4xf32> to vector<4x1xf32>
    %cst_273 = arith.constant 6.400000e+01 : f32
    %738 = vector.broadcast %cst_273 : f32 to vector<4x1xf32>
    %739 = arith.divf %737, %738 : vector<4x1xf32>
    %740 = vector.broadcast %732 : vector<4x1xf32> to vector<4x64xf32>
    %741 = arith.subf %728, %740 : vector<4x64xf32>
    %cst_274 = arith.constant 9.99999974E-6 : f32
    %742 = vector.broadcast %cst_274 : f32 to vector<4x1xf32>
    %743 = arith.addf %739, %742 : vector<4x1xf32>
    %744 = math.rsqrt %743 : vector<4x1xf32>
    %745 = vector.broadcast %744 : vector<4x1xf32> to vector<4x64xf32>
    %746 = arith.mulf %741, %745 : vector<4x64xf32>
    %747 = vector.broadcast %6 : vector<1x64xf32> to vector<4x64xf32>
    %748 = arith.mulf %746, %747 : vector<4x64xf32>
    %749 = vector.broadcast %7 : vector<1x64xf32> to vector<4x64xf32>
    %750 = arith.addf %748, %749 : vector<4x64xf32>
    %751 = arith.index_cast %687 : i32 to index
    %c0_275 = arith.constant 0 : index
    %c0_276 = arith.constant 0 : index
    %752 = vector.load %arg20[%751, %c0_275, %c0_276] : memref<8x4x64xf32, #tpu.memory_space<vmem>>, vector<1x4x64xf32>
    %753 = vector.shape_cast %752 : vector<1x4x64xf32> to vector<4x64xf32>
    %754 = vector.shape_cast %750 : vector<4x64xf32> to vector<1x4x64xf32>
    tpu.vector_store %arg20[%751, %c0_275, %c0_276], %754 {strides = array<i32>} : memref<8x4x64xf32, #tpu.memory_space<vmem>>, vector<1x4x64xf32>,
    %c6_i32_277 = arith.constant 6 : i32
    %c7_i32_278 = arith.constant 7 : i32
    %755 = arith.subi %c7_i32_278, %c6_i32_277 : i32
    %756 = arith.index_cast %755 : i32 to index
    %c0_279 = arith.constant 0 : index
    %c0_280 = arith.constant 0 : index
    %757 = vector.load %arg21[%756, %c0_279, %c0_280] : memref<8x4x256xf32, #tpu.memory_space<vmem>>, vector<1x4x256xf32>
    %758 = vector.shape_cast %757 : vector<1x4x256xf32> to vector<4x256xf32>
    %759 = vector.extract_strided_slice %758 {offsets = [0, 128], sizes = [4, 128], strides = [1, 1]} : vector<4x256xf32> to vector<4x128xf32>
    %cst_281 = arith.constant dense<0.000000e+00> : vector<4x128xf32>
    %760 = tpu.matmul %724, %3, %cst_281 {dimension_numbers = #tpu.dot_dimension_numbers<[1], [0], [0], [1], [0, 0, 1, 1], [], []>} : vector<4x32xf32>, vector<32x128xf32>, vector<4x128xf32> -> vector<4x128xf32>
    %761 = arith.addf %759, %760 : vector<4x128xf32>
    %762 = vector.extract_strided_slice %761 {offsets = [0, 0], sizes = [4, 32], strides = [1, 1]} : vector<4x128xf32> to vector<4x32xf32>
    %cst_282 = arith.constant 5.000000e-01 : f32
    %763 = vector.broadcast %cst_282 : f32 to vector<4x32xf32>
    %764 = arith.mulf %763, %762 : vector<4x32xf32>
    %765 = math.tanh %764 : vector<4x32xf32>
    %cst_283 = arith.constant 5.000000e-01 : f32
    %766 = vector.broadcast %cst_283 : f32 to vector<4x32xf32>
    %767 = arith.mulf %766, %765 : vector<4x32xf32>
    %cst_284 = arith.constant 5.000000e-01 : f32
    %768 = vector.broadcast %cst_284 : f32 to vector<4x32xf32>
    %769 = arith.addf %767, %768 : vector<4x32xf32>
    %770 = vector.extract_strided_slice %761 {offsets = [0, 32], sizes = [4, 32], strides = [1, 1]} : vector<4x128xf32> to vector<4x32xf32>
    %cst_285 = arith.constant 5.000000e-01 : f32
    %771 = vector.broadcast %cst_285 : f32 to vector<4x32xf32>
    %772 = arith.mulf %771, %770 : vector<4x32xf32>
    %773 = math.tanh %772 : vector<4x32xf32>
    %cst_286 = arith.constant 5.000000e-01 : f32
    %774 = vector.broadcast %cst_286 : f32 to vector<4x32xf32>
    %775 = arith.mulf %774, %773 : vector<4x32xf32>
    %cst_287 = arith.constant 5.000000e-01 : f32
    %776 = vector.broadcast %cst_287 : f32 to vector<4x32xf32>
    %777 = arith.addf %775, %776 : vector<4x32xf32>
    %778 = vector.extract_strided_slice %761 {offsets = [0, 64], sizes = [4, 32], strides = [1, 1]} : vector<4x128xf32> to vector<4x32xf32>
    %779 = math.tanh %778 : vector<4x32xf32>
    %780 = vector.extract_strided_slice %761 {offsets = [0, 96], sizes = [4, 32], strides = [1, 1]} : vector<4x128xf32> to vector<4x32xf32>
    %cst_288 = arith.constant 5.000000e-01 : f32
    %781 = vector.broadcast %cst_288 : f32 to vector<4x32xf32>
    %782 = arith.mulf %781, %780 : vector<4x32xf32>
    %783 = math.tanh %782 : vector<4x32xf32>
    %cst_289 = arith.constant 5.000000e-01 : f32
    %784 = vector.broadcast %cst_289 : f32 to vector<4x32xf32>
    %785 = arith.mulf %784, %783 : vector<4x32xf32>
    %cst_290 = arith.constant 5.000000e-01 : f32
    %786 = vector.broadcast %cst_290 : f32 to vector<4x32xf32>
    %787 = arith.addf %785, %786 : vector<4x32xf32>
    %788 = arith.mulf %777, %722 : vector<4x32xf32>
    %789 = arith.mulf %769, %779 : vector<4x32xf32>
    %790 = arith.addf %788, %789 : vector<4x32xf32>
    %791 = math.tanh %790 : vector<4x32xf32>
    %792 = arith.mulf %787, %791 : vector<4x32xf32>
    %793 = arith.index_cast %755 : i32 to index
    %c0_291 = arith.constant 0 : index
    %c0_292 = arith.constant 0 : index
    %794 = vector.load %arg19[%793, %c0_291, %c0_292] : memref<8x4x32xf32, #tpu.memory_space<vmem>>, vector<1x4x32xf32>
    %795 = vector.shape_cast %794 : vector<1x4x32xf32> to vector<4x32xf32>
    %796 = tpu.concatenate %795, %792 in 1 : vector<4x32xf32>, vector<4x32xf32> -> vector<4x64xf32>
    %cst_293 = arith.constant dense<0.000000e+00> : vector<4xf32>
    %797 = vector.multi_reduction <add>, %796, %cst_293 [1] : vector<4x64xf32> to vector<4xf32>
    %798 = vector.shape_cast %797 : vector<4xf32> to vector<4x1xf32>
    %cst_294 = arith.constant 6.400000e+01 : f32
    %799 = vector.broadcast %cst_294 : f32 to vector<4x1xf32>
    %800 = arith.divf %798, %799 : vector<4x1xf32>
    %801 = vector.broadcast %800 : vector<4x1xf32> to vector<4x64xf32>
    %802 = arith.subf %796, %801 : vector<4x64xf32>
    %803 = arith.mulf %802, %802 : vector<4x64xf32>
    %cst_295 = arith.constant dense<0.000000e+00> : vector<4xf32>
    %804 = vector.multi_reduction <add>, %803, %cst_295 [1] : vector<4x64xf32> to vector<4xf32>
    %805 = vector.shape_cast %804 : vector<4xf32> to vector<4x1xf32>
    %cst_296 = arith.constant 6.400000e+01 : f32
    %806 = vector.broadcast %cst_296 : f32 to vector<4x1xf32>
    %807 = arith.divf %805, %806 : vector<4x1xf32>
    %808 = vector.broadcast %800 : vector<4x1xf32> to vector<4x64xf32>
    %809 = arith.subf %796, %808 : vector<4x64xf32>
    %cst_297 = arith.constant 9.99999974E-6 : f32
    %810 = vector.broadcast %cst_297 : f32 to vector<4x1xf32>
    %811 = arith.addf %807, %810 : vector<4x1xf32>
    %812 = math.rsqrt %811 : vector<4x1xf32>
    %813 = vector.broadcast %812 : vector<4x1xf32> to vector<4x64xf32>
    %814 = arith.mulf %809, %813 : vector<4x64xf32>
    %815 = vector.broadcast %6 : vector<1x64xf32> to vector<4x64xf32>
    %816 = arith.mulf %814, %815 : vector<4x64xf32>
    %817 = vector.broadcast %7 : vector<1x64xf32> to vector<4x64xf32>
    %818 = arith.addf %816, %817 : vector<4x64xf32>
    %819 = arith.index_cast %755 : i32 to index
    %c0_298 = arith.constant 0 : index
    %c0_299 = arith.constant 0 : index
    %820 = vector.load %arg20[%819, %c0_298, %c0_299] : memref<8x4x64xf32, #tpu.memory_space<vmem>>, vector<1x4x64xf32>
    %821 = vector.shape_cast %820 : vector<1x4x64xf32> to vector<4x64xf32>
    %822 = vector.shape_cast %818 : vector<4x64xf32> to vector<1x4x64xf32>
    tpu.vector_store %arg20[%819, %c0_298, %c0_299], %822 {strides = array<i32>} : memref<8x4x64xf32, #tpu.memory_space<vmem>>, vector<1x4x64xf32>,
    %c7_i32_300 = arith.constant 7 : i32
    %c7_i32_301 = arith.constant 7 : i32
    %823 = arith.subi %c7_i32_301, %c7_i32_300 : i32
    %824 = arith.index_cast %823 : i32 to index
    %c0_302 = arith.constant 0 : index
    %c0_303 = arith.constant 0 : index
    %825 = vector.load %arg21[%824, %c0_302, %c0_303] : memref<8x4x256xf32, #tpu.memory_space<vmem>>, vector<1x4x256xf32>
    %826 = vector.shape_cast %825 : vector<1x4x256xf32> to vector<4x256xf32>
    %827 = vector.extract_strided_slice %826 {offsets = [0, 128], sizes = [4, 128], strides = [1, 1]} : vector<4x256xf32> to vector<4x128xf32>
    %cst_304 = arith.constant dense<0.000000e+00> : vector<4x128xf32>
    %828 = tpu.matmul %792, %3, %cst_304 {dimension_numbers = #tpu.dot_dimension_numbers<[1], [0], [0], [1], [0, 0, 1, 1], [], []>} : vector<4x32xf32>, vector<32x128xf32>, vector<4x128xf32> -> vector<4x128xf32>
    %829 = arith.addf %827, %828 : vector<4x128xf32>
    %830 = vector.extract_strided_slice %829 {offsets = [0, 0], sizes = [4, 32], strides = [1, 1]} : vector<4x128xf32> to vector<4x32xf32>
    %cst_305 = arith.constant 5.000000e-01 : f32
    %831 = vector.broadcast %cst_305 : f32 to vector<4x32xf32>
    %832 = arith.mulf %831, %830 : vector<4x32xf32>
    %833 = math.tanh %832 : vector<4x32xf32>
    %cst_306 = arith.constant 5.000000e-01 : f32
    %834 = vector.broadcast %cst_306 : f32 to vector<4x32xf32>
    %835 = arith.mulf %834, %833 : vector<4x32xf32>
    %cst_307 = arith.constant 5.000000e-01 : f32
    %836 = vector.broadcast %cst_307 : f32 to vector<4x32xf32>
    %837 = arith.addf %835, %836 : vector<4x32xf32>
    %838 = vector.extract_strided_slice %829 {offsets = [0, 32], sizes = [4, 32], strides = [1, 1]} : vector<4x128xf32> to vector<4x32xf32>
    %cst_308 = arith.constant 5.000000e-01 : f32
    %839 = vector.broadcast %cst_308 : f32 to vector<4x32xf32>
    %840 = arith.mulf %839, %838 : vector<4x32xf32>
    %841 = math.tanh %840 : vector<4x32xf32>
    %cst_309 = arith.constant 5.000000e-01 : f32
    %842 = vector.broadcast %cst_309 : f32 to vector<4x32xf32>
    %843 = arith.mulf %842, %841 : vector<4x32xf32>
    %cst_310 = arith.constant 5.000000e-01 : f32
    %844 = vector.broadcast %cst_310 : f32 to vector<4x32xf32>
    %845 = arith.addf %843, %844 : vector<4x32xf32>
    %846 = vector.extract_strided_slice %829 {offsets = [0, 64], sizes = [4, 32], strides = [1, 1]} : vector<4x128xf32> to vector<4x32xf32>
    %847 = math.tanh %846 : vector<4x32xf32>
    %848 = vector.extract_strided_slice %829 {offsets = [0, 96], sizes = [4, 32], strides = [1, 1]} : vector<4x128xf32> to vector<4x32xf32>
    %cst_311 = arith.constant 5.000000e-01 : f32
    %849 = vector.broadcast %cst_311 : f32 to vector<4x32xf32>
    %850 = arith.mulf %849, %848 : vector<4x32xf32>
    %851 = math.tanh %850 : vector<4x32xf32>
    %cst_312 = arith.constant 5.000000e-01 : f32
    %852 = vector.broadcast %cst_312 : f32 to vector<4x32xf32>
    %853 = arith.mulf %852, %851 : vector<4x32xf32>
    %cst_313 = arith.constant 5.000000e-01 : f32
    %854 = vector.broadcast %cst_313 : f32 to vector<4x32xf32>
    %855 = arith.addf %853, %854 : vector<4x32xf32>
    %856 = arith.mulf %845, %790 : vector<4x32xf32>
    %857 = arith.mulf %837, %847 : vector<4x32xf32>
    %858 = arith.addf %856, %857 : vector<4x32xf32>
    %859 = math.tanh %858 : vector<4x32xf32>
    %860 = arith.mulf %855, %859 : vector<4x32xf32>
    %861 = arith.index_cast %823 : i32 to index
    %c0_314 = arith.constant 0 : index
    %c0_315 = arith.constant 0 : index
    %862 = vector.load %arg19[%861, %c0_314, %c0_315] : memref<8x4x32xf32, #tpu.memory_space<vmem>>, vector<1x4x32xf32>
    %863 = vector.shape_cast %862 : vector<1x4x32xf32> to vector<4x32xf32>
    %864 = tpu.concatenate %863, %860 in 1 : vector<4x32xf32>, vector<4x32xf32> -> vector<4x64xf32>
    %cst_316 = arith.constant dense<0.000000e+00> : vector<4xf32>
    %865 = vector.multi_reduction <add>, %864, %cst_316 [1] : vector<4x64xf32> to vector<4xf32>
    %866 = vector.shape_cast %865 : vector<4xf32> to vector<4x1xf32>
    %cst_317 = arith.constant 6.400000e+01 : f32
    %867 = vector.broadcast %cst_317 : f32 to vector<4x1xf32>
    %868 = arith.divf %866, %867 : vector<4x1xf32>
    %869 = vector.broadcast %868 : vector<4x1xf32> to vector<4x64xf32>
    %870 = arith.subf %864, %869 : vector<4x64xf32>
    %871 = arith.mulf %870, %870 : vector<4x64xf32>
    %cst_318 = arith.constant dense<0.000000e+00> : vector<4xf32>
    %872 = vector.multi_reduction <add>, %871, %cst_318 [1] : vector<4x64xf32> to vector<4xf32>
    %873 = vector.shape_cast %872 : vector<4xf32> to vector<4x1xf32>
    %cst_319 = arith.constant 6.400000e+01 : f32
    %874 = vector.broadcast %cst_319 : f32 to vector<4x1xf32>
    %875 = arith.divf %873, %874 : vector<4x1xf32>
    %876 = vector.broadcast %868 : vector<4x1xf32> to vector<4x64xf32>
    %877 = arith.subf %864, %876 : vector<4x64xf32>
    %cst_320 = arith.constant 9.99999974E-6 : f32
    %878 = vector.broadcast %cst_320 : f32 to vector<4x1xf32>
    %879 = arith.addf %875, %878 : vector<4x1xf32>
    %880 = math.rsqrt %879 : vector<4x1xf32>
    %881 = vector.broadcast %880 : vector<4x1xf32> to vector<4x64xf32>
    %882 = arith.mulf %877, %881 : vector<4x64xf32>
    %883 = vector.broadcast %6 : vector<1x64xf32> to vector<4x64xf32>
    %884 = arith.mulf %882, %883 : vector<4x64xf32>
    %885 = vector.broadcast %7 : vector<1x64xf32> to vector<4x64xf32>
    %886 = arith.addf %884, %885 : vector<4x64xf32>
    %887 = arith.index_cast %823 : i32 to index
    %c0_321 = arith.constant 0 : index
    %c0_322 = arith.constant 0 : index
    %888 = vector.load %arg20[%887, %c0_321, %c0_322] : memref<8x4x64xf32, #tpu.memory_space<vmem>>, vector<1x4x64xf32>
    %889 = vector.shape_cast %888 : vector<1x4x64xf32> to vector<4x64xf32>
    %890 = vector.shape_cast %886 : vector<4x64xf32> to vector<1x4x64xf32>
    tpu.vector_store %arg20[%887, %c0_321, %c0_322], %890 {strides = array<i32>} : memref<8x4x64xf32, #tpu.memory_space<vmem>>, vector<1x4x64xf32>,
    %c8_i32_323 = arith.constant 8 : i32
    %c0_324 = arith.constant 0 : index
    %c0_325 = arith.constant 0 : index
    %c0_326 = arith.constant 0 : index
    %891 = vector.load %arg20[%c0_324, %c0_325, %c0_326] : memref<8x4x64xf32, #tpu.memory_space<vmem>>, vector<8x4x64xf32>
    %892 = vector.shape_cast %891 : vector<8x4x64xf32> to vector<32x64xf32>
    %c0_327 = arith.constant 0 : index
    %c0_328 = arith.constant 0 : index
    %893 = vector.load %arg6[%c0_327, %c0_328] : memref<64x256xf32, #tpu.memory_space<vmem>>, vector<64x256xf32>
    %cst_329 = arith.constant dense<0.000000e+00> : vector<32x256xf32>
    %894 = tpu.matmul %892, %893, %cst_329 {dimension_numbers = #tpu.dot_dimension_numbers<[1], [0], [0], [1], [0, 0, 1, 1], [], []>} : vector<32x64xf32>, vector<64x256xf32>, vector<32x256xf32> -> vector<32x256xf32>
    %c0_330 = arith.constant 0 : index
    %c0_331 = arith.constant 0 : index
    %895 = vector.load %arg8[%c0_330, %c0_331] : memref<1x256xf32, #tpu.memory_space<vmem>>, vector<1x256xf32>
    %896 = vector.broadcast %895 : vector<1x256xf32> to vector<32x256xf32>
    %897 = arith.addf %894, %896 : vector<32x256xf32>
    %898 = vector.shape_cast %897 : vector<32x256xf32> to vector<8x4x256xf32>
    %c0_332 = arith.constant 0 : index
    %c0_333 = arith.constant 0 : index
    %c0_334 = arith.constant 0 : index
    %899 = vector.load %arg21[%c0_332, %c0_333, %c0_334] : memref<8x4x256xf32, #tpu.memory_space<vmem>>, vector<8x4x256xf32>
    tpu.vector_store %arg21[%c0_332, %c0_333, %c0_334], %898 {strides = array<i32>} : memref<8x4x256xf32, #tpu.memory_space<vmem>>, vector<8x4x256xf32>,
    %c0_i32_335 = arith.constant 0 : i32
    %900 = arith.index_cast %c0_i32_335 : i32 to index
    %c0_336 = arith.constant 0 : index
    %c0_337 = arith.constant 0 : index
    %901 = vector.load %arg20[%900, %c0_336, %c0_337] : memref<8x4x64xf32, #tpu.memory_space<vmem>>, vector<1x4x64xf32>
    %902 = vector.shape_cast %901 : vector<1x4x64xf32> to vector<4x64xf32>
    %903 = arith.index_cast %c0_i32_335 : i32 to index
    %c0_338 = arith.constant 0 : index
    %c0_339 = arith.constant 0 : index
    %904 = vector.load %arg21[%903, %c0_338, %c0_339] : memref<8x4x256xf32, #tpu.memory_space<vmem>>, vector<1x4x256xf32>
    %905 = vector.shape_cast %904 : vector<1x4x256xf32> to vector<4x256xf32>
    %cst_340 = arith.constant dense<0.000000e+00> : vector<4x256xf32>
    %906 = tpu.matmul %1, %4, %cst_340 {dimension_numbers = #tpu.dot_dimension_numbers<[1], [0], [0], [1], [0, 0, 1, 1], [], []>} : vector<4x64xf32>, vector<64x256xf32>, vector<4x256xf32> -> vector<4x256xf32>
    %907 = arith.addf %905, %906 : vector<4x256xf32>
    %908 = vector.extract_strided_slice %907 {offsets = [0, 0], sizes = [4, 64], strides = [1, 1]} : vector<4x256xf32> to vector<4x64xf32>
    %cst_341 = arith.constant 5.000000e-01 : f32
    %909 = vector.broadcast %cst_341 : f32 to vector<4x64xf32>
    %910 = arith.mulf %909, %908 : vector<4x64xf32>
    %911 = math.tanh %910 : vector<4x64xf32>
    %cst_342 = arith.constant 5.000000e-01 : f32
    %912 = vector.broadcast %cst_342 : f32 to vector<4x64xf32>
    %913 = arith.mulf %912, %911 : vector<4x64xf32>
    %cst_343 = arith.constant 5.000000e-01 : f32
    %914 = vector.broadcast %cst_343 : f32 to vector<4x64xf32>
    %915 = arith.addf %913, %914 : vector<4x64xf32>
    %916 = vector.extract_strided_slice %907 {offsets = [0, 64], sizes = [4, 64], strides = [1, 1]} : vector<4x256xf32> to vector<4x64xf32>
    %cst_344 = arith.constant 5.000000e-01 : f32
    %917 = vector.broadcast %cst_344 : f32 to vector<4x64xf32>
    %918 = arith.mulf %917, %916 : vector<4x64xf32>
    %919 = math.tanh %918 : vector<4x64xf32>
    %cst_345 = arith.constant 5.000000e-01 : f32
    %920 = vector.broadcast %cst_345 : f32 to vector<4x64xf32>
    %921 = arith.mulf %920, %919 : vector<4x64xf32>
    %cst_346 = arith.constant 5.000000e-01 : f32
    %922 = vector.broadcast %cst_346 : f32 to vector<4x64xf32>
    %923 = arith.addf %921, %922 : vector<4x64xf32>
    %924 = vector.extract_strided_slice %907 {offsets = [0, 128], sizes = [4, 64], strides = [1, 1]} : vector<4x256xf32> to vector<4x64xf32>
    %925 = math.tanh %924 : vector<4x64xf32>
    %926 = vector.extract_strided_slice %907 {offsets = [0, 192], sizes = [4, 64], strides = [1, 1]} : vector<4x256xf32> to vector<4x64xf32>
    %cst_347 = arith.constant 5.000000e-01 : f32
    %927 = vector.broadcast %cst_347 : f32 to vector<4x64xf32>
    %928 = arith.mulf %927, %926 : vector<4x64xf32>
    %929 = math.tanh %928 : vector<4x64xf32>
    %cst_348 = arith.constant 5.000000e-01 : f32
    %930 = vector.broadcast %cst_348 : f32 to vector<4x64xf32>
    %931 = arith.mulf %930, %929 : vector<4x64xf32>
    %cst_349 = arith.constant 5.000000e-01 : f32
    %932 = vector.broadcast %cst_349 : f32 to vector<4x64xf32>
    %933 = arith.addf %931, %932 : vector<4x64xf32>
    %934 = arith.mulf %923, %1 : vector<4x64xf32>
    %935 = arith.mulf %915, %925 : vector<4x64xf32>
    %936 = arith.addf %934, %935 : vector<4x64xf32>
    %937 = math.tanh %936 : vector<4x64xf32>
    %938 = arith.mulf %933, %937 : vector<4x64xf32>
    %939 = arith.addf %938, %902 : vector<4x64xf32>
    %cst_350 = arith.constant dense<0.000000e+00> : vector<4xf32>
    %940 = vector.multi_reduction <add>, %939, %cst_350 [1] : vector<4x64xf32> to vector<4xf32>
    %941 = vector.shape_cast %940 : vector<4xf32> to vector<4x1xf32>
    %cst_351 = arith.constant 6.400000e+01 : f32
    %942 = vector.broadcast %cst_351 : f32 to vector<4x1xf32>
    %943 = arith.divf %941, %942 : vector<4x1xf32>
    %944 = vector.broadcast %943 : vector<4x1xf32> to vector<4x64xf32>
    %945 = arith.subf %939, %944 : vector<4x64xf32>
    %946 = arith.mulf %945, %945 : vector<4x64xf32>
    %cst_352 = arith.constant dense<0.000000e+00> : vector<4xf32>
    %947 = vector.multi_reduction <add>, %946, %cst_352 [1] : vector<4x64xf32> to vector<4xf32>
    %948 = vector.shape_cast %947 : vector<4xf32> to vector<4x1xf32>
    %cst_353 = arith.constant 6.400000e+01 : f32
    %949 = vector.broadcast %cst_353 : f32 to vector<4x1xf32>
    %950 = arith.divf %948, %949 : vector<4x1xf32>
    %951 = vector.broadcast %943 : vector<4x1xf32> to vector<4x64xf32>
    %952 = arith.subf %939, %951 : vector<4x64xf32>
    %cst_354 = arith.constant 9.99999974E-6 : f32
    %953 = vector.broadcast %cst_354 : f32 to vector<4x1xf32>
    %954 = arith.addf %950, %953 : vector<4x1xf32>
    %955 = math.rsqrt %954 : vector<4x1xf32>
    %956 = vector.broadcast %955 : vector<4x1xf32> to vector<4x64xf32>
    %957 = arith.mulf %952, %956 : vector<4x64xf32>
    %958 = vector.broadcast %8 : vector<1x64xf32> to vector<4x64xf32>
    %959 = arith.mulf %957, %958 : vector<4x64xf32>
    %960 = vector.broadcast %9 : vector<1x64xf32> to vector<4x64xf32>
    %961 = arith.addf %959, %960 : vector<4x64xf32>
    %962 = arith.index_cast %c0_i32_335 : i32 to index
    %c0_355 = arith.constant 0 : index
    %c0_356 = arith.constant 0 : index
    %963 = vector.load %arg20[%962, %c0_355, %c0_356] : memref<8x4x64xf32, #tpu.memory_space<vmem>>, vector<1x4x64xf32>
    %964 = vector.shape_cast %963 : vector<1x4x64xf32> to vector<4x64xf32>
    %965 = vector.shape_cast %961 : vector<4x64xf32> to vector<1x4x64xf32>
    tpu.vector_store %arg20[%962, %c0_355, %c0_356], %965 {strides = array<i32>} : memref<8x4x64xf32, #tpu.memory_space<vmem>>, vector<1x4x64xf32>,
    %c1_i32_357 = arith.constant 1 : i32
    %966 = arith.index_cast %c1_i32_357 : i32 to index
    %c0_358 = arith.constant 0 : index
    %c0_359 = arith.constant 0 : index
    %967 = vector.load %arg20[%966, %c0_358, %c0_359] : memref<8x4x64xf32, #tpu.memory_space<vmem>>, vector<1x4x64xf32>
    %968 = vector.shape_cast %967 : vector<1x4x64xf32> to vector<4x64xf32>
    %969 = arith.index_cast %c1_i32_357 : i32 to index
    %c0_360 = arith.constant 0 : index
    %c0_361 = arith.constant 0 : index
    %970 = vector.load %arg21[%969, %c0_360, %c0_361] : memref<8x4x256xf32, #tpu.memory_space<vmem>>, vector<1x4x256xf32>
    %971 = vector.shape_cast %970 : vector<1x4x256xf32> to vector<4x256xf32>
    %cst_362 = arith.constant dense<0.000000e+00> : vector<4x256xf32>
    %972 = tpu.matmul %938, %4, %cst_362 {dimension_numbers = #tpu.dot_dimension_numbers<[1], [0], [0], [1], [0, 0, 1, 1], [], []>} : vector<4x64xf32>, vector<64x256xf32>, vector<4x256xf32> -> vector<4x256xf32>
    %973 = arith.addf %971, %972 : vector<4x256xf32>
    %974 = vector.extract_strided_slice %973 {offsets = [0, 0], sizes = [4, 64], strides = [1, 1]} : vector<4x256xf32> to vector<4x64xf32>
    %cst_363 = arith.constant 5.000000e-01 : f32
    %975 = vector.broadcast %cst_363 : f32 to vector<4x64xf32>
    %976 = arith.mulf %975, %974 : vector<4x64xf32>
    %977 = math.tanh %976 : vector<4x64xf32>
    %cst_364 = arith.constant 5.000000e-01 : f32
    %978 = vector.broadcast %cst_364 : f32 to vector<4x64xf32>
    %979 = arith.mulf %978, %977 : vector<4x64xf32>
    %cst_365 = arith.constant 5.000000e-01 : f32
    %980 = vector.broadcast %cst_365 : f32 to vector<4x64xf32>
    %981 = arith.addf %979, %980 : vector<4x64xf32>
    %982 = vector.extract_strided_slice %973 {offsets = [0, 64], sizes = [4, 64], strides = [1, 1]} : vector<4x256xf32> to vector<4x64xf32>
    %cst_366 = arith.constant 5.000000e-01 : f32
    %983 = vector.broadcast %cst_366 : f32 to vector<4x64xf32>
    %984 = arith.mulf %983, %982 : vector<4x64xf32>
    %985 = math.tanh %984 : vector<4x64xf32>
    %cst_367 = arith.constant 5.000000e-01 : f32
    %986 = vector.broadcast %cst_367 : f32 to vector<4x64xf32>
    %987 = arith.mulf %986, %985 : vector<4x64xf32>
    %cst_368 = arith.constant 5.000000e-01 : f32
    %988 = vector.broadcast %cst_368 : f32 to vector<4x64xf32>
    %989 = arith.addf %987, %988 : vector<4x64xf32>
    %990 = vector.extract_strided_slice %973 {offsets = [0, 128], sizes = [4, 64], strides = [1, 1]} : vector<4x256xf32> to vector<4x64xf32>
    %991 = math.tanh %990 : vector<4x64xf32>
    %992 = vector.extract_strided_slice %973 {offsets = [0, 192], sizes = [4, 64], strides = [1, 1]} : vector<4x256xf32> to vector<4x64xf32>
    %cst_369 = arith.constant 5.000000e-01 : f32
    %993 = vector.broadcast %cst_369 : f32 to vector<4x64xf32>
    %994 = arith.mulf %993, %992 : vector<4x64xf32>
    %995 = math.tanh %994 : vector<4x64xf32>
    %cst_370 = arith.constant 5.000000e-01 : f32
    %996 = vector.broadcast %cst_370 : f32 to vector<4x64xf32>
    %997 = arith.mulf %996, %995 : vector<4x64xf32>
    %cst_371 = arith.constant 5.000000e-01 : f32
    %998 = vector.broadcast %cst_371 : f32 to vector<4x64xf32>
    %999 = arith.addf %997, %998 : vector<4x64xf32>
    %1000 = arith.mulf %989, %936 : vector<4x64xf32>
    %1001 = arith.mulf %981, %991 : vector<4x64xf32>
    %1002 = arith.addf %1000, %1001 : vector<4x64xf32>
    %1003 = math.tanh %1002 : vector<4x64xf32>
    %1004 = arith.mulf %999, %1003 : vector<4x64xf32>
    %1005 = arith.addf %1004, %968 : vector<4x64xf32>
    %cst_372 = arith.constant dense<0.000000e+00> : vector<4xf32>
    %1006 = vector.multi_reduction <add>, %1005, %cst_372 [1] : vector<4x64xf32> to vector<4xf32>
    %1007 = vector.shape_cast %1006 : vector<4xf32> to vector<4x1xf32>
    %cst_373 = arith.constant 6.400000e+01 : f32
    %1008 = vector.broadcast %cst_373 : f32 to vector<4x1xf32>
    %1009 = arith.divf %1007, %1008 : vector<4x1xf32>
    %1010 = vector.broadcast %1009 : vector<4x1xf32> to vector<4x64xf32>
    %1011 = arith.subf %1005, %1010 : vector<4x64xf32>
    %1012 = arith.mulf %1011, %1011 : vector<4x64xf32>
    %cst_374 = arith.constant dense<0.000000e+00> : vector<4xf32>
    %1013 = vector.multi_reduction <add>, %1012, %cst_374 [1] : vector<4x64xf32> to vector<4xf32>
    %1014 = vector.shape_cast %1013 : vector<4xf32> to vector<4x1xf32>
    %cst_375 = arith.constant 6.400000e+01 : f32
    %1015 = vector.broadcast %cst_375 : f32 to vector<4x1xf32>
    %1016 = arith.divf %1014, %1015 : vector<4x1xf32>
    %1017 = vector.broadcast %1009 : vector<4x1xf32> to vector<4x64xf32>
    %1018 = arith.subf %1005, %1017 : vector<4x64xf32>
    %cst_376 = arith.constant 9.99999974E-6 : f32
    %1019 = vector.broadcast %cst_376 : f32 to vector<4x1xf32>
    %1020 = arith.addf %1016, %1019 : vector<4x1xf32>
    %1021 = math.rsqrt %1020 : vector<4x1xf32>
    %1022 = vector.broadcast %1021 : vector<4x1xf32> to vector<4x64xf32>
    %1023 = arith.mulf %1018, %1022 : vector<4x64xf32>
    %1024 = vector.broadcast %8 : vector<1x64xf32> to vector<4x64xf32>
    %1025 = arith.mulf %1023, %1024 : vector<4x64xf32>
    %1026 = vector.broadcast %9 : vector<1x64xf32> to vector<4x64xf32>
    %1027 = arith.addf %1025, %1026 : vector<4x64xf32>
    %1028 = arith.index_cast %c1_i32_357 : i32 to index
    %c0_377 = arith.constant 0 : index
    %c0_378 = arith.constant 0 : index
    %1029 = vector.load %arg20[%1028, %c0_377, %c0_378] : memref<8x4x64xf32, #tpu.memory_space<vmem>>, vector<1x4x64xf32>
    %1030 = vector.shape_cast %1029 : vector<1x4x64xf32> to vector<4x64xf32>
    %1031 = vector.shape_cast %1027 : vector<4x64xf32> to vector<1x4x64xf32>
    tpu.vector_store %arg20[%1028, %c0_377, %c0_378], %1031 {strides = array<i32>} : memref<8x4x64xf32, #tpu.memory_space<vmem>>, vector<1x4x64xf32>,
    %c2_i32_379 = arith.constant 2 : i32
    %1032 = arith.index_cast %c2_i32_379 : i32 to index
    %c0_380 = arith.constant 0 : index
    %c0_381 = arith.constant 0 : index
    %1033 = vector.load %arg20[%1032, %c0_380, %c0_381] : memref<8x4x64xf32, #tpu.memory_space<vmem>>, vector<1x4x64xf32>
    %1034 = vector.shape_cast %1033 : vector<1x4x64xf32> to vector<4x64xf32>
    %1035 = arith.index_cast %c2_i32_379 : i32 to index
    %c0_382 = arith.constant 0 : index
    %c0_383 = arith.constant 0 : index
    %1036 = vector.load %arg21[%1035, %c0_382, %c0_383] : memref<8x4x256xf32, #tpu.memory_space<vmem>>, vector<1x4x256xf32>
    %1037 = vector.shape_cast %1036 : vector<1x4x256xf32> to vector<4x256xf32>
    %cst_384 = arith.constant dense<0.000000e+00> : vector<4x256xf32>
    %1038 = tpu.matmul %1004, %4, %cst_384 {dimension_numbers = #tpu.dot_dimension_numbers<[1], [0], [0], [1], [0, 0, 1, 1], [], []>} : vector<4x64xf32>, vector<64x256xf32>, vector<4x256xf32> -> vector<4x256xf32>
    %1039 = arith.addf %1037, %1038 : vector<4x256xf32>
    %1040 = vector.extract_strided_slice %1039 {offsets = [0, 0], sizes = [4, 64], strides = [1, 1]} : vector<4x256xf32> to vector<4x64xf32>
    %cst_385 = arith.constant 5.000000e-01 : f32
    %1041 = vector.broadcast %cst_385 : f32 to vector<4x64xf32>
    %1042 = arith.mulf %1041, %1040 : vector<4x64xf32>
    %1043 = math.tanh %1042 : vector<4x64xf32>
    %cst_386 = arith.constant 5.000000e-01 : f32
    %1044 = vector.broadcast %cst_386 : f32 to vector<4x64xf32>
    %1045 = arith.mulf %1044, %1043 : vector<4x64xf32>
    %cst_387 = arith.constant 5.000000e-01 : f32
    %1046 = vector.broadcast %cst_387 : f32 to vector<4x64xf32>
    %1047 = arith.addf %1045, %1046 : vector<4x64xf32>
    %1048 = vector.extract_strided_slice %1039 {offsets = [0, 64], sizes = [4, 64], strides = [1, 1]} : vector<4x256xf32> to vector<4x64xf32>
    %cst_388 = arith.constant 5.000000e-01 : f32
    %1049 = vector.broadcast %cst_388 : f32 to vector<4x64xf32>
    %1050 = arith.mulf %1049, %1048 : vector<4x64xf32>
    %1051 = math.tanh %1050 : vector<4x64xf32>
    %cst_389 = arith.constant 5.000000e-01 : f32
    %1052 = vector.broadcast %cst_389 : f32 to vector<4x64xf32>
    %1053 = arith.mulf %1052, %1051 : vector<4x64xf32>
    %cst_390 = arith.constant 5.000000e-01 : f32
    %1054 = vector.broadcast %cst_390 : f32 to vector<4x64xf32>
    %1055 = arith.addf %1053, %1054 : vector<4x64xf32>
    %1056 = vector.extract_strided_slice %1039 {offsets = [0, 128], sizes = [4, 64], strides = [1, 1]} : vector<4x256xf32> to vector<4x64xf32>
    %1057 = math.tanh %1056 : vector<4x64xf32>
    %1058 = vector.extract_strided_slice %1039 {offsets = [0, 192], sizes = [4, 64], strides = [1, 1]} : vector<4x256xf32> to vector<4x64xf32>
    %cst_391 = arith.constant 5.000000e-01 : f32
    %1059 = vector.broadcast %cst_391 : f32 to vector<4x64xf32>
    %1060 = arith.mulf %1059, %1058 : vector<4x64xf32>
    %1061 = math.tanh %1060 : vector<4x64xf32>
    %cst_392 = arith.constant 5.000000e-01 : f32
    %1062 = vector.broadcast %cst_392 : f32 to vector<4x64xf32>
    %1063 = arith.mulf %1062, %1061 : vector<4x64xf32>
    %cst_393 = arith.constant 5.000000e-01 : f32
    %1064 = vector.broadcast %cst_393 : f32 to vector<4x64xf32>
    %1065 = arith.addf %1063, %1064 : vector<4x64xf32>
    %1066 = arith.mulf %1055, %1002 : vector<4x64xf32>
    %1067 = arith.mulf %1047, %1057 : vector<4x64xf32>
    %1068 = arith.addf %1066, %1067 : vector<4x64xf32>
    %1069 = math.tanh %1068 : vector<4x64xf32>
    %1070 = arith.mulf %1065, %1069 : vector<4x64xf32>
    %1071 = arith.addf %1070, %1034 : vector<4x64xf32>
    %cst_394 = arith.constant dense<0.000000e+00> : vector<4xf32>
    %1072 = vector.multi_reduction <add>, %1071, %cst_394 [1] : vector<4x64xf32> to vector<4xf32>
    %1073 = vector.shape_cast %1072 : vector<4xf32> to vector<4x1xf32>
    %cst_395 = arith.constant 6.400000e+01 : f32
    %1074 = vector.broadcast %cst_395 : f32 to vector<4x1xf32>
    %1075 = arith.divf %1073, %1074 : vector<4x1xf32>
    %1076 = vector.broadcast %1075 : vector<4x1xf32> to vector<4x64xf32>
    %1077 = arith.subf %1071, %1076 : vector<4x64xf32>
    %1078 = arith.mulf %1077, %1077 : vector<4x64xf32>
    %cst_396 = arith.constant dense<0.000000e+00> : vector<4xf32>
    %1079 = vector.multi_reduction <add>, %1078, %cst_396 [1] : vector<4x64xf32> to vector<4xf32>
    %1080 = vector.shape_cast %1079 : vector<4xf32> to vector<4x1xf32>
    %cst_397 = arith.constant 6.400000e+01 : f32
    %1081 = vector.broadcast %cst_397 : f32 to vector<4x1xf32>
    %1082 = arith.divf %1080, %1081 : vector<4x1xf32>
    %1083 = vector.broadcast %1075 : vector<4x1xf32> to vector<4x64xf32>
    %1084 = arith.subf %1071, %1083 : vector<4x64xf32>
    %cst_398 = arith.constant 9.99999974E-6 : f32
    %1085 = vector.broadcast %cst_398 : f32 to vector<4x1xf32>
    %1086 = arith.addf %1082, %1085 : vector<4x1xf32>
    %1087 = math.rsqrt %1086 : vector<4x1xf32>
    %1088 = vector.broadcast %1087 : vector<4x1xf32> to vector<4x64xf32>
    %1089 = arith.mulf %1084, %1088 : vector<4x64xf32>
    %1090 = vector.broadcast %8 : vector<1x64xf32> to vector<4x64xf32>
    %1091 = arith.mulf %1089, %1090 : vector<4x64xf32>
    %1092 = vector.broadcast %9 : vector<1x64xf32> to vector<4x64xf32>
    %1093 = arith.addf %1091, %1092 : vector<4x64xf32>
    %1094 = arith.index_cast %c2_i32_379 : i32 to index
    %c0_399 = arith.constant 0 : index
    %c0_400 = arith.constant 0 : index
    %1095 = vector.load %arg20[%1094, %c0_399, %c0_400] : memref<8x4x64xf32, #tpu.memory_space<vmem>>, vector<1x4x64xf32>
    %1096 = vector.shape_cast %1095 : vector<1x4x64xf32> to vector<4x64xf32>
    %1097 = vector.shape_cast %1093 : vector<4x64xf32> to vector<1x4x64xf32>
    tpu.vector_store %arg20[%1094, %c0_399, %c0_400], %1097 {strides = array<i32>} : memref<8x4x64xf32, #tpu.memory_space<vmem>>, vector<1x4x64xf32>,
    %c3_i32_401 = arith.constant 3 : i32
    %1098 = arith.index_cast %c3_i32_401 : i32 to index
    %c0_402 = arith.constant 0 : index
    %c0_403 = arith.constant 0 : index
    %1099 = vector.load %arg20[%1098, %c0_402, %c0_403] : memref<8x4x64xf32, #tpu.memory_space<vmem>>, vector<1x4x64xf32>
    %1100 = vector.shape_cast %1099 : vector<1x4x64xf32> to vector<4x64xf32>
    %1101 = arith.index_cast %c3_i32_401 : i32 to index
    %c0_404 = arith.constant 0 : index
    %c0_405 = arith.constant 0 : index
    %1102 = vector.load %arg21[%1101, %c0_404, %c0_405] : memref<8x4x256xf32, #tpu.memory_space<vmem>>, vector<1x4x256xf32>
    %1103 = vector.shape_cast %1102 : vector<1x4x256xf32> to vector<4x256xf32>
    %cst_406 = arith.constant dense<0.000000e+00> : vector<4x256xf32>
    %1104 = tpu.matmul %1070, %4, %cst_406 {dimension_numbers = #tpu.dot_dimension_numbers<[1], [0], [0], [1], [0, 0, 1, 1], [], []>} : vector<4x64xf32>, vector<64x256xf32>, vector<4x256xf32> -> vector<4x256xf32>
    %1105 = arith.addf %1103, %1104 : vector<4x256xf32>
    %1106 = vector.extract_strided_slice %1105 {offsets = [0, 0], sizes = [4, 64], strides = [1, 1]} : vector<4x256xf32> to vector<4x64xf32>
    %cst_407 = arith.constant 5.000000e-01 : f32
    %1107 = vector.broadcast %cst_407 : f32 to vector<4x64xf32>
    %1108 = arith.mulf %1107, %1106 : vector<4x64xf32>
    %1109 = math.tanh %1108 : vector<4x64xf32>
    %cst_408 = arith.constant 5.000000e-01 : f32
    %1110 = vector.broadcast %cst_408 : f32 to vector<4x64xf32>
    %1111 = arith.mulf %1110, %1109 : vector<4x64xf32>
    %cst_409 = arith.constant 5.000000e-01 : f32
    %1112 = vector.broadcast %cst_409 : f32 to vector<4x64xf32>
    %1113 = arith.addf %1111, %1112 : vector<4x64xf32>
    %1114 = vector.extract_strided_slice %1105 {offsets = [0, 64], sizes = [4, 64], strides = [1, 1]} : vector<4x256xf32> to vector<4x64xf32>
    %cst_410 = arith.constant 5.000000e-01 : f32
    %1115 = vector.broadcast %cst_410 : f32 to vector<4x64xf32>
    %1116 = arith.mulf %1115, %1114 : vector<4x64xf32>
    %1117 = math.tanh %1116 : vector<4x64xf32>
    %cst_411 = arith.constant 5.000000e-01 : f32
    %1118 = vector.broadcast %cst_411 : f32 to vector<4x64xf32>
    %1119 = arith.mulf %1118, %1117 : vector<4x64xf32>
    %cst_412 = arith.constant 5.000000e-01 : f32
    %1120 = vector.broadcast %cst_412 : f32 to vector<4x64xf32>
    %1121 = arith.addf %1119, %1120 : vector<4x64xf32>
    %1122 = vector.extract_strided_slice %1105 {offsets = [0, 128], sizes = [4, 64], strides = [1, 1]} : vector<4x256xf32> to vector<4x64xf32>
    %1123 = math.tanh %1122 : vector<4x64xf32>
    %1124 = vector.extract_strided_slice %1105 {offsets = [0, 192], sizes = [4, 64], strides = [1, 1]} : vector<4x256xf32> to vector<4x64xf32>
    %cst_413 = arith.constant 5.000000e-01 : f32
    %1125 = vector.broadcast %cst_413 : f32 to vector<4x64xf32>
    %1126 = arith.mulf %1125, %1124 : vector<4x64xf32>
    %1127 = math.tanh %1126 : vector<4x64xf32>
    %cst_414 = arith.constant 5.000000e-01 : f32
    %1128 = vector.broadcast %cst_414 : f32 to vector<4x64xf32>
    %1129 = arith.mulf %1128, %1127 : vector<4x64xf32>
    %cst_415 = arith.constant 5.000000e-01 : f32
    %1130 = vector.broadcast %cst_415 : f32 to vector<4x64xf32>
    %1131 = arith.addf %1129, %1130 : vector<4x64xf32>
    %1132 = arith.mulf %1121, %1068 : vector<4x64xf32>
    %1133 = arith.mulf %1113, %1123 : vector<4x64xf32>
    %1134 = arith.addf %1132, %1133 : vector<4x64xf32>
    %1135 = math.tanh %1134 : vector<4x64xf32>
    %1136 = arith.mulf %1131, %1135 : vector<4x64xf32>
    %1137 = arith.addf %1136, %1100 : vector<4x64xf32>
    %cst_416 = arith.constant dense<0.000000e+00> : vector<4xf32>
    %1138 = vector.multi_reduction <add>, %1137, %cst_416 [1] : vector<4x64xf32> to vector<4xf32>
    %1139 = vector.shape_cast %1138 : vector<4xf32> to vector<4x1xf32>
    %cst_417 = arith.constant 6.400000e+01 : f32
    %1140 = vector.broadcast %cst_417 : f32 to vector<4x1xf32>
    %1141 = arith.divf %1139, %1140 : vector<4x1xf32>
    %1142 = vector.broadcast %1141 : vector<4x1xf32> to vector<4x64xf32>
    %1143 = arith.subf %1137, %1142 : vector<4x64xf32>
    %1144 = arith.mulf %1143, %1143 : vector<4x64xf32>
    %cst_418 = arith.constant dense<0.000000e+00> : vector<4xf32>
    %1145 = vector.multi_reduction <add>, %1144, %cst_418 [1] : vector<4x64xf32> to vector<4xf32>
    %1146 = vector.shape_cast %1145 : vector<4xf32> to vector<4x1xf32>
    %cst_419 = arith.constant 6.400000e+01 : f32
    %1147 = vector.broadcast %cst_419 : f32 to vector<4x1xf32>
    %1148 = arith.divf %1146, %1147 : vector<4x1xf32>
    %1149 = vector.broadcast %1141 : vector<4x1xf32> to vector<4x64xf32>
    %1150 = arith.subf %1137, %1149 : vector<4x64xf32>
    %cst_420 = arith.constant 9.99999974E-6 : f32
    %1151 = vector.broadcast %cst_420 : f32 to vector<4x1xf32>
    %1152 = arith.addf %1148, %1151 : vector<4x1xf32>
    %1153 = math.rsqrt %1152 : vector<4x1xf32>
    %1154 = vector.broadcast %1153 : vector<4x1xf32> to vector<4x64xf32>
    %1155 = arith.mulf %1150, %1154 : vector<4x64xf32>
    %1156 = vector.broadcast %8 : vector<1x64xf32> to vector<4x64xf32>
    %1157 = arith.mulf %1155, %1156 : vector<4x64xf32>
    %1158 = vector.broadcast %9 : vector<1x64xf32> to vector<4x64xf32>
    %1159 = arith.addf %1157, %1158 : vector<4x64xf32>
    %1160 = arith.index_cast %c3_i32_401 : i32 to index
    %c0_421 = arith.constant 0 : index
    %c0_422 = arith.constant 0 : index
    %1161 = vector.load %arg20[%1160, %c0_421, %c0_422] : memref<8x4x64xf32, #tpu.memory_space<vmem>>, vector<1x4x64xf32>
    %1162 = vector.shape_cast %1161 : vector<1x4x64xf32> to vector<4x64xf32>
    %1163 = vector.shape_cast %1159 : vector<4x64xf32> to vector<1x4x64xf32>
    tpu.vector_store %arg20[%1160, %c0_421, %c0_422], %1163 {strides = array<i32>} : memref<8x4x64xf32, #tpu.memory_space<vmem>>, vector<1x4x64xf32>,
    %c4_i32_423 = arith.constant 4 : i32
    %1164 = arith.index_cast %c4_i32_423 : i32 to index
    %c0_424 = arith.constant 0 : index
    %c0_425 = arith.constant 0 : index
    %1165 = vector.load %arg20[%1164, %c0_424, %c0_425] : memref<8x4x64xf32, #tpu.memory_space<vmem>>, vector<1x4x64xf32>
    %1166 = vector.shape_cast %1165 : vector<1x4x64xf32> to vector<4x64xf32>
    %1167 = arith.index_cast %c4_i32_423 : i32 to index
    %c0_426 = arith.constant 0 : index
    %c0_427 = arith.constant 0 : index
    %1168 = vector.load %arg21[%1167, %c0_426, %c0_427] : memref<8x4x256xf32, #tpu.memory_space<vmem>>, vector<1x4x256xf32>
    %1169 = vector.shape_cast %1168 : vector<1x4x256xf32> to vector<4x256xf32>
    %cst_428 = arith.constant dense<0.000000e+00> : vector<4x256xf32>
    %1170 = tpu.matmul %1136, %4, %cst_428 {dimension_numbers = #tpu.dot_dimension_numbers<[1], [0], [0], [1], [0, 0, 1, 1], [], []>} : vector<4x64xf32>, vector<64x256xf32>, vector<4x256xf32> -> vector<4x256xf32>
    %1171 = arith.addf %1169, %1170 : vector<4x256xf32>
    %1172 = vector.extract_strided_slice %1171 {offsets = [0, 0], sizes = [4, 64], strides = [1, 1]} : vector<4x256xf32> to vector<4x64xf32>
    %cst_429 = arith.constant 5.000000e-01 : f32
    %1173 = vector.broadcast %cst_429 : f32 to vector<4x64xf32>
    %1174 = arith.mulf %1173, %1172 : vector<4x64xf32>
    %1175 = math.tanh %1174 : vector<4x64xf32>
    %cst_430 = arith.constant 5.000000e-01 : f32
    %1176 = vector.broadcast %cst_430 : f32 to vector<4x64xf32>
    %1177 = arith.mulf %1176, %1175 : vector<4x64xf32>
    %cst_431 = arith.constant 5.000000e-01 : f32
    %1178 = vector.broadcast %cst_431 : f32 to vector<4x64xf32>
    %1179 = arith.addf %1177, %1178 : vector<4x64xf32>
    %1180 = vector.extract_strided_slice %1171 {offsets = [0, 64], sizes = [4, 64], strides = [1, 1]} : vector<4x256xf32> to vector<4x64xf32>
    %cst_432 = arith.constant 5.000000e-01 : f32
    %1181 = vector.broadcast %cst_432 : f32 to vector<4x64xf32>
    %1182 = arith.mulf %1181, %1180 : vector<4x64xf32>
    %1183 = math.tanh %1182 : vector<4x64xf32>
    %cst_433 = arith.constant 5.000000e-01 : f32
    %1184 = vector.broadcast %cst_433 : f32 to vector<4x64xf32>
    %1185 = arith.mulf %1184, %1183 : vector<4x64xf32>
    %cst_434 = arith.constant 5.000000e-01 : f32
    %1186 = vector.broadcast %cst_434 : f32 to vector<4x64xf32>
    %1187 = arith.addf %1185, %1186 : vector<4x64xf32>
    %1188 = vector.extract_strided_slice %1171 {offsets = [0, 128], sizes = [4, 64], strides = [1, 1]} : vector<4x256xf32> to vector<4x64xf32>
    %1189 = math.tanh %1188 : vector<4x64xf32>
    %1190 = vector.extract_strided_slice %1171 {offsets = [0, 192], sizes = [4, 64], strides = [1, 1]} : vector<4x256xf32> to vector<4x64xf32>
    %cst_435 = arith.constant 5.000000e-01 : f32
    %1191 = vector.broadcast %cst_435 : f32 to vector<4x64xf32>
    %1192 = arith.mulf %1191, %1190 : vector<4x64xf32>
    %1193 = math.tanh %1192 : vector<4x64xf32>
    %cst_436 = arith.constant 5.000000e-01 : f32
    %1194 = vector.broadcast %cst_436 : f32 to vector<4x64xf32>
    %1195 = arith.mulf %1194, %1193 : vector<4x64xf32>
    %cst_437 = arith.constant 5.000000e-01 : f32
    %1196 = vector.broadcast %cst_437 : f32 to vector<4x64xf32>
    %1197 = arith.addf %1195, %1196 : vector<4x64xf32>
    %1198 = arith.mulf %1187, %1134 : vector<4x64xf32>
    %1199 = arith.mulf %1179, %1189 : vector<4x64xf32>
    %1200 = arith.addf %1198, %1199 : vector<4x64xf32>
    %1201 = math.tanh %1200 : vector<4x64xf32>
    %1202 = arith.mulf %1197, %1201 : vector<4x64xf32>
    %1203 = arith.addf %1202, %1166 : vector<4x64xf32>
    %cst_438 = arith.constant dense<0.000000e+00> : vector<4xf32>
    %1204 = vector.multi_reduction <add>, %1203, %cst_438 [1] : vector<4x64xf32> to vector<4xf32>
    %1205 = vector.shape_cast %1204 : vector<4xf32> to vector<4x1xf32>
    %cst_439 = arith.constant 6.400000e+01 : f32
    %1206 = vector.broadcast %cst_439 : f32 to vector<4x1xf32>
    %1207 = arith.divf %1205, %1206 : vector<4x1xf32>
    %1208 = vector.broadcast %1207 : vector<4x1xf32> to vector<4x64xf32>
    %1209 = arith.subf %1203, %1208 : vector<4x64xf32>
    %1210 = arith.mulf %1209, %1209 : vector<4x64xf32>
    %cst_440 = arith.constant dense<0.000000e+00> : vector<4xf32>
    %1211 = vector.multi_reduction <add>, %1210, %cst_440 [1] : vector<4x64xf32> to vector<4xf32>
    %1212 = vector.shape_cast %1211 : vector<4xf32> to vector<4x1xf32>
    %cst_441 = arith.constant 6.400000e+01 : f32
    %1213 = vector.broadcast %cst_441 : f32 to vector<4x1xf32>
    %1214 = arith.divf %1212, %1213 : vector<4x1xf32>
    %1215 = vector.broadcast %1207 : vector<4x1xf32> to vector<4x64xf32>
    %1216 = arith.subf %1203, %1215 : vector<4x64xf32>
    %cst_442 = arith.constant 9.99999974E-6 : f32
    %1217 = vector.broadcast %cst_442 : f32 to vector<4x1xf32>
    %1218 = arith.addf %1214, %1217 : vector<4x1xf32>
    %1219 = math.rsqrt %1218 : vector<4x1xf32>
    %1220 = vector.broadcast %1219 : vector<4x1xf32> to vector<4x64xf32>
    %1221 = arith.mulf %1216, %1220 : vector<4x64xf32>
    %1222 = vector.broadcast %8 : vector<1x64xf32> to vector<4x64xf32>
    %1223 = arith.mulf %1221, %1222 : vector<4x64xf32>
    %1224 = vector.broadcast %9 : vector<1x64xf32> to vector<4x64xf32>
    %1225 = arith.addf %1223, %1224 : vector<4x64xf32>
    %1226 = arith.index_cast %c4_i32_423 : i32 to index
    %c0_443 = arith.constant 0 : index
    %c0_444 = arith.constant 0 : index
    %1227 = vector.load %arg20[%1226, %c0_443, %c0_444] : memref<8x4x64xf32, #tpu.memory_space<vmem>>, vector<1x4x64xf32>
    %1228 = vector.shape_cast %1227 : vector<1x4x64xf32> to vector<4x64xf32>
    %1229 = vector.shape_cast %1225 : vector<4x64xf32> to vector<1x4x64xf32>
    tpu.vector_store %arg20[%1226, %c0_443, %c0_444], %1229 {strides = array<i32>} : memref<8x4x64xf32, #tpu.memory_space<vmem>>, vector<1x4x64xf32>,
    %c5_i32_445 = arith.constant 5 : i32
    %1230 = arith.index_cast %c5_i32_445 : i32 to index
    %c0_446 = arith.constant 0 : index
    %c0_447 = arith.constant 0 : index
    %1231 = vector.load %arg20[%1230, %c0_446, %c0_447] : memref<8x4x64xf32, #tpu.memory_space<vmem>>, vector<1x4x64xf32>
    %1232 = vector.shape_cast %1231 : vector<1x4x64xf32> to vector<4x64xf32>
    %1233 = arith.index_cast %c5_i32_445 : i32 to index
    %c0_448 = arith.constant 0 : index
    %c0_449 = arith.constant 0 : index
    %1234 = vector.load %arg21[%1233, %c0_448, %c0_449] : memref<8x4x256xf32, #tpu.memory_space<vmem>>, vector<1x4x256xf32>
    %1235 = vector.shape_cast %1234 : vector<1x4x256xf32> to vector<4x256xf32>
    %cst_450 = arith.constant dense<0.000000e+00> : vector<4x256xf32>
    %1236 = tpu.matmul %1202, %4, %cst_450 {dimension_numbers = #tpu.dot_dimension_numbers<[1], [0], [0], [1], [0, 0, 1, 1], [], []>} : vector<4x64xf32>, vector<64x256xf32>, vector<4x256xf32> -> vector<4x256xf32>
    %1237 = arith.addf %1235, %1236 : vector<4x256xf32>
    %1238 = vector.extract_strided_slice %1237 {offsets = [0, 0], sizes = [4, 64], strides = [1, 1]} : vector<4x256xf32> to vector<4x64xf32>
    %cst_451 = arith.constant 5.000000e-01 : f32
    %1239 = vector.broadcast %cst_451 : f32 to vector<4x64xf32>
    %1240 = arith.mulf %1239, %1238 : vector<4x64xf32>
    %1241 = math.tanh %1240 : vector<4x64xf32>
    %cst_452 = arith.constant 5.000000e-01 : f32
    %1242 = vector.broadcast %cst_452 : f32 to vector<4x64xf32>
    %1243 = arith.mulf %1242, %1241 : vector<4x64xf32>
    %cst_453 = arith.constant 5.000000e-01 : f32
    %1244 = vector.broadcast %cst_453 : f32 to vector<4x64xf32>
    %1245 = arith.addf %1243, %1244 : vector<4x64xf32>
    %1246 = vector.extract_strided_slice %1237 {offsets = [0, 64], sizes = [4, 64], strides = [1, 1]} : vector<4x256xf32> to vector<4x64xf32>
    %cst_454 = arith.constant 5.000000e-01 : f32
    %1247 = vector.broadcast %cst_454 : f32 to vector<4x64xf32>
    %1248 = arith.mulf %1247, %1246 : vector<4x64xf32>
    %1249 = math.tanh %1248 : vector<4x64xf32>
    %cst_455 = arith.constant 5.000000e-01 : f32
    %1250 = vector.broadcast %cst_455 : f32 to vector<4x64xf32>
    %1251 = arith.mulf %1250, %1249 : vector<4x64xf32>
    %cst_456 = arith.constant 5.000000e-01 : f32
    %1252 = vector.broadcast %cst_456 : f32 to vector<4x64xf32>
    %1253 = arith.addf %1251, %1252 : vector<4x64xf32>
    %1254 = vector.extract_strided_slice %1237 {offsets = [0, 128], sizes = [4, 64], strides = [1, 1]} : vector<4x256xf32> to vector<4x64xf32>
    %1255 = math.tanh %1254 : vector<4x64xf32>
    %1256 = vector.extract_strided_slice %1237 {offsets = [0, 192], sizes = [4, 64], strides = [1, 1]} : vector<4x256xf32> to vector<4x64xf32>
    %cst_457 = arith.constant 5.000000e-01 : f32
    %1257 = vector.broadcast %cst_457 : f32 to vector<4x64xf32>
    %1258 = arith.mulf %1257, %1256 : vector<4x64xf32>
    %1259 = math.tanh %1258 : vector<4x64xf32>
    %cst_458 = arith.constant 5.000000e-01 : f32
    %1260 = vector.broadcast %cst_458 : f32 to vector<4x64xf32>
    %1261 = arith.mulf %1260, %1259 : vector<4x64xf32>
    %cst_459 = arith.constant 5.000000e-01 : f32
    %1262 = vector.broadcast %cst_459 : f32 to vector<4x64xf32>
    %1263 = arith.addf %1261, %1262 : vector<4x64xf32>
    %1264 = arith.mulf %1253, %1200 : vector<4x64xf32>
    %1265 = arith.mulf %1245, %1255 : vector<4x64xf32>
    %1266 = arith.addf %1264, %1265 : vector<4x64xf32>
    %1267 = math.tanh %1266 : vector<4x64xf32>
    %1268 = arith.mulf %1263, %1267 : vector<4x64xf32>
    %1269 = arith.addf %1268, %1232 : vector<4x64xf32>
    %cst_460 = arith.constant dense<0.000000e+00> : vector<4xf32>
    %1270 = vector.multi_reduction <add>, %1269, %cst_460 [1] : vector<4x64xf32> to vector<4xf32>
    %1271 = vector.shape_cast %1270 : vector<4xf32> to vector<4x1xf32>
    %cst_461 = arith.constant 6.400000e+01 : f32
    %1272 = vector.broadcast %cst_461 : f32 to vector<4x1xf32>
    %1273 = arith.divf %1271, %1272 : vector<4x1xf32>
    %1274 = vector.broadcast %1273 : vector<4x1xf32> to vector<4x64xf32>
    %1275 = arith.subf %1269, %1274 : vector<4x64xf32>
    %1276 = arith.mulf %1275, %1275 : vector<4x64xf32>
    %cst_462 = arith.constant dense<0.000000e+00> : vector<4xf32>
    %1277 = vector.multi_reduction <add>, %1276, %cst_462 [1] : vector<4x64xf32> to vector<4xf32>
    %1278 = vector.shape_cast %1277 : vector<4xf32> to vector<4x1xf32>
    %cst_463 = arith.constant 6.400000e+01 : f32
    %1279 = vector.broadcast %cst_463 : f32 to vector<4x1xf32>
    %1280 = arith.divf %1278, %1279 : vector<4x1xf32>
    %1281 = vector.broadcast %1273 : vector<4x1xf32> to vector<4x64xf32>
    %1282 = arith.subf %1269, %1281 : vector<4x64xf32>
    %cst_464 = arith.constant 9.99999974E-6 : f32
    %1283 = vector.broadcast %cst_464 : f32 to vector<4x1xf32>
    %1284 = arith.addf %1280, %1283 : vector<4x1xf32>
    %1285 = math.rsqrt %1284 : vector<4x1xf32>
    %1286 = vector.broadcast %1285 : vector<4x1xf32> to vector<4x64xf32>
    %1287 = arith.mulf %1282, %1286 : vector<4x64xf32>
    %1288 = vector.broadcast %8 : vector<1x64xf32> to vector<4x64xf32>
    %1289 = arith.mulf %1287, %1288 : vector<4x64xf32>
    %1290 = vector.broadcast %9 : vector<1x64xf32> to vector<4x64xf32>
    %1291 = arith.addf %1289, %1290 : vector<4x64xf32>
    %1292 = arith.index_cast %c5_i32_445 : i32 to index
    %c0_465 = arith.constant 0 : index
    %c0_466 = arith.constant 0 : index
    %1293 = vector.load %arg20[%1292, %c0_465, %c0_466] : memref<8x4x64xf32, #tpu.memory_space<vmem>>, vector<1x4x64xf32>
    %1294 = vector.shape_cast %1293 : vector<1x4x64xf32> to vector<4x64xf32>
    %1295 = vector.shape_cast %1291 : vector<4x64xf32> to vector<1x4x64xf32>
    tpu.vector_store %arg20[%1292, %c0_465, %c0_466], %1295 {strides = array<i32>} : memref<8x4x64xf32, #tpu.memory_space<vmem>>, vector<1x4x64xf32>,
    %c6_i32_467 = arith.constant 6 : i32
    %1296 = arith.index_cast %c6_i32_467 : i32 to index
    %c0_468 = arith.constant 0 : index
    %c0_469 = arith.constant 0 : index
    %1297 = vector.load %arg20[%1296, %c0_468, %c0_469] : memref<8x4x64xf32, #tpu.memory_space<vmem>>, vector<1x4x64xf32>
    %1298 = vector.shape_cast %1297 : vector<1x4x64xf32> to vector<4x64xf32>
    %1299 = arith.index_cast %c6_i32_467 : i32 to index
    %c0_470 = arith.constant 0 : index
    %c0_471 = arith.constant 0 : index
    %1300 = vector.load %arg21[%1299, %c0_470, %c0_471] : memref<8x4x256xf32, #tpu.memory_space<vmem>>, vector<1x4x256xf32>
    %1301 = vector.shape_cast %1300 : vector<1x4x256xf32> to vector<4x256xf32>
    %cst_472 = arith.constant dense<0.000000e+00> : vector<4x256xf32>
    %1302 = tpu.matmul %1268, %4, %cst_472 {dimension_numbers = #tpu.dot_dimension_numbers<[1], [0], [0], [1], [0, 0, 1, 1], [], []>} : vector<4x64xf32>, vector<64x256xf32>, vector<4x256xf32> -> vector<4x256xf32>
    %1303 = arith.addf %1301, %1302 : vector<4x256xf32>
    %1304 = vector.extract_strided_slice %1303 {offsets = [0, 0], sizes = [4, 64], strides = [1, 1]} : vector<4x256xf32> to vector<4x64xf32>
    %cst_473 = arith.constant 5.000000e-01 : f32
    %1305 = vector.broadcast %cst_473 : f32 to vector<4x64xf32>
    %1306 = arith.mulf %1305, %1304 : vector<4x64xf32>
    %1307 = math.tanh %1306 : vector<4x64xf32>
    %cst_474 = arith.constant 5.000000e-01 : f32
    %1308 = vector.broadcast %cst_474 : f32 to vector<4x64xf32>
    %1309 = arith.mulf %1308, %1307 : vector<4x64xf32>
    %cst_475 = arith.constant 5.000000e-01 : f32
    %1310 = vector.broadcast %cst_475 : f32 to vector<4x64xf32>
    %1311 = arith.addf %1309, %1310 : vector<4x64xf32>
    %1312 = vector.extract_strided_slice %1303 {offsets = [0, 64], sizes = [4, 64], strides = [1, 1]} : vector<4x256xf32> to vector<4x64xf32>
    %cst_476 = arith.constant 5.000000e-01 : f32
    %1313 = vector.broadcast %cst_476 : f32 to vector<4x64xf32>
    %1314 = arith.mulf %1313, %1312 : vector<4x64xf32>
    %1315 = math.tanh %1314 : vector<4x64xf32>
    %cst_477 = arith.constant 5.000000e-01 : f32
    %1316 = vector.broadcast %cst_477 : f32 to vector<4x64xf32>
    %1317 = arith.mulf %1316, %1315 : vector<4x64xf32>
    %cst_478 = arith.constant 5.000000e-01 : f32
    %1318 = vector.broadcast %cst_478 : f32 to vector<4x64xf32>
    %1319 = arith.addf %1317, %1318 : vector<4x64xf32>
    %1320 = vector.extract_strided_slice %1303 {offsets = [0, 128], sizes = [4, 64], strides = [1, 1]} : vector<4x256xf32> to vector<4x64xf32>
    %1321 = math.tanh %1320 : vector<4x64xf32>
    %1322 = vector.extract_strided_slice %1303 {offsets = [0, 192], sizes = [4, 64], strides = [1, 1]} : vector<4x256xf32> to vector<4x64xf32>
    %cst_479 = arith.constant 5.000000e-01 : f32
    %1323 = vector.broadcast %cst_479 : f32 to vector<4x64xf32>
    %1324 = arith.mulf %1323, %1322 : vector<4x64xf32>
    %1325 = math.tanh %1324 : vector<4x64xf32>
    %cst_480 = arith.constant 5.000000e-01 : f32
    %1326 = vector.broadcast %cst_480 : f32 to vector<4x64xf32>
    %1327 = arith.mulf %1326, %1325 : vector<4x64xf32>
    %cst_481 = arith.constant 5.000000e-01 : f32
    %1328 = vector.broadcast %cst_481 : f32 to vector<4x64xf32>
    %1329 = arith.addf %1327, %1328 : vector<4x64xf32>
    %1330 = arith.mulf %1319, %1266 : vector<4x64xf32>
    %1331 = arith.mulf %1311, %1321 : vector<4x64xf32>
    %1332 = arith.addf %1330, %1331 : vector<4x64xf32>
    %1333 = math.tanh %1332 : vector<4x64xf32>
    %1334 = arith.mulf %1329, %1333 : vector<4x64xf32>
    %1335 = arith.addf %1334, %1298 : vector<4x64xf32>
    %cst_482 = arith.constant dense<0.000000e+00> : vector<4xf32>
    %1336 = vector.multi_reduction <add>, %1335, %cst_482 [1] : vector<4x64xf32> to vector<4xf32>
    %1337 = vector.shape_cast %1336 : vector<4xf32> to vector<4x1xf32>
    %cst_483 = arith.constant 6.400000e+01 : f32
    %1338 = vector.broadcast %cst_483 : f32 to vector<4x1xf32>
    %1339 = arith.divf %1337, %1338 : vector<4x1xf32>
    %1340 = vector.broadcast %1339 : vector<4x1xf32> to vector<4x64xf32>
    %1341 = arith.subf %1335, %1340 : vector<4x64xf32>
    %1342 = arith.mulf %1341, %1341 : vector<4x64xf32>
    %cst_484 = arith.constant dense<0.000000e+00> : vector<4xf32>
    %1343 = vector.multi_reduction <add>, %1342, %cst_484 [1] : vector<4x64xf32> to vector<4xf32>
    %1344 = vector.shape_cast %1343 : vector<4xf32> to vector<4x1xf32>
    %cst_485 = arith.constant 6.400000e+01 : f32
    %1345 = vector.broadcast %cst_485 : f32 to vector<4x1xf32>
    %1346 = arith.divf %1344, %1345 : vector<4x1xf32>
    %1347 = vector.broadcast %1339 : vector<4x1xf32> to vector<4x64xf32>
    %1348 = arith.subf %1335, %1347 : vector<4x64xf32>
    %cst_486 = arith.constant 9.99999974E-6 : f32
    %1349 = vector.broadcast %cst_486 : f32 to vector<4x1xf32>
    %1350 = arith.addf %1346, %1349 : vector<4x1xf32>
    %1351 = math.rsqrt %1350 : vector<4x1xf32>
    %1352 = vector.broadcast %1351 : vector<4x1xf32> to vector<4x64xf32>
    %1353 = arith.mulf %1348, %1352 : vector<4x64xf32>
    %1354 = vector.broadcast %8 : vector<1x64xf32> to vector<4x64xf32>
    %1355 = arith.mulf %1353, %1354 : vector<4x64xf32>
    %1356 = vector.broadcast %9 : vector<1x64xf32> to vector<4x64xf32>
    %1357 = arith.addf %1355, %1356 : vector<4x64xf32>
    %1358 = arith.index_cast %c6_i32_467 : i32 to index
    %c0_487 = arith.constant 0 : index
    %c0_488 = arith.constant 0 : index
    %1359 = vector.load %arg20[%1358, %c0_487, %c0_488] : memref<8x4x64xf32, #tpu.memory_space<vmem>>, vector<1x4x64xf32>
    %1360 = vector.shape_cast %1359 : vector<1x4x64xf32> to vector<4x64xf32>
    %1361 = vector.shape_cast %1357 : vector<4x64xf32> to vector<1x4x64xf32>
    tpu.vector_store %arg20[%1358, %c0_487, %c0_488], %1361 {strides = array<i32>} : memref<8x4x64xf32, #tpu.memory_space<vmem>>, vector<1x4x64xf32>,
    %c7_i32_489 = arith.constant 7 : i32
    %1362 = arith.index_cast %c7_i32_489 : i32 to index
    %c0_490 = arith.constant 0 : index
    %c0_491 = arith.constant 0 : index
    %1363 = vector.load %arg20[%1362, %c0_490, %c0_491] : memref<8x4x64xf32, #tpu.memory_space<vmem>>, vector<1x4x64xf32>
    %1364 = vector.shape_cast %1363 : vector<1x4x64xf32> to vector<4x64xf32>
    %1365 = arith.index_cast %c7_i32_489 : i32 to index
    %c0_492 = arith.constant 0 : index
    %c0_493 = arith.constant 0 : index
    %1366 = vector.load %arg21[%1365, %c0_492, %c0_493] : memref<8x4x256xf32, #tpu.memory_space<vmem>>, vector<1x4x256xf32>
    %1367 = vector.shape_cast %1366 : vector<1x4x256xf32> to vector<4x256xf32>
    %cst_494 = arith.constant dense<0.000000e+00> : vector<4x256xf32>
    %1368 = tpu.matmul %1334, %4, %cst_494 {dimension_numbers = #tpu.dot_dimension_numbers<[1], [0], [0], [1], [0, 0, 1, 1], [], []>} : vector<4x64xf32>, vector<64x256xf32>, vector<4x256xf32> -> vector<4x256xf32>
    %1369 = arith.addf %1367, %1368 : vector<4x256xf32>
    %1370 = vector.extract_strided_slice %1369 {offsets = [0, 0], sizes = [4, 64], strides = [1, 1]} : vector<4x256xf32> to vector<4x64xf32>
    %cst_495 = arith.constant 5.000000e-01 : f32
    %1371 = vector.broadcast %cst_495 : f32 to vector<4x64xf32>
    %1372 = arith.mulf %1371, %1370 : vector<4x64xf32>
    %1373 = math.tanh %1372 : vector<4x64xf32>
    %cst_496 = arith.constant 5.000000e-01 : f32
    %1374 = vector.broadcast %cst_496 : f32 to vector<4x64xf32>
    %1375 = arith.mulf %1374, %1373 : vector<4x64xf32>
    %cst_497 = arith.constant 5.000000e-01 : f32
    %1376 = vector.broadcast %cst_497 : f32 to vector<4x64xf32>
    %1377 = arith.addf %1375, %1376 : vector<4x64xf32>
    %1378 = vector.extract_strided_slice %1369 {offsets = [0, 64], sizes = [4, 64], strides = [1, 1]} : vector<4x256xf32> to vector<4x64xf32>
    %cst_498 = arith.constant 5.000000e-01 : f32
    %1379 = vector.broadcast %cst_498 : f32 to vector<4x64xf32>
    %1380 = arith.mulf %1379, %1378 : vector<4x64xf32>
    %1381 = math.tanh %1380 : vector<4x64xf32>
    %cst_499 = arith.constant 5.000000e-01 : f32
    %1382 = vector.broadcast %cst_499 : f32 to vector<4x64xf32>
    %1383 = arith.mulf %1382, %1381 : vector<4x64xf32>
    %cst_500 = arith.constant 5.000000e-01 : f32
    %1384 = vector.broadcast %cst_500 : f32 to vector<4x64xf32>
    %1385 = arith.addf %1383, %1384 : vector<4x64xf32>
    %1386 = vector.extract_strided_slice %1369 {offsets = [0, 128], sizes = [4, 64], strides = [1, 1]} : vector<4x256xf32> to vector<4x64xf32>
    %1387 = math.tanh %1386 : vector<4x64xf32>
    %1388 = vector.extract_strided_slice %1369 {offsets = [0, 192], sizes = [4, 64], strides = [1, 1]} : vector<4x256xf32> to vector<4x64xf32>
    %cst_501 = arith.constant 5.000000e-01 : f32
    %1389 = vector.broadcast %cst_501 : f32 to vector<4x64xf32>
    %1390 = arith.mulf %1389, %1388 : vector<4x64xf32>
    %1391 = math.tanh %1390 : vector<4x64xf32>
    %cst_502 = arith.constant 5.000000e-01 : f32
    %1392 = vector.broadcast %cst_502 : f32 to vector<4x64xf32>
    %1393 = arith.mulf %1392, %1391 : vector<4x64xf32>
    %cst_503 = arith.constant 5.000000e-01 : f32
    %1394 = vector.broadcast %cst_503 : f32 to vector<4x64xf32>
    %1395 = arith.addf %1393, %1394 : vector<4x64xf32>
    %1396 = arith.mulf %1385, %1332 : vector<4x64xf32>
    %1397 = arith.mulf %1377, %1387 : vector<4x64xf32>
    %1398 = arith.addf %1396, %1397 : vector<4x64xf32>
    %1399 = math.tanh %1398 : vector<4x64xf32>
    %1400 = arith.mulf %1395, %1399 : vector<4x64xf32>
    %1401 = arith.addf %1400, %1364 : vector<4x64xf32>
    %cst_504 = arith.constant dense<0.000000e+00> : vector<4xf32>
    %1402 = vector.multi_reduction <add>, %1401, %cst_504 [1] : vector<4x64xf32> to vector<4xf32>
    %1403 = vector.shape_cast %1402 : vector<4xf32> to vector<4x1xf32>
    %cst_505 = arith.constant 6.400000e+01 : f32
    %1404 = vector.broadcast %cst_505 : f32 to vector<4x1xf32>
    %1405 = arith.divf %1403, %1404 : vector<4x1xf32>
    %1406 = vector.broadcast %1405 : vector<4x1xf32> to vector<4x64xf32>
    %1407 = arith.subf %1401, %1406 : vector<4x64xf32>
    %1408 = arith.mulf %1407, %1407 : vector<4x64xf32>
    %cst_506 = arith.constant dense<0.000000e+00> : vector<4xf32>
    %1409 = vector.multi_reduction <add>, %1408, %cst_506 [1] : vector<4x64xf32> to vector<4xf32>
    %1410 = vector.shape_cast %1409 : vector<4xf32> to vector<4x1xf32>
    %cst_507 = arith.constant 6.400000e+01 : f32
    %1411 = vector.broadcast %cst_507 : f32 to vector<4x1xf32>
    %1412 = arith.divf %1410, %1411 : vector<4x1xf32>
    %1413 = vector.broadcast %1405 : vector<4x1xf32> to vector<4x64xf32>
    %1414 = arith.subf %1401, %1413 : vector<4x64xf32>
    %cst_508 = arith.constant 9.99999974E-6 : f32
    %1415 = vector.broadcast %cst_508 : f32 to vector<4x1xf32>
    %1416 = arith.addf %1412, %1415 : vector<4x1xf32>
    %1417 = math.rsqrt %1416 : vector<4x1xf32>
    %1418 = vector.broadcast %1417 : vector<4x1xf32> to vector<4x64xf32>
    %1419 = arith.mulf %1414, %1418 : vector<4x64xf32>
    %1420 = vector.broadcast %8 : vector<1x64xf32> to vector<4x64xf32>
    %1421 = arith.mulf %1419, %1420 : vector<4x64xf32>
    %1422 = vector.broadcast %9 : vector<1x64xf32> to vector<4x64xf32>
    %1423 = arith.addf %1421, %1422 : vector<4x64xf32>
    %1424 = arith.index_cast %c7_i32_489 : i32 to index
    %c0_509 = arith.constant 0 : index
    %c0_510 = arith.constant 0 : index
    %1425 = vector.load %arg20[%1424, %c0_509, %c0_510] : memref<8x4x64xf32, #tpu.memory_space<vmem>>, vector<1x4x64xf32>
    %1426 = vector.shape_cast %1425 : vector<1x4x64xf32> to vector<4x64xf32>
    %1427 = vector.shape_cast %1423 : vector<4x64xf32> to vector<1x4x64xf32>
    tpu.vector_store %arg20[%1424, %c0_509, %c0_510], %1427 {strides = array<i32>} : memref<8x4x64xf32, #tpu.memory_space<vmem>>, vector<1x4x64xf32>,
    %c8_i32_511 = arith.constant 8 : i32
    %c0_512 = arith.constant 0 : index
    %c0_513 = arith.constant 0 : index
    %c0_514 = arith.constant 0 : index
    %1428 = vector.load %arg20[%c0_512, %c0_513, %c0_514] : memref<8x4x64xf32, #tpu.memory_space<vmem>>, vector<8x4x64xf32>
    %1429 = vector.shape_cast %1428 : vector<8x4x64xf32> to vector<32x64xf32>
    %c0_515 = arith.constant 0 : index
    %c0_516 = arith.constant 0 : index
    %1430 = vector.load %arg9[%c0_515, %c0_516] : memref<64x256xf32, #tpu.memory_space<vmem>>, vector<64x256xf32>
    %cst_517 = arith.constant dense<0.000000e+00> : vector<32x256xf32>
    %1431 = tpu.matmul %1429, %1430, %cst_517 {dimension_numbers = #tpu.dot_dimension_numbers<[1], [0], [0], [1], [0, 0, 1, 1], [], []>} : vector<32x64xf32>, vector<64x256xf32>, vector<32x256xf32> -> vector<32x256xf32>
    %c0_518 = arith.constant 0 : index
    %c0_519 = arith.constant 0 : index
    %1432 = vector.load %arg11[%c0_518, %c0_519] : memref<1x256xf32, #tpu.memory_space<vmem>>, vector<1x256xf32>
    %1433 = vector.broadcast %1432 : vector<1x256xf32> to vector<32x256xf32>
    %1434 = arith.addf %1431, %1433 : vector<32x256xf32>
    %1435 = vector.shape_cast %1434 : vector<32x256xf32> to vector<8x4x256xf32>
    %c0_520 = arith.constant 0 : index
    %c0_521 = arith.constant 0 : index
    %c0_522 = arith.constant 0 : index
    %1436 = vector.load %arg21[%c0_520, %c0_521, %c0_522] : memref<8x4x256xf32, #tpu.memory_space<vmem>>, vector<8x4x256xf32>
    tpu.vector_store %arg21[%c0_520, %c0_521, %c0_522], %1435 {strides = array<i32>} : memref<8x4x256xf32, #tpu.memory_space<vmem>>, vector<8x4x256xf32>,
    %c0_523 = arith.constant 0 : index
    %c0_524 = arith.constant 0 : index
    %1437 = vector.load %arg1[%c0_523, %c0_524] : memref<4x1xi32, #tpu.memory_space<vmem>>, vector<4x1xi32>
    %cst_525 = arith.constant -1.000000e+30 : f32
    %1438 = vector.broadcast %cst_525 : f32 to vector<4x64xf32>
    %c0_i32_526 = arith.constant 0 : i32
    %1439 = arith.index_cast %c0_i32_526 : i32 to index
    %c0_527 = arith.constant 0 : index
    %c0_528 = arith.constant 0 : index
    %1440 = vector.load %arg21[%1439, %c0_527, %c0_528] : memref<8x4x256xf32, #tpu.memory_space<vmem>>, vector<1x4x256xf32>
    %1441 = vector.shape_cast %1440 : vector<1x4x256xf32> to vector<4x256xf32>
    %cst_529 = arith.constant dense<0.000000e+00> : vector<4x256xf32>
    %1442 = tpu.matmul %1, %5, %cst_529 {dimension_numbers = #tpu.dot_dimension_numbers<[1], [0], [0], [1], [0, 0, 1, 1], [], []>} : vector<4x64xf32>, vector<64x256xf32>, vector<4x256xf32> -> vector<4x256xf32>
    %1443 = arith.addf %1441, %1442 : vector<4x256xf32>
    %1444 = vector.extract_strided_slice %1443 {offsets = [0, 0], sizes = [4, 64], strides = [1, 1]} : vector<4x256xf32> to vector<4x64xf32>
    %cst_530 = arith.constant 5.000000e-01 : f32
    %1445 = vector.broadcast %cst_530 : f32 to vector<4x64xf32>
    %1446 = arith.mulf %1445, %1444 : vector<4x64xf32>
    %1447 = math.tanh %1446 : vector<4x64xf32>
    %cst_531 = arith.constant 5.000000e-01 : f32
    %1448 = vector.broadcast %cst_531 : f32 to vector<4x64xf32>
    %1449 = arith.mulf %1448, %1447 : vector<4x64xf32>
    %cst_532 = arith.constant 5.000000e-01 : f32
    %1450 = vector.broadcast %cst_532 : f32 to vector<4x64xf32>
    %1451 = arith.addf %1449, %1450 : vector<4x64xf32>
    %1452 = vector.extract_strided_slice %1443 {offsets = [0, 64], sizes = [4, 64], strides = [1, 1]} : vector<4x256xf32> to vector<4x64xf32>
    %cst_533 = arith.constant 5.000000e-01 : f32
    %1453 = vector.broadcast %cst_533 : f32 to vector<4x64xf32>
    %1454 = arith.mulf %1453, %1452 : vector<4x64xf32>
    %1455 = math.tanh %1454 : vector<4x64xf32>
    %cst_534 = arith.constant 5.000000e-01 : f32
    %1456 = vector.broadcast %cst_534 : f32 to vector<4x64xf32>
    %1457 = arith.mulf %1456, %1455 : vector<4x64xf32>
    %cst_535 = arith.constant 5.000000e-01 : f32
    %1458 = vector.broadcast %cst_535 : f32 to vector<4x64xf32>
    %1459 = arith.addf %1457, %1458 : vector<4x64xf32>
    %1460 = vector.extract_strided_slice %1443 {offsets = [0, 128], sizes = [4, 64], strides = [1, 1]} : vector<4x256xf32> to vector<4x64xf32>
    %1461 = math.tanh %1460 : vector<4x64xf32>
    %1462 = vector.extract_strided_slice %1443 {offsets = [0, 192], sizes = [4, 64], strides = [1, 1]} : vector<4x256xf32> to vector<4x64xf32>
    %cst_536 = arith.constant 5.000000e-01 : f32
    %1463 = vector.broadcast %cst_536 : f32 to vector<4x64xf32>
    %1464 = arith.mulf %1463, %1462 : vector<4x64xf32>
    %1465 = math.tanh %1464 : vector<4x64xf32>
    %cst_537 = arith.constant 5.000000e-01 : f32
    %1466 = vector.broadcast %cst_537 : f32 to vector<4x64xf32>
    %1467 = arith.mulf %1466, %1465 : vector<4x64xf32>
    %cst_538 = arith.constant 5.000000e-01 : f32
    %1468 = vector.broadcast %cst_538 : f32 to vector<4x64xf32>
    %1469 = arith.addf %1467, %1468 : vector<4x64xf32>
    %1470 = arith.mulf %1459, %1 : vector<4x64xf32>
    %1471 = arith.mulf %1451, %1461 : vector<4x64xf32>
    %1472 = arith.addf %1470, %1471 : vector<4x64xf32>
    %1473 = math.tanh %1472 : vector<4x64xf32>
    %1474 = arith.mulf %1469, %1473 : vector<4x64xf32>
    %1475 = vector.broadcast %c0_i32_526 : i32 to vector<4x1xi32>
    %1476 = arith.cmpi eq, %1437, %1475 : vector<4x1xi32>
    %1477 = vector.shape_cast %1476 : vector<4x1xi1> to vector<4x1xi1>
    %1478 = vector.broadcast %1477 : vector<4x1xi1> to vector<4x64xi1>
    %1479 = arith.select %1478, %1474, %1 : vector<4x64xi1>, vector<4x64xf32>
    %1480 = arith.maximumf %1438, %1474 : vector<4x64xf32>
    %c1_i32_539 = arith.constant 1 : i32
    %1481 = arith.index_cast %c1_i32_539 : i32 to index
    %c0_540 = arith.constant 0 : index
    %c0_541 = arith.constant 0 : index
    %1482 = vector.load %arg21[%1481, %c0_540, %c0_541] : memref<8x4x256xf32, #tpu.memory_space<vmem>>, vector<1x4x256xf32>
    %1483 = vector.shape_cast %1482 : vector<1x4x256xf32> to vector<4x256xf32>
    %cst_542 = arith.constant dense<0.000000e+00> : vector<4x256xf32>
    %1484 = tpu.matmul %1474, %5, %cst_542 {dimension_numbers = #tpu.dot_dimension_numbers<[1], [0], [0], [1], [0, 0, 1, 1], [], []>} : vector<4x64xf32>, vector<64x256xf32>, vector<4x256xf32> -> vector<4x256xf32>
    %1485 = arith.addf %1483, %1484 : vector<4x256xf32>
    %1486 = vector.extract_strided_slice %1485 {offsets = [0, 0], sizes = [4, 64], strides = [1, 1]} : vector<4x256xf32> to vector<4x64xf32>
    %cst_543 = arith.constant 5.000000e-01 : f32
    %1487 = vector.broadcast %cst_543 : f32 to vector<4x64xf32>
    %1488 = arith.mulf %1487, %1486 : vector<4x64xf32>
    %1489 = math.tanh %1488 : vector<4x64xf32>
    %cst_544 = arith.constant 5.000000e-01 : f32
    %1490 = vector.broadcast %cst_544 : f32 to vector<4x64xf32>
    %1491 = arith.mulf %1490, %1489 : vector<4x64xf32>
    %cst_545 = arith.constant 5.000000e-01 : f32
    %1492 = vector.broadcast %cst_545 : f32 to vector<4x64xf32>
    %1493 = arith.addf %1491, %1492 : vector<4x64xf32>
    %1494 = vector.extract_strided_slice %1485 {offsets = [0, 64], sizes = [4, 64], strides = [1, 1]} : vector<4x256xf32> to vector<4x64xf32>
    %cst_546 = arith.constant 5.000000e-01 : f32
    %1495 = vector.broadcast %cst_546 : f32 to vector<4x64xf32>
    %1496 = arith.mulf %1495, %1494 : vector<4x64xf32>
    %1497 = math.tanh %1496 : vector<4x64xf32>
    %cst_547 = arith.constant 5.000000e-01 : f32
    %1498 = vector.broadcast %cst_547 : f32 to vector<4x64xf32>
    %1499 = arith.mulf %1498, %1497 : vector<4x64xf32>
    %cst_548 = arith.constant 5.000000e-01 : f32
    %1500 = vector.broadcast %cst_548 : f32 to vector<4x64xf32>
    %1501 = arith.addf %1499, %1500 : vector<4x64xf32>
    %1502 = vector.extract_strided_slice %1485 {offsets = [0, 128], sizes = [4, 64], strides = [1, 1]} : vector<4x256xf32> to vector<4x64xf32>
    %1503 = math.tanh %1502 : vector<4x64xf32>
    %1504 = vector.extract_strided_slice %1485 {offsets = [0, 192], sizes = [4, 64], strides = [1, 1]} : vector<4x256xf32> to vector<4x64xf32>
    %cst_549 = arith.constant 5.000000e-01 : f32
    %1505 = vector.broadcast %cst_549 : f32 to vector<4x64xf32>
    %1506 = arith.mulf %1505, %1504 : vector<4x64xf32>
    %1507 = math.tanh %1506 : vector<4x64xf32>
    %cst_550 = arith.constant 5.000000e-01 : f32
    %1508 = vector.broadcast %cst_550 : f32 to vector<4x64xf32>
    %1509 = arith.mulf %1508, %1507 : vector<4x64xf32>
    %cst_551 = arith.constant 5.000000e-01 : f32
    %1510 = vector.broadcast %cst_551 : f32 to vector<4x64xf32>
    %1511 = arith.addf %1509, %1510 : vector<4x64xf32>
    %1512 = arith.mulf %1501, %1472 : vector<4x64xf32>
    %1513 = arith.mulf %1493, %1503 : vector<4x64xf32>
    %1514 = arith.addf %1512, %1513 : vector<4x64xf32>
    %1515 = math.tanh %1514 : vector<4x64xf32>
    %1516 = arith.mulf %1511, %1515 : vector<4x64xf32>
    %1517 = vector.broadcast %c1_i32_539 : i32 to vector<4x1xi32>
    %1518 = arith.cmpi eq, %1437, %1517 : vector<4x1xi32>
    %1519 = vector.shape_cast %1518 : vector<4x1xi1> to vector<4x1xi1>
    %1520 = vector.broadcast %1519 : vector<4x1xi1> to vector<4x64xi1>
    %1521 = arith.select %1520, %1516, %1479 : vector<4x64xi1>, vector<4x64xf32>
    %1522 = arith.maximumf %1480, %1516 : vector<4x64xf32>
    %c2_i32_552 = arith.constant 2 : i32
    %1523 = arith.index_cast %c2_i32_552 : i32 to index
    %c0_553 = arith.constant 0 : index
    %c0_554 = arith.constant 0 : index
    %1524 = vector.load %arg21[%1523, %c0_553, %c0_554] : memref<8x4x256xf32, #tpu.memory_space<vmem>>, vector<1x4x256xf32>
    %1525 = vector.shape_cast %1524 : vector<1x4x256xf32> to vector<4x256xf32>
    %cst_555 = arith.constant dense<0.000000e+00> : vector<4x256xf32>
    %1526 = tpu.matmul %1516, %5, %cst_555 {dimension_numbers = #tpu.dot_dimension_numbers<[1], [0], [0], [1], [0, 0, 1, 1], [], []>} : vector<4x64xf32>, vector<64x256xf32>, vector<4x256xf32> -> vector<4x256xf32>
    %1527 = arith.addf %1525, %1526 : vector<4x256xf32>
    %1528 = vector.extract_strided_slice %1527 {offsets = [0, 0], sizes = [4, 64], strides = [1, 1]} : vector<4x256xf32> to vector<4x64xf32>
    %cst_556 = arith.constant 5.000000e-01 : f32
    %1529 = vector.broadcast %cst_556 : f32 to vector<4x64xf32>
    %1530 = arith.mulf %1529, %1528 : vector<4x64xf32>
    %1531 = math.tanh %1530 : vector<4x64xf32>
    %cst_557 = arith.constant 5.000000e-01 : f32
    %1532 = vector.broadcast %cst_557 : f32 to vector<4x64xf32>
    %1533 = arith.mulf %1532, %1531 : vector<4x64xf32>
    %cst_558 = arith.constant 5.000000e-01 : f32
    %1534 = vector.broadcast %cst_558 : f32 to vector<4x64xf32>
    %1535 = arith.addf %1533, %1534 : vector<4x64xf32>
    %1536 = vector.extract_strided_slice %1527 {offsets = [0, 64], sizes = [4, 64], strides = [1, 1]} : vector<4x256xf32> to vector<4x64xf32>
    %cst_559 = arith.constant 5.000000e-01 : f32
    %1537 = vector.broadcast %cst_559 : f32 to vector<4x64xf32>
    %1538 = arith.mulf %1537, %1536 : vector<4x64xf32>
    %1539 = math.tanh %1538 : vector<4x64xf32>
    %cst_560 = arith.constant 5.000000e-01 : f32
    %1540 = vector.broadcast %cst_560 : f32 to vector<4x64xf32>
    %1541 = arith.mulf %1540, %1539 : vector<4x64xf32>
    %cst_561 = arith.constant 5.000000e-01 : f32
    %1542 = vector.broadcast %cst_561 : f32 to vector<4x64xf32>
    %1543 = arith.addf %1541, %1542 : vector<4x64xf32>
    %1544 = vector.extract_strided_slice %1527 {offsets = [0, 128], sizes = [4, 64], strides = [1, 1]} : vector<4x256xf32> to vector<4x64xf32>
    %1545 = math.tanh %1544 : vector<4x64xf32>
    %1546 = vector.extract_strided_slice %1527 {offsets = [0, 192], sizes = [4, 64], strides = [1, 1]} : vector<4x256xf32> to vector<4x64xf32>
    %cst_562 = arith.constant 5.000000e-01 : f32
    %1547 = vector.broadcast %cst_562 : f32 to vector<4x64xf32>
    %1548 = arith.mulf %1547, %1546 : vector<4x64xf32>
    %1549 = math.tanh %1548 : vector<4x64xf32>
    %cst_563 = arith.constant 5.000000e-01 : f32
    %1550 = vector.broadcast %cst_563 : f32 to vector<4x64xf32>
    %1551 = arith.mulf %1550, %1549 : vector<4x64xf32>
    %cst_564 = arith.constant 5.000000e-01 : f32
    %1552 = vector.broadcast %cst_564 : f32 to vector<4x64xf32>
    %1553 = arith.addf %1551, %1552 : vector<4x64xf32>
    %1554 = arith.mulf %1543, %1514 : vector<4x64xf32>
    %1555 = arith.mulf %1535, %1545 : vector<4x64xf32>
    %1556 = arith.addf %1554, %1555 : vector<4x64xf32>
    %1557 = math.tanh %1556 : vector<4x64xf32>
    %1558 = arith.mulf %1553, %1557 : vector<4x64xf32>
    %1559 = vector.broadcast %c2_i32_552 : i32 to vector<4x1xi32>
    %1560 = arith.cmpi eq, %1437, %1559 : vector<4x1xi32>
    %1561 = vector.shape_cast %1560 : vector<4x1xi1> to vector<4x1xi1>
    %1562 = vector.broadcast %1561 : vector<4x1xi1> to vector<4x64xi1>
    %1563 = arith.select %1562, %1558, %1521 : vector<4x64xi1>, vector<4x64xf32>
    %1564 = arith.maximumf %1522, %1558 : vector<4x64xf32>
    %c3_i32_565 = arith.constant 3 : i32
    %1565 = arith.index_cast %c3_i32_565 : i32 to index
    %c0_566 = arith.constant 0 : index
    %c0_567 = arith.constant 0 : index
    %1566 = vector.load %arg21[%1565, %c0_566, %c0_567] : memref<8x4x256xf32, #tpu.memory_space<vmem>>, vector<1x4x256xf32>
    %1567 = vector.shape_cast %1566 : vector<1x4x256xf32> to vector<4x256xf32>
    %cst_568 = arith.constant dense<0.000000e+00> : vector<4x256xf32>
    %1568 = tpu.matmul %1558, %5, %cst_568 {dimension_numbers = #tpu.dot_dimension_numbers<[1], [0], [0], [1], [0, 0, 1, 1], [], []>} : vector<4x64xf32>, vector<64x256xf32>, vector<4x256xf32> -> vector<4x256xf32>
    %1569 = arith.addf %1567, %1568 : vector<4x256xf32>
    %1570 = vector.extract_strided_slice %1569 {offsets = [0, 0], sizes = [4, 64], strides = [1, 1]} : vector<4x256xf32> to vector<4x64xf32>
    %cst_569 = arith.constant 5.000000e-01 : f32
    %1571 = vector.broadcast %cst_569 : f32 to vector<4x64xf32>
    %1572 = arith.mulf %1571, %1570 : vector<4x64xf32>
    %1573 = math.tanh %1572 : vector<4x64xf32>
    %cst_570 = arith.constant 5.000000e-01 : f32
    %1574 = vector.broadcast %cst_570 : f32 to vector<4x64xf32>
    %1575 = arith.mulf %1574, %1573 : vector<4x64xf32>
    %cst_571 = arith.constant 5.000000e-01 : f32
    %1576 = vector.broadcast %cst_571 : f32 to vector<4x64xf32>
    %1577 = arith.addf %1575, %1576 : vector<4x64xf32>
    %1578 = vector.extract_strided_slice %1569 {offsets = [0, 64], sizes = [4, 64], strides = [1, 1]} : vector<4x256xf32> to vector<4x64xf32>
    %cst_572 = arith.constant 5.000000e-01 : f32
    %1579 = vector.broadcast %cst_572 : f32 to vector<4x64xf32>
    %1580 = arith.mulf %1579, %1578 : vector<4x64xf32>
    %1581 = math.tanh %1580 : vector<4x64xf32>
    %cst_573 = arith.constant 5.000000e-01 : f32
    %1582 = vector.broadcast %cst_573 : f32 to vector<4x64xf32>
    %1583 = arith.mulf %1582, %1581 : vector<4x64xf32>
    %cst_574 = arith.constant 5.000000e-01 : f32
    %1584 = vector.broadcast %cst_574 : f32 to vector<4x64xf32>
    %1585 = arith.addf %1583, %1584 : vector<4x64xf32>
    %1586 = vector.extract_strided_slice %1569 {offsets = [0, 128], sizes = [4, 64], strides = [1, 1]} : vector<4x256xf32> to vector<4x64xf32>
    %1587 = math.tanh %1586 : vector<4x64xf32>
    %1588 = vector.extract_strided_slice %1569 {offsets = [0, 192], sizes = [4, 64], strides = [1, 1]} : vector<4x256xf32> to vector<4x64xf32>
    %cst_575 = arith.constant 5.000000e-01 : f32
    %1589 = vector.broadcast %cst_575 : f32 to vector<4x64xf32>
    %1590 = arith.mulf %1589, %1588 : vector<4x64xf32>
    %1591 = math.tanh %1590 : vector<4x64xf32>
    %cst_576 = arith.constant 5.000000e-01 : f32
    %1592 = vector.broadcast %cst_576 : f32 to vector<4x64xf32>
    %1593 = arith.mulf %1592, %1591 : vector<4x64xf32>
    %cst_577 = arith.constant 5.000000e-01 : f32
    %1594 = vector.broadcast %cst_577 : f32 to vector<4x64xf32>
    %1595 = arith.addf %1593, %1594 : vector<4x64xf32>
    %1596 = arith.mulf %1585, %1556 : vector<4x64xf32>
    %1597 = arith.mulf %1577, %1587 : vector<4x64xf32>
    %1598 = arith.addf %1596, %1597 : vector<4x64xf32>
    %1599 = math.tanh %1598 : vector<4x64xf32>
    %1600 = arith.mulf %1595, %1599 : vector<4x64xf32>
    %1601 = vector.broadcast %c3_i32_565 : i32 to vector<4x1xi32>
    %1602 = arith.cmpi eq, %1437, %1601 : vector<4x1xi32>
    %1603 = vector.shape_cast %1602 : vector<4x1xi1> to vector<4x1xi1>
    %1604 = vector.broadcast %1603 : vector<4x1xi1> to vector<4x64xi1>
    %1605 = arith.select %1604, %1600, %1563 : vector<4x64xi1>, vector<4x64xf32>
    %1606 = arith.maximumf %1564, %1600 : vector<4x64xf32>
    %c4_i32_578 = arith.constant 4 : i32
    %1607 = arith.index_cast %c4_i32_578 : i32 to index
    %c0_579 = arith.constant 0 : index
    %c0_580 = arith.constant 0 : index
    %1608 = vector.load %arg21[%1607, %c0_579, %c0_580] : memref<8x4x256xf32, #tpu.memory_space<vmem>>, vector<1x4x256xf32>
    %1609 = vector.shape_cast %1608 : vector<1x4x256xf32> to vector<4x256xf32>
    %cst_581 = arith.constant dense<0.000000e+00> : vector<4x256xf32>
    %1610 = tpu.matmul %1600, %5, %cst_581 {dimension_numbers = #tpu.dot_dimension_numbers<[1], [0], [0], [1], [0, 0, 1, 1], [], []>} : vector<4x64xf32>, vector<64x256xf32>, vector<4x256xf32> -> vector<4x256xf32>
    %1611 = arith.addf %1609, %1610 : vector<4x256xf32>
    %1612 = vector.extract_strided_slice %1611 {offsets = [0, 0], sizes = [4, 64], strides = [1, 1]} : vector<4x256xf32> to vector<4x64xf32>
    %cst_582 = arith.constant 5.000000e-01 : f32
    %1613 = vector.broadcast %cst_582 : f32 to vector<4x64xf32>
    %1614 = arith.mulf %1613, %1612 : vector<4x64xf32>
    %1615 = math.tanh %1614 : vector<4x64xf32>
    %cst_583 = arith.constant 5.000000e-01 : f32
    %1616 = vector.broadcast %cst_583 : f32 to vector<4x64xf32>
    %1617 = arith.mulf %1616, %1615 : vector<4x64xf32>
    %cst_584 = arith.constant 5.000000e-01 : f32
    %1618 = vector.broadcast %cst_584 : f32 to vector<4x64xf32>
    %1619 = arith.addf %1617, %1618 : vector<4x64xf32>
    %1620 = vector.extract_strided_slice %1611 {offsets = [0, 64], sizes = [4, 64], strides = [1, 1]} : vector<4x256xf32> to vector<4x64xf32>
    %cst_585 = arith.constant 5.000000e-01 : f32
    %1621 = vector.broadcast %cst_585 : f32 to vector<4x64xf32>
    %1622 = arith.mulf %1621, %1620 : vector<4x64xf32>
    %1623 = math.tanh %1622 : vector<4x64xf32>
    %cst_586 = arith.constant 5.000000e-01 : f32
    %1624 = vector.broadcast %cst_586 : f32 to vector<4x64xf32>
    %1625 = arith.mulf %1624, %1623 : vector<4x64xf32>
    %cst_587 = arith.constant 5.000000e-01 : f32
    %1626 = vector.broadcast %cst_587 : f32 to vector<4x64xf32>
    %1627 = arith.addf %1625, %1626 : vector<4x64xf32>
    %1628 = vector.extract_strided_slice %1611 {offsets = [0, 128], sizes = [4, 64], strides = [1, 1]} : vector<4x256xf32> to vector<4x64xf32>
    %1629 = math.tanh %1628 : vector<4x64xf32>
    %1630 = vector.extract_strided_slice %1611 {offsets = [0, 192], sizes = [4, 64], strides = [1, 1]} : vector<4x256xf32> to vector<4x64xf32>
    %cst_588 = arith.constant 5.000000e-01 : f32
    %1631 = vector.broadcast %cst_588 : f32 to vector<4x64xf32>
    %1632 = arith.mulf %1631, %1630 : vector<4x64xf32>
    %1633 = math.tanh %1632 : vector<4x64xf32>
    %cst_589 = arith.constant 5.000000e-01 : f32
    %1634 = vector.broadcast %cst_589 : f32 to vector<4x64xf32>
    %1635 = arith.mulf %1634, %1633 : vector<4x64xf32>
    %cst_590 = arith.constant 5.000000e-01 : f32
    %1636 = vector.broadcast %cst_590 : f32 to vector<4x64xf32>
    %1637 = arith.addf %1635, %1636 : vector<4x64xf32>
    %1638 = arith.mulf %1627, %1598 : vector<4x64xf32>
    %1639 = arith.mulf %1619, %1629 : vector<4x64xf32>
    %1640 = arith.addf %1638, %1639 : vector<4x64xf32>
    %1641 = math.tanh %1640 : vector<4x64xf32>
    %1642 = arith.mulf %1637, %1641 : vector<4x64xf32>
    %1643 = vector.broadcast %c4_i32_578 : i32 to vector<4x1xi32>
    %1644 = arith.cmpi eq, %1437, %1643 : vector<4x1xi32>
    %1645 = vector.shape_cast %1644 : vector<4x1xi1> to vector<4x1xi1>
    %1646 = vector.broadcast %1645 : vector<4x1xi1> to vector<4x64xi1>
    %1647 = arith.select %1646, %1642, %1605 : vector<4x64xi1>, vector<4x64xf32>
    %1648 = arith.maximumf %1606, %1642 : vector<4x64xf32>
    %c5_i32_591 = arith.constant 5 : i32
    %1649 = arith.index_cast %c5_i32_591 : i32 to index
    %c0_592 = arith.constant 0 : index
    %c0_593 = arith.constant 0 : index
    %1650 = vector.load %arg21[%1649, %c0_592, %c0_593] : memref<8x4x256xf32, #tpu.memory_space<vmem>>, vector<1x4x256xf32>
    %1651 = vector.shape_cast %1650 : vector<1x4x256xf32> to vector<4x256xf32>
    %cst_594 = arith.constant dense<0.000000e+00> : vector<4x256xf32>
    %1652 = tpu.matmul %1642, %5, %cst_594 {dimension_numbers = #tpu.dot_dimension_numbers<[1], [0], [0], [1], [0, 0, 1, 1], [], []>} : vector<4x64xf32>, vector<64x256xf32>, vector<4x256xf32> -> vector<4x256xf32>
    %1653 = arith.addf %1651, %1652 : vector<4x256xf32>
    %1654 = vector.extract_strided_slice %1653 {offsets = [0, 0], sizes = [4, 64], strides = [1, 1]} : vector<4x256xf32> to vector<4x64xf32>
    %cst_595 = arith.constant 5.000000e-01 : f32
    %1655 = vector.broadcast %cst_595 : f32 to vector<4x64xf32>
    %1656 = arith.mulf %1655, %1654 : vector<4x64xf32>
    %1657 = math.tanh %1656 : vector<4x64xf32>
    %cst_596 = arith.constant 5.000000e-01 : f32
    %1658 = vector.broadcast %cst_596 : f32 to vector<4x64xf32>
    %1659 = arith.mulf %1658, %1657 : vector<4x64xf32>
    %cst_597 = arith.constant 5.000000e-01 : f32
    %1660 = vector.broadcast %cst_597 : f32 to vector<4x64xf32>
    %1661 = arith.addf %1659, %1660 : vector<4x64xf32>
    %1662 = vector.extract_strided_slice %1653 {offsets = [0, 64], sizes = [4, 64], strides = [1, 1]} : vector<4x256xf32> to vector<4x64xf32>
    %cst_598 = arith.constant 5.000000e-01 : f32
    %1663 = vector.broadcast %cst_598 : f32 to vector<4x64xf32>
    %1664 = arith.mulf %1663, %1662 : vector<4x64xf32>
    %1665 = math.tanh %1664 : vector<4x64xf32>
    %cst_599 = arith.constant 5.000000e-01 : f32
    %1666 = vector.broadcast %cst_599 : f32 to vector<4x64xf32>
    %1667 = arith.mulf %1666, %1665 : vector<4x64xf32>
    %cst_600 = arith.constant 5.000000e-01 : f32
    %1668 = vector.broadcast %cst_600 : f32 to vector<4x64xf32>
    %1669 = arith.addf %1667, %1668 : vector<4x64xf32>
    %1670 = vector.extract_strided_slice %1653 {offsets = [0, 128], sizes = [4, 64], strides = [1, 1]} : vector<4x256xf32> to vector<4x64xf32>
    %1671 = math.tanh %1670 : vector<4x64xf32>
    %1672 = vector.extract_strided_slice %1653 {offsets = [0, 192], sizes = [4, 64], strides = [1, 1]} : vector<4x256xf32> to vector<4x64xf32>
    %cst_601 = arith.constant 5.000000e-01 : f32
    %1673 = vector.broadcast %cst_601 : f32 to vector<4x64xf32>
    %1674 = arith.mulf %1673, %1672 : vector<4x64xf32>
    %1675 = math.tanh %1674 : vector<4x64xf32>
    %cst_602 = arith.constant 5.000000e-01 : f32
    %1676 = vector.broadcast %cst_602 : f32 to vector<4x64xf32>
    %1677 = arith.mulf %1676, %1675 : vector<4x64xf32>
    %cst_603 = arith.constant 5.000000e-01 : f32
    %1678 = vector.broadcast %cst_603 : f32 to vector<4x64xf32>
    %1679 = arith.addf %1677, %1678 : vector<4x64xf32>
    %1680 = arith.mulf %1669, %1640 : vector<4x64xf32>
    %1681 = arith.mulf %1661, %1671 : vector<4x64xf32>
    %1682 = arith.addf %1680, %1681 : vector<4x64xf32>
    %1683 = math.tanh %1682 : vector<4x64xf32>
    %1684 = arith.mulf %1679, %1683 : vector<4x64xf32>
    %1685 = vector.broadcast %c5_i32_591 : i32 to vector<4x1xi32>
    %1686 = arith.cmpi eq, %1437, %1685 : vector<4x1xi32>
    %1687 = vector.shape_cast %1686 : vector<4x1xi1> to vector<4x1xi1>
    %1688 = vector.broadcast %1687 : vector<4x1xi1> to vector<4x64xi1>
    %1689 = arith.select %1688, %1684, %1647 : vector<4x64xi1>, vector<4x64xf32>
    %1690 = arith.maximumf %1648, %1684 : vector<4x64xf32>
    %c6_i32_604 = arith.constant 6 : i32
    %1691 = arith.index_cast %c6_i32_604 : i32 to index
    %c0_605 = arith.constant 0 : index
    %c0_606 = arith.constant 0 : index
    %1692 = vector.load %arg21[%1691, %c0_605, %c0_606] : memref<8x4x256xf32, #tpu.memory_space<vmem>>, vector<1x4x256xf32>
    %1693 = vector.shape_cast %1692 : vector<1x4x256xf32> to vector<4x256xf32>
    %cst_607 = arith.constant dense<0.000000e+00> : vector<4x256xf32>
    %1694 = tpu.matmul %1684, %5, %cst_607 {dimension_numbers = #tpu.dot_dimension_numbers<[1], [0], [0], [1], [0, 0, 1, 1], [], []>} : vector<4x64xf32>, vector<64x256xf32>, vector<4x256xf32> -> vector<4x256xf32>
    %1695 = arith.addf %1693, %1694 : vector<4x256xf32>
    %1696 = vector.extract_strided_slice %1695 {offsets = [0, 0], sizes = [4, 64], strides = [1, 1]} : vector<4x256xf32> to vector<4x64xf32>
    %cst_608 = arith.constant 5.000000e-01 : f32
    %1697 = vector.broadcast %cst_608 : f32 to vector<4x64xf32>
    %1698 = arith.mulf %1697, %1696 : vector<4x64xf32>
    %1699 = math.tanh %1698 : vector<4x64xf32>
    %cst_609 = arith.constant 5.000000e-01 : f32
    %1700 = vector.broadcast %cst_609 : f32 to vector<4x64xf32>
    %1701 = arith.mulf %1700, %1699 : vector<4x64xf32>
    %cst_610 = arith.constant 5.000000e-01 : f32
    %1702 = vector.broadcast %cst_610 : f32 to vector<4x64xf32>
    %1703 = arith.addf %1701, %1702 : vector<4x64xf32>
    %1704 = vector.extract_strided_slice %1695 {offsets = [0, 64], sizes = [4, 64], strides = [1, 1]} : vector<4x256xf32> to vector<4x64xf32>
    %cst_611 = arith.constant 5.000000e-01 : f32
    %1705 = vector.broadcast %cst_611 : f32 to vector<4x64xf32>
    %1706 = arith.mulf %1705, %1704 : vector<4x64xf32>
    %1707 = math.tanh %1706 : vector<4x64xf32>
    %cst_612 = arith.constant 5.000000e-01 : f32
    %1708 = vector.broadcast %cst_612 : f32 to vector<4x64xf32>
    %1709 = arith.mulf %1708, %1707 : vector<4x64xf32>
    %cst_613 = arith.constant 5.000000e-01 : f32
    %1710 = vector.broadcast %cst_613 : f32 to vector<4x64xf32>
    %1711 = arith.addf %1709, %1710 : vector<4x64xf32>
    %1712 = vector.extract_strided_slice %1695 {offsets = [0, 128], sizes = [4, 64], strides = [1, 1]} : vector<4x256xf32> to vector<4x64xf32>
    %1713 = math.tanh %1712 : vector<4x64xf32>
    %1714 = vector.extract_strided_slice %1695 {offsets = [0, 192], sizes = [4, 64], strides = [1, 1]} : vector<4x256xf32> to vector<4x64xf32>
    %cst_614 = arith.constant 5.000000e-01 : f32
    %1715 = vector.broadcast %cst_614 : f32 to vector<4x64xf32>
    %1716 = arith.mulf %1715, %1714 : vector<4x64xf32>
    %1717 = math.tanh %1716 : vector<4x64xf32>
    %cst_615 = arith.constant 5.000000e-01 : f32
    %1718 = vector.broadcast %cst_615 : f32 to vector<4x64xf32>
    %1719 = arith.mulf %1718, %1717 : vector<4x64xf32>
    %cst_616 = arith.constant 5.000000e-01 : f32
    %1720 = vector.broadcast %cst_616 : f32 to vector<4x64xf32>
    %1721 = arith.addf %1719, %1720 : vector<4x64xf32>
    %1722 = arith.mulf %1711, %1682 : vector<4x64xf32>
    %1723 = arith.mulf %1703, %1713 : vector<4x64xf32>
    %1724 = arith.addf %1722, %1723 : vector<4x64xf32>
    %1725 = math.tanh %1724 : vector<4x64xf32>
    %1726 = arith.mulf %1721, %1725 : vector<4x64xf32>
    %1727 = vector.broadcast %c6_i32_604 : i32 to vector<4x1xi32>
    %1728 = arith.cmpi eq, %1437, %1727 : vector<4x1xi32>
    %1729 = vector.shape_cast %1728 : vector<4x1xi1> to vector<4x1xi1>
    %1730 = vector.broadcast %1729 : vector<4x1xi1> to vector<4x64xi1>
    %1731 = arith.select %1730, %1726, %1689 : vector<4x64xi1>, vector<4x64xf32>
    %1732 = arith.maximumf %1690, %1726 : vector<4x64xf32>
    %c7_i32_617 = arith.constant 7 : i32
    %1733 = arith.index_cast %c7_i32_617 : i32 to index
    %c0_618 = arith.constant 0 : index
    %c0_619 = arith.constant 0 : index
    %1734 = vector.load %arg21[%1733, %c0_618, %c0_619] : memref<8x4x256xf32, #tpu.memory_space<vmem>>, vector<1x4x256xf32>
    %1735 = vector.shape_cast %1734 : vector<1x4x256xf32> to vector<4x256xf32>
    %cst_620 = arith.constant dense<0.000000e+00> : vector<4x256xf32>
    %1736 = tpu.matmul %1726, %5, %cst_620 {dimension_numbers = #tpu.dot_dimension_numbers<[1], [0], [0], [1], [0, 0, 1, 1], [], []>} : vector<4x64xf32>, vector<64x256xf32>, vector<4x256xf32> -> vector<4x256xf32>
    %1737 = arith.addf %1735, %1736 : vector<4x256xf32>
    %1738 = vector.extract_strided_slice %1737 {offsets = [0, 0], sizes = [4, 64], strides = [1, 1]} : vector<4x256xf32> to vector<4x64xf32>
    %cst_621 = arith.constant 5.000000e-01 : f32
    %1739 = vector.broadcast %cst_621 : f32 to vector<4x64xf32>
    %1740 = arith.mulf %1739, %1738 : vector<4x64xf32>
    %1741 = math.tanh %1740 : vector<4x64xf32>
    %cst_622 = arith.constant 5.000000e-01 : f32
    %1742 = vector.broadcast %cst_622 : f32 to vector<4x64xf32>
    %1743 = arith.mulf %1742, %1741 : vector<4x64xf32>
    %cst_623 = arith.constant 5.000000e-01 : f32
    %1744 = vector.broadcast %cst_623 : f32 to vector<4x64xf32>
    %1745 = arith.addf %1743, %1744 : vector<4x64xf32>
    %1746 = vector.extract_strided_slice %1737 {offsets = [0, 64], sizes = [4, 64], strides = [1, 1]} : vector<4x256xf32> to vector<4x64xf32>
    %cst_624 = arith.constant 5.000000e-01 : f32
    %1747 = vector.broadcast %cst_624 : f32 to vector<4x64xf32>
    %1748 = arith.mulf %1747, %1746 : vector<4x64xf32>
    %1749 = math.tanh %1748 : vector<4x64xf32>
    %cst_625 = arith.constant 5.000000e-01 : f32
    %1750 = vector.broadcast %cst_625 : f32 to vector<4x64xf32>
    %1751 = arith.mulf %1750, %1749 : vector<4x64xf32>
    %cst_626 = arith.constant 5.000000e-01 : f32
    %1752 = vector.broadcast %cst_626 : f32 to vector<4x64xf32>
    %1753 = arith.addf %1751, %1752 : vector<4x64xf32>
    %1754 = vector.extract_strided_slice %1737 {offsets = [0, 128], sizes = [4, 64], strides = [1, 1]} : vector<4x256xf32> to vector<4x64xf32>
    %1755 = math.tanh %1754 : vector<4x64xf32>
    %1756 = vector.extract_strided_slice %1737 {offsets = [0, 192], sizes = [4, 64], strides = [1, 1]} : vector<4x256xf32> to vector<4x64xf32>
    %cst_627 = arith.constant 5.000000e-01 : f32
    %1757 = vector.broadcast %cst_627 : f32 to vector<4x64xf32>
    %1758 = arith.mulf %1757, %1756 : vector<4x64xf32>
    %1759 = math.tanh %1758 : vector<4x64xf32>
    %cst_628 = arith.constant 5.000000e-01 : f32
    %1760 = vector.broadcast %cst_628 : f32 to vector<4x64xf32>
    %1761 = arith.mulf %1760, %1759 : vector<4x64xf32>
    %cst_629 = arith.constant 5.000000e-01 : f32
    %1762 = vector.broadcast %cst_629 : f32 to vector<4x64xf32>
    %1763 = arith.addf %1761, %1762 : vector<4x64xf32>
    %1764 = arith.mulf %1753, %1724 : vector<4x64xf32>
    %1765 = arith.mulf %1745, %1755 : vector<4x64xf32>
    %1766 = arith.addf %1764, %1765 : vector<4x64xf32>
    %1767 = math.tanh %1766 : vector<4x64xf32>
    %1768 = arith.mulf %1763, %1767 : vector<4x64xf32>
    %1769 = vector.broadcast %c7_i32_617 : i32 to vector<4x1xi32>
    %1770 = arith.cmpi eq, %1437, %1769 : vector<4x1xi32>
    %1771 = vector.shape_cast %1770 : vector<4x1xi1> to vector<4x1xi1>
    %1772 = vector.broadcast %1771 : vector<4x1xi1> to vector<4x64xi1>
    %1773 = arith.select %1772, %1768, %1731 : vector<4x64xi1>, vector<4x64xf32>
    %1774 = arith.maximumf %1732, %1768 : vector<4x64xf32>
    %c8_i32_630 = arith.constant 8 : i32
    %1775 = tpu.concatenate %1773, %1774 in 1 : vector<4x64xf32>, vector<4x64xf32> -> vector<4x128xf32>
    %c0_631 = arith.constant 0 : index
    %c0_632 = arith.constant 0 : index
    %1776 = vector.load %arg16[%c0_631, %c0_632] : memref<1x128xf32, #tpu.memory_space<vmem>>, vector<1x128xf32>
    %1777 = vector.broadcast %1776 : vector<1x128xf32> to vector<4x128xf32>
    %1778 = arith.mulf %1775, %1777 : vector<4x128xf32>
    %c0_633 = arith.constant 0 : index
    %c0_634 = arith.constant 0 : index
    %1779 = vector.load %arg17[%c0_633, %c0_634] : memref<1x128xf32, #tpu.memory_space<vmem>>, vector<1x128xf32>
    %1780 = vector.broadcast %1779 : vector<1x128xf32> to vector<4x128xf32>
    %1781 = arith.addf %1778, %1780 : vector<4x128xf32>
    %cst_635 = arith.constant 0.000000e+00 : f32
    %1782 = vector.broadcast %cst_635 : f32 to vector<4x128xf32>
    %1783 = arith.maximumf %1781, %1782 : vector<4x128xf32>
    %c0_636 = arith.constant 0 : index
    %c0_637 = arith.constant 0 : index
    %1784 = vector.load %arg18[%c0_636, %c0_637] : memref<4x128xf32, #tpu.memory_space<vmem>>, vector<4x128xf32>
    tpu.vector_store %arg18[%c0_636, %c0_637], %1783 {strides = array<i32>} : memref<4x128xf32, #tpu.memory_space<vmem>>, vector<4x128xf32>,
    return
  }
}

</mosaic_0001>

<llo_original>
// kernel: lstm_extraction_v2_forward.1
$region0: #{lstm_extraction_v2_forward.1}
  #allocation0 [shape = 'u32[]', space=smem, size = 0x4, offset = 0x4, fixed_abs, tag = 'smem constant byte address 0x4 - core index']
  #allocation1 [shape = 'u32[144,128]{1,0:T(1,128)}', space=vmem, size = 0x12000, scoped, tag = 'internal scratch']
  #allocation2 [shape = 'f32[8,4,32]{2,1,0:T(4,128)}', space=vmem, size = 0x4000, scoped, tag = 'scratch operand']
  #allocation3 [shape = 'f32[8,4,64]{2,1,0:T(4,128)}', space=vmem, size = 0x4000, scoped, tag = 'scratch operand']
  #allocation4 [shape = 'f32[8,4,256]{2,1,0:T(4,128)}', space=vmem, size = 0x8000, scoped, tag = 'scratch operand']
  %s0 = inlined_call_operand.vmem [shape: f32[8,4,32], index: 0, kind: input, shape index: {}]
  %s1 = inlined_call_operand.vmem [shape: s32[4,1], index: 1, kind: input, shape index: {}]
  %s2 = inlined_call_operand.vmem [shape: f32[32,256], index: 2, kind: input, shape index: {}]
  %s3 = inlined_call_operand.vmem [shape: f32[1,256], index: 3, kind: input, shape index: {}]
  %s4 = inlined_call_operand.vmem [shape: f32[32,128], index: 4, kind: input, shape index: {}]
  %s5 = inlined_call_operand.hbm [shape: f32[32,128], index: 5, kind: input, shape index: {}]
  %s6 = inlined_call_operand.vmem [shape: f32[64,256], index: 6, kind: input, shape index: {}]
  %s7 = inlined_call_operand.hbm [shape: f32[64,256], index: 7, kind: input, shape index: {}]
  %s8 = inlined_call_operand.vmem [shape: f32[1,256], index: 8, kind: input, shape index: {}]
  %s9 = inlined_call_operand.hbm [shape: f32[64,256], index: 9, kind: input, shape index: {}]
  %s10 = inlined_call_operand.hbm [shape: f32[64,256], index: 10, kind: input, shape index: {}]
  %s11 = inlined_call_operand.vmem [shape: f32[1,256], index: 11, kind: input, shape index: {}]
  %s12 = inlined_call_operand.hbm [shape: f32[1,64], index: 12, kind: input, shape index: {}]
  %s13 = inlined_call_operand.hbm [shape: f32[1,64], index: 13, kind: input, shape index: {}]
  %s14 = inlined_call_operand.hbm [shape: f32[1,64], index: 14, kind: input, shape index: {}]
  %s15 = inlined_call_operand.hbm [shape: f32[1,64], index: 15, kind: input, shape index: {}]
  %s16 = inlined_call_operand.hbm [shape: f32[1,128], index: 16, kind: input, shape index: {}]
  %s17 = inlined_call_operand.hbm [shape: f32[1,128], index: 17, kind: input, shape index: {}]
  %s18 = inlined_call_operand.hbm [shape: f32[4,128], index: 18, kind: output, shape index: {}]
  %s19 = sld [smem:[#allocation0]]
  $region122: #{lstm_extraction_v2_forward.1} parent=0
    _
  %s21 = ssub.s32 1, %s19
  %s22 = scalar_select 0, %s21, %s19
  $region1: #{lstm_extraction_v2_forward.1} parent=0
    #allocation5 [shape = 'u8[16384]{0}', space=vmem, size = 0x4000, scoped, tag = 'input window, operand 5, single buffered']
    #allocation6 [shape = 's32[1]{0}', space=sflag, size = 0x4, scoped, tag = 'scoped memory for lstm_extraction_v2_forward.1']
    #allocation7 [shape = 's32[1]{0}', space=sflag, size = 0x4, scoped, tag = 'scoped memory for lstm_extraction_v2_forward.1']
    #allocation8 [shape = 'u8[65536]{0}', space=vmem, size = 0x10000, scoped, tag = 'input window, operand 7, single buffered']
    #allocation9 [shape = 's32[1]{0}', space=sflag, size = 0x4, scoped, tag = 'scoped memory for lstm_extraction_v2_forward.1']
    #allocation10 [shape = 'u8[65536]{0}', space=vmem, size = 0x10000, scoped, tag = 'input window, operand 9, single buffered']
    #allocation11 [shape = 'u8[65536]{0}', space=vmem, size = 0x10000, scoped, tag = 'input window, operand 10, single buffered']
    #allocation12 [shape = 's32[1]{0}', space=sflag, size = 0x4, scoped, tag = 'scoped memory for lstm_extraction_v2_forward.1']
    #allocation13 [shape = 'u8[512]{0}', space=vmem, size = 0x400, scoped, tag = 'input window, operand 12, single buffered']
    #allocation14 [shape = 'u8[512]{0}', space=vmem, size = 0x400, scoped, tag = 'input window, operand 13, single buffered']
    #allocation15 [shape = 's32[1]{0}', space=sflag, size = 0x4, scoped, tag = 'scoped memory for lstm_extraction_v2_forward.1']
    #allocation16 [shape = 'u8[512]{0}', space=vmem, size = 0x400, scoped, tag = 'input window, operand 14, single buffered']
    #allocation17 [shape = 'u8[512]{0}', space=vmem, size = 0x400, scoped, tag = 'input window, operand 15, single buffered']
    #allocation18 [shape = 's32[1]{0}', space=sflag, size = 0x4, scoped, tag = 'scoped memory for lstm_extraction_v2_forward.1']
    #allocation19 [shape = 'u8[512]{0}', space=vmem, size = 0x400, scoped, tag = 'input window, operand 16, single buffered']
    #allocation20 [shape = 'u8[512]{0}', space=vmem, size = 0x400, scoped, tag = 'input window, operand 17, single buffered']
    #allocation21 [shape = 's32[1]{0}', space=sflag, size = 0x4, scoped, tag = 'scoped memory for lstm_extraction_v2_forward.1']
    #allocation22 [shape = 'u8[2048]{0}', space=vmem, size = 0x800, scoped, tag = 'output window, operand 0, single buffered']
    %23 = vsyncpa [#allocation6], 0
    %24 = vsyncpa [#allocation9], 0
    %25 = vsyncpa [#allocation12], 0
    %26 = vsyncpa [#allocation15], 0
    %27 = vsyncpa [#allocation18], 0
    %28 = vsyncpa [#allocation21], 0
    %29 = vsyncpa [#allocation7], 0
    // Predicated region
    $region2: #{lstm_extraction_v2_forward.1} parent=1 // pred_check
      _
    $region3: #{lstm_extraction_v2_forward.1} parent=1 // pred_check_branch
      %31 = sbr.rel (0) target = $region5
    $region4: #{lstm_extraction_v2_forward.1} parent=1 // pred_region
      _
    $region5: #{lstm_extraction_v2_forward.1} parent=1 // pred_fallthru
      _
    // Predicated region
    $region6: #{lstm_extraction_v2_forward.1} parent=1 // pred_check
      _
    $region7: #{lstm_extraction_v2_forward.1} parent=1 // pred_check_branch
      %33 = sbr.rel (0) target = $region9
    $region8: #{lstm_extraction_v2_forward.1} parent=1 // pred_region
      _
    $region9: #{lstm_extraction_v2_forward.1} parent=1 // pred_fallthru
      _
    // Predicated region
    $region10: #{lstm_extraction_v2_forward.1} parent=1 // pred_check
      _
    $region11: #{lstm_extraction_v2_forward.1} parent=1 // pred_check_branch
      %35 = sbr.rel (0) target = $region13
    $region12: #{lstm_extraction_v2_forward.1} parent=1 // pred_region
      _
    $region13: #{lstm_extraction_v2_forward.1} parent=1 // pred_fallthru
      _
    // Predicated region
    $region14: #{lstm_extraction_v2_forward.1} parent=1 // pred_check
      _
    $region15: #{lstm_extraction_v2_forward.1} parent=1 // pred_check_branch
      %37 = sbr.rel (0) target = $region17
    $region16: #{lstm_extraction_v2_forward.1} parent=1 // pred_region
      _
    $region17: #{lstm_extraction_v2_forward.1} parent=1 // pred_fallthru
      _
    // Predicated region
    $region18: #{lstm_extraction_v2_forward.1} parent=1 // pred_check
      _
    $region19: #{lstm_extraction_v2_forward.1} parent=1 // pred_check_branch
      %39 = sbr.rel (0) target = $region21
    $region20: #{lstm_extraction_v2_forward.1} parent=1 // pred_region
      _
    $region21: #{lstm_extraction_v2_forward.1} parent=1 // pred_fallthru
      _
    // Predicated region
    $region22: #{lstm_extraction_v2_forward.1} parent=1 // pred_check
      _
    $region23: #{lstm_extraction_v2_forward.1} parent=1 // pred_check_branch
      %41 = sbr.rel (0) target = $region25
    $region24: #{lstm_extraction_v2_forward.1} parent=1 // pred_region
      %s43 = ssub.s32 512, 512
      %44 = vsyncadd [#allocation6], %s43
      %s45 = sshll.u32 [#allocation5], 4
      %s46 = int_to_ptr.vmem [resolvable:$true] %s45
      %51 = dma.hbm_to_vmem [thread:$0]  %s5, 512, %s46, [#allocation6], 128, 128, 8
    $region25: #{lstm_extraction_v2_forward.1} parent=1 // pred_fallthru
      _
    // Predicated region
    $region26: #{lstm_extraction_v2_forward.1} parent=1 // pred_check
      _
    $region27: #{lstm_extraction_v2_forward.1} parent=1 // pred_check_branch
      %53 = sbr.rel (0) target = $region29
    $region28: #{lstm_extraction_v2_forward.1} parent=1 // pred_region
      _
    $region29: #{lstm_extraction_v2_forward.1} parent=1 // pred_fallthru
      _
    // Predicated region
    $region30: #{lstm_extraction_v2_forward.1} parent=1 // pred_check
      _
    $region31: #{lstm_extraction_v2_forward.1} parent=1 // pred_check_branch
      %55 = sbr.rel (0) target = $region33
    $region32: #{lstm_extraction_v2_forward.1} parent=1 // pred_region
      %s57 = ssub.s32 2048, 2048
      %58 = vsyncadd [#allocation9], %s57
      %s59 = sshll.u32 [#allocation8], 4
      %s60 = int_to_ptr.vmem [resolvable:$true] %s59
      %65 = dma.hbm_to_vmem [thread:$0]  %s7, 2048, %s60, [#allocation9], 256, 256, 16
    $region33: #{lstm_extraction_v2_forward.1} parent=1 // pred_fallthru
      _
    // Predicated region
    $region34: #{lstm_extraction_v2_forward.1} parent=1 // pred_check
      _
    $region35: #{lstm_extraction_v2_forward.1} parent=1 // pred_check_branch
      %67 = sbr.rel (0) target = $region37
    $region36: #{lstm_extraction_v2_forward.1} parent=1 // pred_region
      _
    $region37: #{lstm_extraction_v2_forward.1} parent=1 // pred_fallthru
      _
    // Predicated region
    $region38: #{lstm_extraction_v2_forward.1} parent=1 // pred_check
      _
    $region39: #{lstm_extraction_v2_forward.1} parent=1 // pred_check_branch
      %69 = sbr.rel (0) target = $region41
    $region40: #{lstm_extraction_v2_forward.1} parent=1 // pred_region
      %s71 = ssub.s32 2048, 2048
      %72 = vsyncadd [#allocation9], %s71
      %s73 = sshll.u32 [#allocation10], 4
      %s74 = int_to_ptr.vmem [resolvable:$true] %s73
      %79 = dma.hbm_to_vmem [thread:$0]  %s9, 2048, %s74, [#allocation9], 256, 256, 16
    $region41: #{lstm_extraction_v2_forward.1} parent=1 // pred_fallthru
      _
    // Predicated region
    $region42: #{lstm_extraction_v2_forward.1} parent=1 // pred_check
      _
    $region43: #{lstm_extraction_v2_forward.1} parent=1 // pred_check_branch
      %81 = sbr.rel (0) target = $region45
    $region44: #{lstm_extraction_v2_forward.1} parent=1 // pred_region
      %s83 = ssub.s32 2048, 2048
      %84 = vsyncadd [#allocation12], %s83
      %s85 = sshll.u32 [#allocation11], 4
      %s86 = int_to_ptr.vmem [resolvable:$true] %s85
      %91 = dma.hbm_to_vmem [thread:$0]  %s10, 2048, %s86, [#allocation12], 256, 256, 16
    $region45: #{lstm_extraction_v2_forward.1} parent=1 // pred_fallthru
      _
    // Predicated region
    $region46: #{lstm_extraction_v2_forward.1} parent=1 // pred_check
      _
    $region47: #{lstm_extraction_v2_forward.1} parent=1 // pred_check_branch
      %93 = sbr.rel (0) target = $region49
    $region48: #{lstm_extraction_v2_forward.1} parent=1 // pred_region
      _
    $region49: #{lstm_extraction_v2_forward.1} parent=1 // pred_fallthru
      _
    // Predicated region
    $region50: #{lstm_extraction_v2_forward.1} parent=1 // pred_check
      _
    $region51: #{lstm_extraction_v2_forward.1} parent=1 // pred_check_branch
      %95 = sbr.rel (0) target = $region53
    $region52: #{lstm_extraction_v2_forward.1} parent=1 // pred_region
      %s97 = ssub.s32 16, 16
      %98 = vsyncadd [#allocation12], %s97
      %s100 = sshll.u32 [#allocation13], 4
      %s101 = int_to_ptr.vmem [resolvable:$true] %s100
      %103 = dma.hbm_to_vmem [thread:$0]  %s12, 16, %s101, [#allocation12]
    $region53: #{lstm_extraction_v2_forward.1} parent=1 // pred_fallthru
      _
    // Predicated region
    $region54: #{lstm_extraction_v2_forward.1} parent=1 // pred_check
      _
    $region55: #{lstm_extraction_v2_forward.1} parent=1 // pred_check_branch
      %105 = sbr.rel (0) target = $region57
    $region56: #{lstm_extraction_v2_forward.1} parent=1 // pred_region
      %s107 = ssub.s32 16, 16
      %108 = vsyncadd [#allocation15], %s107
      %s110 = sshll.u32 [#allocation14], 4
      %s111 = int_to_ptr.vmem [resolvable:$true] %s110
      %113 = dma.hbm_to_vmem [thread:$0]  %s13, 16, %s111, [#allocation15]
    $region57: #{lstm_extraction_v2_forward.1} parent=1 // pred_fallthru
      _
    // Predicated region
    $region58: #{lstm_extraction_v2_forward.1} parent=1 // pred_check
      _
    $region59: #{lstm_extraction_v2_forward.1} parent=1 // pred_check_branch
      %115 = sbr.rel (0) target = $region61
    $region60: #{lstm_extraction_v2_forward.1} parent=1 // pred_region
      %s117 = ssub.s32 16, 16
      %118 = vsyncadd [#allocation15], %s117
      %s120 = sshll.u32 [#allocation16], 4
      %s121 = int_to_ptr.vmem [resolvable:$true] %s120
      %123 = dma.hbm_to_vmem [thread:$0]  %s14, 16, %s121, [#allocation15]
    $region61: #{lstm_extraction_v2_forward.1} parent=1 // pred_fallthru
      _
    // Predicated region
    $region62: #{lstm_extraction_v2_forward.1} parent=1 // pred_check
      _
    $region63: #{lstm_extraction_v2_forward.1} parent=1 // pred_check_branch
      %125 = sbr.rel (0) target = $region65
    $region64: #{lstm_extraction_v2_forward.1} parent=1 // pred_region
      %s127 = ssub.s32 16, 16
      %128 = vsyncadd [#allocation18], %s127
      %s130 = sshll.u32 [#allocation17], 4
      %s131 = int_to_ptr.vmem [resolvable:$true] %s130
      %133 = dma.hbm_to_vmem [thread:$0]  %s15, 16, %s131, [#allocation18]
    $region65: #{lstm_extraction_v2_forward.1} parent=1 // pred_fallthru
      _
    // Predicated region
    $region66: #{lstm_extraction_v2_forward.1} parent=1 // pred_check
      _
    $region67: #{lstm_extraction_v2_forward.1} parent=1 // pred_check_branch
      %135 = sbr.rel (0) target = $region69
    $region68: #{lstm_extraction_v2_forward.1} parent=1 // pred_region
      %s137 = ssub.s32 16, 16
      %138 = vsyncadd [#allocation18], %s137
      %s140 = sshll.u32 [#allocation19], 4
      %s141 = int_to_ptr.vmem [resolvable:$true] %s140
      %143 = dma.hbm_to_vmem [thread:$0]  %s16, 16, %s141, [#allocation18]
    $region69: #{lstm_extraction_v2_forward.1} parent=1 // pred_fallthru
      _
    // Predicated region
    $region70: #{lstm_extraction_v2_forward.1} parent=1 // pred_check
      _
    $region71: #{lstm_extraction_v2_forward.1} parent=1 // pred_check_branch
      %145 = sbr.rel (0) target = $region73
    $region72: #{lstm_extraction_v2_forward.1} parent=1 // pred_region
      %s147 = ssub.s32 16, 16
      %148 = vsyncadd [#allocation21], %s147
      %s150 = sshll.u32 [#allocation20], 4
      %s151 = int_to_ptr.vmem [resolvable:$true] %s150
      %153 = dma.hbm_to_vmem [thread:$0]  %s17, 16, %s151, [#allocation21]
    $region73: #{lstm_extraction_v2_forward.1} parent=1 // pred_fallthru
      _
    // Predicated region
    $region74: #{lstm_extraction_v2_forward.1} parent=1 // pred_check
      _
    $region75: #{lstm_extraction_v2_forward.1} parent=1 // pred_check_branch
      %155 = sbr.rel (0) target = $region77
    $region76: #{lstm_extraction_v2_forward.1} parent=1 // pred_region
      %156 = dma.done [#allocation6], 512
    $region77: #{lstm_extraction_v2_forward.1} parent=1 // pred_fallthru
      _
    // Predicated region
    $region78: #{lstm_extraction_v2_forward.1} parent=1 // pred_check
      _
    $region79: #{lstm_extraction_v2_forward.1} parent=1 // pred_check_branch
      %158 = sbr.rel (0) target = $region81
    $region80: #{lstm_extraction_v2_forward.1} parent=1 // pred_region
      %159 = dma.done [#allocation9], 2048
    $region81: #{lstm_extraction_v2_forward.1} parent=1 // pred_fallthru
      _
    // Predicated region
    $region82: #{lstm_extraction_v2_forward.1} parent=1 // pred_check
      _
    $region83: #{lstm_extraction_v2_forward.1} parent=1 // pred_check_branch
      %161 = sbr.rel (0) target = $region85
    $region84: #{lstm_extraction_v2_forward.1} parent=1 // pred_region
      %162 = dma.done [#allocation9], 2048
    $region85: #{lstm_extraction_v2_forward.1} parent=1 // pred_fallthru
      _
    // Predicated region
    $region86: #{lstm_extraction_v2_forward.1} parent=1 // pred_check
      _
    $region87: #{lstm_extraction_v2_forward.1} parent=1 // pred_check_branch
      %164 = sbr.rel (0) target = $region89
    $region88: #{lstm_extraction_v2_forward.1} parent=1 // pred_region
      %165 = dma.done [#allocation12], 2048
    $region89: #{lstm_extraction_v2_forward.1} parent=1 // pred_fallthru
      _
    // Predicated region
    $region90: #{lstm_extraction_v2_forward.1} parent=1 // pred_check
      _
    $region91: #{lstm_extraction_v2_forward.1} parent=1 // pred_check_branch
      %167 = sbr.rel (0) target = $region93
    $region92: #{lstm_extraction_v2_forward.1} parent=1 // pred_region
      %168 = dma.done [#allocation12], 16
    $region93: #{lstm_extraction_v2_forward.1} parent=1 // pred_fallthru
      _
    // Predicated region
    $region94: #{lstm_extraction_v2_forward.1} parent=1 // pred_check
      _
    $region95: #{lstm_extraction_v2_forward.1} parent=1 // pred_check_branch
      %170 = sbr.rel (0) target = $region97
    $region96: #{lstm_extraction_v2_forward.1} parent=1 // pred_region
      %171 = dma.done [#allocation15], 16
    $region97: #{lstm_extraction_v2_forward.1} parent=1 // pred_fallthru
      _
    // Predicated region
    $region98: #{lstm_extraction_v2_forward.1} parent=1 // pred_check
      _
    $region99: #{lstm_extraction_v2_forward.1} parent=1 // pred_check_branch
      %173 = sbr.rel (0) target = $region101
    $region100: #{lstm_extraction_v2_forward.1} parent=1 // pred_region
      %174 = dma.done [#allocation15], 16
    $region101: #{lstm_extraction_v2_forward.1} parent=1 // pred_fallthru
      _
    // Predicated region
    $region102: #{lstm_extraction_v2_forward.1} parent=1 // pred_check
      _
    $region103: #{lstm_extraction_v2_forward.1} parent=1 // pred_check_branch
      %176 = sbr.rel (0) target = $region105
    $region104: #{lstm_extraction_v2_forward.1} parent=1 // pred_region
      %177 = dma.done [#allocation18], 16
    $region105: #{lstm_extraction_v2_forward.1} parent=1 // pred_fallthru
      _
    // Predicated region
    $region106: #{lstm_extraction_v2_forward.1} parent=1 // pred_check
      _
    $region107: #{lstm_extraction_v2_forward.1} parent=1 // pred_check_branch
      %179 = sbr.rel (0) target = $region109
    $region108: #{lstm_extraction_v2_forward.1} parent=1 // pred_region
      %180 = dma.done [#allocation18], 16
    $region109: #{lstm_extraction_v2_forward.1} parent=1 // pred_fallthru
      _
    // Predicated region
    $region110: #{lstm_extraction_v2_forward.1} parent=1 // pred_check
      _
    $region111: #{lstm_extraction_v2_forward.1} parent=1 // pred_check_branch
      %182 = sbr.rel (0) target = $region113
    $region112: #{lstm_extraction_v2_forward.1} parent=1 // pred_region
      %183 = dma.done [#allocation21], 16
    $region113: #{lstm_extraction_v2_forward.1} parent=1 // pred_fallthru
      _
    %v184 = vld [vmem:[%s4] sm:$0xff]
    %v185 = vld [vmem:[%s4 + $0x8] sm:$0xff]
    %v186 = vld [vmem:[%s4 + $0x10] sm:$0xff]
    %v187 = vld [vmem:[%s4 + $0x18] sm:$0xff]
    %v188 = vld [vmem:[#allocation5] sm:$0xff]
    %v189 = vld [vmem:[#allocation5 + $0x8] sm:$0xff]
    %v190 = vld [vmem:[#allocation5 + $0x10] sm:$0xff]
    %v191 = vld [vmem:[#allocation5 + $0x18] sm:$0xff]
    %v192 = vld [vmem:[#allocation8] sm:$0xff]
    %v193 = vld [vmem:[#allocation8 + $0x8] sm:$0xff]
    %v194 = vld [vmem:[#allocation8 + $0x10] sm:$0xff]
    %v195 = vld [vmem:[#allocation8 + $0x18] sm:$0xff]
    %v196 = vld [vmem:[#allocation8 + $0x20] sm:$0xff]
    %v197 = vld [vmem:[#allocation8 + $0x28] sm:$0xff]
    %v198 = vld [vmem:[#allocation8 + $0x30] sm:$0xff]
    %v199 = vld [vmem:[#allocation8 + $0x38] sm:$0xff]
    %v200 = vld [vmem:[#allocation8 + $0x40] sm:$0xff]
    %v201 = vld [vmem:[#allocation8 + $0x48] sm:$0xff]
    %v202 = vld [vmem:[#allocation8 + $0x50] sm:$0xff]
    %v203 = vld [vmem:[#allocation8 + $0x58] sm:$0xff]
    %v204 = vld [vmem:[#allocation8 + $0x60] sm:$0xff]
    %v205 = vld [vmem:[#allocation8 + $0x68] sm:$0xff]
    %v206 = vld [vmem:[#allocation8 + $0x70] sm:$0xff]
    %v207 = vld [vmem:[#allocation8 + $0x78] sm:$0xff]
    %v208 = vld [vmem:[#allocation11] sm:$0xff]
    %v209 = vld [vmem:[#allocation11 + $0x8] sm:$0xff]
    %v210 = vld [vmem:[#allocation11 + $0x10] sm:$0xff]
    %v211 = vld [vmem:[#allocation11 + $0x18] sm:$0xff]
    %v212 = vld [vmem:[#allocation11 + $0x20] sm:$0xff]
    %v213 = vld [vmem:[#allocation11 + $0x28] sm:$0xff]
    %v214 = vld [vmem:[#allocation11 + $0x30] sm:$0xff]
    %v215 = vld [vmem:[#allocation11 + $0x38] sm:$0xff]
    %v216 = vld [vmem:[#allocation11 + $0x40] sm:$0xff]
    %v217 = vld [vmem:[#allocation11 + $0x48] sm:$0xff]
    %v218 = vld [vmem:[#allocation11 + $0x50] sm:$0xff]
    %v219 = vld [vmem:[#allocation11 + $0x58] sm:$0xff]
    %v220 = vld [vmem:[#allocation11 + $0x60] sm:$0xff]
    %v221 = vld [vmem:[#allocation11 + $0x68] sm:$0xff]
    %v222 = vld [vmem:[#allocation11 + $0x70] sm:$0xff]
    %v223 = vld [vmem:[#allocation11 + $0x78] sm:$0xff]
    %v224 = vld [vmem:[#allocation13] sm:$0x1]
    %v225 = vld [vmem:[#allocation14] sm:$0x1]
    %v226 = vld [vmem:[#allocation16] sm:$0x1]
    %v227 = vld [vmem:[#allocation17] sm:$0x1]
    %v228 = vld [vmem:[%s0] sm:$0xf]
    %v229 = vld [vmem:[%s0 + $0x4] sm:$0xf]
    %v230 = vld [vmem:[%s0 + $0x8] sm:$0xf]
    %v231 = vld [vmem:[%s0 + $0xc] sm:$0xf]
    %v232 = vld [vmem:[%s0 + $0x10] sm:$0xf]
    %v233 = vld [vmem:[%s0 + $0x14] sm:$0xf]
    %v234 = vld [vmem:[%s0 + $0x18] sm:$0xf]
    %v235 = vld [vmem:[%s0 + $0x1c] sm:$0xf]
    %v236 = vld [vmem:[%s2] sm:$0xff]
    %v237 = vld [vmem:[%s2 + $0x8] sm:$0xff]
    %v238 = vld [vmem:[%s2 + $0x10] sm:$0xff]
    %v239 = vld [vmem:[%s2 + $0x18] sm:$0xff]
    %v240 = vld [vmem:[%s2 + $0x20] sm:$0xff]
    %v241 = vld [vmem:[%s2 + $0x28] sm:$0xff]
    %v242 = vld [vmem:[%s2 + $0x30] sm:$0xff]
    %v243 = vld [vmem:[%s2 + $0x38] sm:$0xff]
    %v244 = vld [vmem:[%s3] sm:$0x3]
    %v246 = vlaneseq
    %v247 = vshrl.u32 %v246, 7
    %v248 = vsub.s32 0, %v247
    %v249 = vrot.slane %v244, %v248
    %v250 = vlaneseq
    %v251 = vshrl.u32 %v250, 7
    %v252 = vsub.s32 1, %v251
    %v253 = vrot.slane %v244, %v252
    %v264 = vcombine.low %v228, %v229
    %v265 = vcombine.low %v230, %v231
    %v266 = vcombine.low %v232, %v233
    %v267 = vcombine.low %v234, %v235
    %vm268 = vcmask 261120
    %v269 = vsel %vm268, %v264, 0
    %v271 = vsel %vm268, %v265, 0
    %v273 = vsel %vm268, %v266, 0
    %v275 = vsel %vm268, %v267, 0
    %277 = vmatprep.subr.mxu0 0.0
    %278 = vmatpush1.msra.mxu0 0.0
    %279 = vmatprep.subr.mxu0 0.0
    %280 = vmatpush1.msra.mxu0 0.0
    %281 = vmatprep.subr.mxu0 0.0
    %282 = vmatpush1.msra.mxu0 0.0
    %283 = vmatprep.subr.mxu0 0.0
    %284 = vmatpush1.msra.mxu0 0.0
    %285 = vmatprep.subr.mxu0 0.0
    %286 = vmatpush1.msra.mxu0 0.0
    %287 = vmatprep.subr.mxu0 0.0
    %288 = vmatpush1.msra.mxu0 0.0
    %289 = vmatprep.subr.mxu0 0.0
    %290 = vmatpush1.msra.mxu0 0.0
    %291 = vmatprep.subr.mxu0 0.0
    %292 = vmatpush1.msra.mxu0 0.0
    %293 = vmatprep.subr.mxu0 0.0
    %294 = vmatpush1.msra.mxu0 0.0
    %295 = vmatprep.subr.mxu0 0.0
    %296 = vmatpush1.msra.mxu0 0.0
    %297 = vmatprep.subr.mxu0 0.0
    %298 = vmatpush1.msra.mxu0 0.0
    %299 = vmatprep.subr.mxu0 0.0
    %300 = vmatpush1.msra.mxu0 0.0
    %301 = vmatprep.subr.mxu0 %v243
    %302 = vmatpush1.msra.mxu0 %v242
    %303 = vmatprep.subr.mxu0 %v241
    %304 = vmatpush1.msra.mxu0 %v240
    %305 = vmatprep.subr.mxu0 %v239
    %306 = vmatpush1.msra.mxu0 %v238
    %307 = vmatprep.subr.mxu0 %v237
    %308 = vmatpush1.msra.mxu0 %v236
    %309 = vmatprep.subr.mxu0 0.0
    %310 = vmatpush2.msra.mxu0 0.0
    %311 = vmatprep.subr.mxu0 0.0
    %312 = vmatpush2.msra.mxu0 0.0
    %313 = vmatprep.subr.mxu0 0.0
    %314 = vmatpush2.msra.mxu0 0.0
    %315 = vmatprep.subr.mxu0 0.0
    %316 = vmatpush2.msra.mxu0 0.0
    %317 = vmatprep.subr.mxu0 0.0
    %318 = vmatpush2.msra.mxu0 0.0
    %319 = vmatprep.subr.mxu0 0.0
    %320 = vmatpush2.msra.mxu0 0.0
    %321 = vmatprep.subr.mxu0 0.0
    %322 = vmatpush2.msra.mxu0 0.0
    %323 = vmatprep.subr.mxu0 0.0
    %324 = vmatpush2.msra.mxu0 0.0
    %325 = vmatprep.subr.mxu0 0.0
    %326 = vmatpush2.msra.mxu0 0.0
    %327 = vmatprep.subr.mxu0 0.0
    %328 = vmatpush2.msra.mxu0 0.0
    %329 = vmatprep.subr.mxu0 0.0
    %330 = vmatpush2.msra.mxu0 0.0
    %331 = vmatprep.subr.mxu0 0.0
    %332 = vmatpush2.msra.mxu0 0.0
    %333 = vmatprep.subr.mxu0 0.0
    %334 = vmatpush2.msra.mxu0 0.0
    %335 = vmatprep.subr.mxu0 0.0
    %336 = vmatpush2.msra.mxu0 0.0
    %337 = vmatprep.subr.mxu0 0.0
    %338 = vmatpush2.msra.mxu0 0.0
    %339 = vmatprep.subr.mxu0 0.0
    %340 = vmatpush2.msra.mxu0 0.0
    %341 = vmatprep.mubr.f32.mxu0 0.0
    %342 = vmatmul.mubr.f32.gmra.mxu0 %v269
    %v343 = vpop.f32.mrf.mxu0
    %v344 = vadd.f32 %v249, %v343
    %v345 = vpop.f32.mrf.mxu0
    %v346 = vadd.f32 %v253, %v345
    %347 = vmatprep.mubr.f32.mxu0 0.0
    %348 = vmatmul.mubr.f32.gmra.mxu0 %v271
    %v349 = vpop.f32.mrf.mxu0
    %v350 = vadd.f32 %v249, %v349
    %v351 = vpop.f32.mrf.mxu0
    %v352 = vadd.f32 %v253, %v351
    %353 = vmatprep.mubr.f32.mxu0 0.0
    %354 = vmatmul.mubr.f32.gmra.mxu0 %v273
    %v355 = vpop.f32.mrf.mxu0
    %v356 = vadd.f32 %v249, %v355
    %v357 = vpop.f32.mrf.mxu0
    %v358 = vadd.f32 %v253, %v357
    %359 = vmatprep.mubr.f32.mxu0 0.0
    %360 = vmatmul.mubr.f32.gmra.mxu0 %v275
    %v361 = vpop.f32.mrf.mxu0
    %v362 = vadd.f32 %v249, %v361
    %v363 = vpop.f32.mrf.mxu0
    %v364 = vadd.f32 %v253, %v363
    %365 = vdwg.mxu0
    %v374 = vcombine.low %v344, %v346
    %v375 = vcombine.high %v344, %v346
    %v376 = vcombine.low %v350, %v352
    %v377 = vcombine.high %v350, %v352
    %v378 = vcombine.low %v356, %v358
    %v379 = vcombine.high %v356, %v358
    %v380 = vcombine.low %v362, %v364
    %v381 = vcombine.high %v362, %v364
    %390 = vst [vmem:[#allocation4] sm:$0xff] %v374
    %391 = vst [vmem:[#allocation4 + $0x8] sm:$0xff] %v375
    %392 = vst [vmem:[#allocation4 + $0x10] sm:$0xff] %v376
    %393 = vst [vmem:[#allocation4 + $0x18] sm:$0xff] %v377
    %394 = vst [vmem:[#allocation4 + $0x20] sm:$0xff] %v378
    %395 = vst [vmem:[#allocation4 + $0x28] sm:$0xff] %v379
    %396 = vst [vmem:[#allocation4 + $0x30] sm:$0xff] %v380
    %397 = vst [vmem:[#allocation4 + $0x38] sm:$0xff] %v381
    %v398 = vld [vmem:[#allocation4] sm:$0xff]
    %v400 = vsel %vm268, 0.0, 0
    %402 = vmatprep.subr.mxu0 0.0
    %403 = vmatpush1.msra.mxu0 0.0
    %404 = vmatprep.subr.mxu0 0.0
    %405 = vmatpush1.msra.mxu0 0.0
    %406 = vmatprep.subr.mxu0 0.0
    %407 = vmatpush1.msra.mxu0 0.0
    %408 = vmatprep.subr.mxu0 0.0
    %409 = vmatpush1.msra.mxu0 0.0
    %410 = vmatprep.subr.mxu0 0.0
    %411 = vmatpush1.msra.mxu0 0.0
    %412 = vmatprep.subr.mxu0 0.0
    %413 = vmatpush1.msra.mxu0 0.0
    %414 = vmatprep.subr.mxu0 0.0
    %415 = vmatpush1.msra.mxu0 0.0
    %416 = vmatprep.subr.mxu0 0.0
    %417 = vmatpush1.msra.mxu0 0.0
    %418 = vmatprep.subr.mxu0 0.0
    %419 = vmatpush1.msra.mxu0 0.0
    %420 = vmatprep.subr.mxu0 0.0
    %421 = vmatpush1.msra.mxu0 0.0
    %422 = vmatprep.subr.mxu0 0.0
    %423 = vmatpush1.msra.mxu0 0.0
    %424 = vmatprep.subr.mxu0 0.0
    %425 = vmatpush1.msra.mxu0 0.0
    %426 = vmatprep.subr.mxu0 0.0
    %427 = vmatpush1.msra.mxu0 %v187
    %428 = vmatprep.subr.mxu0 0.0
    %429 = vmatpush1.msra.mxu0 %v186
    %430 = vmatprep.subr.mxu0 0.0
    %431 = vmatpush1.msra.mxu0 %v185
    %432 = vmatprep.subr.mxu0 0.0
    %433 = vmatpush1.msra.mxu0 %v184
    %434 = vmatprep.subr.mxu0 0.0
    %435 = vmatpush2.msra.mxu0 0.0
    %436 = vmatprep.subr.mxu0 0.0
    %437 = vmatpush2.msra.mxu0 0.0
    %438 = vmatprep.subr.mxu0 0.0
    %439 = vmatpush2.msra.mxu0 0.0
    %440 = vmatprep.subr.mxu0 0.0
    %441 = vmatpush2.msra.mxu0 0.0
    %442 = vmatprep.subr.mxu0 0.0
    %443 = vmatpush2.msra.mxu0 0.0
    %444 = vmatprep.subr.mxu0 0.0
    %445 = vmatpush2.msra.mxu0 0.0
    %446 = vmatprep.subr.mxu0 0.0
    %447 = vmatpush2.msra.mxu0 0.0
    %448 = vmatprep.subr.mxu0 0.0
    %449 = vmatpush2.msra.mxu0 0.0
    %450 = vmatprep.subr.mxu0 0.0
    %451 = vmatpush2.msra.mxu0 0.0
    %452 = vmatprep.subr.mxu0 0.0
    %453 = vmatpush2.msra.mxu0 0.0
    %454 = vmatprep.subr.mxu0 0.0
    %455 = vmatpush2.msra.mxu0 0.0
    %456 = vmatprep.subr.mxu0 0.0
    %457 = vmatpush2.msra.mxu0 0.0
    %458 = vmatprep.subr.mxu0 0.0
    %459 = vmatpush2.msra.mxu0 0.0
    %460 = vmatprep.subr.mxu0 0.0
    %461 = vmatpush2.msra.mxu0 0.0
    %462 = vmatprep.subr.mxu0 0.0
    %463 = vmatpush2.msra.mxu0 0.0
    %464 = vmatprep.subr.mxu0 0.0
    %465 = vmatpush2.msra.mxu0 0.0
    %466 = vmatprep.mubr.f32.mxu0 0.0
    %467 = vmatmul.mubr.f32.gmra.mxu0 %v400
    %v468 = vpop.f32.mrf.mxu0
    %v469 = vadd.f32 0.0, %v468
    %v470 = vpop.f32.mrf.mxu0
    %471 = vdwg.mxu0
    %v472 = vadd.f32 %v398, %v469
    %v473 = vmul.f32 %v472, 0.5
    %v474 = vtanh.pop %v473
    %v475 = vmul.f32 %v474, 0.5
    %v476 = vadd.f32 %v475, 0.5
    %v477 = vtanh.pop %v472
    %v478 = vmul.f32 %v476, 0.0
    %480 = vrot.lane.b32.xlu0 %v477, 64
    %v481 = vpop.permute.xlu0 %480
    %v483 = vmul.f32 %v476, %v481
    %485 = vrot.lane.b32.xlu0 %v483, 32
    %v486 = vpop.permute.xlu0 %485
    %v488 = vadd.f32 %v478, %v486
    %v489 = vtanh.pop %v488
    %491 = vrot.lane.b32.xlu0 %v489, 64
    %v492 = vpop.permute.xlu0 %491
    %v494 = vmul.f32 %v476, %v492
    %496 = vrot.lane.b32.xlu0 %v494, 32
    %v497 = vpop.permute.xlu0 %496
    %vm499 = vcmask 257024
    %500 = vst.msk [vmem:[#allocation2] sm:$0xf] %vm499, %v497
    %s501 = scalar_lea.vmem [#allocation4], 8
    %v502 = vld [vmem:[%s501] sm:$0xff]
    %v503 = vsel %vm268, %v497, 0
    %505 = vmatprep.subr.mxu0 0.0
    %506 = vmatpush1.msra.mxu0 0.0
    %507 = vmatprep.subr.mxu0 0.0
    %508 = vmatpush1.msra.mxu0 0.0
    %509 = vmatprep.subr.mxu0 0.0
    %510 = vmatpush1.msra.mxu0 0.0
    %511 = vmatprep.subr.mxu0 0.0
    %512 = vmatpush1.msra.mxu0 0.0
    %513 = vmatprep.subr.mxu0 0.0
    %514 = vmatpush1.msra.mxu0 0.0
    %515 = vmatprep.subr.mxu0 0.0
    %516 = vmatpush1.msra.mxu0 0.0
    %517 = vmatprep.subr.mxu0 0.0
    %518 = vmatpush1.msra.mxu0 0.0
    %519 = vmatprep.subr.mxu0 0.0
    %520 = vmatpush1.msra.mxu0 0.0
    %521 = vmatprep.subr.mxu0 0.0
    %522 = vmatpush1.msra.mxu0 0.0
    %523 = vmatprep.subr.mxu0 0.0
    %524 = vmatpush1.msra.mxu0 0.0
    %525 = vmatprep.subr.mxu0 0.0
    %526 = vmatpush1.msra.mxu0 0.0
    %527 = vmatprep.subr.mxu0 0.0
    %528 = vmatpush1.msra.mxu0 0.0
    %529 = vmatprep.subr.mxu0 0.0
    %530 = vmatpush1.msra.mxu0 %v187
    %531 = vmatprep.subr.mxu0 0.0
    %532 = vmatpush1.msra.mxu0 %v186
    %533 = vmatprep.subr.mxu0 0.0
    %534 = vmatpush1.msra.mxu0 %v185
    %535 = vmatprep.subr.mxu0 0.0
    %536 = vmatpush1.msra.mxu0 %v184
    %537 = vmatprep.subr.mxu0 0.0
    %538 = vmatpush2.msra.mxu0 0.0
    %539 = vmatprep.subr.mxu0 0.0
    %540 = vmatpush2.msra.mxu0 0.0
    %541 = vmatprep.subr.mxu0 0.0
    %542 = vmatpush2.msra.mxu0 0.0
    %543 = vmatprep.subr.mxu0 0.0
    %544 = vmatpush2.msra.mxu0 0.0
    %545 = vmatprep.subr.mxu0 0.0
    %546 = vmatpush2.msra.mxu0 0.0
    %547 = vmatprep.subr.mxu0 0.0
    %548 = vmatpush2.msra.mxu0 0.0
    %549 = vmatprep.subr.mxu0 0.0
    %550 = vmatpush2.msra.mxu0 0.0
    %551 = vmatprep.subr.mxu0 0.0
    %552 = vmatpush2.msra.mxu0 0.0
    %553 = vmatprep.subr.mxu0 0.0
    %554 = vmatpush2.msra.mxu0 0.0
    %555 = vmatprep.subr.mxu0 0.0
    %556 = vmatpush2.msra.mxu0 0.0
    %557 = vmatprep.subr.mxu0 0.0
    %558 = vmatpush2.msra.mxu0 0.0
    %559 = vmatprep.subr.mxu0 0.0
    %560 = vmatpush2.msra.mxu0 0.0
    %561 = vmatprep.subr.mxu0 0.0
    %562 = vmatpush2.msra.mxu0 0.0
    %563 = vmatprep.subr.mxu0 0.0
    %564 = vmatpush2.msra.mxu0 0.0
    %565 = vmatprep.subr.mxu0 0.0
    %566 = vmatpush2.msra.mxu0 0.0
    %567 = vmatprep.subr.mxu0 0.0
    %568 = vmatpush2.msra.mxu0 0.0
    %569 = vmatprep.mubr.f32.mxu0 0.0
    %570 = vmatmul.mubr.f32.gmra.mxu0 %v503
    %v571 = vpop.f32.mrf.mxu0
    %v572 = vadd.f32 0.0, %v571
    %v573 = vpop.f32.mrf.mxu0
    %574 = vdwg.mxu0
    %v575 = vadd.f32 %v502, %v572
    %v576 = vmul.f32 %v575, 0.5
    %v577 = vtanh.pop %v576
    %v578 = vmul.f32 %v577, 0.5
    %v579 = vadd.f32 %v578, 0.5
    %v580 = vtanh.pop %v575
    %v581 = vmul.f32 %v579, %v488
    %583 = vrot.lane.b32.xlu0 %v580, 64
    %v584 = vpop.permute.xlu0 %583
    %v586 = vmul.f32 %v579, %v584
    %588 = vrot.lane.b32.xlu0 %v586, 32
    %v589 = vpop.permute.xlu0 %588
    %v591 = vadd.f32 %v581, %v589
    %v592 = vtanh.pop %v591
    %594 = vrot.lane.b32.xlu0 %v592, 64
    %v595 = vpop.permute.xlu0 %594
    %v597 = vmul.f32 %v579, %v595
    %599 = vrot.lane.b32.xlu0 %v597, 32
    %v600 = vpop.permute.xlu0 %599
    %s602 = scalar_lea.vmem [#allocation2], 4
    %603 = vst.msk [vmem:[%s602] sm:$0xf] %vm499, %v600
    %s604 = scalar_lea.vmem [#allocation4], 16
    %v605 = vld [vmem:[%s604] sm:$0xff]
    %v606 = vsel %vm268, %v600, 0
    %608 = vmatprep.subr.mxu0 0.0
    %609 = vmatpush1.msra.mxu0 0.0
    %610 = vmatprep.subr.mxu0 0.0
    %611 = vmatpush1.msra.mxu0 0.0
    %612 = vmatprep.subr.mxu0 0.0
    %613 = vmatpush1.msra.mxu0 0.0
    %614 = vmatprep.subr.mxu0 0.0
    %615 = vmatpush1.msra.mxu0 0.0
    %616 = vmatprep.subr.mxu0 0.0
    %617 = vmatpush1.msra.mxu0 0.0
    %618 = vmatprep.subr.mxu0 0.0
    %619 = vmatpush1.msra.mxu0 0.0
    %620 = vmatprep.subr.mxu0 0.0
    %621 = vmatpush1.msra.mxu0 0.0
    %622 = vmatprep.subr.mxu0 0.0
    %623 = vmatpush1.msra.mxu0 0.0
    %624 = vmatprep.subr.mxu0 0.0
    %625 = vmatpush1.msra.mxu0 0.0
    %626 = vmatprep.subr.mxu0 0.0
    %627 = vmatpush1.msra.mxu0 0.0
    %628 = vmatprep.subr.mxu0 0.0
    %629 = vmatpush1.msra.mxu0 0.0
    %630 = vmatprep.subr.mxu0 0.0
    %631 = vmatpush1.msra.mxu0 0.0
    %632 = vmatprep.subr.mxu0 0.0
    %633 = vmatpush1.msra.mxu0 %v187
    %634 = vmatprep.subr.mxu0 0.0
    %635 = vmatpush1.msra.mxu0 %v186
    %636 = vmatprep.subr.mxu0 0.0
    %637 = vmatpush1.msra.mxu0 %v185
    %638 = vmatprep.subr.mxu0 0.0
    %639 = vmatpush1.msra.mxu0 %v184
    %640 = vmatprep.subr.mxu0 0.0
    %641 = vmatpush2.msra.mxu0 0.0
    %642 = vmatprep.subr.mxu0 0.0
    %643 = vmatpush2.msra.mxu0 0.0
    %644 = vmatprep.subr.mxu0 0.0
    %645 = vmatpush2.msra.mxu0 0.0
    %646 = vmatprep.subr.mxu0 0.0
    %647 = vmatpush2.msra.mxu0 0.0
    %648 = vmatprep.subr.mxu0 0.0
    %649 = vmatpush2.msra.mxu0 0.0
    %650 = vmatprep.subr.mxu0 0.0
    %651 = vmatpush2.msra.mxu0 0.0
    %652 = vmatprep.subr.mxu0 0.0
    %653 = vmatpush2.msra.mxu0 0.0
    %654 = vmatprep.subr.mxu0 0.0
    %655 = vmatpush2.msra.mxu0 0.0
    %656 = vmatprep.subr.mxu0 0.0
    %657 = vmatpush2.msra.mxu0 0.0
    %658 = vmatprep.subr.mxu0 0.0
    %659 = vmatpush2.msra.mxu0 0.0
    %660 = vmatprep.subr.mxu0 0.0
    %661 = vmatpush2.msra.mxu0 0.0
    %662 = vmatprep.subr.mxu0 0.0
    %663 = vmatpush2.msra.mxu0 0.0
    %664 = vmatprep.subr.mxu0 0.0
    %665 = vmatpush2.msra.mxu0 0.0
    %666 = vmatprep.subr.mxu0 0.0
    %667 = vmatpush2.msra.mxu0 0.0
    %668 = vmatprep.subr.mxu0 0.0
    %669 = vmatpush2.msra.mxu0 0.0
    %670 = vmatprep.subr.mxu0 0.0
    %671 = vmatpush2.msra.mxu0 0.0
    %672 = vmatprep.mubr.f32.mxu0 0.0
    %673 = vmatmul.mubr.f32.gmra.mxu0 %v606
    %v674 = vpop.f32.mrf.mxu0
    %v675 = vadd.f32 0.0, %v674
    %v676 = vpop.f32.mrf.mxu0
    %677 = vdwg.mxu0
    %v678 = vadd.f32 %v605, %v675
    %v679 = vmul.f32 %v678, 0.5
    %v680 = vtanh.pop %v679
    %v681 = vmul.f32 %v680, 0.5
    %v682 = vadd.f32 %v681, 0.5
    %v683 = vtanh.pop %v678
    %v684 = vmul.f32 %v682, %v591
    %686 = vrot.lane.b32.xlu0 %v683, 64
    %v687 = vpop.permute.xlu0 %686
    %v689 = vmul.f32 %v682, %v687
    %691 = vrot.lane.b32.xlu0 %v689, 32
    %v692 = vpop.permute.xlu0 %691
    %v694 = vadd.f32 %v684, %v692
    %v695 = vtanh.pop %v694
    %697 = vrot.lane.b32.xlu0 %v695, 64
    %v698 = vpop.permute.xlu0 %697
    %v700 = vmul.f32 %v682, %v698
    %702 = vrot.lane.b32.xlu0 %v700, 32
    %v703 = vpop.permute.xlu0 %702
    %s705 = scalar_lea.vmem [#allocation2], 8
    %706 = vst.msk [vmem:[%s705] sm:$0xf] %vm499, %v703
    %s707 = scalar_lea.vmem [#allocation4], 24
    %v708 = vld [vmem:[%s707] sm:$0xff]
    %v709 = vsel %vm268, %v703, 0
    %711 = vmatprep.subr.mxu0 0.0
    %712 = vmatpush1.msra.mxu0 0.0
    %713 = vmatprep.subr.mxu0 0.0
    %714 = vmatpush1.msra.mxu0 0.0
    %715 = vmatprep.subr.mxu0 0.0
    %716 = vmatpush1.msra.mxu0 0.0
    %717 = vmatprep.subr.mxu0 0.0
    %718 = vmatpush1.msra.mxu0 0.0
    %719 = vmatprep.subr.mxu0 0.0
    %720 = vmatpush1.msra.mxu0 0.0
    %721 = vmatprep.subr.mxu0 0.0
    %722 = vmatpush1.msra.mxu0 0.0
    %723 = vmatprep.subr.mxu0 0.0
    %724 = vmatpush1.msra.mxu0 0.0
    %725 = vmatprep.subr.mxu0 0.0
    %726 = vmatpush1.msra.mxu0 0.0
    %727 = vmatprep.subr.mxu0 0.0
    %728 = vmatpush1.msra.mxu0 0.0
    %729 = vmatprep.subr.mxu0 0.0
    %730 = vmatpush1.msra.mxu0 0.0
    %731 = vmatprep.subr.mxu0 0.0
    %732 = vmatpush1.msra.mxu0 0.0
    %733 = vmatprep.subr.mxu0 0.0
    %734 = vmatpush1.msra.mxu0 0.0
    %735 = vmatprep.subr.mxu0 0.0
    %736 = vmatpush1.msra.mxu0 %v187
    %737 = vmatprep.subr.mxu0 0.0
    %738 = vmatpush1.msra.mxu0 %v186
    %739 = vmatprep.subr.mxu0 0.0
    %740 = vmatpush1.msra.mxu0 %v185
    %741 = vmatprep.subr.mxu0 0.0
    %742 = vmatpush1.msra.mxu0 %v184
    %743 = vmatprep.subr.mxu0 0.0
    %744 = vmatpush2.msra.mxu0 0.0
    %745 = vmatprep.subr.mxu0 0.0
    %746 = vmatpush2.msra.mxu0 0.0
    %747 = vmatprep.subr.mxu0 0.0
    %748 = vmatpush2.msra.mxu0 0.0
    %749 = vmatprep.subr.mxu0 0.0
    %750 = vmatpush2.msra.mxu0 0.0
    %751 = vmatprep.subr.mxu0 0.0
    %752 = vmatpush2.msra.mxu0 0.0
    %753 = vmatprep.subr.mxu0 0.0
    %754 = vmatpush2.msra.mxu0 0.0
    %755 = vmatprep.subr.mxu0 0.0
    %756 = vmatpush2.msra.mxu0 0.0
    %757 = vmatprep.subr.mxu0 0.0
    %758 = vmatpush2.msra.mxu0 0.0
    %759 = vmatprep.subr.mxu0 0.0
    %760 = vmatpush2.msra.mxu0 0.0
    %761 = vmatprep.subr.mxu0 0.0
    %762 = vmatpush2.msra.mxu0 0.0
    %763 = vmatprep.subr.mxu0 0.0
    %764 = vmatpush2.msra.mxu0 0.0
    %765 = vmatprep.subr.mxu0 0.0
    %766 = vmatpush2.msra.mxu0 0.0
    %767 = vmatprep.subr.mxu0 0.0
    %768 = vmatpush2.msra.mxu0 0.0
    %769 = vmatprep.subr.mxu0 0.0
    %770 = vmatpush2.msra.mxu0 0.0
    %771 = vmatprep.subr.mxu0 0.0
    %772 = vmatpush2.msra.mxu0 0.0
    %773 = vmatprep.subr.mxu0 0.0
    %774 = vmatpush2.msra.mxu0 0.0
    %775 = vmatprep.mubr.f32.mxu0 0.0
    %776 = vmatmul.mubr.f32.gmra.mxu0 %v709
    %v777 = vpop.f32.mrf.mxu0
    %v778 = vadd.f32 0.0, %v777
    %v779 = vpop.f32.mrf.mxu0
    %780 = vdwg.mxu0
    %v781 = vadd.f32 %v708, %v778
    %v782 = vmul.f32 %v781, 0.5
    %v783 = vtanh.pop %v782
    %v784 = vmul.f32 %v783, 0.5
    %v785 = vadd.f32 %v784, 0.5
    %v786 = vtanh.pop %v781
    %v787 = vmul.f32 %v785, %v694
    %789 = vrot.lane.b32.xlu0 %v786, 64
    %v790 = vpop.permute.xlu0 %789
    %v792 = vmul.f32 %v785, %v790
    %794 = vrot.lane.b32.xlu0 %v792, 32
    %v795 = vpop.permute.xlu0 %794
    %v797 = vadd.f32 %v787, %v795
    %v798 = vtanh.pop %v797
    %800 = vrot.lane.b32.xlu0 %v798, 64
    %v801 = vpop.permute.xlu0 %800
    %v803 = vmul.f32 %v785, %v801
    %805 = vrot.lane.b32.xlu0 %v803, 32
    %v806 = vpop.permute.xlu0 %805
    %s808 = scalar_lea.vmem [#allocation2], 12
    %809 = vst.msk [vmem:[%s808] sm:$0xf] %vm499, %v806
    %s810 = scalar_lea.vmem [#allocation4], 32
    %v811 = vld [vmem:[%s810] sm:$0xff]
    %v812 = vsel %vm268, %v806, 0
    %814 = vmatprep.subr.mxu0 0.0
    %815 = vmatpush1.msra.mxu0 0.0
    %816 = vmatprep.subr.mxu0 0.0
    %817 = vmatpush1.msra.mxu0 0.0
    %818 = vmatprep.subr.mxu0 0.0
    %819 = vmatpush1.msra.mxu0 0.0
    %820 = vmatprep.subr.mxu0 0.0
    %821 = vmatpush1.msra.mxu0 0.0
    %822 = vmatprep.subr.mxu0 0.0
    %823 = vmatpush1.msra.mxu0 0.0
    %824 = vmatprep.subr.mxu0 0.0
    %825 = vmatpush1.msra.mxu0 0.0
    %826 = vmatprep.subr.mxu0 0.0
    %827 = vmatpush1.msra.mxu0 0.0
    %828 = vmatprep.subr.mxu0 0.0
    %829 = vmatpush1.msra.mxu0 0.0
    %830 = vmatprep.subr.mxu0 0.0
    %831 = vmatpush1.msra.mxu0 0.0
    %832 = vmatprep.subr.mxu0 0.0
    %833 = vmatpush1.msra.mxu0 0.0
    %834 = vmatprep.subr.mxu0 0.0
    %835 = vmatpush1.msra.mxu0 0.0
    %836 = vmatprep.subr.mxu0 0.0
    %837 = vmatpush1.msra.mxu0 0.0
    %838 = vmatprep.subr.mxu0 0.0
    %839 = vmatpush1.msra.mxu0 %v187
    %840 = vmatprep.subr.mxu0 0.0
    %841 = vmatpush1.msra.mxu0 %v186
    %842 = vmatprep.subr.mxu0 0.0
    %843 = vmatpush1.msra.mxu0 %v185
    %844 = vmatprep.subr.mxu0 0.0
    %845 = vmatpush1.msra.mxu0 %v184
    %846 = vmatprep.subr.mxu0 0.0
    %847 = vmatpush2.msra.mxu0 0.0
    %848 = vmatprep.subr.mxu0 0.0
    %849 = vmatpush2.msra.mxu0 0.0
    %850 = vmatprep.subr.mxu0 0.0
    %851 = vmatpush2.msra.mxu0 0.0
    %852 = vmatprep.subr.mxu0 0.0
    %853 = vmatpush2.msra.mxu0 0.0
    %854 = vmatprep.subr.mxu0 0.0
    %855 = vmatpush2.msra.mxu0 0.0
    %856 = vmatprep.subr.mxu0 0.0
    %857 = vmatpush2.msra.mxu0 0.0
    %858 = vmatprep.subr.mxu0 0.0
    %859 = vmatpush2.msra.mxu0 0.0
    %860 = vmatprep.subr.mxu0 0.0
    %861 = vmatpush2.msra.mxu0 0.0
    %862 = vmatprep.subr.mxu0 0.0
    %863 = vmatpush2.msra.mxu0 0.0
    %864 = vmatprep.subr.mxu0 0.0
    %865 = vmatpush2.msra.mxu0 0.0
    %866 = vmatprep.subr.mxu0 0.0
    %867 = vmatpush2.msra.mxu0 0.0
    %868 = vmatprep.subr.mxu0 0.0
    %869 = vmatpush2.msra.mxu0 0.0
    %870 = vmatprep.subr.mxu0 0.0
    %871 = vmatpush2.msra.mxu0 0.0
    %872 = vmatprep.subr.mxu0 0.0
    %873 = vmatpush2.msra.mxu0 0.0
    %874 = vmatprep.subr.mxu0 0.0
    %875 = vmatpush2.msra.mxu0 0.0
    %876 = vmatprep.subr.mxu0 0.0
    %877 = vmatpush2.msra.mxu0 0.0
    %878 = vmatprep.mubr.f32.mxu0 0.0
    %879 = vmatmul.mubr.f32.gmra.mxu0 %v812
    %v880 = vpop.f32.mrf.mxu0
    %v881 = vadd.f32 0.0, %v880
    %v882 = vpop.f32.mrf.mxu0
    %883 = vdwg.mxu0
    %v884 = vadd.f32 %v811, %v881
    %v885 = vmul.f32 %v884, 0.5
    %v886 = vtanh.pop %v885
    %v887 = vmul.f32 %v886, 0.5
    %v888 = vadd.f32 %v887, 0.5
    %v889 = vtanh.pop %v884
    %v890 = vmul.f32 %v888, %v797
    %892 = vrot.lane.b32.xlu0 %v889, 64
    %v893 = vpop.permute.xlu0 %892
    %v895 = vmul.f32 %v888, %v893
    %897 = vrot.lane.b32.xlu0 %v895, 32
    %v898 = vpop.permute.xlu0 %897
    %v900 = vadd.f32 %v890, %v898
    %v901 = vtanh.pop %v900
    %903 = vrot.lane.b32.xlu0 %v901, 64
    %v904 = vpop.permute.xlu0 %903
    %v906 = vmul.f32 %v888, %v904
    %908 = vrot.lane.b32.xlu0 %v906, 32
    %v909 = vpop.permute.xlu0 %908
    %s911 = scalar_lea.vmem [#allocation2], 16
    %912 = vst.msk [vmem:[%s911] sm:$0xf] %vm499, %v909
    %s913 = scalar_lea.vmem [#allocation4], 40
    %v914 = vld [vmem:[%s913] sm:$0xff]
    %v915 = vsel %vm268, %v909, 0
    %917 = vmatprep.subr.mxu0 0.0
    %918 = vmatpush1.msra.mxu0 0.0
    %919 = vmatprep.subr.mxu0 0.0
    %920 = vmatpush1.msra.mxu0 0.0
    %921 = vmatprep.subr.mxu0 0.0
    %922 = vmatpush1.msra.mxu0 0.0
    %923 = vmatprep.subr.mxu0 0.0
    %924 = vmatpush1.msra.mxu0 0.0
    %925 = vmatprep.subr.mxu0 0.0
    %926 = vmatpush1.msra.mxu0 0.0
    %927 = vmatprep.subr.mxu0 0.0
    %928 = vmatpush1.msra.mxu0 0.0
    %929 = vmatprep.subr.mxu0 0.0
    %930 = vmatpush1.msra.mxu0 0.0
    %931 = vmatprep.subr.mxu0 0.0
    %932 = vmatpush1.msra.mxu0 0.0
    %933 = vmatprep.subr.mxu0 0.0
    %934 = vmatpush1.msra.mxu0 0.0
    %935 = vmatprep.subr.mxu0 0.0
    %936 = vmatpush1.msra.mxu0 0.0
    %937 = vmatprep.subr.mxu0 0.0
    %938 = vmatpush1.msra.mxu0 0.0
    %939 = vmatprep.subr.mxu0 0.0
    %940 = vmatpush1.msra.mxu0 0.0
    %941 = vmatprep.subr.mxu0 0.0
    %942 = vmatpush1.msra.mxu0 %v187
    %943 = vmatprep.subr.mxu0 0.0
    %944 = vmatpush1.msra.mxu0 %v186
    %945 = vmatprep.subr.mxu0 0.0
    %946 = vmatpush1.msra.mxu0 %v185
    %947 = vmatprep.subr.mxu0 0.0
    %948 = vmatpush1.msra.mxu0 %v184
    %949 = vmatprep.subr.mxu0 0.0
    %950 = vmatpush2.msra.mxu0 0.0
    %951 = vmatprep.subr.mxu0 0.0
    %952 = vmatpush2.msra.mxu0 0.0
    %953 = vmatprep.subr.mxu0 0.0
    %954 = vmatpush2.msra.mxu0 0.0
    %955 = vmatprep.subr.mxu0 0.0
    %956 = vmatpush2.msra.mxu0 0.0
    %957 = vmatprep.subr.mxu0 0.0
    %958 = vmatpush2.msra.mxu0 0.0
    %959 = vmatprep.subr.mxu0 0.0
    %960 = vmatpush2.msra.mxu0 0.0
    %961 = vmatprep.subr.mxu0 0.0
    %962 = vmatpush2.msra.mxu0 0.0
    %963 = vmatprep.subr.mxu0 0.0
    %964 = vmatpush2.msra.mxu0 0.0
    %965 = vmatprep.subr.mxu0 0.0
    %966 = vmatpush2.msra.mxu0 0.0
    %967 = vmatprep.subr.mxu0 0.0
    %968 = vmatpush2.msra.mxu0 0.0
    %969 = vmatprep.subr.mxu0 0.0
    %970 = vmatpush2.msra.mxu0 0.0
    %971 = vmatprep.subr.mxu0 0.0
    %972 = vmatpush2.msra.mxu0 0.0
    %973 = vmatprep.subr.mxu0 0.0
    %974 = vmatpush2.msra.mxu0 0.0
    %975 = vmatprep.subr.mxu0 0.0
    %976 = vmatpush2.msra.mxu0 0.0
    %977 = vmatprep.subr.mxu0 0.0
    %978 = vmatpush2.msra.mxu0 0.0
    %979 = vmatprep.subr.mxu0 0.0
    %980 = vmatpush2.msra.mxu0 0.0
    %981 = vmatprep.mubr.f32.mxu0 0.0
    %982 = vmatmul.mubr.f32.gmra.mxu0 %v915
    %v983 = vpop.f32.mrf.mxu0
    %v984 = vadd.f32 0.0, %v983
    %v985 = vpop.f32.mrf.mxu0
    %986 = vdwg.mxu0
    %v987 = vadd.f32 %v914, %v984
    %v988 = vmul.f32 %v987, 0.5
    %v989 = vtanh.pop %v988
    %v990 = vmul.f32 %v989, 0.5
    %v991 = vadd.f32 %v990, 0.5
    %v992 = vtanh.pop %v987
    %v993 = vmul.f32 %v991, %v900
    %995 = vrot.lane.b32.xlu0 %v992, 64
    %v996 = vpop.permute.xlu0 %995
    %v998 = vmul.f32 %v991, %v996
    %1000 = vrot.lane.b32.xlu0 %v998, 32
    %v1001 = vpop.permute.xlu0 %1000
    %v1003 = vadd.f32 %v993, %v1001
    %v1004 = vtanh.pop %v1003
    %1006 = vrot.lane.b32.xlu0 %v1004, 64
    %v1007 = vpop.permute.xlu0 %1006
    %v1009 = vmul.f32 %v991, %v1007
    %1011 = vrot.lane.b32.xlu0 %v1009, 32
    %v1012 = vpop.permute.xlu0 %1011
    %s1014 = scalar_lea.vmem [#allocation2], 20
    %1015 = vst.msk [vmem:[%s1014] sm:$0xf] %vm499, %v1012
    %s1016 = scalar_lea.vmem [#allocation4], 48
    %v1017 = vld [vmem:[%s1016] sm:$0xff]
    %v1018 = vsel %vm268, %v1012, 0
    %1020 = vmatprep.subr.mxu0 0.0
    %1021 = vmatpush1.msra.mxu0 0.0
    %1022 = vmatprep.subr.mxu0 0.0
    %1023 = vmatpush1.msra.mxu0 0.0
    %1024 = vmatprep.subr.mxu0 0.0
    %1025 = vmatpush1.msra.mxu0 0.0
    %1026 = vmatprep.subr.mxu0 0.0
    %1027 = vmatpush1.msra.mxu0 0.0
    %1028 = vmatprep.subr.mxu0 0.0
    %1029 = vmatpush1.msra.mxu0 0.0
    %1030 = vmatprep.subr.mxu0 0.0
    %1031 = vmatpush1.msra.mxu0 0.0
    %1032 = vmatprep.subr.mxu0 0.0
    %1033 = vmatpush1.msra.mxu0 0.0
    %1034 = vmatprep.subr.mxu0 0.0
    %1035 = vmatpush1.msra.mxu0 0.0
    %1036 = vmatprep.subr.mxu0 0.0
    %1037 = vmatpush1.msra.mxu0 0.0
    %1038 = vmatprep.subr.mxu0 0.0
    %1039 = vmatpush1.msra.mxu0 0.0
    %1040 = vmatprep.subr.mxu0 0.0
    %1041 = vmatpush1.msra.mxu0 0.0
    %1042 = vmatprep.subr.mxu0 0.0
    %1043 = vmatpush1.msra.mxu0 0.0
    %1044 = vmatprep.subr.mxu0 0.0
    %1045 = vmatpush1.msra.mxu0 %v187
    %1046 = vmatprep.subr.mxu0 0.0
    %1047 = vmatpush1.msra.mxu0 %v186
    %1048 = vmatprep.subr.mxu0 0.0
    %1049 = vmatpush1.msra.mxu0 %v185
    %1050 = vmatprep.subr.mxu0 0.0
    %1051 = vmatpush1.msra.mxu0 %v184
    %1052 = vmatprep.subr.mxu0 0.0
    %1053 = vmatpush2.msra.mxu0 0.0
    %1054 = vmatprep.subr.mxu0 0.0
    %1055 = vmatpush2.msra.mxu0 0.0
    %1056 = vmatprep.subr.mxu0 0.0
    %1057 = vmatpush2.msra.mxu0 0.0
    %1058 = vmatprep.subr.mxu0 0.0
    %1059 = vmatpush2.msra.mxu0 0.0
    %1060 = vmatprep.subr.mxu0 0.0
    %1061 = vmatpush2.msra.mxu0 0.0
    %1062 = vmatprep.subr.mxu0 0.0
    %1063 = vmatpush2.msra.mxu0 0.0
    %1064 = vmatprep.subr.mxu0 0.0
    %1065 = vmatpush2.msra.mxu0 0.0
    %1066 = vmatprep.subr.mxu0 0.0
    %1067 = vmatpush2.msra.mxu0 0.0
    %1068 = vmatprep.subr.mxu0 0.0
    %1069 = vmatpush2.msra.mxu0 0.0
    %1070 = vmatprep.subr.mxu0 0.0
    %1071 = vmatpush2.msra.mxu0 0.0
    %1072 = vmatprep.subr.mxu0 0.0
    %1073 = vmatpush2.msra.mxu0 0.0
    %1074 = vmatprep.subr.mxu0 0.0
    %1075 = vmatpush2.msra.mxu0 0.0
    %1076 = vmatprep.subr.mxu0 0.0
    %1077 = vmatpush2.msra.mxu0 0.0
    %1078 = vmatprep.subr.mxu0 0.0
    %1079 = vmatpush2.msra.mxu0 0.0
    %1080 = vmatprep.subr.mxu0 0.0
    %1081 = vmatpush2.msra.mxu0 0.0
    %1082 = vmatprep.subr.mxu0 0.0
    %1083 = vmatpush2.msra.mxu0 0.0
    %1084 = vmatprep.mubr.f32.mxu0 0.0
    %1085 = vmatmul.mubr.f32.gmra.mxu0 %v1018
    %v1086 = vpop.f32.mrf.mxu0
    %v1087 = vadd.f32 0.0, %v1086
    %v1088 = vpop.f32.mrf.mxu0
    %1089 = vdwg.mxu0
    %v1090 = vadd.f32 %v1017, %v1087
    %v1091 = vmul.f32 %v1090, 0.5
    %v1092 = vtanh.pop %v1091
    %v1093 = vmul.f32 %v1092, 0.5
    %v1094 = vadd.f32 %v1093, 0.5
    %v1095 = vtanh.pop %v1090
    %v1096 = vmul.f32 %v1094, %v1003
    %1098 = vrot.lane.b32.xlu0 %v1095, 64
    %v1099 = vpop.permute.xlu0 %1098
    %v1101 = vmul.f32 %v1094, %v1099
    %1103 = vrot.lane.b32.xlu0 %v1101, 32
    %v1104 = vpop.permute.xlu0 %1103
    %v1106 = vadd.f32 %v1096, %v1104
    %v1107 = vtanh.pop %v1106
    %1109 = vrot.lane.b32.xlu0 %v1107, 64
    %v1110 = vpop.permute.xlu0 %1109
    %v1112 = vmul.f32 %v1094, %v1110
    %1114 = vrot.lane.b32.xlu0 %v1112, 32
    %v1115 = vpop.permute.xlu0 %1114
    %s1117 = scalar_lea.vmem [#allocation2], 24
    %1118 = vst.msk [vmem:[%s1117] sm:$0xf] %vm499, %v1115
    %s1119 = scalar_lea.vmem [#allocation4], 56
    %v1120 = vld [vmem:[%s1119] sm:$0xff]
    %v1121 = vsel %vm268, %v1115, 0
    %1123 = vmatprep.subr.mxu0 0.0
    %1124 = vmatpush1.msra.mxu0 0.0
    %1125 = vmatprep.subr.mxu0 0.0
    %1126 = vmatpush1.msra.mxu0 0.0
    %1127 = vmatprep.subr.mxu0 0.0
    %1128 = vmatpush1.msra.mxu0 0.0
    %1129 = vmatprep.subr.mxu0 0.0
    %1130 = vmatpush1.msra.mxu0 0.0
    %1131 = vmatprep.subr.mxu0 0.0
    %1132 = vmatpush1.msra.mxu0 0.0
    %1133 = vmatprep.subr.mxu0 0.0
    %1134 = vmatpush1.msra.mxu0 0.0
    %1135 = vmatprep.subr.mxu0 0.0
    %1136 = vmatpush1.msra.mxu0 0.0
    %1137 = vmatprep.subr.mxu0 0.0
    %1138 = vmatpush1.msra.mxu0 0.0
    %1139 = vmatprep.subr.mxu0 0.0
    %1140 = vmatpush1.msra.mxu0 0.0
    %1141 = vmatprep.subr.mxu0 0.0
    %1142 = vmatpush1.msra.mxu0 0.0
    %1143 = vmatprep.subr.mxu0 0.0
    %1144 = vmatpush1.msra.mxu0 0.0
    %1145 = vmatprep.subr.mxu0 0.0
    %1146 = vmatpush1.msra.mxu0 0.0
    %1147 = vmatprep.subr.mxu0 0.0
    %1148 = vmatpush1.msra.mxu0 %v187
    %1149 = vmatprep.subr.mxu0 0.0
    %1150 = vmatpush1.msra.mxu0 %v186
    %1151 = vmatprep.subr.mxu0 0.0
    %1152 = vmatpush1.msra.mxu0 %v185
    %1153 = vmatprep.subr.mxu0 0.0
    %1154 = vmatpush1.msra.mxu0 %v184
    %1155 = vmatprep.subr.mxu0 0.0
    %1156 = vmatpush2.msra.mxu0 0.0
    %1157 = vmatprep.subr.mxu0 0.0
    %1158 = vmatpush2.msra.mxu0 0.0
    %1159 = vmatprep.subr.mxu0 0.0
    %1160 = vmatpush2.msra.mxu0 0.0
    %1161 = vmatprep.subr.mxu0 0.0
    %1162 = vmatpush2.msra.mxu0 0.0
    %1163 = vmatprep.subr.mxu0 0.0
    %1164 = vmatpush2.msra.mxu0 0.0
    %1165 = vmatprep.subr.mxu0 0.0
    %1166 = vmatpush2.msra.mxu0 0.0
    %1167 = vmatprep.subr.mxu0 0.0
    %1168 = vmatpush2.msra.mxu0 0.0
    %1169 = vmatprep.subr.mxu0 0.0
    %1170 = vmatpush2.msra.mxu0 0.0
    %1171 = vmatprep.subr.mxu0 0.0
    %1172 = vmatpush2.msra.mxu0 0.0
    %1173 = vmatprep.subr.mxu0 0.0
    %1174 = vmatpush2.msra.mxu0 0.0
    %1175 = vmatprep.subr.mxu0 0.0
    %1176 = vmatpush2.msra.mxu0 0.0
    %1177 = vmatprep.subr.mxu0 0.0
    %1178 = vmatpush2.msra.mxu0 0.0
    %1179 = vmatprep.subr.mxu0 0.0
    %1180 = vmatpush2.msra.mxu0 0.0
    %1181 = vmatprep.subr.mxu0 0.0
    %1182 = vmatpush2.msra.mxu0 0.0
    %1183 = vmatprep.subr.mxu0 0.0
    %1184 = vmatpush2.msra.mxu0 0.0
    %1185 = vmatprep.subr.mxu0 0.0
    %1186 = vmatpush2.msra.mxu0 0.0
    %1187 = vmatprep.mubr.f32.mxu0 0.0
    %1188 = vmatmul.mubr.f32.gmra.mxu0 %v1121
    %v1189 = vpop.f32.mrf.mxu0
    %v1190 = vadd.f32 0.0, %v1189
    %v1191 = vpop.f32.mrf.mxu0
    %1192 = vdwg.mxu0
    %v1193 = vadd.f32 %v1120, %v1190
    %v1194 = vmul.f32 %v1193, 0.5
    %v1195 = vtanh.pop %v1194
    %v1196 = vmul.f32 %v1195, 0.5
    %v1197 = vadd.f32 %v1196, 0.5
    %v1198 = vtanh.pop %v1193
    %v1199 = vmul.f32 %v1197, %v1106
    %1201 = vrot.lane.b32.xlu0 %v1198, 64
    %v1202 = vpop.permute.xlu0 %1201
    %v1204 = vmul.f32 %v1197, %v1202
    %1206 = vrot.lane.b32.xlu0 %v1204, 32
    %v1207 = vpop.permute.xlu0 %1206
    %v1209 = vadd.f32 %v1199, %v1207
    %v1210 = vtanh.pop %v1209
    %1212 = vrot.lane.b32.xlu0 %v1210, 64
    %v1213 = vpop.permute.xlu0 %1212
    %v1215 = vmul.f32 %v1197, %v1213
    %1217 = vrot.lane.b32.xlu0 %v1215, 32
    %v1218 = vpop.permute.xlu0 %1217
    %s1220 = scalar_lea.vmem [#allocation2], 28
    %1221 = vst.msk [vmem:[%s1220] sm:$0xf] %vm499, %v1218
    %v1222 = vld [vmem:[%s1119] sm:$0xff]
    %1223 = vmatprep.subr.mxu0 0.0
    %1224 = vmatpush1.msra.mxu0 0.0
    %1225 = vmatprep.subr.mxu0 0.0
    %1226 = vmatpush1.msra.mxu0 0.0
    %1227 = vmatprep.subr.mxu0 0.0
    %1228 = vmatpush1.msra.mxu0 0.0
    %1229 = vmatprep.subr.mxu0 0.0
    %1230 = vmatpush1.msra.mxu0 0.0
    %1231 = vmatprep.subr.mxu0 0.0
    %1232 = vmatpush1.msra.mxu0 0.0
    %1233 = vmatprep.subr.mxu0 0.0
    %1234 = vmatpush1.msra.mxu0 0.0
    %1235 = vmatprep.subr.mxu0 0.0
    %1236 = vmatpush1.msra.mxu0 0.0
    %1237 = vmatprep.subr.mxu0 0.0
    %1238 = vmatpush1.msra.mxu0 0.0
    %1239 = vmatprep.subr.mxu0 0.0
    %1240 = vmatpush1.msra.mxu0 0.0
    %1241 = vmatprep.subr.mxu0 0.0
    %1242 = vmatpush1.msra.mxu0 0.0
    %1243 = vmatprep.subr.mxu0 0.0
    %1244 = vmatpush1.msra.mxu0 0.0
    %1245 = vmatprep.subr.mxu0 0.0
    %1246 = vmatpush1.msra.mxu0 0.0
    %1247 = vmatprep.subr.mxu0 0.0
    %1248 = vmatpush1.msra.mxu0 %v191
    %1249 = vmatprep.subr.mxu0 0.0
    %1250 = vmatpush1.msra.mxu0 %v190
    %1251 = vmatprep.subr.mxu0 0.0
    %1252 = vmatpush1.msra.mxu0 %v189
    %1253 = vmatprep.subr.mxu0 0.0
    %1254 = vmatpush1.msra.mxu0 %v188
    %1255 = vmatprep.subr.mxu0 0.0
    %1256 = vmatpush2.msra.mxu0 0.0
    %1257 = vmatprep.subr.mxu0 0.0
    %1258 = vmatpush2.msra.mxu0 0.0
    %1259 = vmatprep.subr.mxu0 0.0
    %1260 = vmatpush2.msra.mxu0 0.0
    %1261 = vmatprep.subr.mxu0 0.0
    %1262 = vmatpush2.msra.mxu0 0.0
    %1263 = vmatprep.subr.mxu0 0.0
    %1264 = vmatpush2.msra.mxu0 0.0
    %1265 = vmatprep.subr.mxu0 0.0
    %1266 = vmatpush2.msra.mxu0 0.0
    %1267 = vmatprep.subr.mxu0 0.0
    %1268 = vmatpush2.msra.mxu0 0.0
    %1269 = vmatprep.subr.mxu0 0.0
    %1270 = vmatpush2.msra.mxu0 0.0
    %1271 = vmatprep.subr.mxu0 0.0
    %1272 = vmatpush2.msra.mxu0 0.0
    %1273 = vmatprep.subr.mxu0 0.0
    %1274 = vmatpush2.msra.mxu0 0.0
    %1275 = vmatprep.subr.mxu0 0.0
    %1276 = vmatpush2.msra.mxu0 0.0
    %1277 = vmatprep.subr.mxu0 0.0
    %1278 = vmatpush2.msra.mxu0 0.0
    %1279 = vmatprep.subr.mxu0 0.0
    %1280 = vmatpush2.msra.mxu0 0.0
    %1281 = vmatprep.subr.mxu0 0.0
    %1282 = vmatpush2.msra.mxu0 0.0
    %1283 = vmatprep.subr.mxu0 0.0
    %1284 = vmatpush2.msra.mxu0 0.0
    %1285 = vmatprep.subr.mxu0 0.0
    %1286 = vmatpush2.msra.mxu0 0.0
    %1287 = vmatprep.mubr.f32.mxu0 0.0
    %1288 = vmatmul.mubr.f32.gmra.mxu0 %v400
    %v1289 = vpop.f32.mrf.mxu0
    %v1290 = vadd.f32 0.0, %v1289
    %v1291 = vpop.f32.mrf.mxu0
    %1292 = vdwg.mxu0
    %v1294 = vrot.slane %v1222, 4
    %v1296 = vadd.f32 %v1294, %v1290
    %v1297 = vmul.f32 %v1296, 0.5
    %v1298 = vtanh.pop %v1297
    %v1299 = vmul.f32 %v1298, 0.5
    %v1300 = vadd.f32 %v1299, 0.5
    %v1301 = vtanh.pop %v1296
    %v1302 = vmul.f32 %v1300, 0.0
    %1304 = vrot.lane.b32.xlu0 %v1301, 64
    %v1305 = vpop.permute.xlu0 %1304
    %v1307 = vmul.f32 %v1300, %v1305
    %1309 = vrot.lane.b32.xlu0 %v1307, 32
    %v1310 = vpop.permute.xlu0 %1309
    %v1312 = vadd.f32 %v1302, %v1310
    %v1313 = vtanh.pop %v1312
    %1315 = vrot.lane.b32.xlu0 %v1313, 64
    %v1316 = vpop.permute.xlu0 %1315
    %v1318 = vmul.f32 %v1300, %v1316
    %v1319 = vld [vmem:[%s1220] sm:$0xf]
    %1321 = vrot.lane.b32.xlu0 %v1318, 64
    %v1322 = vpop.permute.xlu0 %1321
    %v1324 = vsel %vm268, %v1319, %v1322
    %vm1325 = vcmask 519168
    %v1326 = vsel %vm1325, %v1324, 0.0
    %1327 = vadd.xlane.f32.xlu0 %v1326
    %v1328 = vpop.xlane.xlu0 %1327
    %v1329 = vrcp.pop 64.0
    %v1330 = vmul.f32 %v1328, %v1329
    %v1331 = vsub.f32 %v1324, %v1330
    %v1332 = vmul.f32 %v1331, %v1331
    %v1333 = vsel %vm1325, %v1332, 0.0
    %1334 = vadd.xlane.f32.xlu0 %v1333
    %v1335 = vpop.xlane.xlu0 %1334
    %v1336 = vmul.f32 %v1335, %v1329
    %v1337 = vadd.f32 %v1336, 1e-05
    %v1338 = vrsqrt.pop %v1337
    %v1339 = vmul.f32 %v1331, %v1338
    %v1341 = vlaneseq
    %v1342 = vshrl.u32 %v1341, 7
    %v1343 = vsub.s32 0, %v1342
    %v1344 = vrot.slane %v224, %v1343
    %v1346 = vmul.f32 %v1339, %v1344
    %v1348 = vlaneseq
    %v1349 = vshrl.u32 %v1348, 7
    %v1350 = vsub.s32 0, %v1349
    %v1351 = vrot.slane %v225, %v1350
    %v1353 = vadd.f32 %v1346, %v1351
    %s1354 = scalar_lea.vmem [#allocation3], 28
    %1355 = vst.msk [vmem:[%s1354] sm:$0xf] %vm1325, %v1353
    %v1356 = vld [vmem:[%s1016] sm:$0xff]
    %1357 = vrot.lane.b32.xlu0 %v1318, 32
    %v1358 = vpop.permute.xlu0 %1357
    %v1359 = vsel %vm268, %v1358, 0
    %1361 = vmatprep.subr.mxu0 0.0
    %1362 = vmatpush1.msra.mxu0 0.0
    %1363 = vmatprep.subr.mxu0 0.0
    %1364 = vmatpush1.msra.mxu0 0.0
    %1365 = vmatprep.subr.mxu0 0.0
    %1366 = vmatpush1.msra.mxu0 0.0
    %1367 = vmatprep.subr.mxu0 0.0
    %1368 = vmatpush1.msra.mxu0 0.0
    %1369 = vmatprep.subr.mxu0 0.0
    %1370 = vmatpush1.msra.mxu0 0.0
    %1371 = vmatprep.subr.mxu0 0.0
    %1372 = vmatpush1.msra.mxu0 0.0
    %1373 = vmatprep.subr.mxu0 0.0
    %1374 = vmatpush1.msra.mxu0 0.0
    %1375 = vmatprep.subr.mxu0 0.0
    %1376 = vmatpush1.msra.mxu0 0.0
    %1377 = vmatprep.subr.mxu0 0.0
    %1378 = vmatpush1.msra.mxu0 0.0
    %1379 = vmatprep.subr.mxu0 0.0
    %1380 = vmatpush1.msra.mxu0 0.0
    %1381 = vmatprep.subr.mxu0 0.0
    %1382 = vmatpush1.msra.mxu0 0.0
    %1383 = vmatprep.subr.mxu0 0.0
    %1384 = vmatpush1.msra.mxu0 0.0
    %1385 = vmatprep.subr.mxu0 0.0
    %1386 = vmatpush1.msra.mxu0 %v191
    %1387 = vmatprep.subr.mxu0 0.0
    %1388 = vmatpush1.msra.mxu0 %v190
    %1389 = vmatprep.subr.mxu0 0.0
    %1390 = vmatpush1.msra.mxu0 %v189
    %1391 = vmatprep.subr.mxu0 0.0
    %1392 = vmatpush1.msra.mxu0 %v188
    %1393 = vmatprep.subr.mxu0 0.0
    %1394 = vmatpush2.msra.mxu0 0.0
    %1395 = vmatprep.subr.mxu0 0.0
    %1396 = vmatpush2.msra.mxu0 0.0
    %1397 = vmatprep.subr.mxu0 0.0
    %1398 = vmatpush2.msra.mxu0 0.0
    %1399 = vmatprep.subr.mxu0 0.0
    %1400 = vmatpush2.msra.mxu0 0.0
    %1401 = vmatprep.subr.mxu0 0.0
    %1402 = vmatpush2.msra.mxu0 0.0
    %1403 = vmatprep.subr.mxu0 0.0
    %1404 = vmatpush2.msra.mxu0 0.0
    %1405 = vmatprep.subr.mxu0 0.0
    %1406 = vmatpush2.msra.mxu0 0.0
    %1407 = vmatprep.subr.mxu0 0.0
    %1408 = vmatpush2.msra.mxu0 0.0
    %1409 = vmatprep.subr.mxu0 0.0
    %1410 = vmatpush2.msra.mxu0 0.0
    %1411 = vmatprep.subr.mxu0 0.0
    %1412 = vmatpush2.msra.mxu0 0.0
    %1413 = vmatprep.subr.mxu0 0.0
    %1414 = vmatpush2.msra.mxu0 0.0
    %1415 = vmatprep.subr.mxu0 0.0
    %1416 = vmatpush2.msra.mxu0 0.0
    %1417 = vmatprep.subr.mxu0 0.0
    %1418 = vmatpush2.msra.mxu0 0.0
    %1419 = vmatprep.subr.mxu0 0.0
    %1420 = vmatpush2.msra.mxu0 0.0
    %1421 = vmatprep.subr.mxu0 0.0
    %1422 = vmatpush2.msra.mxu0 0.0
    %1423 = vmatprep.subr.mxu0 0.0
    %1424 = vmatpush2.msra.mxu0 0.0
    %1425 = vmatprep.mubr.f32.mxu0 0.0
    %1426 = vmatmul.mubr.f32.gmra.mxu0 %v1359
    %v1427 = vpop.f32.mrf.mxu0
    %v1428 = vadd.f32 0.0, %v1427
    %v1429 = vpop.f32.mrf.mxu0
    %1430 = vdwg.mxu0
    %v1432 = vrot.slane %v1356, 4
    %v1434 = vadd.f32 %v1432, %v1428
    %v1435 = vmul.f32 %v1434, 0.5
    %v1436 = vtanh.pop %v1435
    %v1437 = vmul.f32 %v1436, 0.5
    %v1438 = vadd.f32 %v1437, 0.5
    %v1439 = vtanh.pop %v1434
    %v1440 = vmul.f32 %v1438, %v1312
    %1442 = vrot.lane.b32.xlu0 %v1439, 64
    %v1443 = vpop.permute.xlu0 %1442
    %v1445 = vmul.f32 %v1438, %v1443
    %1447 = vrot.lane.b32.xlu0 %v1445, 32
    %v1448 = vpop.permute.xlu0 %1447
    %v1450 = vadd.f32 %v1440, %v1448
    %v1451 = vtanh.pop %v1450
    %1453 = vrot.lane.b32.xlu0 %v1451, 64
    %v1454 = vpop.permute.xlu0 %1453
    %v1456 = vmul.f32 %v1438, %v1454
    %v1457 = vld [vmem:[%s1117] sm:$0xf]
    %1459 = vrot.lane.b32.xlu0 %v1456, 64
    %v1460 = vpop.permute.xlu0 %1459
    %v1462 = vsel %vm268, %v1457, %v1460
    %v1463 = vsel %vm1325, %v1462, 0.0
    %1464 = vadd.xlane.f32.xlu0 %v1463
    %v1465 = vpop.xlane.xlu0 %1464
    %v1466 = vmul.f32 %v1465, %v1329
    %v1467 = vsub.f32 %v1462, %v1466
    %v1468 = vmul.f32 %v1467, %v1467
    %v1469 = vsel %vm1325, %v1468, 0.0
    %1470 = vadd.xlane.f32.xlu0 %v1469
    %v1471 = vpop.xlane.xlu0 %1470
    %v1472 = vmul.f32 %v1471, %v1329
    %v1473 = vadd.f32 %v1472, 1e-05
    %v1474 = vrsqrt.pop %v1473
    %v1475 = vmul.f32 %v1467, %v1474
    %v1476 = vmul.f32 %v1475, %v1344
    %v1477 = vadd.f32 %v1476, %v1351
    %s1478 = scalar_lea.vmem [#allocation3], 24
    %1479 = vst.msk [vmem:[%s1478] sm:$0xf] %vm1325, %v1477
    %v1480 = vld [vmem:[%s913] sm:$0xff]
    %1481 = vrot.lane.b32.xlu0 %v1456, 32
    %v1482 = vpop.permute.xlu0 %1481
    %v1483 = vsel %vm268, %v1482, 0
    %1485 = vmatprep.subr.mxu0 0.0
    %1486 = vmatpush1.msra.mxu0 0.0
    %1487 = vmatprep.subr.mxu0 0.0
    %1488 = vmatpush1.msra.mxu0 0.0
    %1489 = vmatprep.subr.mxu0 0.0
    %1490 = vmatpush1.msra.mxu0 0.0
    %1491 = vmatprep.subr.mxu0 0.0
    %1492 = vmatpush1.msra.mxu0 0.0
    %1493 = vmatprep.subr.mxu0 0.0
    %1494 = vmatpush1.msra.mxu0 0.0
    %1495 = vmatprep.subr.mxu0 0.0
    %1496 = vmatpush1.msra.mxu0 0.0
    %1497 = vmatprep.subr.mxu0 0.0
    %1498 = vmatpush1.msra.mxu0 0.0
    %1499 = vmatprep.subr.mxu0 0.0
    %1500 = vmatpush1.msra.mxu0 0.0
    %1501 = vmatprep.subr.mxu0 0.0
    %1502 = vmatpush1.msra.mxu0 0.0
    %1503 = vmatprep.subr.mxu0 0.0
    %1504 = vmatpush1.msra.mxu0 0.0
    %1505 = vmatprep.subr.mxu0 0.0
    %1506 = vmatpush1.msra.mxu0 0.0
    %1507 = vmatprep.subr.mxu0 0.0
    %1508 = vmatpush1.msra.mxu0 0.0
    %1509 = vmatprep.subr.mxu0 0.0
    %1510 = vmatpush1.msra.mxu0 %v191
    %1511 = vmatprep.subr.mxu0 0.0
    %1512 = vmatpush1.msra.mxu0 %v190
    %1513 = vmatprep.subr.mxu0 0.0
    %1514 = vmatpush1.msra.mxu0 %v189
    %1515 = vmatprep.subr.mxu0 0.0
    %1516 = vmatpush1.msra.mxu0 %v188
    %1517 = vmatprep.subr.mxu0 0.0
    %1518 = vmatpush2.msra.mxu0 0.0
    %1519 = vmatprep.subr.mxu0 0.0
    %1520 = vmatpush2.msra.mxu0 0.0
    %1521 = vmatprep.subr.mxu0 0.0
    %1522 = vmatpush2.msra.mxu0 0.0
    %1523 = vmatprep.subr.mxu0 0.0
    %1524 = vmatpush2.msra.mxu0 0.0
    %1525 = vmatprep.subr.mxu0 0.0
    %1526 = vmatpush2.msra.mxu0 0.0
    %1527 = vmatprep.subr.mxu0 0.0
    %1528 = vmatpush2.msra.mxu0 0.0
    %1529 = vmatprep.subr.mxu0 0.0
    %1530 = vmatpush2.msra.mxu0 0.0
    %1531 = vmatprep.subr.mxu0 0.0
    %1532 = vmatpush2.msra.mxu0 0.0
    %1533 = vmatprep.subr.mxu0 0.0
    %1534 = vmatpush2.msra.mxu0 0.0
    %1535 = vmatprep.subr.mxu0 0.0
    %1536 = vmatpush2.msra.mxu0 0.0
    %1537 = vmatprep.subr.mxu0 0.0
    %1538 = vmatpush2.msra.mxu0 0.0
    %1539 = vmatprep.subr.mxu0 0.0
    %1540 = vmatpush2.msra.mxu0 0.0
    %1541 = vmatprep.subr.mxu0 0.0
    %1542 = vmatpush2.msra.mxu0 0.0
    %1543 = vmatprep.subr.mxu0 0.0
    %1544 = vmatpush2.msra.mxu0 0.0
    %1545 = vmatprep.subr.mxu0 0.0
    %1546 = vmatpush2.msra.mxu0 0.0
    %1547 = vmatprep.subr.mxu0 0.0
    %1548 = vmatpush2.msra.mxu0 0.0
    %1549 = vmatprep.mubr.f32.mxu0 0.0
    %1550 = vmatmul.mubr.f32.gmra.mxu0 %v1483
    %v1551 = vpop.f32.mrf.mxu0
    %v1552 = vadd.f32 0.0, %v1551
    %v1553 = vpop.f32.mrf.mxu0
    %1554 = vdwg.mxu0
    %v1556 = vrot.slane %v1480, 4
    %v1558 = vadd.f32 %v1556, %v1552
    %v1559 = vmul.f32 %v1558, 0.5
    %v1560 = vtanh.pop %v1559
    %v1561 = vmul.f32 %v1560, 0.5
    %v1562 = vadd.f32 %v1561, 0.5
    %v1563 = vtanh.pop %v1558
    %v1564 = vmul.f32 %v1562, %v1450
    %1566 = vrot.lane.b32.xlu0 %v1563, 64
    %v1567 = vpop.permute.xlu0 %1566
    %v1569 = vmul.f32 %v1562, %v1567
    %1571 = vrot.lane.b32.xlu0 %v1569, 32
    %v1572 = vpop.permute.xlu0 %1571
    %v1574 = vadd.f32 %v1564, %v1572
    %v1575 = vtanh.pop %v1574
    %1577 = vrot.lane.b32.xlu0 %v1575, 64
    %v1578 = vpop.permute.xlu0 %1577
    %v1580 = vmul.f32 %v1562, %v1578
    %v1581 = vld [vmem:[%s1014] sm:$0xf]
    %1583 = vrot.lane.b32.xlu0 %v1580, 64
    %v1584 = vpop.permute.xlu0 %1583
    %v1586 = vsel %vm268, %v1581, %v1584
    %v1587 = vsel %vm1325, %v1586, 0.0
    %1588 = vadd.xlane.f32.xlu0 %v1587
    %v1589 = vpop.xlane.xlu0 %1588
    %v1590 = vmul.f32 %v1589, %v1329
    %v1591 = vsub.f32 %v1586, %v1590
    %v1592 = vmul.f32 %v1591, %v1591
    %v1593 = vsel %vm1325, %v1592, 0.0
    %1594 = vadd.xlane.f32.xlu0 %v1593
    %v1595 = vpop.xlane.xlu0 %1594
    %v1596 = vmul.f32 %v1595, %v1329
    %v1597 = vadd.f32 %v1596, 1e-05
    %v1598 = vrsqrt.pop %v1597
    %v1599 = vmul.f32 %v1591, %v1598
    %v1600 = vmul.f32 %v1599, %v1344
    %v1601 = vadd.f32 %v1600, %v1351
    %s1602 = scalar_lea.vmem [#allocation3], 20
    %1603 = vst.msk [vmem:[%s1602] sm:$0xf] %vm1325, %v1601
    %v1604 = vld [vmem:[%s810] sm:$0xff]
    %1605 = vrot.lane.b32.xlu0 %v1580, 32
    %v1606 = vpop.permute.xlu0 %1605
    %v1607 = vsel %vm268, %v1606, 0
    %1609 = vmatprep.subr.mxu0 0.0
    %1610 = vmatpush1.msra.mxu0 0.0
    %1611 = vmatprep.subr.mxu0 0.0
    %1612 = vmatpush1.msra.mxu0 0.0
    %1613 = vmatprep.subr.mxu0 0.0
    %1614 = vmatpush1.msra.mxu0 0.0
    %1615 = vmatprep.subr.mxu0 0.0
    %1616 = vmatpush1.msra.mxu0 0.0
    %1617 = vmatprep.subr.mxu0 0.0
    %1618 = vmatpush1.msra.mxu0 0.0
    %1619 = vmatprep.subr.mxu0 0.0
    %1620 = vmatpush1.msra.mxu0 0.0
    %1621 = vmatprep.subr.mxu0 0.0
    %1622 = vmatpush1.msra.mxu0 0.0
    %1623 = vmatprep.subr.mxu0 0.0
    %1624 = vmatpush1.msra.mxu0 0.0
    %1625 = vmatprep.subr.mxu0 0.0
    %1626 = vmatpush1.msra.mxu0 0.0
    %1627 = vmatprep.subr.mxu0 0.0
    %1628 = vmatpush1.msra.mxu0 0.0
    %1629 = vmatprep.subr.mxu0 0.0
    %1630 = vmatpush1.msra.mxu0 0.0
    %1631 = vmatprep.subr.mxu0 0.0
    %1632 = vmatpush1.msra.mxu0 0.0
    %1633 = vmatprep.subr.mxu0 0.0
    %1634 = vmatpush1.msra.mxu0 %v191
    %1635 = vmatprep.subr.mxu0 0.0
    %1636 = vmatpush1.msra.mxu0 %v190
    %1637 = vmatprep.subr.mxu0 0.0
    %1638 = vmatpush1.msra.mxu0 %v189
    %1639 = vmatprep.subr.mxu0 0.0
    %1640 = vmatpush1.msra.mxu0 %v188
    %1641 = vmatprep.subr.mxu0 0.0
    %1642 = vmatpush2.msra.mxu0 0.0
    %1643 = vmatprep.subr.mxu0 0.0
    %1644 = vmatpush2.msra.mxu0 0.0
    %1645 = vmatprep.subr.mxu0 0.0
    %1646 = vmatpush2.msra.mxu0 0.0
    %1647 = vmatprep.subr.mxu0 0.0
    %1648 = vmatpush2.msra.mxu0 0.0
    %1649 = vmatprep.subr.mxu0 0.0
    %1650 = vmatpush2.msra.mxu0 0.0
    %1651 = vmatprep.subr.mxu0 0.0
    %1652 = vmatpush2.msra.mxu0 0.0
    %1653 = vmatprep.subr.mxu0 0.0
    %1654 = vmatpush2.msra.mxu0 0.0
    %1655 = vmatprep.subr.mxu0 0.0
    %1656 = vmatpush2.msra.mxu0 0.0
    %1657 = vmatprep.subr.mxu0 0.0
    %1658 = vmatpush2.msra.mxu0 0.0
    %1659 = vmatprep.subr.mxu0 0.0
    %1660 = vmatpush2.msra.mxu0 0.0
    %1661 = vmatprep.subr.mxu0 0.0
    %1662 = vmatpush2.msra.mxu0 0.0
    %1663 = vmatprep.subr.mxu0 0.0
    %1664 = vmatpush2.msra.mxu0 0.0
    %1665 = vmatprep.subr.mxu0 0.0
    %1666 = vmatpush2.msra.mxu0 0.0
    %1667 = vmatprep.subr.mxu0 0.0
    %1668 = vmatpush2.msra.mxu0 0.0
    %1669 = vmatprep.subr.mxu0 0.0
    %1670 = vmatpush2.msra.mxu0 0.0
    %1671 = vmatprep.subr.mxu0 0.0
    %1672 = vmatpush2.msra.mxu0 0.0
    %1673 = vmatprep.mubr.f32.mxu0 0.0
    %1674 = vmatmul.mubr.f32.gmra.mxu0 %v1607
    %v1675 = vpop.f32.mrf.mxu0
    %v1676 = vadd.f32 0.0, %v1675
    %v1677 = vpop.f32.mrf.mxu0
    %1678 = vdwg.mxu0
    %v1680 = vrot.slane %v1604, 4
    %v1682 = vadd.f32 %v1680, %v1676
    %v1683 = vmul.f32 %v1682, 0.5
    %v1684 = vtanh.pop %v1683
    %v1685 = vmul.f32 %v1684, 0.5
    %v1686 = vadd.f32 %v1685, 0.5
    %v1687 = vtanh.pop %v1682
    %v1688 = vmul.f32 %v1686, %v1574
    %1690 = vrot.lane.b32.xlu0 %v1687, 64
    %v1691 = vpop.permute.xlu0 %1690
    %v1693 = vmul.f32 %v1686, %v1691
    %1695 = vrot.lane.b32.xlu0 %v1693, 32
    %v1696 = vpop.permute.xlu0 %1695
    %v1698 = vadd.f32 %v1688, %v1696
    %v1699 = vtanh.pop %v1698
    %1701 = vrot.lane.b32.xlu0 %v1699, 64
    %v1702 = vpop.permute.xlu0 %1701
    %v1704 = vmul.f32 %v1686, %v1702
    %v1705 = vld [vmem:[%s911] sm:$0xf]
    %1707 = vrot.lane.b32.xlu0 %v1704, 64
    %v1708 = vpop.permute.xlu0 %1707
    %v1710 = vsel %vm268, %v1705, %v1708
    %v1711 = vsel %vm1325, %v1710, 0.0
    %1712 = vadd.xlane.f32.xlu0 %v1711
    %v1713 = vpop.xlane.xlu0 %1712
    %v1714 = vmul.f32 %v1713, %v1329
    %v1715 = vsub.f32 %v1710, %v1714
    %v1716 = vmul.f32 %v1715, %v1715
    %v1717 = vsel %vm1325, %v1716, 0.0
    %1718 = vadd.xlane.f32.xlu0 %v1717
    %v1719 = vpop.xlane.xlu0 %1718
    %v1720 = vmul.f32 %v1719, %v1329
    %v1721 = vadd.f32 %v1720, 1e-05
    %v1722 = vrsqrt.pop %v1721
    %v1723 = vmul.f32 %v1715, %v1722
    %v1724 = vmul.f32 %v1723, %v1344
    %v1725 = vadd.f32 %v1724, %v1351
    %s1726 = scalar_lea.vmem [#allocation3], 16
    %1727 = vst.msk [vmem:[%s1726] sm:$0xf] %vm1325, %v1725
    %v1728 = vld [vmem:[%s707] sm:$0xff]
    %1729 = vrot.lane.b32.xlu0 %v1704, 32
    %v1730 = vpop.permute.xlu0 %1729
    %v1731 = vsel %vm268, %v1730, 0
    %1733 = vmatprep.subr.mxu0 0.0
    %1734 = vmatpush1.msra.mxu0 0.0
    %1735 = vmatprep.subr.mxu0 0.0
    %1736 = vmatpush1.msra.mxu0 0.0
    %1737 = vmatprep.subr.mxu0 0.0
    %1738 = vmatpush1.msra.mxu0 0.0
    %1739 = vmatprep.subr.mxu0 0.0
    %1740 = vmatpush1.msra.mxu0 0.0
    %1741 = vmatprep.subr.mxu0 0.0
    %1742 = vmatpush1.msra.mxu0 0.0
    %1743 = vmatprep.subr.mxu0 0.0
    %1744 = vmatpush1.msra.mxu0 0.0
    %1745 = vmatprep.subr.mxu0 0.0
    %1746 = vmatpush1.msra.mxu0 0.0
    %1747 = vmatprep.subr.mxu0 0.0
    %1748 = vmatpush1.msra.mxu0 0.0
    %1749 = vmatprep.subr.mxu0 0.0
    %1750 = vmatpush1.msra.mxu0 0.0
    %1751 = vmatprep.subr.mxu0 0.0
    %1752 = vmatpush1.msra.mxu0 0.0
    %1753 = vmatprep.subr.mxu0 0.0
    %1754 = vmatpush1.msra.mxu0 0.0
    %1755 = vmatprep.subr.mxu0 0.0
    %1756 = vmatpush1.msra.mxu0 0.0
    %1757 = vmatprep.subr.mxu0 0.0
    %1758 = vmatpush1.msra.mxu0 %v191
    %1759 = vmatprep.subr.mxu0 0.0
    %1760 = vmatpush1.msra.mxu0 %v190
    %1761 = vmatprep.subr.mxu0 0.0
    %1762 = vmatpush1.msra.mxu0 %v189
    %1763 = vmatprep.subr.mxu0 0.0
    %1764 = vmatpush1.msra.mxu0 %v188
    %1765 = vmatprep.subr.mxu0 0.0
    %1766 = vmatpush2.msra.mxu0 0.0
    %1767 = vmatprep.subr.mxu0 0.0
    %1768 = vmatpush2.msra.mxu0 0.0
    %1769 = vmatprep.subr.mxu0 0.0
    %1770 = vmatpush2.msra.mxu0 0.0
    %1771 = vmatprep.subr.mxu0 0.0
    %1772 = vmatpush2.msra.mxu0 0.0
    %1773 = vmatprep.subr.mxu0 0.0
    %1774 = vmatpush2.msra.mxu0 0.0
    %1775 = vmatprep.subr.mxu0 0.0
    %1776 = vmatpush2.msra.mxu0 0.0
    %1777 = vmatprep.subr.mxu0 0.0
    %1778 = vmatpush2.msra.mxu0 0.0
    %1779 = vmatprep.subr.mxu0 0.0
    %1780 = vmatpush2.msra.mxu0 0.0
    %1781 = vmatprep.subr.mxu0 0.0
    %1782 = vmatpush2.msra.mxu0 0.0
    %1783 = vmatprep.subr.mxu0 0.0
    %1784 = vmatpush2.msra.mxu0 0.0
    %1785 = vmatprep.subr.mxu0 0.0
    %1786 = vmatpush2.msra.mxu0 0.0
    %1787 = vmatprep.subr.mxu0 0.0
    %1788 = vmatpush2.msra.mxu0 0.0
    %1789 = vmatprep.subr.mxu0 0.0
    %1790 = vmatpush2.msra.mxu0 0.0
    %1791 = vmatprep.subr.mxu0 0.0
    %1792 = vmatpush2.msra.mxu0 0.0
    %1793 = vmatprep.subr.mxu0 0.0
    %1794 = vmatpush2.msra.mxu0 0.0
    %1795 = vmatprep.subr.mxu0 0.0
    %1796 = vmatpush2.msra.mxu0 0.0
    %1797 = vmatprep.mubr.f32.mxu0 0.0
    %1798 = vmatmul.mubr.f32.gmra.mxu0 %v1731
    %v1799 = vpop.f32.mrf.mxu0
    %v1800 = vadd.f32 0.0, %v1799
    %v1801 = vpop.f32.mrf.mxu0
    %1802 = vdwg.mxu0
    %v1804 = vrot.slane %v1728, 4
    %v1806 = vadd.f32 %v1804, %v1800
    %v1807 = vmul.f32 %v1806, 0.5
    %v1808 = vtanh.pop %v1807
    %v1809 = vmul.f32 %v1808, 0.5
    %v1810 = vadd.f32 %v1809, 0.5
    %v1811 = vtanh.pop %v1806
    %v1812 = vmul.f32 %v1810, %v1698
    %1814 = vrot.lane.b32.xlu0 %v1811, 64
    %v1815 = vpop.permute.xlu0 %1814
    %v1817 = vmul.f32 %v1810, %v1815
    %1819 = vrot.lane.b32.xlu0 %v1817, 32
    %v1820 = vpop.permute.xlu0 %1819
    %v1822 = vadd.f32 %v1812, %v1820
    %v1823 = vtanh.pop %v1822
    %1825 = vrot.lane.b32.xlu0 %v1823, 64
    %v1826 = vpop.permute.xlu0 %1825
    %v1828 = vmul.f32 %v1810, %v1826
    %v1829 = vld [vmem:[%s808] sm:$0xf]
    %1831 = vrot.lane.b32.xlu0 %v1828, 64
    %v1832 = vpop.permute.xlu0 %1831
    %v1834 = vsel %vm268, %v1829, %v1832
    %v1835 = vsel %vm1325, %v1834, 0.0
    %1836 = vadd.xlane.f32.xlu0 %v1835
    %v1837 = vpop.xlane.xlu0 %1836
    %v1838 = vmul.f32 %v1837, %v1329
    %v1839 = vsub.f32 %v1834, %v1838
    %v1840 = vmul.f32 %v1839, %v1839
    %v1841 = vsel %vm1325, %v1840, 0.0
    %1842 = vadd.xlane.f32.xlu0 %v1841
    %v1843 = vpop.xlane.xlu0 %1842
    %v1844 = vmul.f32 %v1843, %v1329
    %v1845 = vadd.f32 %v1844, 1e-05
    %v1846 = vrsqrt.pop %v1845
    %v1847 = vmul.f32 %v1839, %v1846
    %v1848 = vmul.f32 %v1847, %v1344
    %v1849 = vadd.f32 %v1848, %v1351
    %s1850 = scalar_lea.vmem [#allocation3], 12
    %1851 = vst.msk [vmem:[%s1850] sm:$0xf] %vm1325, %v1849
    %v1852 = vld [vmem:[%s604] sm:$0xff]
    %1853 = vrot.lane.b32.xlu0 %v1828, 32
    %v1854 = vpop.permute.xlu0 %1853
    %v1855 = vsel %vm268, %v1854, 0
    %1857 = vmatprep.subr.mxu0 0.0
    %1858 = vmatpush1.msra.mxu0 0.0
    %1859 = vmatprep.subr.mxu0 0.0
    %1860 = vmatpush1.msra.mxu0 0.0
    %1861 = vmatprep.subr.mxu0 0.0
    %1862 = vmatpush1.msra.mxu0 0.0
    %1863 = vmatprep.subr.mxu0 0.0
    %1864 = vmatpush1.msra.mxu0 0.0
    %1865 = vmatprep.subr.mxu0 0.0
    %1866 = vmatpush1.msra.mxu0 0.0
    %1867 = vmatprep.subr.mxu0 0.0
    %1868 = vmatpush1.msra.mxu0 0.0
    %1869 = vmatprep.subr.mxu0 0.0
    %1870 = vmatpush1.msra.mxu0 0.0
    %1871 = vmatprep.subr.mxu0 0.0
    %1872 = vmatpush1.msra.mxu0 0.0
    %1873 = vmatprep.subr.mxu0 0.0
    %1874 = vmatpush1.msra.mxu0 0.0
    %1875 = vmatprep.subr.mxu0 0.0
    %1876 = vmatpush1.msra.mxu0 0.0
    %1877 = vmatprep.subr.mxu0 0.0
    %1878 = vmatpush1.msra.mxu0 0.0
    %1879 = vmatprep.subr.mxu0 0.0
    %1880 = vmatpush1.msra.mxu0 0.0
    %1881 = vmatprep.subr.mxu0 0.0
    %1882 = vmatpush1.msra.mxu0 %v191
    %1883 = vmatprep.subr.mxu0 0.0
    %1884 = vmatpush1.msra.mxu0 %v190
    %1885 = vmatprep.subr.mxu0 0.0
    %1886 = vmatpush1.msra.mxu0 %v189
    %1887 = vmatprep.subr.mxu0 0.0
    %1888 = vmatpush1.msra.mxu0 %v188
    %1889 = vmatprep.subr.mxu0 0.0
    %1890 = vmatpush2.msra.mxu0 0.0
    %1891 = vmatprep.subr.mxu0 0.0
    %1892 = vmatpush2.msra.mxu0 0.0
    %1893 = vmatprep.subr.mxu0 0.0
    %1894 = vmatpush2.msra.mxu0 0.0
    %1895 = vmatprep.subr.mxu0 0.0
    %1896 = vmatpush2.msra.mxu0 0.0
    %1897 = vmatprep.subr.mxu0 0.0
    %1898 = vmatpush2.msra.mxu0 0.0
    %1899 = vmatprep.subr.mxu0 0.0
    %1900 = vmatpush2.msra.mxu0 0.0
    %1901 = vmatprep.subr.mxu0 0.0
    %1902 = vmatpush2.msra.mxu0 0.0
    %1903 = vmatprep.subr.mxu0 0.0
    %1904 = vmatpush2.msra.mxu0 0.0
    %1905 = vmatprep.subr.mxu0 0.0
    %1906 = vmatpush2.msra.mxu0 0.0
    %1907 = vmatprep.subr.mxu0 0.0
    %1908 = vmatpush2.msra.mxu0 0.0
    %1909 = vmatprep.subr.mxu0 0.0
    %1910 = vmatpush2.msra.mxu0 0.0
    %1911 = vmatprep.subr.mxu0 0.0
    %1912 = vmatpush2.msra.mxu0 0.0
    %1913 = vmatprep.subr.mxu0 0.0
    %1914 = vmatpush2.msra.mxu0 0.0
    %1915 = vmatprep.subr.mxu0 0.0
    %1916 = vmatpush2.msra.mxu0 0.0
    %1917 = vmatprep.subr.mxu0 0.0
    %1918 = vmatpush2.msra.mxu0 0.0
    %1919 = vmatprep.subr.mxu0 0.0
    %1920 = vmatpush2.msra.mxu0 0.0
    %1921 = vmatprep.mubr.f32.mxu0 0.0
    %1922 = vmatmul.mubr.f32.gmra.mxu0 %v1855
    %v1923 = vpop.f32.mrf.mxu0
    %v1924 = vadd.f32 0.0, %v1923
    %v1925 = vpop.f32.mrf.mxu0
    %1926 = vdwg.mxu0
    %v1928 = vrot.slane %v1852, 4
    %v1930 = vadd.f32 %v1928, %v1924
    %v1931 = vmul.f32 %v1930, 0.5
    %v1932 = vtanh.pop %v1931
    %v1933 = vmul.f32 %v1932, 0.5
    %v1934 = vadd.f32 %v1933, 0.5
    %v1935 = vtanh.pop %v1930
    %v1936 = vmul.f32 %v1934, %v1822
    %1938 = vrot.lane.b32.xlu0 %v1935, 64
    %v1939 = vpop.permute.xlu0 %1938
    %v1941 = vmul.f32 %v1934, %v1939
    %1943 = vrot.lane.b32.xlu0 %v1941, 32
    %v1944 = vpop.permute.xlu0 %1943
    %v1946 = vadd.f32 %v1936, %v1944
    %v1947 = vtanh.pop %v1946
    %1949 = vrot.lane.b32.xlu0 %v1947, 64
    %v1950 = vpop.permute.xlu0 %1949
    %v1952 = vmul.f32 %v1934, %v1950
    %v1953 = vld [vmem:[%s705] sm:$0xf]
    %1955 = vrot.lane.b32.xlu0 %v1952, 64
    %v1956 = vpop.permute.xlu0 %1955
    %v1958 = vsel %vm268, %v1953, %v1956
    %v1959 = vsel %vm1325, %v1958, 0.0
    %1960 = vadd.xlane.f32.xlu0 %v1959
    %v1961 = vpop.xlane.xlu0 %1960
    %v1962 = vmul.f32 %v1961, %v1329
    %v1963 = vsub.f32 %v1958, %v1962
    %v1964 = vmul.f32 %v1963, %v1963
    %v1965 = vsel %vm1325, %v1964, 0.0
    %1966 = vadd.xlane.f32.xlu0 %v1965
    %v1967 = vpop.xlane.xlu0 %1966
    %v1968 = vmul.f32 %v1967, %v1329
    %v1969 = vadd.f32 %v1968, 1e-05
    %v1970 = vrsqrt.pop %v1969
    %v1971 = vmul.f32 %v1963, %v1970
    %v1972 = vmul.f32 %v1971, %v1344
    %v1973 = vadd.f32 %v1972, %v1351
    %s1974 = scalar_lea.vmem [#allocation3], 8
    %1975 = vst.msk [vmem:[%s1974] sm:$0xf] %vm1325, %v1973
    %v1976 = vld [vmem:[%s501] sm:$0xff]
    %1977 = vrot.lane.b32.xlu0 %v1952, 32
    %v1978 = vpop.permute.xlu0 %1977
    %v1979 = vsel %vm268, %v1978, 0
    %1981 = vmatprep.subr.mxu0 0.0
    %1982 = vmatpush1.msra.mxu0 0.0
    %1983 = vmatprep.subr.mxu0 0.0
    %1984 = vmatpush1.msra.mxu0 0.0
    %1985 = vmatprep.subr.mxu0 0.0
    %1986 = vmatpush1.msra.mxu0 0.0
    %1987 = vmatprep.subr.mxu0 0.0
    %1988 = vmatpush1.msra.mxu0 0.0
    %1989 = vmatprep.subr.mxu0 0.0
    %1990 = vmatpush1.msra.mxu0 0.0
    %1991 = vmatprep.subr.mxu0 0.0
    %1992 = vmatpush1.msra.mxu0 0.0
    %1993 = vmatprep.subr.mxu0 0.0
    %1994 = vmatpush1.msra.mxu0 0.0
    %1995 = vmatprep.subr.mxu0 0.0
    %1996 = vmatpush1.msra.mxu0 0.0
    %1997 = vmatprep.subr.mxu0 0.0
    %1998 = vmatpush1.msra.mxu0 0.0
    %1999 = vmatprep.subr.mxu0 0.0
    %2000 = vmatpush1.msra.mxu0 0.0
    %2001 = vmatprep.subr.mxu0 0.0
    %2002 = vmatpush1.msra.mxu0 0.0
    %2003 = vmatprep.subr.mxu0 0.0
    %2004 = vmatpush1.msra.mxu0 0.0
    %2005 = vmatprep.subr.mxu0 0.0
    %2006 = vmatpush1.msra.mxu0 %v191
    %2007 = vmatprep.subr.mxu0 0.0
    %2008 = vmatpush1.msra.mxu0 %v190
    %2009 = vmatprep.subr.mxu0 0.0
    %2010 = vmatpush1.msra.mxu0 %v189
    %2011 = vmatprep.subr.mxu0 0.0
    %2012 = vmatpush1.msra.mxu0 %v188
    %2013 = vmatprep.subr.mxu0 0.0
    %2014 = vmatpush2.msra.mxu0 0.0
    %2015 = vmatprep.subr.mxu0 0.0
    %2016 = vmatpush2.msra.mxu0 0.0
    %2017 = vmatprep.subr.mxu0 0.0
    %2018 = vmatpush2.msra.mxu0 0.0
    %2019 = vmatprep.subr.mxu0 0.0
    %2020 = vmatpush2.msra.mxu0 0.0
    %2021 = vmatprep.subr.mxu0 0.0
    %2022 = vmatpush2.msra.mxu0 0.0
    %2023 = vmatprep.subr.mxu0 0.0
    %2024 = vmatpush2.msra.mxu0 0.0
    %2025 = vmatprep.subr.mxu0 0.0
    %2026 = vmatpush2.msra.mxu0 0.0
    %2027 = vmatprep.subr.mxu0 0.0
    %2028 = vmatpush2.msra.mxu0 0.0
    %2029 = vmatprep.subr.mxu0 0.0
    %2030 = vmatpush2.msra.mxu0 0.0
    %2031 = vmatprep.subr.mxu0 0.0
    %2032 = vmatpush2.msra.mxu0 0.0
    %2033 = vmatprep.subr.mxu0 0.0
    %2034 = vmatpush2.msra.mxu0 0.0
    %2035 = vmatprep.subr.mxu0 0.0
    %2036 = vmatpush2.msra.mxu0 0.0
    %2037 = vmatprep.subr.mxu0 0.0
    %2038 = vmatpush2.msra.mxu0 0.0
    %2039 = vmatprep.subr.mxu0 0.0
    %2040 = vmatpush2.msra.mxu0 0.0
    %2041 = vmatprep.subr.mxu0 0.0
    %2042 = vmatpush2.msra.mxu0 0.0
    %2043 = vmatprep.subr.mxu0 0.0
    %2044 = vmatpush2.msra.mxu0 0.0
    %2045 = vmatprep.mubr.f32.mxu0 0.0
    %2046 = vmatmul.mubr.f32.gmra.mxu0 %v1979
    %v2047 = vpop.f32.mrf.mxu0
    %v2048 = vadd.f32 0.0, %v2047
    %v2049 = vpop.f32.mrf.mxu0
    %2050 = vdwg.mxu0
    %v2052 = vrot.slane %v1976, 4
    %v2054 = vadd.f32 %v2052, %v2048
    %v2055 = vmul.f32 %v2054, 0.5
    %v2056 = vtanh.pop %v2055
    %v2057 = vmul.f32 %v2056, 0.5
    %v2058 = vadd.f32 %v2057, 0.5
    %v2059 = vtanh.pop %v2054
    %v2060 = vmul.f32 %v2058, %v1946
    %2062 = vrot.lane.b32.xlu0 %v2059, 64
    %v2063 = vpop.permute.xlu0 %2062
    %v2065 = vmul.f32 %v2058, %v2063
    %2067 = vrot.lane.b32.xlu0 %v2065, 32
    %v2068 = vpop.permute.xlu0 %2067
    %v2070 = vadd.f32 %v2060, %v2068
    %v2071 = vtanh.pop %v2070
    %2073 = vrot.lane.b32.xlu0 %v2071, 64
    %v2074 = vpop.permute.xlu0 %2073
    %v2076 = vmul.f32 %v2058, %v2074
    %v2077 = vld [vmem:[%s602] sm:$0xf]
    %2079 = vrot.lane.b32.xlu0 %v2076, 64
    %v2080 = vpop.permute.xlu0 %2079
    %v2082 = vsel %vm268, %v2077, %v2080
    %v2083 = vsel %vm1325, %v2082, 0.0
    %2084 = vadd.xlane.f32.xlu0 %v2083
    %v2085 = vpop.xlane.xlu0 %2084
    %v2086 = vmul.f32 %v2085, %v1329
    %v2087 = vsub.f32 %v2082, %v2086
    %v2088 = vmul.f32 %v2087, %v2087
    %v2089 = vsel %vm1325, %v2088, 0.0
    %2090 = vadd.xlane.f32.xlu0 %v2089
    %v2091 = vpop.xlane.xlu0 %2090
    %v2092 = vmul.f32 %v2091, %v1329
    %v2093 = vadd.f32 %v2092, 1e-05
    %v2094 = vrsqrt.pop %v2093
    %v2095 = vmul.f32 %v2087, %v2094
    %v2096 = vmul.f32 %v2095, %v1344
    %v2097 = vadd.f32 %v2096, %v1351
    %s2098 = scalar_lea.vmem [#allocation3], 4
    %2099 = vst.msk [vmem:[%s2098] sm:$0xf] %vm1325, %v2097
    %v2100 = vld [vmem:[#allocation4] sm:$0xff]
    %2101 = vrot.lane.b32.xlu0 %v2076, 32
    %v2102 = vpop.permute.xlu0 %2101
    %v2103 = vsel %vm268, %v2102, 0
    %2105 = vmatprep.subr.mxu0 0.0
    %2106 = vmatpush1.msra.mxu0 0.0
    %2107 = vmatprep.subr.mxu0 0.0
    %2108 = vmatpush1.msra.mxu0 0.0
    %2109 = vmatprep.subr.mxu0 0.0
    %2110 = vmatpush1.msra.mxu0 0.0
    %2111 = vmatprep.subr.mxu0 0.0
    %2112 = vmatpush1.msra.mxu0 0.0
    %2113 = vmatprep.subr.mxu0 0.0
    %2114 = vmatpush1.msra.mxu0 0.0
    %2115 = vmatprep.subr.mxu0 0.0
    %2116 = vmatpush1.msra.mxu0 0.0
    %2117 = vmatprep.subr.mxu0 0.0
    %2118 = vmatpush1.msra.mxu0 0.0
    %2119 = vmatprep.subr.mxu0 0.0
    %2120 = vmatpush1.msra.mxu0 0.0
    %2121 = vmatprep.subr.mxu0 0.0
    %2122 = vmatpush1.msra.mxu0 0.0
    %2123 = vmatprep.subr.mxu0 0.0
    %2124 = vmatpush1.msra.mxu0 0.0
    %2125 = vmatprep.subr.mxu0 0.0
    %2126 = vmatpush1.msra.mxu0 0.0
    %2127 = vmatprep.subr.mxu0 0.0
    %2128 = vmatpush1.msra.mxu0 0.0
    %2129 = vmatprep.subr.mxu0 0.0
    %2130 = vmatpush1.msra.mxu0 %v191
    %2131 = vmatprep.subr.mxu0 0.0
    %2132 = vmatpush1.msra.mxu0 %v190
    %2133 = vmatprep.subr.mxu0 0.0
    %2134 = vmatpush1.msra.mxu0 %v189
    %2135 = vmatprep.subr.mxu0 0.0
    %2136 = vmatpush1.msra.mxu0 %v188
    %2137 = vmatprep.subr.mxu0 0.0
    %2138 = vmatpush2.msra.mxu0 0.0
    %2139 = vmatprep.subr.mxu0 0.0
    %2140 = vmatpush2.msra.mxu0 0.0
    %2141 = vmatprep.subr.mxu0 0.0
    %2142 = vmatpush2.msra.mxu0 0.0
    %2143 = vmatprep.subr.mxu0 0.0
    %2144 = vmatpush2.msra.mxu0 0.0
    %2145 = vmatprep.subr.mxu0 0.0
    %2146 = vmatpush2.msra.mxu0 0.0
    %2147 = vmatprep.subr.mxu0 0.0
    %2148 = vmatpush2.msra.mxu0 0.0
    %2149 = vmatprep.subr.mxu0 0.0
    %2150 = vmatpush2.msra.mxu0 0.0
    %2151 = vmatprep.subr.mxu0 0.0
    %2152 = vmatpush2.msra.mxu0 0.0
    %2153 = vmatprep.subr.mxu0 0.0
    %2154 = vmatpush2.msra.mxu0 0.0
    %2155 = vmatprep.subr.mxu0 0.0
    %2156 = vmatpush2.msra.mxu0 0.0
    %2157 = vmatprep.subr.mxu0 0.0
    %2158 = vmatpush2.msra.mxu0 0.0
    %2159 = vmatprep.subr.mxu0 0.0
    %2160 = vmatpush2.msra.mxu0 0.0
    %2161 = vmatprep.subr.mxu0 0.0
    %2162 = vmatpush2.msra.mxu0 0.0
    %2163 = vmatprep.subr.mxu0 0.0
    %2164 = vmatpush2.msra.mxu0 0.0
    %2165 = vmatprep.subr.mxu0 0.0
    %2166 = vmatpush2.msra.mxu0 0.0
    %2167 = vmatprep.subr.mxu0 0.0
    %2168 = vmatpush2.msra.mxu0 0.0
    %2169 = vmatprep.mubr.f32.mxu0 0.0
    %2170 = vmatmul.mubr.f32.gmra.mxu0 %v2103
    %v2171 = vpop.f32.mrf.mxu0
    %v2172 = vadd.f32 0.0, %v2171
    %v2173 = vpop.f32.mrf.mxu0
    %2174 = vdwg.mxu0
    %v2176 = vrot.slane %v2100, 4
    %v2178 = vadd.f32 %v2176, %v2172
    %v2179 = vmul.f32 %v2178, 0.5
    %v2180 = vtanh.pop %v2179
    %v2181 = vmul.f32 %v2180, 0.5
    %v2182 = vadd.f32 %v2181, 0.5
    %v2183 = vtanh.pop %v2178
    %v2184 = vmul.f32 %v2182, %v2070
    %2186 = vrot.lane.b32.xlu0 %v2183, 64
    %v2187 = vpop.permute.xlu0 %2186
    %v2189 = vmul.f32 %v2182, %v2187
    %2191 = vrot.lane.b32.xlu0 %v2189, 32
    %v2192 = vpop.permute.xlu0 %2191
    %v2194 = vadd.f32 %v2184, %v2192
    %v2195 = vtanh.pop %v2194
    %2197 = vrot.lane.b32.xlu0 %v2195, 64
    %v2198 = vpop.permute.xlu0 %2197
    %v2200 = vmul.f32 %v2182, %v2198
    %v2201 = vld [vmem:[#allocation2] sm:$0xf]
    %2203 = vrot.lane.b32.xlu0 %v2200, 64
    %v2204 = vpop.permute.xlu0 %2203
    %v2206 = vsel %vm268, %v2201, %v2204
    %v2207 = vsel %vm1325, %v2206, 0.0
    %2208 = vadd.xlane.f32.xlu0 %v2207
    %v2209 = vpop.xlane.xlu0 %2208
    %v2210 = vmul.f32 %v2209, %v1329
    %v2211 = vsub.f32 %v2206, %v2210
    %v2212 = vmul.f32 %v2211, %v2211
    %v2213 = vsel %vm1325, %v2212, 0.0
    %2214 = vadd.xlane.f32.xlu0 %v2213
    %v2215 = vpop.xlane.xlu0 %2214
    %v2216 = vmul.f32 %v2215, %v1329
    %v2217 = vadd.f32 %v2216, 1e-05
    %v2218 = vrsqrt.pop %v2217
    %v2219 = vmul.f32 %v2211, %v2218
    %v2220 = vmul.f32 %v2219, %v1344
    %v2221 = vadd.f32 %v2220, %v1351
    %2222 = vst.msk [vmem:[#allocation3] sm:$0xf] %vm1325, %v2221
    %v2223 = vld [vmem:[#allocation3] sm:$0xf]
    %v2224 = vld [vmem:[#allocation3 + $0x4] sm:$0xf]
    %v2225 = vld [vmem:[#allocation3 + $0x8] sm:$0xf]
    %v2226 = vld [vmem:[#allocation3 + $0xc] sm:$0xf]
    %v2227 = vld [vmem:[#allocation3 + $0x10] sm:$0xf]
    %v2228 = vld [vmem:[#allocation3 + $0x14] sm:$0xf]
    %v2229 = vld [vmem:[#allocation3 + $0x18] sm:$0xf]
    %v2230 = vld [vmem:[#allocation3 + $0x1c] sm:$0xf]
    %v2231 = vld [vmem:[%s6] sm:$0xff]
    %v2232 = vld [vmem:[%s6 + $0x8] sm:$0xff]
    %v2233 = vld [vmem:[%s6 + $0x10] sm:$0xff]
    %v2234 = vld [vmem:[%s6 + $0x18] sm:$0xff]
    %v2235 = vld [vmem:[%s6 + $0x20] sm:$0xff]
    %v2236 = vld [vmem:[%s6 + $0x28] sm:$0xff]
    %v2237 = vld [vmem:[%s6 + $0x30] sm:$0xff]
    %v2238 = vld [vmem:[%s6 + $0x38] sm:$0xff]
    %v2239 = vld [vmem:[%s6 + $0x40] sm:$0xff]
    %v2240 = vld [vmem:[%s6 + $0x48] sm:$0xff]
    %v2241 = vld [vmem:[%s6 + $0x50] sm:$0xff]
    %v2242 = vld [vmem:[%s6 + $0x58] sm:$0xff]
    %v2243 = vld [vmem:[%s6 + $0x60] sm:$0xff]
    %v2244 = vld [vmem:[%s6 + $0x68] sm:$0xff]
    %v2245 = vld [vmem:[%s6 + $0x70] sm:$0xff]
    %v2246 = vld [vmem:[%s6 + $0x78] sm:$0xff]
    %v2247 = vld [vmem:[%s8] sm:$0x3]
    %v2249 = vlaneseq
    %v2250 = vshrl.u32 %v2249, 7
    %v2251 = vsub.s32 0, %v2250
    %v2252 = vrot.slane %v2247, %v2251
    %v2253 = vlaneseq
    %v2254 = vshrl.u32 %v2253, 7
    %v2255 = vsub.s32 1, %v2254
    %v2256 = vrot.slane %v2247, %v2255
    %v2267 = vcombine.low %v2223, %v2224
    %v2268 = vcombine.low %v2225, %v2226
    %v2269 = vcombine.low %v2227, %v2228
    %v2270 = vcombine.low %v2229, %v2230
    %vm2271 = vcmask 523264
    %v2272 = vsel %vm2271, %v2267, 0
    %v2274 = vsel %vm2271, %v2268, 0
    %v2276 = vsel %vm2271, %v2269, 0
    %v2278 = vsel %vm2271, %v2270, 0
    %2280 = vmatprep.subr.mxu0 0.0
    %2281 = vmatpush1.msra.mxu0 0.0
    %2282 = vmatprep.subr.mxu0 0.0
    %2283 = vmatpush1.msra.mxu0 0.0
    %2284 = vmatprep.subr.mxu0 0.0
    %2285 = vmatpush1.msra.mxu0 0.0
    %2286 = vmatprep.subr.mxu0 0.0
    %2287 = vmatpush1.msra.mxu0 0.0
    %2288 = vmatprep.subr.mxu0 0.0
    %2289 = vmatpush1.msra.mxu0 0.0
    %2290 = vmatprep.subr.mxu0 0.0
    %2291 = vmatpush1.msra.mxu0 0.0
    %2292 = vmatprep.subr.mxu0 0.0
    %2293 = vmatpush1.msra.mxu0 0.0
    %2294 = vmatprep.subr.mxu0 0.0
    %2295 = vmatpush1.msra.mxu0 0.0
    %2296 = vmatprep.subr.mxu0 %v2246
    %2297 = vmatpush1.msra.mxu0 %v2245
    %2298 = vmatprep.subr.mxu0 %v2244
    %2299 = vmatpush1.msra.mxu0 %v2243
    %2300 = vmatprep.subr.mxu0 %v2242
    %2301 = vmatpush1.msra.mxu0 %v2241
    %2302 = vmatprep.subr.mxu0 %v2240
    %2303 = vmatpush1.msra.mxu0 %v2239
    %2304 = vmatprep.subr.mxu0 %v2238
    %2305 = vmatpush1.msra.mxu0 %v2237
    %2306 = vmatprep.subr.mxu0 %v2236
    %2307 = vmatpush1.msra.mxu0 %v2235
    %2308 = vmatprep.subr.mxu0 %v2234
    %2309 = vmatpush1.msra.mxu0 %v2233
    %2310 = vmatprep.subr.mxu0 %v2232
    %2311 = vmatpush1.msra.mxu0 %v2231
    %2312 = vmatprep.subr.mxu0 0.0
    %2313 = vmatpush2.msra.mxu0 0.0
    %2314 = vmatprep.subr.mxu0 0.0
    %2315 = vmatpush2.msra.mxu0 0.0
    %2316 = vmatprep.subr.mxu0 0.0
    %2317 = vmatpush2.msra.mxu0 0.0
    %2318 = vmatprep.subr.mxu0 0.0
    %2319 = vmatpush2.msra.mxu0 0.0
    %2320 = vmatprep.subr.mxu0 0.0
    %2321 = vmatpush2.msra.mxu0 0.0
    %2322 = vmatprep.subr.mxu0 0.0
    %2323 = vmatpush2.msra.mxu0 0.0
    %2324 = vmatprep.subr.mxu0 0.0
    %2325 = vmatpush2.msra.mxu0 0.0
    %2326 = vmatprep.subr.mxu0 0.0
    %2327 = vmatpush2.msra.mxu0 0.0
    %2328 = vmatprep.subr.mxu0 0.0
    %2329 = vmatpush2.msra.mxu0 0.0
    %2330 = vmatprep.subr.mxu0 0.0
    %2331 = vmatpush2.msra.mxu0 0.0
    %2332 = vmatprep.subr.mxu0 0.0
    %2333 = vmatpush2.msra.mxu0 0.0
    %2334 = vmatprep.subr.mxu0 0.0
    %2335 = vmatpush2.msra.mxu0 0.0
    %2336 = vmatprep.subr.mxu0 0.0
    %2337 = vmatpush2.msra.mxu0 0.0
    %2338 = vmatprep.subr.mxu0 0.0
    %2339 = vmatpush2.msra.mxu0 0.0
    %2340 = vmatprep.subr.mxu0 0.0
    %2341 = vmatpush2.msra.mxu0 0.0
    %2342 = vmatprep.subr.mxu0 0.0
    %2343 = vmatpush2.msra.mxu0 0.0
    %2344 = vmatprep.mubr.f32.mxu0 0.0
    %2345 = vmatmul.mubr.f32.gmra.mxu0 %v2272
    %v2346 = vpop.f32.mrf.mxu0
    %v2347 = vadd.f32 %v2252, %v2346
    %v2348 = vpop.f32.mrf.mxu0
    %v2349 = vadd.f32 %v2256, %v2348
    %2350 = vmatprep.mubr.f32.mxu0 0.0
    %2351 = vmatmul.mubr.f32.gmra.mxu0 %v2274
    %v2352 = vpop.f32.mrf.mxu0
    %v2353 = vadd.f32 %v2252, %v2352
    %v2354 = vpop.f32.mrf.mxu0
    %v2355 = vadd.f32 %v2256, %v2354
    %2356 = vmatprep.mubr.f32.mxu0 0.0
    %2357 = vmatmul.mubr.f32.gmra.mxu0 %v2276
    %v2358 = vpop.f32.mrf.mxu0
    %v2359 = vadd.f32 %v2252, %v2358
    %v2360 = vpop.f32.mrf.mxu0
    %v2361 = vadd.f32 %v2256, %v2360
    %2362 = vmatprep.mubr.f32.mxu0 0.0
    %2363 = vmatmul.mubr.f32.gmra.mxu0 %v2278
    %v2364 = vpop.f32.mrf.mxu0
    %v2365 = vadd.f32 %v2252, %v2364
    %v2366 = vpop.f32.mrf.mxu0
    %v2367 = vadd.f32 %v2256, %v2366
    %2368 = vdwg.mxu0
    %v2377 = vcombine.low %v2347, %v2349
    %v2378 = vcombine.high %v2347, %v2349
    %v2379 = vcombine.low %v2353, %v2355
    %v2380 = vcombine.high %v2353, %v2355
    %v2381 = vcombine.low %v2359, %v2361
    %v2382 = vcombine.high %v2359, %v2361
    %v2383 = vcombine.low %v2365, %v2367
    %v2384 = vcombine.high %v2365, %v2367
    %2393 = vst [vmem:[#allocation4] sm:$0xff] %v2377
    %2394 = vst [vmem:[#allocation4 + $0x8] sm:$0xff] %v2378
    %2395 = vst [vmem:[#allocation4 + $0x10] sm:$0xff] %v2379
    %2396 = vst [vmem:[#allocation4 + $0x18] sm:$0xff] %v2380
    %2397 = vst [vmem:[#allocation4 + $0x20] sm:$0xff] %v2381
    %2398 = vst [vmem:[#allocation4 + $0x28] sm:$0xff] %v2382
    %2399 = vst [vmem:[#allocation4 + $0x30] sm:$0xff] %v2383
    %2400 = vst [vmem:[#allocation4 + $0x38] sm:$0xff] %v2384
    %v2401 = vld [vmem:[#allocation3] sm:$0xf]
    %v2402 = vld [vmem:[#allocation4] sm:$0xff]
    %v2403 = vsel %vm2271, 0.0, 0
    %2405 = vmatprep.subr.mxu0 0.0
    %2406 = vmatpush1.msra.mxu0 0.0
    %2407 = vmatprep.subr.mxu0 0.0
    %2408 = vmatpush1.msra.mxu0 0.0
    %2409 = vmatprep.subr.mxu0 0.0
    %2410 = vmatpush1.msra.mxu0 0.0
    %2411 = vmatprep.subr.mxu0 0.0
    %2412 = vmatpush1.msra.mxu0 0.0
    %2413 = vmatprep.subr.mxu0 0.0
    %2414 = vmatpush1.msra.mxu0 0.0
    %2415 = vmatprep.subr.mxu0 0.0
    %2416 = vmatpush1.msra.mxu0 0.0
    %2417 = vmatprep.subr.mxu0 0.0
    %2418 = vmatpush1.msra.mxu0 0.0
    %2419 = vmatprep.subr.mxu0 0.0
    %2420 = vmatpush1.msra.mxu0 0.0
    %2421 = vmatprep.subr.mxu0 %v207
    %2422 = vmatpush1.msra.mxu0 %v206
    %2423 = vmatprep.subr.mxu0 %v205
    %2424 = vmatpush1.msra.mxu0 %v204
    %2425 = vmatprep.subr.mxu0 %v203
    %2426 = vmatpush1.msra.mxu0 %v202
    %2427 = vmatprep.subr.mxu0 %v201
    %2428 = vmatpush1.msra.mxu0 %v200
    %2429 = vmatprep.subr.mxu0 %v199
    %2430 = vmatpush1.msra.mxu0 %v198
    %2431 = vmatprep.subr.mxu0 %v197
    %2432 = vmatpush1.msra.mxu0 %v196
    %2433 = vmatprep.subr.mxu0 %v195
    %2434 = vmatpush1.msra.mxu0 %v194
    %2435 = vmatprep.subr.mxu0 %v193
    %2436 = vmatpush1.msra.mxu0 %v192
    %2437 = vmatprep.subr.mxu0 0.0
    %2438 = vmatpush2.msra.mxu0 0.0
    %2439 = vmatprep.subr.mxu0 0.0
    %2440 = vmatpush2.msra.mxu0 0.0
    %2441 = vmatprep.subr.mxu0 0.0
    %2442 = vmatpush2.msra.mxu0 0.0
    %2443 = vmatprep.subr.mxu0 0.0
    %2444 = vmatpush2.msra.mxu0 0.0
    %2445 = vmatprep.subr.mxu0 0.0
    %2446 = vmatpush2.msra.mxu0 0.0
    %2447 = vmatprep.subr.mxu0 0.0
    %2448 = vmatpush2.msra.mxu0 0.0
    %2449 = vmatprep.subr.mxu0 0.0
    %2450 = vmatpush2.msra.mxu0 0.0
    %2451 = vmatprep.subr.mxu0 0.0
    %2452 = vmatpush2.msra.mxu0 0.0
    %2453 = vmatprep.subr.mxu0 0.0
    %2454 = vmatpush2.msra.mxu0 0.0
    %2455 = vmatprep.subr.mxu0 0.0
    %2456 = vmatpush2.msra.mxu0 0.0
    %2457 = vmatprep.subr.mxu0 0.0
    %2458 = vmatpush2.msra.mxu0 0.0
    %2459 = vmatprep.subr.mxu0 0.0
    %2460 = vmatpush2.msra.mxu0 0.0
    %2461 = vmatprep.subr.mxu0 0.0
    %2462 = vmatpush2.msra.mxu0 0.0
    %2463 = vmatprep.subr.mxu0 0.0
    %2464 = vmatpush2.msra.mxu0 0.0
    %2465 = vmatprep.subr.mxu0 0.0
    %2466 = vmatpush2.msra.mxu0 0.0
    %2467 = vmatprep.subr.mxu0 0.0
    %2468 = vmatpush2.msra.mxu0 0.0
    %2469 = vmatprep.mubr.f32.mxu0 0.0
    %2470 = vmatmul.mubr.f32.gmra.mxu0 %v2403
    %v2471 = vpop.f32.mrf.mxu0
    %v2472 = vadd.f32 0.0, %v2471
    %v2473 = vpop.f32.mrf.mxu0
    %v2474 = vadd.f32 0.0, %v2473
    %2475 = vdwg.mxu0
    %v2478 = vcombine.low %v2472, %v2474
    %v2480 = vadd.f32 %v2402, %v2478
    %v2481 = vmul.f32 %v2480, 0.5
    %v2482 = vtanh.pop %v2481
    %v2483 = vmul.f32 %v2482, 0.5
    %v2484 = vadd.f32 %v2483, 0.5
    %v2486 = vrot.slane %v2480, 4
    %v2488 = vtanh.pop %v2486
    %2489 = vrot.lane.b32.xlu0 %v2480, 64
    %v2490 = vpop.permute.xlu0 %2489
    %v2491 = vrot.slane %v2490, 4
    %v2493 = vmul.f32 %v2491, 0.5
    %v2494 = vtanh.pop %v2493
    %v2495 = vmul.f32 %v2494, 0.5
    %v2496 = vadd.f32 %v2495, 0.5
    %v2497 = vmul.f32 %v2484, 0.0
    %v2498 = vmul.f32 %v2484, %v2488
    %2500 = vrot.lane.b32.xlu0 %v2498, 64
    %v2501 = vpop.permute.xlu0 %2500
    %v2503 = vadd.f32 %v2497, %v2501
    %v2504 = vtanh.pop %v2503
    %2506 = vrot.lane.b32.xlu0 %v2504, 64
    %v2507 = vpop.permute.xlu0 %2506
    %v2509 = vmul.f32 %v2496, %v2507
    %v2510 = vadd.f32 %v2509, %v2401
    %v2511 = vsel %vm1325, %v2510, 0.0
    %2512 = vadd.xlane.f32.xlu0 %v2511
    %v2513 = vpop.xlane.xlu0 %2512
    %v2514 = vmul.f32 %v2513, %v1329
    %v2515 = vsub.f32 %v2510, %v2514
    %v2516 = vmul.f32 %v2515, %v2515
    %v2517 = vsel %vm1325, %v2516, 0.0
    %2518 = vadd.xlane.f32.xlu0 %v2517
    %v2519 = vpop.xlane.xlu0 %2518
    %v2520 = vmul.f32 %v2519, %v1329
    %v2521 = vadd.f32 %v2520, 1e-05
    %v2522 = vrsqrt.pop %v2521
    %v2523 = vmul.f32 %v2515, %v2522
    %v2525 = vlaneseq
    %v2526 = vshrl.u32 %v2525, 7
    %v2527 = vsub.s32 0, %v2526
    %v2528 = vrot.slane %v226, %v2527
    %v2530 = vmul.f32 %v2523, %v2528
    %v2532 = vlaneseq
    %v2533 = vshrl.u32 %v2532, 7
    %v2534 = vsub.s32 0, %v2533
    %v2535 = vrot.slane %v227, %v2534
    %v2537 = vadd.f32 %v2530, %v2535
    %2538 = vst.msk [vmem:[#allocation3] sm:$0xf] %vm1325, %v2537
    %v2539 = vld [vmem:[%s2098] sm:$0xf]
    %v2540 = vld [vmem:[%s501] sm:$0xff]
    %v2542 = vsel %vm2271, %v2509, 0
    %2544 = vmatprep.subr.mxu0 0.0
    %2545 = vmatpush1.msra.mxu0 0.0
    %2546 = vmatprep.subr.mxu0 0.0
    %2547 = vmatpush1.msra.mxu0 0.0
    %2548 = vmatprep.subr.mxu0 0.0
    %2549 = vmatpush1.msra.mxu0 0.0
    %2550 = vmatprep.subr.mxu0 0.0
    %2551 = vmatpush1.msra.mxu0 0.0
    %2552 = vmatprep.subr.mxu0 0.0
    %2553 = vmatpush1.msra.mxu0 0.0
    %2554 = vmatprep.subr.mxu0 0.0
    %2555 = vmatpush1.msra.mxu0 0.0
    %2556 = vmatprep.subr.mxu0 0.0
    %2557 = vmatpush1.msra.mxu0 0.0
    %2558 = vmatprep.subr.mxu0 0.0
    %2559 = vmatpush1.msra.mxu0 0.0
    %2560 = vmatprep.subr.mxu0 %v207
    %2561 = vmatpush1.msra.mxu0 %v206
    %2562 = vmatprep.subr.mxu0 %v205
    %2563 = vmatpush1.msra.mxu0 %v204
    %2564 = vmatprep.subr.mxu0 %v203
    %2565 = vmatpush1.msra.mxu0 %v202
    %2566 = vmatprep.subr.mxu0 %v201
    %2567 = vmatpush1.msra.mxu0 %v200
    %2568 = vmatprep.subr.mxu0 %v199
    %2569 = vmatpush1.msra.mxu0 %v198
    %2570 = vmatprep.subr.mxu0 %v197
    %2571 = vmatpush1.msra.mxu0 %v196
    %2572 = vmatprep.subr.mxu0 %v195
    %2573 = vmatpush1.msra.mxu0 %v194
    %2574 = vmatprep.subr.mxu0 %v193
    %2575 = vmatpush1.msra.mxu0 %v192
    %2576 = vmatprep.subr.mxu0 0.0
    %2577 = vmatpush2.msra.mxu0 0.0
    %2578 = vmatprep.subr.mxu0 0.0
    %2579 = vmatpush2.msra.mxu0 0.0
    %2580 = vmatprep.subr.mxu0 0.0
    %2581 = vmatpush2.msra.mxu0 0.0
    %2582 = vmatprep.subr.mxu0 0.0
    %2583 = vmatpush2.msra.mxu0 0.0
    %2584 = vmatprep.subr.mxu0 0.0
    %2585 = vmatpush2.msra.mxu0 0.0
    %2586 = vmatprep.subr.mxu0 0.0
    %2587 = vmatpush2.msra.mxu0 0.0
    %2588 = vmatprep.subr.mxu0 0.0
    %2589 = vmatpush2.msra.mxu0 0.0
    %2590 = vmatprep.subr.mxu0 0.0
    %2591 = vmatpush2.msra.mxu0 0.0
    %2592 = vmatprep.subr.mxu0 0.0
    %2593 = vmatpush2.msra.mxu0 0.0
    %2594 = vmatprep.subr.mxu0 0.0
    %2595 = vmatpush2.msra.mxu0 0.0
    %2596 = vmatprep.subr.mxu0 0.0
    %2597 = vmatpush2.msra.mxu0 0.0
    %2598 = vmatprep.subr.mxu0 0.0
    %2599 = vmatpush2.msra.mxu0 0.0
    %2600 = vmatprep.subr.mxu0 0.0
    %2601 = vmatpush2.msra.mxu0 0.0
    %2602 = vmatprep.subr.mxu0 0.0
    %2603 = vmatpush2.msra.mxu0 0.0
    %2604 = vmatprep.subr.mxu0 0.0
    %2605 = vmatpush2.msra.mxu0 0.0
    %2606 = vmatprep.subr.mxu0 0.0
    %2607 = vmatpush2.msra.mxu0 0.0
    %2608 = vmatprep.mubr.f32.mxu0 0.0
    %2609 = vmatmul.mubr.f32.gmra.mxu0 %v2542
    %v2610 = vpop.f32.mrf.mxu0
    %v2611 = vadd.f32 0.0, %v2610
    %v2612 = vpop.f32.mrf.mxu0
    %v2613 = vadd.f32 0.0, %v2612
    %2614 = vdwg.mxu0
    %v2617 = vcombine.low %v2611, %v2613
    %v2619 = vadd.f32 %v2540, %v2617
    %v2620 = vmul.f32 %v2619, 0.5
    %v2621 = vtanh.pop %v2620
    %v2622 = vmul.f32 %v2621, 0.5
    %v2623 = vadd.f32 %v2622, 0.5
    %v2625 = vrot.slane %v2619, 4
    %v2627 = vtanh.pop %v2625
    %2628 = vrot.lane.b32.xlu0 %v2619, 64
    %v2629 = vpop.permute.xlu0 %2628
    %v2630 = vrot.slane %v2629, 4
    %v2632 = vmul.f32 %v2630, 0.5
    %v2633 = vtanh.pop %v2632
    %v2634 = vmul.f32 %v2633, 0.5
    %v2635 = vadd.f32 %v2634, 0.5
    %v2636 = vmul.f32 %v2623, %v2503
    %v2637 = vmul.f32 %v2623, %v2627
    %2639 = vrot.lane.b32.xlu0 %v2637, 64
    %v2640 = vpop.permute.xlu0 %2639
    %v2642 = vadd.f32 %v2636, %v2640
    %v2643 = vtanh.pop %v2642
    %2645 = vrot.lane.b32.xlu0 %v2643, 64
    %v2646 = vpop.permute.xlu0 %2645
    %v2648 = vmul.f32 %v2635, %v2646
    %v2649 = vadd.f32 %v2648, %v2539
    %v2650 = vsel %vm1325, %v2649, 0.0
    %2651 = vadd.xlane.f32.xlu0 %v2650
    %v2652 = vpop.xlane.xlu0 %2651
    %v2653 = vmul.f32 %v2652, %v1329
    %v2654 = vsub.f32 %v2649, %v2653
    %v2655 = vmul.f32 %v2654, %v2654
    %v2656 = vsel %vm1325, %v2655, 0.0
    %2657 = vadd.xlane.f32.xlu0 %v2656
    %v2658 = vpop.xlane.xlu0 %2657
    %v2659 = vmul.f32 %v2658, %v1329
    %v2660 = vadd.f32 %v2659, 1e-05
    %v2661 = vrsqrt.pop %v2660
    %v2662 = vmul.f32 %v2654, %v2661
    %v2663 = vmul.f32 %v2662, %v2528
    %v2664 = vadd.f32 %v2663, %v2535
    %2665 = vst.msk [vmem:[%s2098] sm:$0xf] %vm1325, %v2664
    %v2666 = vld [vmem:[%s1974] sm:$0xf]
    %v2667 = vld [vmem:[%s604] sm:$0xff]
    %v2669 = vsel %vm2271, %v2648, 0
    %2671 = vmatprep.subr.mxu0 0.0
    %2672 = vmatpush1.msra.mxu0 0.0
    %2673 = vmatprep.subr.mxu0 0.0
    %2674 = vmatpush1.msra.mxu0 0.0
    %2675 = vmatprep.subr.mxu0 0.0
    %2676 = vmatpush1.msra.mxu0 0.0
    %2677 = vmatprep.subr.mxu0 0.0
    %2678 = vmatpush1.msra.mxu0 0.0
    %2679 = vmatprep.subr.mxu0 0.0
    %2680 = vmatpush1.msra.mxu0 0.0
    %2681 = vmatprep.subr.mxu0 0.0
    %2682 = vmatpush1.msra.mxu0 0.0
    %2683 = vmatprep.subr.mxu0 0.0
    %2684 = vmatpush1.msra.mxu0 0.0
    %2685 = vmatprep.subr.mxu0 0.0
    %2686 = vmatpush1.msra.mxu0 0.0
    %2687 = vmatprep.subr.mxu0 %v207
    %2688 = vmatpush1.msra.mxu0 %v206
    %2689 = vmatprep.subr.mxu0 %v205
    %2690 = vmatpush1.msra.mxu0 %v204
    %2691 = vmatprep.subr.mxu0 %v203
    %2692 = vmatpush1.msra.mxu0 %v202
    %2693 = vmatprep.subr.mxu0 %v201
    %2694 = vmatpush1.msra.mxu0 %v200
    %2695 = vmatprep.subr.mxu0 %v199
    %2696 = vmatpush1.msra.mxu0 %v198
    %2697 = vmatprep.subr.mxu0 %v197
    %2698 = vmatpush1.msra.mxu0 %v196
    %2699 = vmatprep.subr.mxu0 %v195
    %2700 = vmatpush1.msra.mxu0 %v194
    %2701 = vmatprep.subr.mxu0 %v193
    %2702 = vmatpush1.msra.mxu0 %v192
    %2703 = vmatprep.subr.mxu0 0.0
    %2704 = vmatpush2.msra.mxu0 0.0
    %2705 = vmatprep.subr.mxu0 0.0
    %2706 = vmatpush2.msra.mxu0 0.0
    %2707 = vmatprep.subr.mxu0 0.0
    %2708 = vmatpush2.msra.mxu0 0.0
    %2709 = vmatprep.subr.mxu0 0.0
    %2710 = vmatpush2.msra.mxu0 0.0
    %2711 = vmatprep.subr.mxu0 0.0
    %2712 = vmatpush2.msra.mxu0 0.0
    %2713 = vmatprep.subr.mxu0 0.0
    %2714 = vmatpush2.msra.mxu0 0.0
    %2715 = vmatprep.subr.mxu0 0.0
    %2716 = vmatpush2.msra.mxu0 0.0
    %2717 = vmatprep.subr.mxu0 0.0
    %2718 = vmatpush2.msra.mxu0 0.0
    %2719 = vmatprep.subr.mxu0 0.0
    %2720 = vmatpush2.msra.mxu0 0.0
    %2721 = vmatprep.subr.mxu0 0.0
    %2722 = vmatpush2.msra.mxu0 0.0
    %2723 = vmatprep.subr.mxu0 0.0
    %2724 = vmatpush2.msra.mxu0 0.0
    %2725 = vmatprep.subr.mxu0 0.0
    %2726 = vmatpush2.msra.mxu0 0.0
    %2727 = vmatprep.subr.mxu0 0.0
    %2728 = vmatpush2.msra.mxu0 0.0
    %2729 = vmatprep.subr.mxu0 0.0
    %2730 = vmatpush2.msra.mxu0 0.0
    %2731 = vmatprep.subr.mxu0 0.0
    %2732 = vmatpush2.msra.mxu0 0.0
    %2733 = vmatprep.subr.mxu0 0.0
    %2734 = vmatpush2.msra.mxu0 0.0
    %2735 = vmatprep.mubr.f32.mxu0 0.0
    %2736 = vmatmul.mubr.f32.gmra.mxu0 %v2669
    %v2737 = vpop.f32.mrf.mxu0
    %v2738 = vadd.f32 0.0, %v2737
    %v2739 = vpop.f32.mrf.mxu0
    %v2740 = vadd.f32 0.0, %v2739
    %2741 = vdwg.mxu0
    %v2744 = vcombine.low %v2738, %v2740
    %v2746 = vadd.f32 %v2667, %v2744
    %v2747 = vmul.f32 %v2746, 0.5
    %v2748 = vtanh.pop %v2747
    %v2749 = vmul.f32 %v2748, 0.5
    %v2750 = vadd.f32 %v2749, 0.5
    %v2752 = vrot.slane %v2746, 4
    %v2754 = vtanh.pop %v2752
    %2755 = vrot.lane.b32.xlu0 %v2746, 64
    %v2756 = vpop.permute.xlu0 %2755
    %v2757 = vrot.slane %v2756, 4
    %v2759 = vmul.f32 %v2757, 0.5
    %v2760 = vtanh.pop %v2759
    %v2761 = vmul.f32 %v2760, 0.5
    %v2762 = vadd.f32 %v2761, 0.5
    %v2763 = vmul.f32 %v2750, %v2642
    %v2764 = vmul.f32 %v2750, %v2754
    %2766 = vrot.lane.b32.xlu0 %v2764, 64
    %v2767 = vpop.permute.xlu0 %2766
    %v2769 = vadd.f32 %v2763, %v2767
    %v2770 = vtanh.pop %v2769
    %2772 = vrot.lane.b32.xlu0 %v2770, 64
    %v2773 = vpop.permute.xlu0 %2772
    %v2775 = vmul.f32 %v2762, %v2773
    %v2776 = vadd.f32 %v2775, %v2666
    %v2777 = vsel %vm1325, %v2776, 0.0
    %2778 = vadd.xlane.f32.xlu0 %v2777
    %v2779 = vpop.xlane.xlu0 %2778
    %v2780 = vmul.f32 %v2779, %v1329
    %v2781 = vsub.f32 %v2776, %v2780
    %v2782 = vmul.f32 %v2781, %v2781
    %v2783 = vsel %vm1325, %v2782, 0.0
    %2784 = vadd.xlane.f32.xlu0 %v2783
    %v2785 = vpop.xlane.xlu0 %2784
    %v2786 = vmul.f32 %v2785, %v1329
    %v2787 = vadd.f32 %v2786, 1e-05
    %v2788 = vrsqrt.pop %v2787
    %v2789 = vmul.f32 %v2781, %v2788
    %v2790 = vmul.f32 %v2789, %v2528
    %v2791 = vadd.f32 %v2790, %v2535
    %2792 = vst.msk [vmem:[%s1974] sm:$0xf] %vm1325, %v2791
    %v2793 = vld [vmem:[%s1850] sm:$0xf]
    %v2794 = vld [vmem:[%s707] sm:$0xff]
    %v2796 = vsel %vm2271, %v2775, 0
    %2798 = vmatprep.subr.mxu0 0.0
    %2799 = vmatpush1.msra.mxu0 0.0
    %2800 = vmatprep.subr.mxu0 0.0
    %2801 = vmatpush1.msra.mxu0 0.0
    %2802 = vmatprep.subr.mxu0 0.0
    %2803 = vmatpush1.msra.mxu0 0.0
    %2804 = vmatprep.subr.mxu0 0.0
    %2805 = vmatpush1.msra.mxu0 0.0
    %2806 = vmatprep.subr.mxu0 0.0
    %2807 = vmatpush1.msra.mxu0 0.0
    %2808 = vmatprep.subr.mxu0 0.0
    %2809 = vmatpush1.msra.mxu0 0.0
    %2810 = vmatprep.subr.mxu0 0.0
    %2811 = vmatpush1.msra.mxu0 0.0
    %2812 = vmatprep.subr.mxu0 0.0
    %2813 = vmatpush1.msra.mxu0 0.0
    %2814 = vmatprep.subr.mxu0 %v207
    %2815 = vmatpush1.msra.mxu0 %v206
    %2816 = vmatprep.subr.mxu0 %v205
    %2817 = vmatpush1.msra.mxu0 %v204
    %2818 = vmatprep.subr.mxu0 %v203
    %2819 = vmatpush1.msra.mxu0 %v202
    %2820 = vmatprep.subr.mxu0 %v201
    %2821 = vmatpush1.msra.mxu0 %v200
    %2822 = vmatprep.subr.mxu0 %v199
    %2823 = vmatpush1.msra.mxu0 %v198
    %2824 = vmatprep.subr.mxu0 %v197
    %2825 = vmatpush1.msra.mxu0 %v196
    %2826 = vmatprep.subr.mxu0 %v195
    %2827 = vmatpush1.msra.mxu0 %v194
    %2828 = vmatprep.subr.mxu0 %v193
    %2829 = vmatpush1.msra.mxu0 %v192
    %2830 = vmatprep.subr.mxu0 0.0
    %2831 = vmatpush2.msra.mxu0 0.0
    %2832 = vmatprep.subr.mxu0 0.0
    %2833 = vmatpush2.msra.mxu0 0.0
    %2834 = vmatprep.subr.mxu0 0.0
    %2835 = vmatpush2.msra.mxu0 0.0
    %2836 = vmatprep.subr.mxu0 0.0
    %2837 = vmatpush2.msra.mxu0 0.0
    %2838 = vmatprep.subr.mxu0 0.0
    %2839 = vmatpush2.msra.mxu0 0.0
    %2840 = vmatprep.subr.mxu0 0.0
    %2841 = vmatpush2.msra.mxu0 0.0
    %2842 = vmatprep.subr.mxu0 0.0
    %2843 = vmatpush2.msra.mxu0 0.0
    %2844 = vmatprep.subr.mxu0 0.0
    %2845 = vmatpush2.msra.mxu0 0.0
    %2846 = vmatprep.subr.mxu0 0.0
    %2847 = vmatpush2.msra.mxu0 0.0
    %2848 = vmatprep.subr.mxu0 0.0
    %2849 = vmatpush2.msra.mxu0 0.0
    %2850 = vmatprep.subr.mxu0 0.0
    %2851 = vmatpush2.msra.mxu0 0.0
    %2852 = vmatprep.subr.mxu0 0.0
    %2853 = vmatpush2.msra.mxu0 0.0
    %2854 = vmatprep.subr.mxu0 0.0
    %2855 = vmatpush2.msra.mxu0 0.0
    %2856 = vmatprep.subr.mxu0 0.0
    %2857 = vmatpush2.msra.mxu0 0.0
    %2858 = vmatprep.subr.mxu0 0.0
    %2859 = vmatpush2.msra.mxu0 0.0
    %2860 = vmatprep.subr.mxu0 0.0
    %2861 = vmatpush2.msra.mxu0 0.0
    %2862 = vmatprep.mubr.f32.mxu0 0.0
    %2863 = vmatmul.mubr.f32.gmra.mxu0 %v2796
    %v2864 = vpop.f32.mrf.mxu0
    %v2865 = vadd.f32 0.0, %v2864
    %v2866 = vpop.f32.mrf.mxu0
    %v2867 = vadd.f32 0.0, %v2866
    %2868 = vdwg.mxu0
    %v2871 = vcombine.low %v2865, %v2867
    %v2873 = vadd.f32 %v2794, %v2871
    %v2874 = vmul.f32 %v2873, 0.5
    %v2875 = vtanh.pop %v2874
    %v2876 = vmul.f32 %v2875, 0.5
    %v2877 = vadd.f32 %v2876, 0.5
    %v2879 = vrot.slane %v2873, 4
    %v2881 = vtanh.pop %v2879
    %2882 = vrot.lane.b32.xlu0 %v2873, 64
    %v2883 = vpop.permute.xlu0 %2882
    %v2884 = vrot.slane %v2883, 4
    %v2886 = vmul.f32 %v2884, 0.5
    %v2887 = vtanh.pop %v2886
    %v2888 = vmul.f32 %v2887, 0.5
    %v2889 = vadd.f32 %v2888, 0.5
    %v2890 = vmul.f32 %v2877, %v2769
    %v2891 = vmul.f32 %v2877, %v2881
    %2893 = vrot.lane.b32.xlu0 %v2891, 64
    %v2894 = vpop.permute.xlu0 %2893
    %v2896 = vadd.f32 %v2890, %v2894
    %v2897 = vtanh.pop %v2896
    %2899 = vrot.lane.b32.xlu0 %v2897, 64
    %v2900 = vpop.permute.xlu0 %2899
    %v2902 = vmul.f32 %v2889, %v2900
    %v2903 = vadd.f32 %v2902, %v2793
    %v2904 = vsel %vm1325, %v2903, 0.0
    %2905 = vadd.xlane.f32.xlu0 %v2904
    %v2906 = vpop.xlane.xlu0 %2905
    %v2907 = vmul.f32 %v2906, %v1329
    %v2908 = vsub.f32 %v2903, %v2907
    %v2909 = vmul.f32 %v2908, %v2908
    %v2910 = vsel %vm1325, %v2909, 0.0
    %2911 = vadd.xlane.f32.xlu0 %v2910
    %v2912 = vpop.xlane.xlu0 %2911
    %v2913 = vmul.f32 %v2912, %v1329
    %v2914 = vadd.f32 %v2913, 1e-05
    %v2915 = vrsqrt.pop %v2914
    %v2916 = vmul.f32 %v2908, %v2915
    %v2917 = vmul.f32 %v2916, %v2528
    %v2918 = vadd.f32 %v2917, %v2535
    %2919 = vst.msk [vmem:[%s1850] sm:$0xf] %vm1325, %v2918
    %v2920 = vld [vmem:[%s1726] sm:$0xf]
    %v2921 = vld [vmem:[%s810] sm:$0xff]
    %v2923 = vsel %vm2271, %v2902, 0
    %2925 = vmatprep.subr.mxu0 0.0
    %2926 = vmatpush1.msra.mxu0 0.0
    %2927 = vmatprep.subr.mxu0 0.0
    %2928 = vmatpush1.msra.mxu0 0.0
    %2929 = vmatprep.subr.mxu0 0.0
    %2930 = vmatpush1.msra.mxu0 0.0
    %2931 = vmatprep.subr.mxu0 0.0
    %2932 = vmatpush1.msra.mxu0 0.0
    %2933 = vmatprep.subr.mxu0 0.0
    %2934 = vmatpush1.msra.mxu0 0.0
    %2935 = vmatprep.subr.mxu0 0.0
    %2936 = vmatpush1.msra.mxu0 0.0
    %2937 = vmatprep.subr.mxu0 0.0
    %2938 = vmatpush1.msra.mxu0 0.0
    %2939 = vmatprep.subr.mxu0 0.0
    %2940 = vmatpush1.msra.mxu0 0.0
    %2941 = vmatprep.subr.mxu0 %v207
    %2942 = vmatpush1.msra.mxu0 %v206
    %2943 = vmatprep.subr.mxu0 %v205
    %2944 = vmatpush1.msra.mxu0 %v204
    %2945 = vmatprep.subr.mxu0 %v203
    %2946 = vmatpush1.msra.mxu0 %v202
    %2947 = vmatprep.subr.mxu0 %v201
    %2948 = vmatpush1.msra.mxu0 %v200
    %2949 = vmatprep.subr.mxu0 %v199
    %2950 = vmatpush1.msra.mxu0 %v198
    %2951 = vmatprep.subr.mxu0 %v197
    %2952 = vmatpush1.msra.mxu0 %v196
    %2953 = vmatprep.subr.mxu0 %v195
    %2954 = vmatpush1.msra.mxu0 %v194
    %2955 = vmatprep.subr.mxu0 %v193
    %2956 = vmatpush1.msra.mxu0 %v192
    %2957 = vmatprep.subr.mxu0 0.0
    %2958 = vmatpush2.msra.mxu0 0.0
    %2959 = vmatprep.subr.mxu0 0.0
    %2960 = vmatpush2.msra.mxu0 0.0
    %2961 = vmatprep.subr.mxu0 0.0
    %2962 = vmatpush2.msra.mxu0 0.0
    %2963 = vmatprep.subr.mxu0 0.0
    %2964 = vmatpush2.msra.mxu0 0.0
    %2965 = vmatprep.subr.mxu0 0.0
    %2966 = vmatpush2.msra.mxu0 0.0
    %2967 = vmatprep.subr.mxu0 0.0
    %2968 = vmatpush2.msra.mxu0 0.0
    %2969 = vmatprep.subr.mxu0 0.0
    %2970 = vmatpush2.msra.mxu0 0.0
    %2971 = vmatprep.subr.mxu0 0.0
    %2972 = vmatpush2.msra.mxu0 0.0
    %2973 = vmatprep.subr.mxu0 0.0
    %2974 = vmatpush2.msra.mxu0 0.0
    %2975 = vmatprep.subr.mxu0 0.0
    %2976 = vmatpush2.msra.mxu0 0.0
    %2977 = vmatprep.subr.mxu0 0.0
    %2978 = vmatpush2.msra.mxu0 0.0
    %2979 = vmatprep.subr.mxu0 0.0
    %2980 = vmatpush2.msra.mxu0 0.0
    %2981 = vmatprep.subr.mxu0 0.0
    %2982 = vmatpush2.msra.mxu0 0.0
    %2983 = vmatprep.subr.mxu0 0.0
    %2984 = vmatpush2.msra.mxu0 0.0
    %2985 = vmatprep.subr.mxu0 0.0
    %2986 = vmatpush2.msra.mxu0 0.0
    %2987 = vmatprep.subr.mxu0 0.0
    %2988 = vmatpush2.msra.mxu0 0.0
    %2989 = vmatprep.mubr.f32.mxu0 0.0
    %2990 = vmatmul.mubr.f32.gmra.mxu0 %v2923
    %v2991 = vpop.f32.mrf.mxu0
    %v2992 = vadd.f32 0.0, %v2991
    %v2993 = vpop.f32.mrf.mxu0
    %v2994 = vadd.f32 0.0, %v2993
    %2995 = vdwg.mxu0
    %v2998 = vcombine.low %v2992, %v2994
    %v3000 = vadd.f32 %v2921, %v2998
    %v3001 = vmul.f32 %v3000, 0.5
    %v3002 = vtanh.pop %v3001
    %v3003 = vmul.f32 %v3002, 0.5
    %v3004 = vadd.f32 %v3003, 0.5
    %v3006 = vrot.slane %v3000, 4
    %v3008 = vtanh.pop %v3006
    %3009 = vrot.lane.b32.xlu0 %v3000, 64
    %v3010 = vpop.permute.xlu0 %3009
    %v3011 = vrot.slane %v3010, 4
    %v3013 = vmul.f32 %v3011, 0.5
    %v3014 = vtanh.pop %v3013
    %v3015 = vmul.f32 %v3014, 0.5
    %v3016 = vadd.f32 %v3015, 0.5
    %v3017 = vmul.f32 %v3004, %v2896
    %v3018 = vmul.f32 %v3004, %v3008
    %3020 = vrot.lane.b32.xlu0 %v3018, 64
    %v3021 = vpop.permute.xlu0 %3020
    %v3023 = vadd.f32 %v3017, %v3021
    %v3024 = vtanh.pop %v3023
    %3026 = vrot.lane.b32.xlu0 %v3024, 64
    %v3027 = vpop.permute.xlu0 %3026
    %v3029 = vmul.f32 %v3016, %v3027
    %v3030 = vadd.f32 %v3029, %v2920
    %v3031 = vsel %vm1325, %v3030, 0.0
    %3032 = vadd.xlane.f32.xlu0 %v3031
    %v3033 = vpop.xlane.xlu0 %3032
    %v3034 = vmul.f32 %v3033, %v1329
    %v3035 = vsub.f32 %v3030, %v3034
    %v3036 = vmul.f32 %v3035, %v3035
    %v3037 = vsel %vm1325, %v3036, 0.0
    %3038 = vadd.xlane.f32.xlu0 %v3037
    %v3039 = vpop.xlane.xlu0 %3038
    %v3040 = vmul.f32 %v3039, %v1329
    %v3041 = vadd.f32 %v3040, 1e-05
    %v3042 = vrsqrt.pop %v3041
    %v3043 = vmul.f32 %v3035, %v3042
    %v3044 = vmul.f32 %v3043, %v2528
    %v3045 = vadd.f32 %v3044, %v2535
    %3046 = vst.msk [vmem:[%s1726] sm:$0xf] %vm1325, %v3045
    %v3047 = vld [vmem:[%s1602] sm:$0xf]
    %v3048 = vld [vmem:[%s913] sm:$0xff]
    %v3050 = vsel %vm2271, %v3029, 0
    %3052 = vmatprep.subr.mxu0 0.0
    %3053 = vmatpush1.msra.mxu0 0.0
    %3054 = vmatprep.subr.mxu0 0.0
    %3055 = vmatpush1.msra.mxu0 0.0
    %3056 = vmatprep.subr.mxu0 0.0
    %3057 = vmatpush1.msra.mxu0 0.0
    %3058 = vmatprep.subr.mxu0 0.0
    %3059 = vmatpush1.msra.mxu0 0.0
    %3060 = vmatprep.subr.mxu0 0.0
    %3061 = vmatpush1.msra.mxu0 0.0
    %3062 = vmatprep.subr.mxu0 0.0
    %3063 = vmatpush1.msra.mxu0 0.0
    %3064 = vmatprep.subr.mxu0 0.0
    %3065 = vmatpush1.msra.mxu0 0.0
    %3066 = vmatprep.subr.mxu0 0.0
    %3067 = vmatpush1.msra.mxu0 0.0
    %3068 = vmatprep.subr.mxu0 %v207
    %3069 = vmatpush1.msra.mxu0 %v206
    %3070 = vmatprep.subr.mxu0 %v205
    %3071 = vmatpush1.msra.mxu0 %v204
    %3072 = vmatprep.subr.mxu0 %v203
    %3073 = vmatpush1.msra.mxu0 %v202
    %3074 = vmatprep.subr.mxu0 %v201
    %3075 = vmatpush1.msra.mxu0 %v200
    %3076 = vmatprep.subr.mxu0 %v199
    %3077 = vmatpush1.msra.mxu0 %v198
    %3078 = vmatprep.subr.mxu0 %v197
    %3079 = vmatpush1.msra.mxu0 %v196
    %3080 = vmatprep.subr.mxu0 %v195
    %3081 = vmatpush1.msra.mxu0 %v194
    %3082 = vmatprep.subr.mxu0 %v193
    %3083 = vmatpush1.msra.mxu0 %v192
    %3084 = vmatprep.subr.mxu0 0.0
    %3085 = vmatpush2.msra.mxu0 0.0
    %3086 = vmatprep.subr.mxu0 0.0
    %3087 = vmatpush2.msra.mxu0 0.0
    %3088 = vmatprep.subr.mxu0 0.0
    %3089 = vmatpush2.msra.mxu0 0.0
    %3090 = vmatprep.subr.mxu0 0.0
    %3091 = vmatpush2.msra.mxu0 0.0
    %3092 = vmatprep.subr.mxu0 0.0
    %3093 = vmatpush2.msra.mxu0 0.0
    %3094 = vmatprep.subr.mxu0 0.0
    %3095 = vmatpush2.msra.mxu0 0.0
    %3096 = vmatprep.subr.mxu0 0.0
    %3097 = vmatpush2.msra.mxu0 0.0
    %3098 = vmatprep.subr.mxu0 0.0
    %3099 = vmatpush2.msra.mxu0 0.0
    %3100 = vmatprep.subr.mxu0 0.0
    %3101 = vmatpush2.msra.mxu0 0.0
    %3102 = vmatprep.subr.mxu0 0.0
    %3103 = vmatpush2.msra.mxu0 0.0
    %3104 = vmatprep.subr.mxu0 0.0
    %3105 = vmatpush2.msra.mxu0 0.0
    %3106 = vmatprep.subr.mxu0 0.0
    %3107 = vmatpush2.msra.mxu0 0.0
    %3108 = vmatprep.subr.mxu0 0.0
    %3109 = vmatpush2.msra.mxu0 0.0
    %3110 = vmatprep.subr.mxu0 0.0
    %3111 = vmatpush2.msra.mxu0 0.0
    %3112 = vmatprep.subr.mxu0 0.0
    %3113 = vmatpush2.msra.mxu0 0.0
    %3114 = vmatprep.subr.mxu0 0.0
    %3115 = vmatpush2.msra.mxu0 0.0
    %3116 = vmatprep.mubr.f32.mxu0 0.0
    %3117 = vmatmul.mubr.f32.gmra.mxu0 %v3050
    %v3118 = vpop.f32.mrf.mxu0
    %v3119 = vadd.f32 0.0, %v3118
    %v3120 = vpop.f32.mrf.mxu0
    %v3121 = vadd.f32 0.0, %v3120
    %3122 = vdwg.mxu0
    %v3125 = vcombine.low %v3119, %v3121
    %v3127 = vadd.f32 %v3048, %v3125
    %v3128 = vmul.f32 %v3127, 0.5
    %v3129 = vtanh.pop %v3128
    %v3130 = vmul.f32 %v3129, 0.5
    %v3131 = vadd.f32 %v3130, 0.5
    %v3133 = vrot.slane %v3127, 4
    %v3135 = vtanh.pop %v3133
    %3136 = vrot.lane.b32.xlu0 %v3127, 64
    %v3137 = vpop.permute.xlu0 %3136
    %v3138 = vrot.slane %v3137, 4
    %v3140 = vmul.f32 %v3138, 0.5
    %v3141 = vtanh.pop %v3140
    %v3142 = vmul.f32 %v3141, 0.5
    %v3143 = vadd.f32 %v3142, 0.5
    %v3144 = vmul.f32 %v3131, %v3023
    %v3145 = vmul.f32 %v3131, %v3135
    %3147 = vrot.lane.b32.xlu0 %v3145, 64
    %v3148 = vpop.permute.xlu0 %3147
    %v3150 = vadd.f32 %v3144, %v3148
    %v3151 = vtanh.pop %v3150
    %3153 = vrot.lane.b32.xlu0 %v3151, 64
    %v3154 = vpop.permute.xlu0 %3153
    %v3156 = vmul.f32 %v3143, %v3154
    %v3157 = vadd.f32 %v3156, %v3047
    %v3158 = vsel %vm1325, %v3157, 0.0
    %3159 = vadd.xlane.f32.xlu0 %v3158
    %v3160 = vpop.xlane.xlu0 %3159
    %v3161 = vmul.f32 %v3160, %v1329
    %v3162 = vsub.f32 %v3157, %v3161
    %v3163 = vmul.f32 %v3162, %v3162
    %v3164 = vsel %vm1325, %v3163, 0.0
    %3165 = vadd.xlane.f32.xlu0 %v3164
    %v3166 = vpop.xlane.xlu0 %3165
    %v3167 = vmul.f32 %v3166, %v1329
    %v3168 = vadd.f32 %v3167, 1e-05
    %v3169 = vrsqrt.pop %v3168
    %v3170 = vmul.f32 %v3162, %v3169
    %v3171 = vmul.f32 %v3170, %v2528
    %v3172 = vadd.f32 %v3171, %v2535
    %3173 = vst.msk [vmem:[%s1602] sm:$0xf] %vm1325, %v3172
    %v3174 = vld [vmem:[%s1478] sm:$0xf]
    %v3175 = vld [vmem:[%s1016] sm:$0xff]
    %v3177 = vsel %vm2271, %v3156, 0
    %3179 = vmatprep.subr.mxu0 0.0
    %3180 = vmatpush1.msra.mxu0 0.0
    %3181 = vmatprep.subr.mxu0 0.0
    %3182 = vmatpush1.msra.mxu0 0.0
    %3183 = vmatprep.subr.mxu0 0.0
    %3184 = vmatpush1.msra.mxu0 0.0
    %3185 = vmatprep.subr.mxu0 0.0
    %3186 = vmatpush1.msra.mxu0 0.0
    %3187 = vmatprep.subr.mxu0 0.0
    %3188 = vmatpush1.msra.mxu0 0.0
    %3189 = vmatprep.subr.mxu0 0.0
    %3190 = vmatpush1.msra.mxu0 0.0
    %3191 = vmatprep.subr.mxu0 0.0
    %3192 = vmatpush1.msra.mxu0 0.0
    %3193 = vmatprep.subr.mxu0 0.0
    %3194 = vmatpush1.msra.mxu0 0.0
    %3195 = vmatprep.subr.mxu0 %v207
    %3196 = vmatpush1.msra.mxu0 %v206
    %3197 = vmatprep.subr.mxu0 %v205
    %3198 = vmatpush1.msra.mxu0 %v204
    %3199 = vmatprep.subr.mxu0 %v203
    %3200 = vmatpush1.msra.mxu0 %v202
    %3201 = vmatprep.subr.mxu0 %v201
    %3202 = vmatpush1.msra.mxu0 %v200
    %3203 = vmatprep.subr.mxu0 %v199
    %3204 = vmatpush1.msra.mxu0 %v198
    %3205 = vmatprep.subr.mxu0 %v197
    %3206 = vmatpush1.msra.mxu0 %v196
    %3207 = vmatprep.subr.mxu0 %v195
    %3208 = vmatpush1.msra.mxu0 %v194
    %3209 = vmatprep.subr.mxu0 %v193
    %3210 = vmatpush1.msra.mxu0 %v192
    %3211 = vmatprep.subr.mxu0 0.0
    %3212 = vmatpush2.msra.mxu0 0.0
    %3213 = vmatprep.subr.mxu0 0.0
    %3214 = vmatpush2.msra.mxu0 0.0
    %3215 = vmatprep.subr.mxu0 0.0
    %3216 = vmatpush2.msra.mxu0 0.0
    %3217 = vmatprep.subr.mxu0 0.0
    %3218 = vmatpush2.msra.mxu0 0.0
    %3219 = vmatprep.subr.mxu0 0.0
    %3220 = vmatpush2.msra.mxu0 0.0
    %3221 = vmatprep.subr.mxu0 0.0
    %3222 = vmatpush2.msra.mxu0 0.0
    %3223 = vmatprep.subr.mxu0 0.0
    %3224 = vmatpush2.msra.mxu0 0.0
    %3225 = vmatprep.subr.mxu0 0.0
    %3226 = vmatpush2.msra.mxu0 0.0
    %3227 = vmatprep.subr.mxu0 0.0
    %3228 = vmatpush2.msra.mxu0 0.0
    %3229 = vmatprep.subr.mxu0 0.0
    %3230 = vmatpush2.msra.mxu0 0.0
    %3231 = vmatprep.subr.mxu0 0.0
    %3232 = vmatpush2.msra.mxu0 0.0
    %3233 = vmatprep.subr.mxu0 0.0
    %3234 = vmatpush2.msra.mxu0 0.0
    %3235 = vmatprep.subr.mxu0 0.0
    %3236 = vmatpush2.msra.mxu0 0.0
    %3237 = vmatprep.subr.mxu0 0.0
    %3238 = vmatpush2.msra.mxu0 0.0
    %3239 = vmatprep.subr.mxu0 0.0
    %3240 = vmatpush2.msra.mxu0 0.0
    %3241 = vmatprep.subr.mxu0 0.0
    %3242 = vmatpush2.msra.mxu0 0.0
    %3243 = vmatprep.mubr.f32.mxu0 0.0
    %3244 = vmatmul.mubr.f32.gmra.mxu0 %v3177
    %v3245 = vpop.f32.mrf.mxu0
    %v3246 = vadd.f32 0.0, %v3245
    %v3247 = vpop.f32.mrf.mxu0
    %v3248 = vadd.f32 0.0, %v3247
    %3249 = vdwg.mxu0
    %v3252 = vcombine.low %v3246, %v3248
    %v3254 = vadd.f32 %v3175, %v3252
    %v3255 = vmul.f32 %v3254, 0.5
    %v3256 = vtanh.pop %v3255
    %v3257 = vmul.f32 %v3256, 0.5
    %v3258 = vadd.f32 %v3257, 0.5
    %v3260 = vrot.slane %v3254, 4
    %v3262 = vtanh.pop %v3260
    %3263 = vrot.lane.b32.xlu0 %v3254, 64
    %v3264 = vpop.permute.xlu0 %3263
    %v3265 = vrot.slane %v3264, 4
    %v3267 = vmul.f32 %v3265, 0.5
    %v3268 = vtanh.pop %v3267
    %v3269 = vmul.f32 %v3268, 0.5
    %v3270 = vadd.f32 %v3269, 0.5
    %v3271 = vmul.f32 %v3258, %v3150
    %v3272 = vmul.f32 %v3258, %v3262
    %3274 = vrot.lane.b32.xlu0 %v3272, 64
    %v3275 = vpop.permute.xlu0 %3274
    %v3277 = vadd.f32 %v3271, %v3275
    %v3278 = vtanh.pop %v3277
    %3280 = vrot.lane.b32.xlu0 %v3278, 64
    %v3281 = vpop.permute.xlu0 %3280
    %v3283 = vmul.f32 %v3270, %v3281
    %v3284 = vadd.f32 %v3283, %v3174
    %v3285 = vsel %vm1325, %v3284, 0.0
    %3286 = vadd.xlane.f32.xlu0 %v3285
    %v3287 = vpop.xlane.xlu0 %3286
    %v3288 = vmul.f32 %v3287, %v1329
    %v3289 = vsub.f32 %v3284, %v3288
    %v3290 = vmul.f32 %v3289, %v3289
    %v3291 = vsel %vm1325, %v3290, 0.0
    %3292 = vadd.xlane.f32.xlu0 %v3291
    %v3293 = vpop.xlane.xlu0 %3292
    %v3294 = vmul.f32 %v3293, %v1329
    %v3295 = vadd.f32 %v3294, 1e-05
    %v3296 = vrsqrt.pop %v3295
    %v3297 = vmul.f32 %v3289, %v3296
    %v3298 = vmul.f32 %v3297, %v2528
    %v3299 = vadd.f32 %v3298, %v2535
    %3300 = vst.msk [vmem:[%s1478] sm:$0xf] %vm1325, %v3299
    %v3301 = vld [vmem:[%s1354] sm:$0xf]
    %v3302 = vld [vmem:[%s1119] sm:$0xff]
    %v3304 = vsel %vm2271, %v3283, 0
    %3306 = vmatprep.subr.mxu0 0.0
    %3307 = vmatpush1.msra.mxu0 0.0
    %3308 = vmatprep.subr.mxu0 0.0
    %3309 = vmatpush1.msra.mxu0 0.0
    %3310 = vmatprep.subr.mxu0 0.0
    %3311 = vmatpush1.msra.mxu0 0.0
    %3312 = vmatprep.subr.mxu0 0.0
    %3313 = vmatpush1.msra.mxu0 0.0
    %3314 = vmatprep.subr.mxu0 0.0
    %3315 = vmatpush1.msra.mxu0 0.0
    %3316 = vmatprep.subr.mxu0 0.0
    %3317 = vmatpush1.msra.mxu0 0.0
    %3318 = vmatprep.subr.mxu0 0.0
    %3319 = vmatpush1.msra.mxu0 0.0
    %3320 = vmatprep.subr.mxu0 0.0
    %3321 = vmatpush1.msra.mxu0 0.0
    %3322 = vmatprep.subr.mxu0 %v207
    %3323 = vmatpush1.msra.mxu0 %v206
    %3324 = vmatprep.subr.mxu0 %v205
    %3325 = vmatpush1.msra.mxu0 %v204
    %3326 = vmatprep.subr.mxu0 %v203
    %3327 = vmatpush1.msra.mxu0 %v202
    %3328 = vmatprep.subr.mxu0 %v201
    %3329 = vmatpush1.msra.mxu0 %v200
    %3330 = vmatprep.subr.mxu0 %v199
    %3331 = vmatpush1.msra.mxu0 %v198
    %3332 = vmatprep.subr.mxu0 %v197
    %3333 = vmatpush1.msra.mxu0 %v196
    %3334 = vmatprep.subr.mxu0 %v195
    %3335 = vmatpush1.msra.mxu0 %v194
    %3336 = vmatprep.subr.mxu0 %v193
    %3337 = vmatpush1.msra.mxu0 %v192
    %3338 = vmatprep.subr.mxu0 0.0
    %3339 = vmatpush2.msra.mxu0 0.0
    %3340 = vmatprep.subr.mxu0 0.0
    %3341 = vmatpush2.msra.mxu0 0.0
    %3342 = vmatprep.subr.mxu0 0.0
    %3343 = vmatpush2.msra.mxu0 0.0
    %3344 = vmatprep.subr.mxu0 0.0
    %3345 = vmatpush2.msra.mxu0 0.0
    %3346 = vmatprep.subr.mxu0 0.0
    %3347 = vmatpush2.msra.mxu0 0.0
    %3348 = vmatprep.subr.mxu0 0.0
    %3349 = vmatpush2.msra.mxu0 0.0
    %3350 = vmatprep.subr.mxu0 0.0
    %3351 = vmatpush2.msra.mxu0 0.0
    %3352 = vmatprep.subr.mxu0 0.0
    %3353 = vmatpush2.msra.mxu0 0.0
    %3354 = vmatprep.subr.mxu0 0.0
    %3355 = vmatpush2.msra.mxu0 0.0
    %3356 = vmatprep.subr.mxu0 0.0
    %3357 = vmatpush2.msra.mxu0 0.0
    %3358 = vmatprep.subr.mxu0 0.0
    %3359 = vmatpush2.msra.mxu0 0.0
    %3360 = vmatprep.subr.mxu0 0.0
    %3361 = vmatpush2.msra.mxu0 0.0
    %3362 = vmatprep.subr.mxu0 0.0
    %3363 = vmatpush2.msra.mxu0 0.0
    %3364 = vmatprep.subr.mxu0 0.0
    %3365 = vmatpush2.msra.mxu0 0.0
    %3366 = vmatprep.subr.mxu0 0.0
    %3367 = vmatpush2.msra.mxu0 0.0
    %3368 = vmatprep.subr.mxu0 0.0
    %3369 = vmatpush2.msra.mxu0 0.0
    %3370 = vmatprep.mubr.f32.mxu0 0.0
    %3371 = vmatmul.mubr.f32.gmra.mxu0 %v3304
    %v3372 = vpop.f32.mrf.mxu0
    %v3373 = vadd.f32 0.0, %v3372
    %v3374 = vpop.f32.mrf.mxu0
    %v3375 = vadd.f32 0.0, %v3374
    %3376 = vdwg.mxu0
    %v3379 = vcombine.low %v3373, %v3375
    %v3381 = vadd.f32 %v3302, %v3379
    %v3382 = vmul.f32 %v3381, 0.5
    %v3383 = vtanh.pop %v3382
    %v3384 = vmul.f32 %v3383, 0.5
    %v3385 = vadd.f32 %v3384, 0.5
    %v3387 = vrot.slane %v3381, 4
    %v3389 = vtanh.pop %v3387
    %3390 = vrot.lane.b32.xlu0 %v3381, 64
    %v3391 = vpop.permute.xlu0 %3390
    %v3392 = vrot.slane %v3391, 4
    %v3394 = vmul.f32 %v3392, 0.5
    %v3395 = vtanh.pop %v3394
    %v3396 = vmul.f32 %v3395, 0.5
    %v3397 = vadd.f32 %v3396, 0.5
    %v3398 = vmul.f32 %v3385, %v3277
    %v3399 = vmul.f32 %v3385, %v3389
    %3401 = vrot.lane.b32.xlu0 %v3399, 64
    %v3402 = vpop.permute.xlu0 %3401
    %v3404 = vadd.f32 %v3398, %v3402
    %v3405 = vtanh.pop %v3404
    %3407 = vrot.lane.b32.xlu0 %v3405, 64
    %v3408 = vpop.permute.xlu0 %3407
    %v3410 = vmul.f32 %v3397, %v3408
    %v3411 = vadd.f32 %v3410, %v3301
    %v3412 = vsel %vm1325, %v3411, 0.0
    %3413 = vadd.xlane.f32.xlu0 %v3412
    %v3414 = vpop.xlane.xlu0 %3413
    %v3415 = vmul.f32 %v3414, %v1329
    %v3416 = vsub.f32 %v3411, %v3415
    %v3417 = vmul.f32 %v3416, %v3416
    %v3418 = vsel %vm1325, %v3417, 0.0
    %3419 = vadd.xlane.f32.xlu0 %v3418
    %v3420 = vpop.xlane.xlu0 %3419
    %v3421 = vmul.f32 %v3420, %v1329
    %v3422 = vadd.f32 %v3421, 1e-05
    %v3423 = vrsqrt.pop %v3422
    %v3424 = vmul.f32 %v3416, %v3423
    %v3425 = vmul.f32 %v3424, %v2528
    %v3426 = vadd.f32 %v3425, %v2535
    %3427 = vst.msk [vmem:[%s1354] sm:$0xf] %vm1325, %v3426
    %v3428 = vld [vmem:[#allocation3] sm:$0xf]
    %v3429 = vld [vmem:[#allocation3 + $0x4] sm:$0xf]
    %v3430 = vld [vmem:[#allocation3 + $0x8] sm:$0xf]
    %v3431 = vld [vmem:[#allocation3 + $0xc] sm:$0xf]
    %v3432 = vld [vmem:[#allocation3 + $0x10] sm:$0xf]
    %v3433 = vld [vmem:[#allocation3 + $0x14] sm:$0xf]
    %v3434 = vld [vmem:[#allocation3 + $0x18] sm:$0xf]
    %v3435 = vld [vmem:[#allocation3 + $0x1c] sm:$0xf]
    %v3436 = vld [vmem:[#allocation10] sm:$0xff]
    %v3437 = vld [vmem:[#allocation10 + $0x8] sm:$0xff]
    %v3438 = vld [vmem:[#allocation10 + $0x10] sm:$0xff]
    %v3439 = vld [vmem:[#allocation10 + $0x18] sm:$0xff]
    %v3440 = vld [vmem:[#allocation10 + $0x20] sm:$0xff]
    %v3441 = vld [vmem:[#allocation10 + $0x28] sm:$0xff]
    %v3442 = vld [vmem:[#allocation10 + $0x30] sm:$0xff]
    %v3443 = vld [vmem:[#allocation10 + $0x38] sm:$0xff]
    %v3444 = vld [vmem:[#allocation10 + $0x40] sm:$0xff]
    %v3445 = vld [vmem:[#allocation10 + $0x48] sm:$0xff]
    %v3446 = vld [vmem:[#allocation10 + $0x50] sm:$0xff]
    %v3447 = vld [vmem:[#allocation10 + $0x58] sm:$0xff]
    %v3448 = vld [vmem:[#allocation10 + $0x60] sm:$0xff]
    %v3449 = vld [vmem:[#allocation10 + $0x68] sm:$0xff]
    %v3450 = vld [vmem:[#allocation10 + $0x70] sm:$0xff]
    %v3451 = vld [vmem:[#allocation10 + $0x78] sm:$0xff]
    %v3452 = vld [vmem:[%s11] sm:$0x3]
    %v3454 = vlaneseq
    %v3455 = vshrl.u32 %v3454, 7
    %v3456 = vsub.s32 0, %v3455
    %v3457 = vrot.slane %v3452, %v3456
    %v3458 = vlaneseq
    %v3459 = vshrl.u32 %v3458, 7
    %v3460 = vsub.s32 1, %v3459
    %v3461 = vrot.slane %v3452, %v3460
    %v3472 = vcombine.low %v3428, %v3429
    %v3473 = vcombine.low %v3430, %v3431
    %v3474 = vcombine.low %v3432, %v3433
    %v3475 = vcombine.low %v3434, %v3435
    %v3476 = vsel %vm2271, %v3472, 0
    %v3478 = vsel %vm2271, %v3473, 0
    %v3480 = vsel %vm2271, %v3474, 0
    %v3482 = vsel %vm2271, %v3475, 0
    %3484 = vmatprep.subr.mxu0 0.0
    %3485 = vmatpush1.msra.mxu0 0.0
    %3486 = vmatprep.subr.mxu0 0.0
    %3487 = vmatpush1.msra.mxu0 0.0
    %3488 = vmatprep.subr.mxu0 0.0
    %3489 = vmatpush1.msra.mxu0 0.0
    %3490 = vmatprep.subr.mxu0 0.0
    %3491 = vmatpush1.msra.mxu0 0.0
    %3492 = vmatprep.subr.mxu0 0.0
    %3493 = vmatpush1.msra.mxu0 0.0
    %3494 = vmatprep.subr.mxu0 0.0
    %3495 = vmatpush1.msra.mxu0 0.0
    %3496 = vmatprep.subr.mxu0 0.0
    %3497 = vmatpush1.msra.mxu0 0.0
    %3498 = vmatprep.subr.mxu0 0.0
    %3499 = vmatpush1.msra.mxu0 0.0
    %3500 = vmatprep.subr.mxu0 %v3451
    %3501 = vmatpush1.msra.mxu0 %v3450
    %3502 = vmatprep.subr.mxu0 %v3449
    %3503 = vmatpush1.msra.mxu0 %v3448
    %3504 = vmatprep.subr.mxu0 %v3447
    %3505 = vmatpush1.msra.mxu0 %v3446
    %3506 = vmatprep.subr.mxu0 %v3445
    %3507 = vmatpush1.msra.mxu0 %v3444
    %3508 = vmatprep.subr.mxu0 %v3443
    %3509 = vmatpush1.msra.mxu0 %v3442
    %3510 = vmatprep.subr.mxu0 %v3441
    %3511 = vmatpush1.msra.mxu0 %v3440
    %3512 = vmatprep.subr.mxu0 %v3439
    %3513 = vmatpush1.msra.mxu0 %v3438
    %3514 = vmatprep.subr.mxu0 %v3437
    %3515 = vmatpush1.msra.mxu0 %v3436
    %3516 = vmatprep.subr.mxu0 0.0
    %3517 = vmatpush2.msra.mxu0 0.0
    %3518 = vmatprep.subr.mxu0 0.0
    %3519 = vmatpush2.msra.mxu0 0.0
    %3520 = vmatprep.subr.mxu0 0.0
    %3521 = vmatpush2.msra.mxu0 0.0
    %3522 = vmatprep.subr.mxu0 0.0
    %3523 = vmatpush2.msra.mxu0 0.0
    %3524 = vmatprep.subr.mxu0 0.0
    %3525 = vmatpush2.msra.mxu0 0.0
    %3526 = vmatprep.subr.mxu0 0.0
    %3527 = vmatpush2.msra.mxu0 0.0
    %3528 = vmatprep.subr.mxu0 0.0
    %3529 = vmatpush2.msra.mxu0 0.0
    %3530 = vmatprep.subr.mxu0 0.0
    %3531 = vmatpush2.msra.mxu0 0.0
    %3532 = vmatprep.subr.mxu0 0.0
    %3533 = vmatpush2.msra.mxu0 0.0
    %3534 = vmatprep.subr.mxu0 0.0
    %3535 = vmatpush2.msra.mxu0 0.0
    %3536 = vmatprep.subr.mxu0 0.0
    %3537 = vmatpush2.msra.mxu0 0.0
    %3538 = vmatprep.subr.mxu0 0.0
    %3539 = vmatpush2.msra.mxu0 0.0
    %3540 = vmatprep.subr.mxu0 0.0
    %3541 = vmatpush2.msra.mxu0 0.0
    %3542 = vmatprep.subr.mxu0 0.0
    %3543 = vmatpush2.msra.mxu0 0.0
    %3544 = vmatprep.subr.mxu0 0.0
    %3545 = vmatpush2.msra.mxu0 0.0
    %3546 = vmatprep.subr.mxu0 0.0
    %3547 = vmatpush2.msra.mxu0 0.0
    %3548 = vmatprep.mubr.f32.mxu0 0.0
    %3549 = vmatmul.mubr.f32.gmra.mxu0 %v3476
    %v3550 = vpop.f32.mrf.mxu0
    %v3551 = vadd.f32 %v3457, %v3550
    %v3552 = vpop.f32.mrf.mxu0
    %v3553 = vadd.f32 %v3461, %v3552
    %3554 = vmatprep.mubr.f32.mxu0 0.0
    %3555 = vmatmul.mubr.f32.gmra.mxu0 %v3478
    %v3556 = vpop.f32.mrf.mxu0
    %v3557 = vadd.f32 %v3457, %v3556
    %v3558 = vpop.f32.mrf.mxu0
    %v3559 = vadd.f32 %v3461, %v3558
    %3560 = vmatprep.mubr.f32.mxu0 0.0
    %3561 = vmatmul.mubr.f32.gmra.mxu0 %v3480
    %v3562 = vpop.f32.mrf.mxu0
    %v3563 = vadd.f32 %v3457, %v3562
    %v3564 = vpop.f32.mrf.mxu0
    %v3565 = vadd.f32 %v3461, %v3564
    %3566 = vmatprep.mubr.f32.mxu0 0.0
    %3567 = vmatmul.mubr.f32.gmra.mxu0 %v3482
    %v3568 = vpop.f32.mrf.mxu0
    %v3569 = vadd.f32 %v3457, %v3568
    %v3570 = vpop.f32.mrf.mxu0
    %v3571 = vadd.f32 %v3461, %v3570
    %3572 = vdwg.mxu0
    %v3581 = vcombine.low %v3551, %v3553
    %v3582 = vcombine.high %v3551, %v3553
    %v3583 = vcombine.low %v3557, %v3559
    %v3584 = vcombine.high %v3557, %v3559
    %v3585 = vcombine.low %v3563, %v3565
    %v3586 = vcombine.high %v3563, %v3565
    %v3587 = vcombine.low %v3569, %v3571
    %v3588 = vcombine.high %v3569, %v3571
    %3597 = vst [vmem:[#allocation4] sm:$0xff] %v3581
    %3598 = vst [vmem:[#allocation4 + $0x8] sm:$0xff] %v3582
    %3599 = vst [vmem:[#allocation4 + $0x10] sm:$0xff] %v3583
    %3600 = vst [vmem:[#allocation4 + $0x18] sm:$0xff] %v3584
    %3601 = vst [vmem:[#allocation4 + $0x20] sm:$0xff] %v3585
    %3602 = vst [vmem:[#allocation4 + $0x28] sm:$0xff] %v3586
    %3603 = vst [vmem:[#allocation4 + $0x30] sm:$0xff] %v3587
    %3604 = vst [vmem:[#allocation4 + $0x38] sm:$0xff] %v3588
    %v3605 = vld [vmem:[%s1] sm:$0xf]
    %v3606 = vld [vmem:[#allocation4] sm:$0xff]
    %3607 = vmatprep.subr.mxu0 0.0
    %3608 = vmatpush1.msra.mxu0 0.0
    %3609 = vmatprep.subr.mxu0 0.0
    %3610 = vmatpush1.msra.mxu0 0.0
    %3611 = vmatprep.subr.mxu0 0.0
    %3612 = vmatpush1.msra.mxu0 0.0
    %3613 = vmatprep.subr.mxu0 0.0
    %3614 = vmatpush1.msra.mxu0 0.0
    %3615 = vmatprep.subr.mxu0 0.0
    %3616 = vmatpush1.msra.mxu0 0.0
    %3617 = vmatprep.subr.mxu0 0.0
    %3618 = vmatpush1.msra.mxu0 0.0
    %3619 = vmatprep.subr.mxu0 0.0
    %3620 = vmatpush1.msra.mxu0 0.0
    %3621 = vmatprep.subr.mxu0 0.0
    %3622 = vmatpush1.msra.mxu0 0.0
    %3623 = vmatprep.subr.mxu0 %v223
    %3624 = vmatpush1.msra.mxu0 %v222
    %3625 = vmatprep.subr.mxu0 %v221
    %3626 = vmatpush1.msra.mxu0 %v220
    %3627 = vmatprep.subr.mxu0 %v219
    %3628 = vmatpush1.msra.mxu0 %v218
    %3629 = vmatprep.subr.mxu0 %v217
    %3630 = vmatpush1.msra.mxu0 %v216
    %3631 = vmatprep.subr.mxu0 %v215
    %3632 = vmatpush1.msra.mxu0 %v214
    %3633 = vmatprep.subr.mxu0 %v213
    %3634 = vmatpush1.msra.mxu0 %v212
    %3635 = vmatprep.subr.mxu0 %v211
    %3636 = vmatpush1.msra.mxu0 %v210
    %3637 = vmatprep.subr.mxu0 %v209
    %3638 = vmatpush1.msra.mxu0 %v208
    %3639 = vmatprep.subr.mxu0 0.0
    %3640 = vmatpush2.msra.mxu0 0.0
    %3641 = vmatprep.subr.mxu0 0.0
    %3642 = vmatpush2.msra.mxu0 0.0
    %3643 = vmatprep.subr.mxu0 0.0
    %3644 = vmatpush2.msra.mxu0 0.0
    %3645 = vmatprep.subr.mxu0 0.0
    %3646 = vmatpush2.msra.mxu0 0.0
    %3647 = vmatprep.subr.mxu0 0.0
    %3648 = vmatpush2.msra.mxu0 0.0
    %3649 = vmatprep.subr.mxu0 0.0
    %3650 = vmatpush2.msra.mxu0 0.0
    %3651 = vmatprep.subr.mxu0 0.0
    %3652 = vmatpush2.msra.mxu0 0.0
    %3653 = vmatprep.subr.mxu0 0.0
    %3654 = vmatpush2.msra.mxu0 0.0
    %3655 = vmatprep.subr.mxu0 0.0
    %3656 = vmatpush2.msra.mxu0 0.0
    %3657 = vmatprep.subr.mxu0 0.0
    %3658 = vmatpush2.msra.mxu0 0.0
    %3659 = vmatprep.subr.mxu0 0.0
    %3660 = vmatpush2.msra.mxu0 0.0
    %3661 = vmatprep.subr.mxu0 0.0
    %3662 = vmatpush2.msra.mxu0 0.0
    %3663 = vmatprep.subr.mxu0 0.0
    %3664 = vmatpush2.msra.mxu0 0.0
    %3665 = vmatprep.subr.mxu0 0.0
    %3666 = vmatpush2.msra.mxu0 0.0
    %3667 = vmatprep.subr.mxu0 0.0
    %3668 = vmatpush2.msra.mxu0 0.0
    %3669 = vmatprep.subr.mxu0 0.0
    %3670 = vmatpush2.msra.mxu0 0.0
    %3671 = vmatprep.mubr.f32.mxu0 0.0
    %3672 = vmatmul.mubr.f32.gmra.mxu0 %v2403
    %v3673 = vpop.f32.mrf.mxu0
    %v3674 = vadd.f32 0.0, %v3673
    %v3675 = vpop.f32.mrf.mxu0
    %v3676 = vadd.f32 0.0, %v3675
    %3677 = vdwg.mxu0
    %v3680 = vcombine.low %v3674, %v3676
    %v3682 = vadd.f32 %v3606, %v3680
    %v3683 = vmul.f32 %v3682, 0.5
    %v3684 = vtanh.pop %v3683
    %v3685 = vmul.f32 %v3684, 0.5
    %v3686 = vadd.f32 %v3685, 0.5
    %v3688 = vrot.slane %v3682, 4
    %v3690 = vtanh.pop %v3688
    %3691 = vrot.lane.b32.xlu0 %v3682, 64
    %v3692 = vpop.permute.xlu0 %3691
    %v3693 = vrot.slane %v3692, 4
    %v3695 = vmul.f32 %v3693, 0.5
    %v3696 = vtanh.pop %v3695
    %v3697 = vmul.f32 %v3696, 0.5
    %v3698 = vadd.f32 %v3697, 0.5
    %v3699 = vmul.f32 %v3686, 0.0
    %v3700 = vmul.f32 %v3686, %v3690
    %3702 = vrot.lane.b32.xlu0 %v3700, 64
    %v3703 = vpop.permute.xlu0 %3702
    %v3705 = vadd.f32 %v3699, %v3703
    %v3706 = vtanh.pop %v3705
    %3708 = vrot.lane.b32.xlu0 %v3706, 64
    %v3709 = vpop.permute.xlu0 %3708
    %v3711 = vmul.f32 %v3698, %v3709
    %vm3712 = vcmp.eq.s32.totalorder %v3605, 0
    %v3713 = vsel %vm3712, 1, 0
    %3714 = vset.pattern.permute.xlu0 0
    %3715 = vperm.xlu0 %3714, %v3713
    %v3716 = vpop.permute.xlu0 %3715
    %vm3717 = vcmp.eq.s32.totalorder %v3716, 1
    %v3718 = vsel %vm3717, %v3711, 0.0
    %v3719 = vmax.f32 %v3711, -1e+30
    %v3720 = vld [vmem:[%s501] sm:$0xff]
    %v3722 = vsel %vm2271, %v3711, 0
    %3724 = vmatprep.subr.mxu0 0.0
    %3725 = vmatpush1.msra.mxu0 0.0
    %3726 = vmatprep.subr.mxu0 0.0
    %3727 = vmatpush1.msra.mxu0 0.0
    %3728 = vmatprep.subr.mxu0 0.0
    %3729 = vmatpush1.msra.mxu0 0.0
    %3730 = vmatprep.subr.mxu0 0.0
    %3731 = vmatpush1.msra.mxu0 0.0
    %3732 = vmatprep.subr.mxu0 0.0
    %3733 = vmatpush1.msra.mxu0 0.0
    %3734 = vmatprep.subr.mxu0 0.0
    %3735 = vmatpush1.msra.mxu0 0.0
    %3736 = vmatprep.subr.mxu0 0.0
    %3737 = vmatpush1.msra.mxu0 0.0
    %3738 = vmatprep.subr.mxu0 0.0
    %3739 = vmatpush1.msra.mxu0 0.0
    %3740 = vmatprep.subr.mxu0 %v223
    %3741 = vmatpush1.msra.mxu0 %v222
    %3742 = vmatprep.subr.mxu0 %v221
    %3743 = vmatpush1.msra.mxu0 %v220
    %3744 = vmatprep.subr.mxu0 %v219
    %3745 = vmatpush1.msra.mxu0 %v218
    %3746 = vmatprep.subr.mxu0 %v217
    %3747 = vmatpush1.msra.mxu0 %v216
    %3748 = vmatprep.subr.mxu0 %v215
    %3749 = vmatpush1.msra.mxu0 %v214
    %3750 = vmatprep.subr.mxu0 %v213
    %3751 = vmatpush1.msra.mxu0 %v212
    %3752 = vmatprep.subr.mxu0 %v211
    %3753 = vmatpush1.msra.mxu0 %v210
    %3754 = vmatprep.subr.mxu0 %v209
    %3755 = vmatpush1.msra.mxu0 %v208
    %3756 = vmatprep.subr.mxu0 0.0
    %3757 = vmatpush2.msra.mxu0 0.0
    %3758 = vmatprep.subr.mxu0 0.0
    %3759 = vmatpush2.msra.mxu0 0.0
    %3760 = vmatprep.subr.mxu0 0.0
    %3761 = vmatpush2.msra.mxu0 0.0
    %3762 = vmatprep.subr.mxu0 0.0
    %3763 = vmatpush2.msra.mxu0 0.0
    %3764 = vmatprep.subr.mxu0 0.0
    %3765 = vmatpush2.msra.mxu0 0.0
    %3766 = vmatprep.subr.mxu0 0.0
    %3767 = vmatpush2.msra.mxu0 0.0
    %3768 = vmatprep.subr.mxu0 0.0
    %3769 = vmatpush2.msra.mxu0 0.0
    %3770 = vmatprep.subr.mxu0 0.0
    %3771 = vmatpush2.msra.mxu0 0.0
    %3772 = vmatprep.subr.mxu0 0.0
    %3773 = vmatpush2.msra.mxu0 0.0
    %3774 = vmatprep.subr.mxu0 0.0
    %3775 = vmatpush2.msra.mxu0 0.0
    %3776 = vmatprep.subr.mxu0 0.0
    %3777 = vmatpush2.msra.mxu0 0.0
    %3778 = vmatprep.subr.mxu0 0.0
    %3779 = vmatpush2.msra.mxu0 0.0
    %3780 = vmatprep.subr.mxu0 0.0
    %3781 = vmatpush2.msra.mxu0 0.0
    %3782 = vmatprep.subr.mxu0 0.0
    %3783 = vmatpush2.msra.mxu0 0.0
    %3784 = vmatprep.subr.mxu0 0.0
    %3785 = vmatpush2.msra.mxu0 0.0
    %3786 = vmatprep.subr.mxu0 0.0
    %3787 = vmatpush2.msra.mxu0 0.0
    %3788 = vmatprep.mubr.f32.mxu0 0.0
    %3789 = vmatmul.mubr.f32.gmra.mxu0 %v3722
    %v3790 = vpop.f32.mrf.mxu0
    %v3791 = vadd.f32 0.0, %v3790
    %v3792 = vpop.f32.mrf.mxu0
    %v3793 = vadd.f32 0.0, %v3792
    %3794 = vdwg.mxu0
    %v3797 = vcombine.low %v3791, %v3793
    %v3799 = vadd.f32 %v3720, %v3797
    %v3800 = vmul.f32 %v3799, 0.5
    %v3801 = vtanh.pop %v3800
    %v3802 = vmul.f32 %v3801, 0.5
    %v3803 = vadd.f32 %v3802, 0.5
    %v3805 = vrot.slane %v3799, 4
    %v3807 = vtanh.pop %v3805
    %3808 = vrot.lane.b32.xlu0 %v3799, 64
    %v3809 = vpop.permute.xlu0 %3808
    %v3810 = vrot.slane %v3809, 4
    %v3812 = vmul.f32 %v3810, 0.5
    %v3813 = vtanh.pop %v3812
    %v3814 = vmul.f32 %v3813, 0.5
    %v3815 = vadd.f32 %v3814, 0.5
    %v3816 = vmul.f32 %v3803, %v3705
    %v3817 = vmul.f32 %v3803, %v3807
    %3819 = vrot.lane.b32.xlu0 %v3817, 64
    %v3820 = vpop.permute.xlu0 %3819
    %v3822 = vadd.f32 %v3816, %v3820
    %v3823 = vtanh.pop %v3822
    %3825 = vrot.lane.b32.xlu0 %v3823, 64
    %v3826 = vpop.permute.xlu0 %3825
    %v3828 = vmul.f32 %v3815, %v3826
    %vm3829 = vcmp.eq.s32.totalorder %v3605, 1
    %v3830 = vsel %vm3829, 1, 0
    %3831 = vset.pattern.permute.xlu0 0
    %3832 = vperm.xlu0 %3831, %v3830
    %v3833 = vpop.permute.xlu0 %3832
    %vm3834 = vcmp.eq.s32.totalorder %v3833, 1
    %v3835 = vsel %vm3834, %v3828, %v3718
    %v3836 = vmax.f32 %v3719, %v3828
    %v3837 = vld [vmem:[%s604] sm:$0xff]
    %v3839 = vsel %vm2271, %v3828, 0
    %3841 = vmatprep.subr.mxu0 0.0
    %3842 = vmatpush1.msra.mxu0 0.0
    %3843 = vmatprep.subr.mxu0 0.0
    %3844 = vmatpush1.msra.mxu0 0.0
    %3845 = vmatprep.subr.mxu0 0.0
    %3846 = vmatpush1.msra.mxu0 0.0
    %3847 = vmatprep.subr.mxu0 0.0
    %3848 = vmatpush1.msra.mxu0 0.0
    %3849 = vmatprep.subr.mxu0 0.0
    %3850 = vmatpush1.msra.mxu0 0.0
    %3851 = vmatprep.subr.mxu0 0.0
    %3852 = vmatpush1.msra.mxu0 0.0
    %3853 = vmatprep.subr.mxu0 0.0
    %3854 = vmatpush1.msra.mxu0 0.0
    %3855 = vmatprep.subr.mxu0 0.0
    %3856 = vmatpush1.msra.mxu0 0.0
    %3857 = vmatprep.subr.mxu0 %v223
    %3858 = vmatpush1.msra.mxu0 %v222
    %3859 = vmatprep.subr.mxu0 %v221
    %3860 = vmatpush1.msra.mxu0 %v220
    %3861 = vmatprep.subr.mxu0 %v219
    %3862 = vmatpush1.msra.mxu0 %v218
    %3863 = vmatprep.subr.mxu0 %v217
    %3864 = vmatpush1.msra.mxu0 %v216
    %3865 = vmatprep.subr.mxu0 %v215
    %3866 = vmatpush1.msra.mxu0 %v214
    %3867 = vmatprep.subr.mxu0 %v213
    %3868 = vmatpush1.msra.mxu0 %v212
    %3869 = vmatprep.subr.mxu0 %v211
    %3870 = vmatpush1.msra.mxu0 %v210
    %3871 = vmatprep.subr.mxu0 %v209
    %3872 = vmatpush1.msra.mxu0 %v208
    %3873 = vmatprep.subr.mxu0 0.0
    %3874 = vmatpush2.msra.mxu0 0.0
    %3875 = vmatprep.subr.mxu0 0.0
    %3876 = vmatpush2.msra.mxu0 0.0
    %3877 = vmatprep.subr.mxu0 0.0
    %3878 = vmatpush2.msra.mxu0 0.0
    %3879 = vmatprep.subr.mxu0 0.0
    %3880 = vmatpush2.msra.mxu0 0.0
    %3881 = vmatprep.subr.mxu0 0.0
    %3882 = vmatpush2.msra.mxu0 0.0
    %3883 = vmatprep.subr.mxu0 0.0
    %3884 = vmatpush2.msra.mxu0 0.0
    %3885 = vmatprep.subr.mxu0 0.0
    %3886 = vmatpush2.msra.mxu0 0.0
    %3887 = vmatprep.subr.mxu0 0.0
    %3888 = vmatpush2.msra.mxu0 0.0
    %3889 = vmatprep.subr.mxu0 0.0
    %3890 = vmatpush2.msra.mxu0 0.0
    %3891 = vmatprep.subr.mxu0 0.0
    %3892 = vmatpush2.msra.mxu0 0.0
    %3893 = vmatprep.subr.mxu0 0.0
    %3894 = vmatpush2.msra.mxu0 0.0
    %3895 = vmatprep.subr.mxu0 0.0
    %3896 = vmatpush2.msra.mxu0 0.0
    %3897 = vmatprep.subr.mxu0 0.0
    %3898 = vmatpush2.msra.mxu0 0.0
    %3899 = vmatprep.subr.mxu0 0.0
    %3900 = vmatpush2.msra.mxu0 0.0
    %3901 = vmatprep.subr.mxu0 0.0
    %3902 = vmatpush2.msra.mxu0 0.0
    %3903 = vmatprep.subr.mxu0 0.0
    %3904 = vmatpush2.msra.mxu0 0.0
    %3905 = vmatprep.mubr.f32.mxu0 0.0
    %3906 = vmatmul.mubr.f32.gmra.mxu0 %v3839
    %v3907 = vpop.f32.mrf.mxu0
    %v3908 = vadd.f32 0.0, %v3907
    %v3909 = vpop.f32.mrf.mxu0
    %v3910 = vadd.f32 0.0, %v3909
    %3911 = vdwg.mxu0
    %v3914 = vcombine.low %v3908, %v3910
    %v3916 = vadd.f32 %v3837, %v3914
    %v3917 = vmul.f32 %v3916, 0.5
    %v3918 = vtanh.pop %v3917
    %v3919 = vmul.f32 %v3918, 0.5
    %v3920 = vadd.f32 %v3919, 0.5
    %v3922 = vrot.slane %v3916, 4
    %v3924 = vtanh.pop %v3922
    %3925 = vrot.lane.b32.xlu0 %v3916, 64
    %v3926 = vpop.permute.xlu0 %3925
    %v3927 = vrot.slane %v3926, 4
    %v3929 = vmul.f32 %v3927, 0.5
    %v3930 = vtanh.pop %v3929
    %v3931 = vmul.f32 %v3930, 0.5
    %v3932 = vadd.f32 %v3931, 0.5
    %v3933 = vmul.f32 %v3920, %v3822
    %v3934 = vmul.f32 %v3920, %v3924
    %3936 = vrot.lane.b32.xlu0 %v3934, 64
    %v3937 = vpop.permute.xlu0 %3936
    %v3939 = vadd.f32 %v3933, %v3937
    %v3940 = vtanh.pop %v3939
    %3942 = vrot.lane.b32.xlu0 %v3940, 64
    %v3943 = vpop.permute.xlu0 %3942
    %v3945 = vmul.f32 %v3932, %v3943
    %vm3946 = vcmp.eq.s32.totalorder %v3605, 2
    %v3947 = vsel %vm3946, 1, 0
    %3948 = vset.pattern.permute.xlu0 0
    %3949 = vperm.xlu0 %3948, %v3947
    %v3950 = vpop.permute.xlu0 %3949
    %vm3951 = vcmp.eq.s32.totalorder %v3950, 1
    %v3952 = vsel %vm3951, %v3945, %v3835
    %v3953 = vmax.f32 %v3836, %v3945
    %v3954 = vld [vmem:[%s707] sm:$0xff]
    %v3956 = vsel %vm2271, %v3945, 0
    %3958 = vmatprep.subr.mxu0 0.0
    %3959 = vmatpush1.msra.mxu0 0.0
    %3960 = vmatprep.subr.mxu0 0.0
    %3961 = vmatpush1.msra.mxu0 0.0
    %3962 = vmatprep.subr.mxu0 0.0
    %3963 = vmatpush1.msra.mxu0 0.0
    %3964 = vmatprep.subr.mxu0 0.0
    %3965 = vmatpush1.msra.mxu0 0.0
    %3966 = vmatprep.subr.mxu0 0.0
    %3967 = vmatpush1.msra.mxu0 0.0
    %3968 = vmatprep.subr.mxu0 0.0
    %3969 = vmatpush1.msra.mxu0 0.0
    %3970 = vmatprep.subr.mxu0 0.0
    %3971 = vmatpush1.msra.mxu0 0.0
    %3972 = vmatprep.subr.mxu0 0.0
    %3973 = vmatpush1.msra.mxu0 0.0
    %3974 = vmatprep.subr.mxu0 %v223
    %3975 = vmatpush1.msra.mxu0 %v222
    %3976 = vmatprep.subr.mxu0 %v221
    %3977 = vmatpush1.msra.mxu0 %v220
    %3978 = vmatprep.subr.mxu0 %v219
    %3979 = vmatpush1.msra.mxu0 %v218
    %3980 = vmatprep.subr.mxu0 %v217
    %3981 = vmatpush1.msra.mxu0 %v216
    %3982 = vmatprep.subr.mxu0 %v215
    %3983 = vmatpush1.msra.mxu0 %v214
    %3984 = vmatprep.subr.mxu0 %v213
    %3985 = vmatpush1.msra.mxu0 %v212
    %3986 = vmatprep.subr.mxu0 %v211
    %3987 = vmatpush1.msra.mxu0 %v210
    %3988 = vmatprep.subr.mxu0 %v209
    %3989 = vmatpush1.msra.mxu0 %v208
    %3990 = vmatprep.subr.mxu0 0.0
    %3991 = vmatpush2.msra.mxu0 0.0
    %3992 = vmatprep.subr.mxu0 0.0
    %3993 = vmatpush2.msra.mxu0 0.0
    %3994 = vmatprep.subr.mxu0 0.0
    %3995 = vmatpush2.msra.mxu0 0.0
    %3996 = vmatprep.subr.mxu0 0.0
    %3997 = vmatpush2.msra.mxu0 0.0
    %3998 = vmatprep.subr.mxu0 0.0
    %3999 = vmatpush2.msra.mxu0 0.0
    %4000 = vmatprep.subr.mxu0 0.0
    %4001 = vmatpush2.msra.mxu0 0.0
    %4002 = vmatprep.subr.mxu0 0.0
    %4003 = vmatpush2.msra.mxu0 0.0
    %4004 = vmatprep.subr.mxu0 0.0
    %4005 = vmatpush2.msra.mxu0 0.0
    %4006 = vmatprep.subr.mxu0 0.0
    %4007 = vmatpush2.msra.mxu0 0.0
    %4008 = vmatprep.subr.mxu0 0.0
    %4009 = vmatpush2.msra.mxu0 0.0
    %4010 = vmatprep.subr.mxu0 0.0
    %4011 = vmatpush2.msra.mxu0 0.0
    %4012 = vmatprep.subr.mxu0 0.0
    %4013 = vmatpush2.msra.mxu0 0.0
    %4014 = vmatprep.subr.mxu0 0.0
    %4015 = vmatpush2.msra.mxu0 0.0
    %4016 = vmatprep.subr.mxu0 0.0
    %4017 = vmatpush2.msra.mxu0 0.0
    %4018 = vmatprep.subr.mxu0 0.0
    %4019 = vmatpush2.msra.mxu0 0.0
    %4020 = vmatprep.subr.mxu0 0.0
    %4021 = vmatpush2.msra.mxu0 0.0
    %4022 = vmatprep.mubr.f32.mxu0 0.0
    %4023 = vmatmul.mubr.f32.gmra.mxu0 %v3956
    %v4024 = vpop.f32.mrf.mxu0
    %v4025 = vadd.f32 0.0, %v4024
    %v4026 = vpop.f32.mrf.mxu0
    %v4027 = vadd.f32 0.0, %v4026
    %4028 = vdwg.mxu0
    %v4031 = vcombine.low %v4025, %v4027
    %v4033 = vadd.f32 %v3954, %v4031
    %v4034 = vmul.f32 %v4033, 0.5
    %v4035 = vtanh.pop %v4034
    %v4036 = vmul.f32 %v4035, 0.5
    %v4037 = vadd.f32 %v4036, 0.5
    %v4039 = vrot.slane %v4033, 4
    %v4041 = vtanh.pop %v4039
    %4042 = vrot.lane.b32.xlu0 %v4033, 64
    %v4043 = vpop.permute.xlu0 %4042
    %v4044 = vrot.slane %v4043, 4
    %v4046 = vmul.f32 %v4044, 0.5
    %v4047 = vtanh.pop %v4046
    %v4048 = vmul.f32 %v4047, 0.5
    %v4049 = vadd.f32 %v4048, 0.5
    %v4050 = vmul.f32 %v4037, %v3939
    %v4051 = vmul.f32 %v4037, %v4041
    %4053 = vrot.lane.b32.xlu0 %v4051, 64
    %v4054 = vpop.permute.xlu0 %4053
    %v4056 = vadd.f32 %v4050, %v4054
    %v4057 = vtanh.pop %v4056
    %4059 = vrot.lane.b32.xlu0 %v4057, 64
    %v4060 = vpop.permute.xlu0 %4059
    %v4062 = vmul.f32 %v4049, %v4060
    %vm4063 = vcmp.eq.s32.totalorder %v3605, 3
    %v4064 = vsel %vm4063, 1, 0
    %4065 = vset.pattern.permute.xlu0 0
    %4066 = vperm.xlu0 %4065, %v4064
    %v4067 = vpop.permute.xlu0 %4066
    %vm4068 = vcmp.eq.s32.totalorder %v4067, 1
    %v4069 = vsel %vm4068, %v4062, %v3952
    %v4070 = vmax.f32 %v3953, %v4062
    %v4071 = vld [vmem:[%s810] sm:$0xff]
    %v4073 = vsel %vm2271, %v4062, 0
    %4075 = vmatprep.subr.mxu0 0.0
    %4076 = vmatpush1.msra.mxu0 0.0
    %4077 = vmatprep.subr.mxu0 0.0
    %4078 = vmatpush1.msra.mxu0 0.0
    %4079 = vmatprep.subr.mxu0 0.0
    %4080 = vmatpush1.msra.mxu0 0.0
    %4081 = vmatprep.subr.mxu0 0.0
    %4082 = vmatpush1.msra.mxu0 0.0
    %4083 = vmatprep.subr.mxu0 0.0
    %4084 = vmatpush1.msra.mxu0 0.0
    %4085 = vmatprep.subr.mxu0 0.0
    %4086 = vmatpush1.msra.mxu0 0.0
    %4087 = vmatprep.subr.mxu0 0.0
    %4088 = vmatpush1.msra.mxu0 0.0
    %4089 = vmatprep.subr.mxu0 0.0
    %4090 = vmatpush1.msra.mxu0 0.0
    %4091 = vmatprep.subr.mxu0 %v223
    %4092 = vmatpush1.msra.mxu0 %v222
    %4093 = vmatprep.subr.mxu0 %v221
    %4094 = vmatpush1.msra.mxu0 %v220
    %4095 = vmatprep.subr.mxu0 %v219
    %4096 = vmatpush1.msra.mxu0 %v218
    %4097 = vmatprep.subr.mxu0 %v217
    %4098 = vmatpush1.msra.mxu0 %v216
    %4099 = vmatprep.subr.mxu0 %v215
    %4100 = vmatpush1.msra.mxu0 %v214
    %4101 = vmatprep.subr.mxu0 %v213
    %4102 = vmatpush1.msra.mxu0 %v212
    %4103 = vmatprep.subr.mxu0 %v211
    %4104 = vmatpush1.msra.mxu0 %v210
    %4105 = vmatprep.subr.mxu0 %v209
    %4106 = vmatpush1.msra.mxu0 %v208
    %4107 = vmatprep.subr.mxu0 0.0
    %4108 = vmatpush2.msra.mxu0 0.0
    %4109 = vmatprep.subr.mxu0 0.0
    %4110 = vmatpush2.msra.mxu0 0.0
    %4111 = vmatprep.subr.mxu0 0.0
    %4112 = vmatpush2.msra.mxu0 0.0
    %4113 = vmatprep.subr.mxu0 0.0
    %4114 = vmatpush2.msra.mxu0 0.0
    %4115 = vmatprep.subr.mxu0 0.0
    %4116 = vmatpush2.msra.mxu0 0.0
    %4117 = vmatprep.subr.mxu0 0.0
    %4118 = vmatpush2.msra.mxu0 0.0
    %4119 = vmatprep.subr.mxu0 0.0
    %4120 = vmatpush2.msra.mxu0 0.0
    %4121 = vmatprep.subr.mxu0 0.0
    %4122 = vmatpush2.msra.mxu0 0.0
    %4123 = vmatprep.subr.mxu0 0.0
    %4124 = vmatpush2.msra.mxu0 0.0
    %4125 = vmatprep.subr.mxu0 0.0
    %4126 = vmatpush2.msra.mxu0 0.0
    %4127 = vmatprep.subr.mxu0 0.0
    %4128 = vmatpush2.msra.mxu0 0.0
    %4129 = vmatprep.subr.mxu0 0.0
    %4130 = vmatpush2.msra.mxu0 0.0
    %4131 = vmatprep.subr.mxu0 0.0
    %4132 = vmatpush2.msra.mxu0 0.0
    %4133 = vmatprep.subr.mxu0 0.0
    %4134 = vmatpush2.msra.mxu0 0.0
    %4135 = vmatprep.subr.mxu0 0.0
    %4136 = vmatpush2.msra.mxu0 0.0
    %4137 = vmatprep.subr.mxu0 0.0
    %4138 = vmatpush2.msra.mxu0 0.0
    %4139 = vmatprep.mubr.f32.mxu0 0.0
    %4140 = vmatmul.mubr.f32.gmra.mxu0 %v4073
    %v4141 = vpop.f32.mrf.mxu0
    %v4142 = vadd.f32 0.0, %v4141
    %v4143 = vpop.f32.mrf.mxu0
    %v4144 = vadd.f32 0.0, %v4143
    %4145 = vdwg.mxu0
    %v4148 = vcombine.low %v4142, %v4144
    %v4150 = vadd.f32 %v4071, %v4148
    %v4151 = vmul.f32 %v4150, 0.5
    %v4152 = vtanh.pop %v4151
    %v4153 = vmul.f32 %v4152, 0.5
    %v4154 = vadd.f32 %v4153, 0.5
    %v4156 = vrot.slane %v4150, 4
    %v4158 = vtanh.pop %v4156
    %4159 = vrot.lane.b32.xlu0 %v4150, 64
    %v4160 = vpop.permute.xlu0 %4159
    %v4161 = vrot.slane %v4160, 4
    %v4163 = vmul.f32 %v4161, 0.5
    %v4164 = vtanh.pop %v4163
    %v4165 = vmul.f32 %v4164, 0.5
    %v4166 = vadd.f32 %v4165, 0.5
    %v4167 = vmul.f32 %v4154, %v4056
    %v4168 = vmul.f32 %v4154, %v4158
    %4170 = vrot.lane.b32.xlu0 %v4168, 64
    %v4171 = vpop.permute.xlu0 %4170
    %v4173 = vadd.f32 %v4167, %v4171
    %v4174 = vtanh.pop %v4173
    %4176 = vrot.lane.b32.xlu0 %v4174, 64
    %v4177 = vpop.permute.xlu0 %4176
    %v4179 = vmul.f32 %v4166, %v4177
    %vm4180 = vcmp.eq.s32.totalorder %v3605, 4
    %v4181 = vsel %vm4180, 1, 0
    %4182 = vset.pattern.permute.xlu0 0
    %4183 = vperm.xlu0 %4182, %v4181
    %v4184 = vpop.permute.xlu0 %4183
    %vm4185 = vcmp.eq.s32.totalorder %v4184, 1
    %v4186 = vsel %vm4185, %v4179, %v4069
    %v4187 = vmax.f32 %v4070, %v4179
    %v4188 = vld [vmem:[%s913] sm:$0xff]
    %v4190 = vsel %vm2271, %v4179, 0
    %4192 = vmatprep.subr.mxu0 0.0
    %4193 = vmatpush1.msra.mxu0 0.0
    %4194 = vmatprep.subr.mxu0 0.0
    %4195 = vmatpush1.msra.mxu0 0.0
    %4196 = vmatprep.subr.mxu0 0.0
    %4197 = vmatpush1.msra.mxu0 0.0
    %4198 = vmatprep.subr.mxu0 0.0
    %4199 = vmatpush1.msra.mxu0 0.0
    %4200 = vmatprep.subr.mxu0 0.0
    %4201 = vmatpush1.msra.mxu0 0.0
    %4202 = vmatprep.subr.mxu0 0.0
    %4203 = vmatpush1.msra.mxu0 0.0
    %4204 = vmatprep.subr.mxu0 0.0
    %4205 = vmatpush1.msra.mxu0 0.0
    %4206 = vmatprep.subr.mxu0 0.0
    %4207 = vmatpush1.msra.mxu0 0.0
    %4208 = vmatprep.subr.mxu0 %v223
    %4209 = vmatpush1.msra.mxu0 %v222
    %4210 = vmatprep.subr.mxu0 %v221
    %4211 = vmatpush1.msra.mxu0 %v220
    %4212 = vmatprep.subr.mxu0 %v219
    %4213 = vmatpush1.msra.mxu0 %v218
    %4214 = vmatprep.subr.mxu0 %v217
    %4215 = vmatpush1.msra.mxu0 %v216
    %4216 = vmatprep.subr.mxu0 %v215
    %4217 = vmatpush1.msra.mxu0 %v214
    %4218 = vmatprep.subr.mxu0 %v213
    %4219 = vmatpush1.msra.mxu0 %v212
    %4220 = vmatprep.subr.mxu0 %v211
    %4221 = vmatpush1.msra.mxu0 %v210
    %4222 = vmatprep.subr.mxu0 %v209
    %4223 = vmatpush1.msra.mxu0 %v208
    %4224 = vmatprep.subr.mxu0 0.0
    %4225 = vmatpush2.msra.mxu0 0.0
    %4226 = vmatprep.subr.mxu0 0.0
    %4227 = vmatpush2.msra.mxu0 0.0
    %4228 = vmatprep.subr.mxu0 0.0
    %4229 = vmatpush2.msra.mxu0 0.0
    %4230 = vmatprep.subr.mxu0 0.0
    %4231 = vmatpush2.msra.mxu0 0.0
    %4232 = vmatprep.subr.mxu0 0.0
    %4233 = vmatpush2.msra.mxu0 0.0
    %4234 = vmatprep.subr.mxu0 0.0
    %4235 = vmatpush2.msra.mxu0 0.0
    %4236 = vmatprep.subr.mxu0 0.0
    %4237 = vmatpush2.msra.mxu0 0.0
    %4238 = vmatprep.subr.mxu0 0.0
    %4239 = vmatpush2.msra.mxu0 0.0
    %4240 = vmatprep.subr.mxu0 0.0
    %4241 = vmatpush2.msra.mxu0 0.0
    %4242 = vmatprep.subr.mxu0 0.0
    %4243 = vmatpush2.msra.mxu0 0.0
    %4244 = vmatprep.subr.mxu0 0.0
    %4245 = vmatpush2.msra.mxu0 0.0
    %4246 = vmatprep.subr.mxu0 0.0
    %4247 = vmatpush2.msra.mxu0 0.0
    %4248 = vmatprep.subr.mxu0 0.0
    %4249 = vmatpush2.msra.mxu0 0.0
    %4250 = vmatprep.subr.mxu0 0.0
    %4251 = vmatpush2.msra.mxu0 0.0
    %4252 = vmatprep.subr.mxu0 0.0
    %4253 = vmatpush2.msra.mxu0 0.0
    %4254 = vmatprep.subr.mxu0 0.0
    %4255 = vmatpush2.msra.mxu0 0.0
    %4256 = vmatprep.mubr.f32.mxu0 0.0
    %4257 = vmatmul.mubr.f32.gmra.mxu0 %v4190
    %v4258 = vpop.f32.mrf.mxu0
    %v4259 = vadd.f32 0.0, %v4258
    %v4260 = vpop.f32.mrf.mxu0
    %v4261 = vadd.f32 0.0, %v4260
    %4262 = vdwg.mxu0
    %v4265 = vcombine.low %v4259, %v4261
    %v4267 = vadd.f32 %v4188, %v4265
    %v4268 = vmul.f32 %v4267, 0.5
    %v4269 = vtanh.pop %v4268
    %v4270 = vmul.f32 %v4269, 0.5
    %v4271 = vadd.f32 %v4270, 0.5
    %v4273 = vrot.slane %v4267, 4
    %v4275 = vtanh.pop %v4273
    %4276 = vrot.lane.b32.xlu0 %v4267, 64
    %v4277 = vpop.permute.xlu0 %4276
    %v4278 = vrot.slane %v4277, 4
    %v4280 = vmul.f32 %v4278, 0.5
    %v4281 = vtanh.pop %v4280
    %v4282 = vmul.f32 %v4281, 0.5
    %v4283 = vadd.f32 %v4282, 0.5
    %v4284 = vmul.f32 %v4271, %v4173
    %v4285 = vmul.f32 %v4271, %v4275
    %4287 = vrot.lane.b32.xlu0 %v4285, 64
    %v4288 = vpop.permute.xlu0 %4287
    %v4290 = vadd.f32 %v4284, %v4288
    %v4291 = vtanh.pop %v4290
    %4293 = vrot.lane.b32.xlu0 %v4291, 64
    %v4294 = vpop.permute.xlu0 %4293
    %v4296 = vmul.f32 %v4283, %v4294
    %vm4297 = vcmp.eq.s32.totalorder %v3605, 5
    %v4298 = vsel %vm4297, 1, 0
    %4299 = vset.pattern.permute.xlu0 0
    %4300 = vperm.xlu0 %4299, %v4298
    %v4301 = vpop.permute.xlu0 %4300
    %vm4302 = vcmp.eq.s32.totalorder %v4301, 1
    %v4303 = vsel %vm4302, %v4296, %v4186
    %v4304 = vmax.f32 %v4187, %v4296
    %v4305 = vld [vmem:[%s1016] sm:$0xff]
    %v4307 = vsel %vm2271, %v4296, 0
    %4309 = vmatprep.subr.mxu0 0.0
    %4310 = vmatpush1.msra.mxu0 0.0
    %4311 = vmatprep.subr.mxu0 0.0
    %4312 = vmatpush1.msra.mxu0 0.0
    %4313 = vmatprep.subr.mxu0 0.0
    %4314 = vmatpush1.msra.mxu0 0.0
    %4315 = vmatprep.subr.mxu0 0.0
    %4316 = vmatpush1.msra.mxu0 0.0
    %4317 = vmatprep.subr.mxu0 0.0
    %4318 = vmatpush1.msra.mxu0 0.0
    %4319 = vmatprep.subr.mxu0 0.0
    %4320 = vmatpush1.msra.mxu0 0.0
    %4321 = vmatprep.subr.mxu0 0.0
    %4322 = vmatpush1.msra.mxu0 0.0
    %4323 = vmatprep.subr.mxu0 0.0
    %4324 = vmatpush1.msra.mxu0 0.0
    %4325 = vmatprep.subr.mxu0 %v223
    %4326 = vmatpush1.msra.mxu0 %v222
    %4327 = vmatprep.subr.mxu0 %v221
    %4328 = vmatpush1.msra.mxu0 %v220
    %4329 = vmatprep.subr.mxu0 %v219
    %4330 = vmatpush1.msra.mxu0 %v218
    %4331 = vmatprep.subr.mxu0 %v217
    %4332 = vmatpush1.msra.mxu0 %v216
    %4333 = vmatprep.subr.mxu0 %v215
    %4334 = vmatpush1.msra.mxu0 %v214
    %4335 = vmatprep.subr.mxu0 %v213
    %4336 = vmatpush1.msra.mxu0 %v212
    %4337 = vmatprep.subr.mxu0 %v211
    %4338 = vmatpush1.msra.mxu0 %v210
    %4339 = vmatprep.subr.mxu0 %v209
    %4340 = vmatpush1.msra.mxu0 %v208
    %4341 = vmatprep.subr.mxu0 0.0
    %4342 = vmatpush2.msra.mxu0 0.0
    %4343 = vmatprep.subr.mxu0 0.0
    %4344 = vmatpush2.msra.mxu0 0.0
    %4345 = vmatprep.subr.mxu0 0.0
    %4346 = vmatpush2.msra.mxu0 0.0
    %4347 = vmatprep.subr.mxu0 0.0
    %4348 = vmatpush2.msra.mxu0 0.0
    %4349 = vmatprep.subr.mxu0 0.0
    %4350 = vmatpush2.msra.mxu0 0.0
    %4351 = vmatprep.subr.mxu0 0.0
    %4352 = vmatpush2.msra.mxu0 0.0
    %4353 = vmatprep.subr.mxu0 0.0
    %4354 = vmatpush2.msra.mxu0 0.0
    %4355 = vmatprep.subr.mxu0 0.0
    %4356 = vmatpush2.msra.mxu0 0.0
    %4357 = vmatprep.subr.mxu0 0.0
    %4358 = vmatpush2.msra.mxu0 0.0
    %4359 = vmatprep.subr.mxu0 0.0
    %4360 = vmatpush2.msra.mxu0 0.0
    %4361 = vmatprep.subr.mxu0 0.0
    %4362 = vmatpush2.msra.mxu0 0.0
    %4363 = vmatprep.subr.mxu0 0.0
    %4364 = vmatpush2.msra.mxu0 0.0
    %4365 = vmatprep.subr.mxu0 0.0
    %4366 = vmatpush2.msra.mxu0 0.0
    %4367 = vmatprep.subr.mxu0 0.0
    %4368 = vmatpush2.msra.mxu0 0.0
    %4369 = vmatprep.subr.mxu0 0.0
    %4370 = vmatpush2.msra.mxu0 0.0
    %4371 = vmatprep.subr.mxu0 0.0
    %4372 = vmatpush2.msra.mxu0 0.0
    %4373 = vmatprep.mubr.f32.mxu0 0.0
    %4374 = vmatmul.mubr.f32.gmra.mxu0 %v4307
    %v4375 = vpop.f32.mrf.mxu0
    %v4376 = vadd.f32 0.0, %v4375
    %v4377 = vpop.f32.mrf.mxu0
    %v4378 = vadd.f32 0.0, %v4377
    %4379 = vdwg.mxu0
    %v4382 = vcombine.low %v4376, %v4378
    %v4384 = vadd.f32 %v4305, %v4382
    %v4385 = vmul.f32 %v4384, 0.5
    %v4386 = vtanh.pop %v4385
    %v4387 = vmul.f32 %v4386, 0.5
    %v4388 = vadd.f32 %v4387, 0.5
    %v4390 = vrot.slane %v4384, 4
    %v4392 = vtanh.pop %v4390
    %4393 = vrot.lane.b32.xlu0 %v4384, 64
    %v4394 = vpop.permute.xlu0 %4393
    %v4395 = vrot.slane %v4394, 4
    %v4397 = vmul.f32 %v4395, 0.5
    %v4398 = vtanh.pop %v4397
    %v4399 = vmul.f32 %v4398, 0.5
    %v4400 = vadd.f32 %v4399, 0.5
    %v4401 = vmul.f32 %v4388, %v4290
    %v4402 = vmul.f32 %v4388, %v4392
    %4404 = vrot.lane.b32.xlu0 %v4402, 64
    %v4405 = vpop.permute.xlu0 %4404
    %v4407 = vadd.f32 %v4401, %v4405
    %v4408 = vtanh.pop %v4407
    %4410 = vrot.lane.b32.xlu0 %v4408, 64
    %v4411 = vpop.permute.xlu0 %4410
    %v4413 = vmul.f32 %v4400, %v4411
    %vm4414 = vcmp.eq.s32.totalorder %v3605, 6
    %v4415 = vsel %vm4414, 1, 0
    %4416 = vset.pattern.permute.xlu0 0
    %4417 = vperm.xlu0 %4416, %v4415
    %v4418 = vpop.permute.xlu0 %4417
    %vm4419 = vcmp.eq.s32.totalorder %v4418, 1
    %v4420 = vsel %vm4419, %v4413, %v4303
    %v4421 = vmax.f32 %v4304, %v4413
    %v4422 = vld [vmem:[%s1119] sm:$0xff]
    %v4424 = vsel %vm2271, %v4413, 0
    %4426 = vmatprep.subr.mxu0 0.0
    %4427 = vmatpush1.msra.mxu0 0.0
    %4428 = vmatprep.subr.mxu0 0.0
    %4429 = vmatpush1.msra.mxu0 0.0
    %4430 = vmatprep.subr.mxu0 0.0
    %4431 = vmatpush1.msra.mxu0 0.0
    %4432 = vmatprep.subr.mxu0 0.0
    %4433 = vmatpush1.msra.mxu0 0.0
    %4434 = vmatprep.subr.mxu0 0.0
    %4435 = vmatpush1.msra.mxu0 0.0
    %4436 = vmatprep.subr.mxu0 0.0
    %4437 = vmatpush1.msra.mxu0 0.0
    %4438 = vmatprep.subr.mxu0 0.0
    %4439 = vmatpush1.msra.mxu0 0.0
    %4440 = vmatprep.subr.mxu0 0.0
    %4441 = vmatpush1.msra.mxu0 0.0
    %4442 = vmatprep.subr.mxu0 %v223
    %4443 = vmatpush1.msra.mxu0 %v222
    %4444 = vmatprep.subr.mxu0 %v221
    %4445 = vmatpush1.msra.mxu0 %v220
    %4446 = vmatprep.subr.mxu0 %v219
    %4447 = vmatpush1.msra.mxu0 %v218
    %4448 = vmatprep.subr.mxu0 %v217
    %4449 = vmatpush1.msra.mxu0 %v216
    %4450 = vmatprep.subr.mxu0 %v215
    %4451 = vmatpush1.msra.mxu0 %v214
    %4452 = vmatprep.subr.mxu0 %v213
    %4453 = vmatpush1.msra.mxu0 %v212
    %4454 = vmatprep.subr.mxu0 %v211
    %4455 = vmatpush1.msra.mxu0 %v210
    %4456 = vmatprep.subr.mxu0 %v209
    %4457 = vmatpush1.msra.mxu0 %v208
    %4458 = vmatprep.subr.mxu0 0.0
    %4459 = vmatpush2.msra.mxu0 0.0
    %4460 = vmatprep.subr.mxu0 0.0
    %4461 = vmatpush2.msra.mxu0 0.0
    %4462 = vmatprep.subr.mxu0 0.0
    %4463 = vmatpush2.msra.mxu0 0.0
    %4464 = vmatprep.subr.mxu0 0.0
    %4465 = vmatpush2.msra.mxu0 0.0
    %4466 = vmatprep.subr.mxu0 0.0
    %4467 = vmatpush2.msra.mxu0 0.0
    %4468 = vmatprep.subr.mxu0 0.0
    %4469 = vmatpush2.msra.mxu0 0.0
    %4470 = vmatprep.subr.mxu0 0.0
    %4471 = vmatpush2.msra.mxu0 0.0
    %4472 = vmatprep.subr.mxu0 0.0
    %4473 = vmatpush2.msra.mxu0 0.0
    %4474 = vmatprep.subr.mxu0 0.0
    %4475 = vmatpush2.msra.mxu0 0.0
    %4476 = vmatprep.subr.mxu0 0.0
    %4477 = vmatpush2.msra.mxu0 0.0
    %4478 = vmatprep.subr.mxu0 0.0
    %4479 = vmatpush2.msra.mxu0 0.0
    %4480 = vmatprep.subr.mxu0 0.0
    %4481 = vmatpush2.msra.mxu0 0.0
    %4482 = vmatprep.subr.mxu0 0.0
    %4483 = vmatpush2.msra.mxu0 0.0
    %4484 = vmatprep.subr.mxu0 0.0
    %4485 = vmatpush2.msra.mxu0 0.0
    %4486 = vmatprep.subr.mxu0 0.0
    %4487 = vmatpush2.msra.mxu0 0.0
    %4488 = vmatprep.subr.mxu0 0.0
    %4489 = vmatpush2.msra.mxu0 0.0
    %4490 = vmatprep.mubr.f32.mxu0 0.0
    %4491 = vmatmul.mubr.f32.gmra.mxu0 %v4424
    %v4492 = vpop.f32.mrf.mxu0
    %v4493 = vadd.f32 0.0, %v4492
    %v4494 = vpop.f32.mrf.mxu0
    %v4495 = vadd.f32 0.0, %v4494
    %4496 = vdwg.mxu0
    %v4499 = vcombine.low %v4493, %v4495
    %v4501 = vadd.f32 %v4422, %v4499
    %v4502 = vmul.f32 %v4501, 0.5
    %v4503 = vtanh.pop %v4502
    %v4504 = vmul.f32 %v4503, 0.5
    %v4505 = vadd.f32 %v4504, 0.5
    %v4507 = vrot.slane %v4501, 4
    %v4509 = vtanh.pop %v4507
    %4510 = vrot.lane.b32.xlu0 %v4501, 64
    %v4511 = vpop.permute.xlu0 %4510
    %v4512 = vrot.slane %v4511, 4
    %v4514 = vmul.f32 %v4512, 0.5
    %v4515 = vtanh.pop %v4514
    %v4516 = vmul.f32 %v4515, 0.5
    %v4517 = vadd.f32 %v4516, 0.5
    %v4518 = vmul.f32 %v4505, %v4407
    %v4519 = vmul.f32 %v4505, %v4509
    %4521 = vrot.lane.b32.xlu0 %v4519, 64
    %v4522 = vpop.permute.xlu0 %4521
    %v4524 = vadd.f32 %v4518, %v4522
    %v4525 = vtanh.pop %v4524
    %4527 = vrot.lane.b32.xlu0 %v4525, 64
    %v4528 = vpop.permute.xlu0 %4527
    %v4530 = vmul.f32 %v4517, %v4528
    %vm4531 = vcmp.eq.s32.totalorder %v3605, 7
    %v4532 = vsel %vm4531, 1, 0
    %4533 = vset.pattern.permute.xlu0 0
    %4534 = vperm.xlu0 %4533, %v4532
    %v4535 = vpop.permute.xlu0 %4534
    %vm4536 = vcmp.eq.s32.totalorder %v4535, 1
    %v4537 = vsel %vm4536, %v4530, %v4420
    %v4538 = vmax.f32 %v4421, %v4530
    %4540 = vrot.lane.b32.xlu0 %v4538, 64
    %v4541 = vpop.permute.xlu0 %4540
    %v4543 = vsel %vm2271, %v4537, %v4541
    %v4544 = vld [vmem:[#allocation19] sm:$0x1]
    %v4546 = vlaneseq
    %v4547 = vshrl.u32 %v4546, 7
    %v4548 = vsub.s32 0, %v4547
    %v4549 = vrot.slane %v4544, %v4548
    %v4551 = vmul.f32 %v4543, %v4549
    %v4552 = vld [vmem:[#allocation20] sm:$0x1]
    %v4554 = vlaneseq
    %v4555 = vshrl.u32 %v4554, 7
    %v4556 = vsub.s32 0, %v4555
    %v4557 = vrot.slane %v4552, %v4556
    %v4559 = vadd.f32 %v4551, %v4557
    %v4560 = vmax.f32 %v4559, 0.0
    %4561 = vst [vmem:[#allocation22] sm:$0xf] %v4560
    // Predicated region
    $region114: #{lstm_extraction_v2_forward.1} parent=1 // pred_check
      _
    $region115: #{lstm_extraction_v2_forward.1} parent=1 // pred_check_branch
      %4563 = sbr.rel (0) target = $region117
    $region116: #{lstm_extraction_v2_forward.1} parent=1 // pred_region
      %s4565 = ssub.s32 64, 64
      %4566 = vsyncadd [#allocation7], %s4565
      %s4568 = sshll.u32 [#allocation22], 4
      %s4569 = int_to_ptr.vmem [resolvable:$true] %s4568
      %4571 = dma.vmem_to_hbm [thread:$0]  %s4569, 64, %s18, [#allocation7]
    $region117: #{lstm_extraction_v2_forward.1} parent=1 // pred_fallthru
      _
    // Predicated region
    $region118: #{lstm_extraction_v2_forward.1} parent=1 // pred_check
      _
    $region119: #{lstm_extraction_v2_forward.1} parent=1 // pred_check_branch
      %4573 = sbr.rel (0) target = $region121
    $region120: #{lstm_extraction_v2_forward.1} parent=1 // pred_region
      %4574 = dma.done [#allocation7], 64
    $region121: #{lstm_extraction_v2_forward.1} parent=1 // pred_fallthru
      _
    %4575 = vsyncpa [#allocation6], 1
    %4576 = vsyncpa [#allocation9], 1
    %4577 = vsyncpa [#allocation12], 1
    %4578 = vsyncpa [#allocation15], 1
    %4579 = vsyncpa [#allocation18], 1
    %4580 = vsyncpa [#allocation21], 1
    %4581 = vsyncpa [#allocation7], 1

</llo_original>
